<compile_context>
chip_gen: v7x
topology: tpu7x:2x2x1
jax: 0.10.0
libtpu: 0.0.40
codegen_flags: <defaults>
</compile_context>

<pallas_src>
import functools
import math

import jax
import jax.numpy as jnp
from jax.experimental import pallas as pl
from jax.experimental.pallas import tpu as pltpu


def _sigmoid(z):
    # sigmoid(x) = 0.5 * tanh(0.5 * x) + 0.5  -> one EUP push per element.
    return 0.5 * jnp.tanh(0.5 * z) + 0.5


# ----------------------------- Pallas kernel --------------------------------

def _lstm_model_kernel(*refs, hidden_dim, num_layers, t_len, b_blk):
    # refs (in order):
    #   x_ref:                      (t_len, b_blk, D) f32, time-major input block
    #   per layer l in [0, L):      wih_t (D_l, 4H) bf16, whh_t (H, 4H) bf16,
    #                               b (1, 4H) f32  (b_ih + b_hh)
    #   wfc_t:                      (H, O) bf16
    #   bfc:                        (1, O) f32
    #   out_ref:                    (b_blk, O) f32
    #   proj_scr:                   (t_len*b_blk, 4H) f32  hoisted input projection
    #   hseq_scr:                   (t_len*b_blk, H)  f32  previous-layer hidden seq
    x_ref = refs[0]
    layer_refs = refs[1:1 + 3 * num_layers]
    wfc_ref = refs[1 + 3 * num_layers]
    bfc_ref = refs[2 + 3 * num_layers]
    out_ref = refs[3 + 3 * num_layers]
    proj_scr = refs[4 + 3 * num_layers]
    hseq_scr = refs[5 + 3 * num_layers]

    H = hidden_dim
    n_rows = t_len * b_blk
    h_fin = None

    for layer in range(num_layers):
        wih_t_ref, whh_t_ref, b_ref = layer_refs[3 * layer:3 * layer + 3]

        # ---- Hoisted input projection: one large MXU matmul per layer ----
        if layer == 0:
            d_in = x_ref.shape[2]
            x2 = x_ref[...].reshape(n_rows, d_in).astype(jnp.bfloat16)
        else:
            x2 = hseq_scr[...].astype(jnp.bfloat16)       # (T*B, H), cast once
        proj_scr[...] = (
            jnp.dot(x2, wih_t_ref[...], preferred_element_type=jnp.float32)
            + b_ref[...])                                  # bias broadcast once

        whh_t = whh_t_ref[...]                             # resident bf16 (H, 4H)
        write_seq = layer < num_layers - 1

        def step(t, carry, whh_t=whh_t, write_seq=write_seq):
            h, c = carry                                   # f32 (b_blk, H)
            row = pl.multiple_of(t * b_blk, b_blk)
            gates = proj_scr[pl.ds(row, b_blk), :] + jnp.dot(
                h.astype(jnp.bfloat16), whh_t,
                preferred_element_type=jnp.float32)        # (b_blk, 4H) f32
            # PyTorch gate order: input, forget, cell(g), output.
            i_g = _sigmoid(gates[:, 0 * H:1 * H])
            f_g = _sigmoid(gates[:, 1 * H:2 * H])
            g_g = jnp.tanh(gates[:, 2 * H:3 * H])
            o_g = _sigmoid(gates[:, 3 * H:4 * H])
            c_new = f_g * c + i_g * g_g
            h_new = o_g * jnp.tanh(c_new)
            if write_seq:
                hseq_scr[pl.ds(row, b_blk), :] = h_new     # aligned f32 stores
            return h_new, c_new

        zeros = jnp.zeros((b_blk, H), jnp.float32)
        h_fin, _ = jax.lax.fori_loop(0, t_len, step, (zeros, zeros),
                                     unroll=True)

    # ---- Fused fc(out[:, -1, :]): bf16 operands, f32 accumulation ----
    out_ref[...] = (
        jnp.dot(h_fin.astype(jnp.bfloat16), wfc_ref[...],
                preferred_element_type=jnp.float32)
        + bfc_ref[...])


# ------------------------------ wrapper --------------------------------------

def lstm_model_pallas(x, params):
    """Fused multi-layer LSTM + final Linear. x: (B, T, input_dim) batch_first."""
    B, T, D = x.shape
    lstm_params = params["lstm"]
    num_layers = len(lstm_params)
    w_fc, b_fc = params["fc"]
    H = lstm_params[0][1].shape[1]            # whh: (4H, H)
    O = w_fc.shape[0]

    # Split batch across two blocks (v7x megacore) when it stays sublane-aligned.
    if B >= 16 and (B // 2) % 8 == 0:
        b_blk = B // 2
    else:
        b_blk = B
    n_b = B // b_blk

    # Time-major once; everything downstream stays inside the single kernel.
    # TODO(synk): absorb this transpose into the kernel via strided per-step
    # reads of a batch-major projection to drop the last non-Pallas op.
    x_tm = jnp.transpose(x, (1, 0, 2))        # (T, B, D)

    inputs = [x_tm]
    in_specs = [pl.BlockSpec((T, b_blk, D), lambda bi: (0, bi, 0))]
    for (wih, whh, bih, bhh) in lstm_params:
        d_in = wih.shape[1]
        inputs += [wih.T.astype(jnp.bfloat16),               # (D_l, 4H)
                   whh.T.astype(jnp.bfloat16),               # (H, 4H)
                   (bih + bhh)[None, :].astype(jnp.float32)] # (1, 4H)
        in_specs += [pl.BlockSpec((d_in, 4 * H), lambda bi: (0, 0)),
                     pl.BlockSpec((H, 4 * H), lambda bi: (0, 0)),
                     pl.BlockSpec((1, 4 * H), lambda bi: (0, 0))]
    inputs += [w_fc.T.astype(jnp.bfloat16),                  # (H, O)
               b_fc[None, :].astype(jnp.float32)]            # (1, O)
    in_specs += [pl.BlockSpec((H, O), lambda bi: (0, 0)),
                 pl.BlockSpec((1, O), lambda bi: (0, 0))]
    # TODO(synk): at large H, mark the constant weight specs pl.Buffered(1) to
    # avoid double-buffering the resident weights (matters for v7x's 64 MiB VMEM).

    kernel = functools.partial(_lstm_model_kernel, hidden_dim=H,
                               num_layers=num_layers, t_len=T, b_blk=b_blk)

    return pl.pallas_call(
        kernel,
        out_shape=jax.ShapeDtypeStruct((B, O), jnp.float32),
        grid=(n_b,),
        in_specs=in_specs,
        out_specs=pl.BlockSpec((b_blk, O), lambda bi: (bi, 0)),
        scratch_shapes=[
            pltpu.VMEM((T * b_blk, 4 * H), jnp.float32),   # hoisted projection
            pltpu.VMEM((T * b_blk, H), jnp.float32),       # inter-layer hidden seq
        ],
        compiler_params=pltpu.CompilerParams(
            dimension_semantics=("parallel",),
            vmem_limit_bytes=32 * 1024 * 1024,
        ),
    )(*inputs)


def init_params(key, input_dim, hidden_dim, num_layers, output_dim):
    """Deterministic init mirroring nn.LSTM / nn.Linear uniform(-1/sqrt(H), 1/sqrt(H))."""
    k = 1.0 / math.sqrt(hidden_dim)
    params = {"lstm": [], "fc": None}
    for layer in range(num_layers):
        d_in = input_dim if layer == 0 else hidden_dim
        key, k1, k2, k3, k4 = jax.random.split(key, 5)
        wih = jax.random.uniform(k1, (4 * hidden_dim, d_in), jnp.float32, -k, k)
        whh = jax.random.uniform(k2, (4 * hidden_dim, hidden_dim), jnp.float32, -k, k)
        bih = jax.random.uniform(k3, (4 * hidden_dim,), jnp.float32, -k, k)
        bhh = jax.random.uniform(k4, (4 * hidden_dim,), jnp.float32, -k, k)
        params["lstm"].append((wih, whh, bih, bhh))
    key, k1, k2 = jax.random.split(key, 3)
    w_fc = jax.random.uniform(k1, (output_dim, hidden_dim), jnp.float32, -k, k)
    b_fc = jax.random.uniform(k2, (output_dim,), jnp.float32, -k, k)
    params["fc"] = (w_fc, b_fc)
    return params


@jax.jit
def lstm_model_forward(x, params):
    return lstm_model_pallas(x, params)


# -------------------------- pure-JAX reference ------------------------------

def lstm_model_reference(x, params):
    # Mirrors the kernel math: bf16 matmul operands, f32 accumulation,
    # f32 gate/elementwise math, PyTorch gate order.
    B = x.shape[0]
    h_seq = x
    for (wih, whh, bih, bhh) in params["lstm"]:
        H = whh.shape[1]
        wih_t = wih.T.astype(jnp.bfloat16)
        whh_t = whh.T.astype(jnp.bfloat16)
        bias = (bih + bhh).astype(jnp.float32)
        h = jnp.zeros((B, H), jnp.float32)
        c = jnp.zeros((B, H), jnp.float32)
        outs = []
        for t in range(h_seq.shape[1]):
            x_t = h_seq[:, t, :]
            g = (jnp.dot(x_t.astype(jnp.bfloat16), wih_t,
                         preferred_element_type=jnp.float32)
                 + jnp.dot(h.astype(jnp.bfloat16), whh_t,
                           preferred_element_type=jnp.float32)
                 + bias)
            i_g = _sigmoid(g[:, 0:H])
            f_g = _sigmoid(g[:, H:2 * H])
            g_g = jnp.tanh(g[:, 2 * H:3 * H])
            o_g = _sigmoid(g[:, 3 * H:4 * H])
            c = f_g * c + i_g * g_g
            h = o_g * jnp.tanh(c)
            outs.append(h)
        h_seq = jnp.stack(outs, axis=1)               # (B, T, H) f32
    w_fc, b_fc = params["fc"]
    h_last = h_seq[:, -1, :]
    return (jnp.dot(h_last.astype(jnp.bfloat16), w_fc.T.astype(jnp.bfloat16),
                    preferred_element_type=jnp.float32) + b_fc)


# --------------------------------- main -------------------------------------

if __name__ == "__main__":
    # Lane/sublane-aligned small shapes: B=8 (full f32 sublane tile),
    # H=128 (each gate slice is a full lane tile), T=16, two layers so the
    # fused inter-layer VMEM path is exercised.
    B, T = 8, 16
    input_dim, hidden_dim, num_layers, output_dim = 8, 128, 2, 8

    key = jax.random.PRNGKey(0)
    key, kx = jax.random.split(key)
    x = jax.random.normal(kx, (B, T, input_dim), jnp.float32)

    params = init_params(key, input_dim, hidden_dim, num_layers, output_dim)

    y = lstm_model_forward(x, params)
    y = jax.block_until_ready(y)

    y_ref = lstm_model_reference(x, params)
    assert y.shape == (B, output_dim)
    assert jnp.allclose(y, y_ref, atol=1e-3, rtol=1e-3), "mismatch vs JAX reference"

    print("KERNEL_OK")
</pallas_src>

<mosaic_0001>
module attributes {stable_mosaic.version = 11 : i64} {
  func.func @_lstm_model_kernel(%arg0: i32, %arg1: memref<16x8x8xf32, #tpu.memory_space<vmem>>, %arg2: memref<8x512xbf16, #tpu.memory_space<vmem>>, %arg3: memref<128x512xbf16, #tpu.memory_space<vmem>>, %arg4: memref<1x512xf32, #tpu.memory_space<vmem>>, %arg5: memref<128x512xbf16, #tpu.memory_space<vmem>>, %arg6: memref<128x512xbf16, #tpu.memory_space<vmem>>, %arg7: memref<1x512xf32, #tpu.memory_space<vmem>>, %arg8: memref<128x8xbf16, #tpu.memory_space<vmem>>, %arg9: memref<1x8xf32, #tpu.memory_space<vmem>>, %arg10: memref<8x8xf32, #tpu.memory_space<vmem>>, %arg11: memref<128x512xf32, #tpu.memory_space<vmem>>, %arg12: memref<128x128xf32, #tpu.memory_space<vmem>>) attributes {dimension_semantics = [#tpu.dimension_semantics<parallel>], iteration_bounds = array<i64: 1>, scalar_prefetch = 0 : i64, scratch_operands = 2 : i64, tpu.core_type = #tpu.core_type<tc>, window_params = [{transform_indices = @transform_0, window_bounds = array<i64: 16, 8, 8>}, {pipeline_mode = #tpu.pipeline_mode<synchronous>, transform_indices = @transform_1, window_bounds = array<i64: 8, 512>}, {pipeline_mode = #tpu.pipeline_mode<synchronous>, transform_indices = @transform_2, window_bounds = array<i64: 128, 512>}, {pipeline_mode = #tpu.pipeline_mode<synchronous>, transform_indices = @transform_3, window_bounds = array<i64: 1, 512>}, {pipeline_mode = #tpu.pipeline_mode<synchronous>, transform_indices = @transform_4, window_bounds = array<i64: 128, 512>}, {pipeline_mode = #tpu.pipeline_mode<synchronous>, transform_indices = @transform_5, window_bounds = array<i64: 128, 512>}, {pipeline_mode = #tpu.pipeline_mode<synchronous>, transform_indices = @transform_6, window_bounds = array<i64: 1, 512>}, {pipeline_mode = #tpu.pipeline_mode<synchronous>, transform_indices = @transform_7, window_bounds = array<i64: 128, 8>}, {pipeline_mode = #tpu.pipeline_mode<synchronous>, transform_indices = @transform_8, window_bounds = array<i64: 1, 8>}, {transform_indices = @transform_9, window_bounds = array<i64: 8, 8>}]} {
    %c0 = arith.constant 0 : index
    %c0_0 = arith.constant 0 : index
    %c0_1 = arith.constant 0 : index
    %0 = vector.load %arg1[%c0, %c0_0, %c0_1] : memref<16x8x8xf32, #tpu.memory_space<vmem>>, vector<16x8x8xf32>
    %1 = vector.shape_cast %0 : vector<16x8x8xf32> to vector<128x8xf32>
    %2 = arith.truncf %1 : vector<128x8xf32> to vector<128x8xbf16>
    %c0_2 = arith.constant 0 : index
    %c0_3 = arith.constant 0 : index
    %3 = vector.load %arg2[%c0_2, %c0_3] : memref<8x512xbf16, #tpu.memory_space<vmem>>, vector<8x512xbf16>
    %cst = arith.constant dense<0.000000e+00> : vector<128x512xf32>
    %4 = tpu.matmul %2, %3, %cst {dimension_numbers = #tpu.dot_dimension_numbers<[1], [0], [0], [1], [0, 0, 1, 1], [], []>} : vector<128x8xbf16>, vector<8x512xbf16>, vector<128x512xf32> -> vector<128x512xf32>
    %c0_4 = arith.constant 0 : index
    %c0_5 = arith.constant 0 : index
    %5 = vector.load %arg4[%c0_4, %c0_5] : memref<1x512xf32, #tpu.memory_space<vmem>>, vector<1x512xf32>
    %6 = vector.broadcast %5 : vector<1x512xf32> to vector<128x512xf32>
    %7 = arith.addf %4, %6 : vector<128x512xf32>
    %c0_6 = arith.constant 0 : index
    %c0_7 = arith.constant 0 : index
    %8 = vector.load %arg11[%c0_6, %c0_7] : memref<128x512xf32, #tpu.memory_space<vmem>>, vector<128x512xf32>
    tpu.vector_store %arg11[%c0_6, %c0_7], %7 {strides = array<i32>} : memref<128x512xf32, #tpu.memory_space<vmem>>, vector<128x512xf32>,
    %c0_8 = arith.constant 0 : index
    %c0_9 = arith.constant 0 : index
    %9 = vector.load %arg3[%c0_8, %c0_9] : memref<128x512xbf16, #tpu.memory_space<vmem>>, vector<128x512xbf16>
    %cst_10 = arith.constant 0.000000e+00 : f32
    %10 = vector.broadcast %cst_10 : f32 to vector<8x128xf32>
    %c0_i32 = arith.constant 0 : i32
    %c8_i32 = arith.constant 8 : i32
    %11 = arith.muli %c0_i32, %c8_i32 : i32
    %12 = tpu.assume_multiple %11, 8 : i32
    %13 = arith.index_cast %12 : i32 to index
    %c0_11 = arith.constant 0 : index
    %14 = vector.load %arg11[%13, %c0_11] : memref<128x512xf32, #tpu.memory_space<vmem>>, vector<8x512xf32>
    %15 = arith.truncf %10 : vector<8x128xf32> to vector<8x128xbf16>
    %cst_12 = arith.constant dense<0.000000e+00> : vector<8x512xf32>
    %16 = tpu.matmul %15, %9, %cst_12 {dimension_numbers = #tpu.dot_dimension_numbers<[1], [0], [0], [1], [0, 0, 1, 1], [], []>} : vector<8x128xbf16>, vector<128x512xbf16>, vector<8x512xf32> -> vector<8x512xf32>
    %17 = arith.addf %14, %16 : vector<8x512xf32>
    %18 = vector.extract_strided_slice %17 {offsets = [0, 0], sizes = [8, 128], strides = [1, 1]} : vector<8x512xf32> to vector<8x128xf32>
    %cst_13 = arith.constant 5.000000e-01 : f32
    %19 = vector.broadcast %cst_13 : f32 to vector<8x128xf32>
    %20 = arith.mulf %19, %18 : vector<8x128xf32>
    %21 = math.tanh %20 : vector<8x128xf32>
    %cst_14 = arith.constant 5.000000e-01 : f32
    %22 = vector.broadcast %cst_14 : f32 to vector<8x128xf32>
    %23 = arith.mulf %22, %21 : vector<8x128xf32>
    %cst_15 = arith.constant 5.000000e-01 : f32
    %24 = vector.broadcast %cst_15 : f32 to vector<8x128xf32>
    %25 = arith.addf %23, %24 : vector<8x128xf32>
    %26 = vector.extract_strided_slice %17 {offsets = [0, 128], sizes = [8, 128], strides = [1, 1]} : vector<8x512xf32> to vector<8x128xf32>
    %cst_16 = arith.constant 5.000000e-01 : f32
    %27 = vector.broadcast %cst_16 : f32 to vector<8x128xf32>
    %28 = arith.mulf %27, %26 : vector<8x128xf32>
    %29 = math.tanh %28 : vector<8x128xf32>
    %cst_17 = arith.constant 5.000000e-01 : f32
    %30 = vector.broadcast %cst_17 : f32 to vector<8x128xf32>
    %31 = arith.mulf %30, %29 : vector<8x128xf32>
    %cst_18 = arith.constant 5.000000e-01 : f32
    %32 = vector.broadcast %cst_18 : f32 to vector<8x128xf32>
    %33 = arith.addf %31, %32 : vector<8x128xf32>
    %34 = vector.extract_strided_slice %17 {offsets = [0, 256], sizes = [8, 128], strides = [1, 1]} : vector<8x512xf32> to vector<8x128xf32>
    %35 = math.tanh %34 : vector<8x128xf32>
    %36 = vector.extract_strided_slice %17 {offsets = [0, 384], sizes = [8, 128], strides = [1, 1]} : vector<8x512xf32> to vector<8x128xf32>
    %cst_19 = arith.constant 5.000000e-01 : f32
    %37 = vector.broadcast %cst_19 : f32 to vector<8x128xf32>
    %38 = arith.mulf %37, %36 : vector<8x128xf32>
    %39 = math.tanh %38 : vector<8x128xf32>
    %cst_20 = arith.constant 5.000000e-01 : f32
    %40 = vector.broadcast %cst_20 : f32 to vector<8x128xf32>
    %41 = arith.mulf %40, %39 : vector<8x128xf32>
    %cst_21 = arith.constant 5.000000e-01 : f32
    %42 = vector.broadcast %cst_21 : f32 to vector<8x128xf32>
    %43 = arith.addf %41, %42 : vector<8x128xf32>
    %44 = arith.mulf %33, %10 : vector<8x128xf32>
    %45 = arith.mulf %25, %35 : vector<8x128xf32>
    %46 = arith.addf %44, %45 : vector<8x128xf32>
    %47 = math.tanh %46 : vector<8x128xf32>
    %48 = arith.mulf %43, %47 : vector<8x128xf32>
    %49 = arith.index_cast %12 : i32 to index
    %c0_22 = arith.constant 0 : index
    %50 = vector.load %arg12[%49, %c0_22] : memref<128x128xf32, #tpu.memory_space<vmem>>, vector<8x128xf32>
    tpu.vector_store %arg12[%49, %c0_22], %48 {strides = array<i32>} : memref<128x128xf32, #tpu.memory_space<vmem>>, vector<8x128xf32>,
    %c1_i32 = arith.constant 1 : i32
    %c8_i32_23 = arith.constant 8 : i32
    %51 = arith.muli %c1_i32, %c8_i32_23 : i32
    %52 = tpu.assume_multiple %51, 8 : i32
    %53 = arith.index_cast %52 : i32 to index
    %c0_24 = arith.constant 0 : index
    %54 = vector.load %arg11[%53, %c0_24] : memref<128x512xf32, #tpu.memory_space<vmem>>, vector<8x512xf32>
    %55 = arith.truncf %48 : vector<8x128xf32> to vector<8x128xbf16>
    %cst_25 = arith.constant dense<0.000000e+00> : vector<8x512xf32>
    %56 = tpu.matmul %55, %9, %cst_25 {dimension_numbers = #tpu.dot_dimension_numbers<[1], [0], [0], [1], [0, 0, 1, 1], [], []>} : vector<8x128xbf16>, vector<128x512xbf16>, vector<8x512xf32> -> vector<8x512xf32>
    %57 = arith.addf %54, %56 : vector<8x512xf32>
    %58 = vector.extract_strided_slice %57 {offsets = [0, 0], sizes = [8, 128], strides = [1, 1]} : vector<8x512xf32> to vector<8x128xf32>
    %cst_26 = arith.constant 5.000000e-01 : f32
    %59 = vector.broadcast %cst_26 : f32 to vector<8x128xf32>
    %60 = arith.mulf %59, %58 : vector<8x128xf32>
    %61 = math.tanh %60 : vector<8x128xf32>
    %cst_27 = arith.constant 5.000000e-01 : f32
    %62 = vector.broadcast %cst_27 : f32 to vector<8x128xf32>
    %63 = arith.mulf %62, %61 : vector<8x128xf32>
    %cst_28 = arith.constant 5.000000e-01 : f32
    %64 = vector.broadcast %cst_28 : f32 to vector<8x128xf32>
    %65 = arith.addf %63, %64 : vector<8x128xf32>
    %66 = vector.extract_strided_slice %57 {offsets = [0, 128], sizes = [8, 128], strides = [1, 1]} : vector<8x512xf32> to vector<8x128xf32>
    %cst_29 = arith.constant 5.000000e-01 : f32
    %67 = vector.broadcast %cst_29 : f32 to vector<8x128xf32>
    %68 = arith.mulf %67, %66 : vector<8x128xf32>
    %69 = math.tanh %68 : vector<8x128xf32>
    %cst_30 = arith.constant 5.000000e-01 : f32
    %70 = vector.broadcast %cst_30 : f32 to vector<8x128xf32>
    %71 = arith.mulf %70, %69 : vector<8x128xf32>
    %cst_31 = arith.constant 5.000000e-01 : f32
    %72 = vector.broadcast %cst_31 : f32 to vector<8x128xf32>
    %73 = arith.addf %71, %72 : vector<8x128xf32>
    %74 = vector.extract_strided_slice %57 {offsets = [0, 256], sizes = [8, 128], strides = [1, 1]} : vector<8x512xf32> to vector<8x128xf32>
    %75 = math.tanh %74 : vector<8x128xf32>
    %76 = vector.extract_strided_slice %57 {offsets = [0, 384], sizes = [8, 128], strides = [1, 1]} : vector<8x512xf32> to vector<8x128xf32>
    %cst_32 = arith.constant 5.000000e-01 : f32
    %77 = vector.broadcast %cst_32 : f32 to vector<8x128xf32>
    %78 = arith.mulf %77, %76 : vector<8x128xf32>
    %79 = math.tanh %78 : vector<8x128xf32>
    %cst_33 = arith.constant 5.000000e-01 : f32
    %80 = vector.broadcast %cst_33 : f32 to vector<8x128xf32>
    %81 = arith.mulf %80, %79 : vector<8x128xf32>
    %cst_34 = arith.constant 5.000000e-01 : f32
    %82 = vector.broadcast %cst_34 : f32 to vector<8x128xf32>
    %83 = arith.addf %81, %82 : vector<8x128xf32>
    %84 = arith.mulf %73, %46 : vector<8x128xf32>
    %85 = arith.mulf %65, %75 : vector<8x128xf32>
    %86 = arith.addf %84, %85 : vector<8x128xf32>
    %87 = math.tanh %86 : vector<8x128xf32>
    %88 = arith.mulf %83, %87 : vector<8x128xf32>
    %89 = arith.index_cast %52 : i32 to index
    %c0_35 = arith.constant 0 : index
    %90 = vector.load %arg12[%89, %c0_35] : memref<128x128xf32, #tpu.memory_space<vmem>>, vector<8x128xf32>
    tpu.vector_store %arg12[%89, %c0_35], %88 {strides = array<i32>} : memref<128x128xf32, #tpu.memory_space<vmem>>, vector<8x128xf32>,
    %c2_i32 = arith.constant 2 : i32
    %c8_i32_36 = arith.constant 8 : i32
    %91 = arith.muli %c2_i32, %c8_i32_36 : i32
    %92 = tpu.assume_multiple %91, 8 : i32
    %93 = arith.index_cast %92 : i32 to index
    %c0_37 = arith.constant 0 : index
    %94 = vector.load %arg11[%93, %c0_37] : memref<128x512xf32, #tpu.memory_space<vmem>>, vector<8x512xf32>
    %95 = arith.truncf %88 : vector<8x128xf32> to vector<8x128xbf16>
    %cst_38 = arith.constant dense<0.000000e+00> : vector<8x512xf32>
    %96 = tpu.matmul %95, %9, %cst_38 {dimension_numbers = #tpu.dot_dimension_numbers<[1], [0], [0], [1], [0, 0, 1, 1], [], []>} : vector<8x128xbf16>, vector<128x512xbf16>, vector<8x512xf32> -> vector<8x512xf32>
    %97 = arith.addf %94, %96 : vector<8x512xf32>
    %98 = vector.extract_strided_slice %97 {offsets = [0, 0], sizes = [8, 128], strides = [1, 1]} : vector<8x512xf32> to vector<8x128xf32>
    %cst_39 = arith.constant 5.000000e-01 : f32
    %99 = vector.broadcast %cst_39 : f32 to vector<8x128xf32>
    %100 = arith.mulf %99, %98 : vector<8x128xf32>
    %101 = math.tanh %100 : vector<8x128xf32>
    %cst_40 = arith.constant 5.000000e-01 : f32
    %102 = vector.broadcast %cst_40 : f32 to vector<8x128xf32>
    %103 = arith.mulf %102, %101 : vector<8x128xf32>
    %cst_41 = arith.constant 5.000000e-01 : f32
    %104 = vector.broadcast %cst_41 : f32 to vector<8x128xf32>
    %105 = arith.addf %103, %104 : vector<8x128xf32>
    %106 = vector.extract_strided_slice %97 {offsets = [0, 128], sizes = [8, 128], strides = [1, 1]} : vector<8x512xf32> to vector<8x128xf32>
    %cst_42 = arith.constant 5.000000e-01 : f32
    %107 = vector.broadcast %cst_42 : f32 to vector<8x128xf32>
    %108 = arith.mulf %107, %106 : vector<8x128xf32>
    %109 = math.tanh %108 : vector<8x128xf32>
    %cst_43 = arith.constant 5.000000e-01 : f32
    %110 = vector.broadcast %cst_43 : f32 to vector<8x128xf32>
    %111 = arith.mulf %110, %109 : vector<8x128xf32>
    %cst_44 = arith.constant 5.000000e-01 : f32
    %112 = vector.broadcast %cst_44 : f32 to vector<8x128xf32>
    %113 = arith.addf %111, %112 : vector<8x128xf32>
    %114 = vector.extract_strided_slice %97 {offsets = [0, 256], sizes = [8, 128], strides = [1, 1]} : vector<8x512xf32> to vector<8x128xf32>
    %115 = math.tanh %114 : vector<8x128xf32>
    %116 = vector.extract_strided_slice %97 {offsets = [0, 384], sizes = [8, 128], strides = [1, 1]} : vector<8x512xf32> to vector<8x128xf32>
    %cst_45 = arith.constant 5.000000e-01 : f32
    %117 = vector.broadcast %cst_45 : f32 to vector<8x128xf32>
    %118 = arith.mulf %117, %116 : vector<8x128xf32>
    %119 = math.tanh %118 : vector<8x128xf32>
    %cst_46 = arith.constant 5.000000e-01 : f32
    %120 = vector.broadcast %cst_46 : f32 to vector<8x128xf32>
    %121 = arith.mulf %120, %119 : vector<8x128xf32>
    %cst_47 = arith.constant 5.000000e-01 : f32
    %122 = vector.broadcast %cst_47 : f32 to vector<8x128xf32>
    %123 = arith.addf %121, %122 : vector<8x128xf32>
    %124 = arith.mulf %113, %86 : vector<8x128xf32>
    %125 = arith.mulf %105, %115 : vector<8x128xf32>
    %126 = arith.addf %124, %125 : vector<8x128xf32>
    %127 = math.tanh %126 : vector<8x128xf32>
    %128 = arith.mulf %123, %127 : vector<8x128xf32>
    %129 = arith.index_cast %92 : i32 to index
    %c0_48 = arith.constant 0 : index
    %130 = vector.load %arg12[%129, %c0_48] : memref<128x128xf32, #tpu.memory_space<vmem>>, vector<8x128xf32>
    tpu.vector_store %arg12[%129, %c0_48], %128 {strides = array<i32>} : memref<128x128xf32, #tpu.memory_space<vmem>>, vector<8x128xf32>,
    %c3_i32 = arith.constant 3 : i32
    %c8_i32_49 = arith.constant 8 : i32
    %131 = arith.muli %c3_i32, %c8_i32_49 : i32
    %132 = tpu.assume_multiple %131, 8 : i32
    %133 = arith.index_cast %132 : i32 to index
    %c0_50 = arith.constant 0 : index
    %134 = vector.load %arg11[%133, %c0_50] : memref<128x512xf32, #tpu.memory_space<vmem>>, vector<8x512xf32>
    %135 = arith.truncf %128 : vector<8x128xf32> to vector<8x128xbf16>
    %cst_51 = arith.constant dense<0.000000e+00> : vector<8x512xf32>
    %136 = tpu.matmul %135, %9, %cst_51 {dimension_numbers = #tpu.dot_dimension_numbers<[1], [0], [0], [1], [0, 0, 1, 1], [], []>} : vector<8x128xbf16>, vector<128x512xbf16>, vector<8x512xf32> -> vector<8x512xf32>
    %137 = arith.addf %134, %136 : vector<8x512xf32>
    %138 = vector.extract_strided_slice %137 {offsets = [0, 0], sizes = [8, 128], strides = [1, 1]} : vector<8x512xf32> to vector<8x128xf32>
    %cst_52 = arith.constant 5.000000e-01 : f32
    %139 = vector.broadcast %cst_52 : f32 to vector<8x128xf32>
    %140 = arith.mulf %139, %138 : vector<8x128xf32>
    %141 = math.tanh %140 : vector<8x128xf32>
    %cst_53 = arith.constant 5.000000e-01 : f32
    %142 = vector.broadcast %cst_53 : f32 to vector<8x128xf32>
    %143 = arith.mulf %142, %141 : vector<8x128xf32>
    %cst_54 = arith.constant 5.000000e-01 : f32
    %144 = vector.broadcast %cst_54 : f32 to vector<8x128xf32>
    %145 = arith.addf %143, %144 : vector<8x128xf32>
    %146 = vector.extract_strided_slice %137 {offsets = [0, 128], sizes = [8, 128], strides = [1, 1]} : vector<8x512xf32> to vector<8x128xf32>
    %cst_55 = arith.constant 5.000000e-01 : f32
    %147 = vector.broadcast %cst_55 : f32 to vector<8x128xf32>
    %148 = arith.mulf %147, %146 : vector<8x128xf32>
    %149 = math.tanh %148 : vector<8x128xf32>
    %cst_56 = arith.constant 5.000000e-01 : f32
    %150 = vector.broadcast %cst_56 : f32 to vector<8x128xf32>
    %151 = arith.mulf %150, %149 : vector<8x128xf32>
    %cst_57 = arith.constant 5.000000e-01 : f32
    %152 = vector.broadcast %cst_57 : f32 to vector<8x128xf32>
    %153 = arith.addf %151, %152 : vector<8x128xf32>
    %154 = vector.extract_strided_slice %137 {offsets = [0, 256], sizes = [8, 128], strides = [1, 1]} : vector<8x512xf32> to vector<8x128xf32>
    %155 = math.tanh %154 : vector<8x128xf32>
    %156 = vector.extract_strided_slice %137 {offsets = [0, 384], sizes = [8, 128], strides = [1, 1]} : vector<8x512xf32> to vector<8x128xf32>
    %cst_58 = arith.constant 5.000000e-01 : f32
    %157 = vector.broadcast %cst_58 : f32 to vector<8x128xf32>
    %158 = arith.mulf %157, %156 : vector<8x128xf32>
    %159 = math.tanh %158 : vector<8x128xf32>
    %cst_59 = arith.constant 5.000000e-01 : f32
    %160 = vector.broadcast %cst_59 : f32 to vector<8x128xf32>
    %161 = arith.mulf %160, %159 : vector<8x128xf32>
    %cst_60 = arith.constant 5.000000e-01 : f32
    %162 = vector.broadcast %cst_60 : f32 to vector<8x128xf32>
    %163 = arith.addf %161, %162 : vector<8x128xf32>
    %164 = arith.mulf %153, %126 : vector<8x128xf32>
    %165 = arith.mulf %145, %155 : vector<8x128xf32>
    %166 = arith.addf %164, %165 : vector<8x128xf32>
    %167 = math.tanh %166 : vector<8x128xf32>
    %168 = arith.mulf %163, %167 : vector<8x128xf32>
    %169 = arith.index_cast %132 : i32 to index
    %c0_61 = arith.constant 0 : index
    %170 = vector.load %arg12[%169, %c0_61] : memref<128x128xf32, #tpu.memory_space<vmem>>, vector<8x128xf32>
    tpu.vector_store %arg12[%169, %c0_61], %168 {strides = array<i32>} : memref<128x128xf32, #tpu.memory_space<vmem>>, vector<8x128xf32>,
    %c4_i32 = arith.constant 4 : i32
    %c8_i32_62 = arith.constant 8 : i32
    %171 = arith.muli %c4_i32, %c8_i32_62 : i32
    %172 = tpu.assume_multiple %171, 8 : i32
    %173 = arith.index_cast %172 : i32 to index
    %c0_63 = arith.constant 0 : index
    %174 = vector.load %arg11[%173, %c0_63] : memref<128x512xf32, #tpu.memory_space<vmem>>, vector<8x512xf32>
    %175 = arith.truncf %168 : vector<8x128xf32> to vector<8x128xbf16>
    %cst_64 = arith.constant dense<0.000000e+00> : vector<8x512xf32>
    %176 = tpu.matmul %175, %9, %cst_64 {dimension_numbers = #tpu.dot_dimension_numbers<[1], [0], [0], [1], [0, 0, 1, 1], [], []>} : vector<8x128xbf16>, vector<128x512xbf16>, vector<8x512xf32> -> vector<8x512xf32>
    %177 = arith.addf %174, %176 : vector<8x512xf32>
    %178 = vector.extract_strided_slice %177 {offsets = [0, 0], sizes = [8, 128], strides = [1, 1]} : vector<8x512xf32> to vector<8x128xf32>
    %cst_65 = arith.constant 5.000000e-01 : f32
    %179 = vector.broadcast %cst_65 : f32 to vector<8x128xf32>
    %180 = arith.mulf %179, %178 : vector<8x128xf32>
    %181 = math.tanh %180 : vector<8x128xf32>
    %cst_66 = arith.constant 5.000000e-01 : f32
    %182 = vector.broadcast %cst_66 : f32 to vector<8x128xf32>
    %183 = arith.mulf %182, %181 : vector<8x128xf32>
    %cst_67 = arith.constant 5.000000e-01 : f32
    %184 = vector.broadcast %cst_67 : f32 to vector<8x128xf32>
    %185 = arith.addf %183, %184 : vector<8x128xf32>
    %186 = vector.extract_strided_slice %177 {offsets = [0, 128], sizes = [8, 128], strides = [1, 1]} : vector<8x512xf32> to vector<8x128xf32>
    %cst_68 = arith.constant 5.000000e-01 : f32
    %187 = vector.broadcast %cst_68 : f32 to vector<8x128xf32>
    %188 = arith.mulf %187, %186 : vector<8x128xf32>
    %189 = math.tanh %188 : vector<8x128xf32>
    %cst_69 = arith.constant 5.000000e-01 : f32
    %190 = vector.broadcast %cst_69 : f32 to vector<8x128xf32>
    %191 = arith.mulf %190, %189 : vector<8x128xf32>
    %cst_70 = arith.constant 5.000000e-01 : f32
    %192 = vector.broadcast %cst_70 : f32 to vector<8x128xf32>
    %193 = arith.addf %191, %192 : vector<8x128xf32>
    %194 = vector.extract_strided_slice %177 {offsets = [0, 256], sizes = [8, 128], strides = [1, 1]} : vector<8x512xf32> to vector<8x128xf32>
    %195 = math.tanh %194 : vector<8x128xf32>
    %196 = vector.extract_strided_slice %177 {offsets = [0, 384], sizes = [8, 128], strides = [1, 1]} : vector<8x512xf32> to vector<8x128xf32>
    %cst_71 = arith.constant 5.000000e-01 : f32
    %197 = vector.broadcast %cst_71 : f32 to vector<8x128xf32>
    %198 = arith.mulf %197, %196 : vector<8x128xf32>
    %199 = math.tanh %198 : vector<8x128xf32>
    %cst_72 = arith.constant 5.000000e-01 : f32
    %200 = vector.broadcast %cst_72 : f32 to vector<8x128xf32>
    %201 = arith.mulf %200, %199 : vector<8x128xf32>
    %cst_73 = arith.constant 5.000000e-01 : f32
    %202 = vector.broadcast %cst_73 : f32 to vector<8x128xf32>
    %203 = arith.addf %201, %202 : vector<8x128xf32>
    %204 = arith.mulf %193, %166 : vector<8x128xf32>
    %205 = arith.mulf %185, %195 : vector<8x128xf32>
    %206 = arith.addf %204, %205 : vector<8x128xf32>
    %207 = math.tanh %206 : vector<8x128xf32>
    %208 = arith.mulf %203, %207 : vector<8x128xf32>
    %209 = arith.index_cast %172 : i32 to index
    %c0_74 = arith.constant 0 : index
    %210 = vector.load %arg12[%209, %c0_74] : memref<128x128xf32, #tpu.memory_space<vmem>>, vector<8x128xf32>
    tpu.vector_store %arg12[%209, %c0_74], %208 {strides = array<i32>} : memref<128x128xf32, #tpu.memory_space<vmem>>, vector<8x128xf32>,
    %c5_i32 = arith.constant 5 : i32
    %c8_i32_75 = arith.constant 8 : i32
    %211 = arith.muli %c5_i32, %c8_i32_75 : i32
    %212 = tpu.assume_multiple %211, 8 : i32
    %213 = arith.index_cast %212 : i32 to index
    %c0_76 = arith.constant 0 : index
    %214 = vector.load %arg11[%213, %c0_76] : memref<128x512xf32, #tpu.memory_space<vmem>>, vector<8x512xf32>
    %215 = arith.truncf %208 : vector<8x128xf32> to vector<8x128xbf16>
    %cst_77 = arith.constant dense<0.000000e+00> : vector<8x512xf32>
    %216 = tpu.matmul %215, %9, %cst_77 {dimension_numbers = #tpu.dot_dimension_numbers<[1], [0], [0], [1], [0, 0, 1, 1], [], []>} : vector<8x128xbf16>, vector<128x512xbf16>, vector<8x512xf32> -> vector<8x512xf32>
    %217 = arith.addf %214, %216 : vector<8x512xf32>
    %218 = vector.extract_strided_slice %217 {offsets = [0, 0], sizes = [8, 128], strides = [1, 1]} : vector<8x512xf32> to vector<8x128xf32>
    %cst_78 = arith.constant 5.000000e-01 : f32
    %219 = vector.broadcast %cst_78 : f32 to vector<8x128xf32>
    %220 = arith.mulf %219, %218 : vector<8x128xf32>
    %221 = math.tanh %220 : vector<8x128xf32>
    %cst_79 = arith.constant 5.000000e-01 : f32
    %222 = vector.broadcast %cst_79 : f32 to vector<8x128xf32>
    %223 = arith.mulf %222, %221 : vector<8x128xf32>
    %cst_80 = arith.constant 5.000000e-01 : f32
    %224 = vector.broadcast %cst_80 : f32 to vector<8x128xf32>
    %225 = arith.addf %223, %224 : vector<8x128xf32>
    %226 = vector.extract_strided_slice %217 {offsets = [0, 128], sizes = [8, 128], strides = [1, 1]} : vector<8x512xf32> to vector<8x128xf32>
    %cst_81 = arith.constant 5.000000e-01 : f32
    %227 = vector.broadcast %cst_81 : f32 to vector<8x128xf32>
    %228 = arith.mulf %227, %226 : vector<8x128xf32>
    %229 = math.tanh %228 : vector<8x128xf32>
    %cst_82 = arith.constant 5.000000e-01 : f32
    %230 = vector.broadcast %cst_82 : f32 to vector<8x128xf32>
    %231 = arith.mulf %230, %229 : vector<8x128xf32>
    %cst_83 = arith.constant 5.000000e-01 : f32
    %232 = vector.broadcast %cst_83 : f32 to vector<8x128xf32>
    %233 = arith.addf %231, %232 : vector<8x128xf32>
    %234 = vector.extract_strided_slice %217 {offsets = [0, 256], sizes = [8, 128], strides = [1, 1]} : vector<8x512xf32> to vector<8x128xf32>
    %235 = math.tanh %234 : vector<8x128xf32>
    %236 = vector.extract_strided_slice %217 {offsets = [0, 384], sizes = [8, 128], strides = [1, 1]} : vector<8x512xf32> to vector<8x128xf32>
    %cst_84 = arith.constant 5.000000e-01 : f32
    %237 = vector.broadcast %cst_84 : f32 to vector<8x128xf32>
    %238 = arith.mulf %237, %236 : vector<8x128xf32>
    %239 = math.tanh %238 : vector<8x128xf32>
    %cst_85 = arith.constant 5.000000e-01 : f32
    %240 = vector.broadcast %cst_85 : f32 to vector<8x128xf32>
    %241 = arith.mulf %240, %239 : vector<8x128xf32>
    %cst_86 = arith.constant 5.000000e-01 : f32
    %242 = vector.broadcast %cst_86 : f32 to vector<8x128xf32>
    %243 = arith.addf %241, %242 : vector<8x128xf32>
    %244 = arith.mulf %233, %206 : vector<8x128xf32>
    %245 = arith.mulf %225, %235 : vector<8x128xf32>
    %246 = arith.addf %244, %245 : vector<8x128xf32>
    %247 = math.tanh %246 : vector<8x128xf32>
    %248 = arith.mulf %243, %247 : vector<8x128xf32>
    %249 = arith.index_cast %212 : i32 to index
    %c0_87 = arith.constant 0 : index
    %250 = vector.load %arg12[%249, %c0_87] : memref<128x128xf32, #tpu.memory_space<vmem>>, vector<8x128xf32>
    tpu.vector_store %arg12[%249, %c0_87], %248 {strides = array<i32>} : memref<128x128xf32, #tpu.memory_space<vmem>>, vector<8x128xf32>,
    %c6_i32 = arith.constant 6 : i32
    %c8_i32_88 = arith.constant 8 : i32
    %251 = arith.muli %c6_i32, %c8_i32_88 : i32
    %252 = tpu.assume_multiple %251, 8 : i32
    %253 = arith.index_cast %252 : i32 to index
    %c0_89 = arith.constant 0 : index
    %254 = vector.load %arg11[%253, %c0_89] : memref<128x512xf32, #tpu.memory_space<vmem>>, vector<8x512xf32>
    %255 = arith.truncf %248 : vector<8x128xf32> to vector<8x128xbf16>
    %cst_90 = arith.constant dense<0.000000e+00> : vector<8x512xf32>
    %256 = tpu.matmul %255, %9, %cst_90 {dimension_numbers = #tpu.dot_dimension_numbers<[1], [0], [0], [1], [0, 0, 1, 1], [], []>} : vector<8x128xbf16>, vector<128x512xbf16>, vector<8x512xf32> -> vector<8x512xf32>
    %257 = arith.addf %254, %256 : vector<8x512xf32>
    %258 = vector.extract_strided_slice %257 {offsets = [0, 0], sizes = [8, 128], strides = [1, 1]} : vector<8x512xf32> to vector<8x128xf32>
    %cst_91 = arith.constant 5.000000e-01 : f32
    %259 = vector.broadcast %cst_91 : f32 to vector<8x128xf32>
    %260 = arith.mulf %259, %258 : vector<8x128xf32>
    %261 = math.tanh %260 : vector<8x128xf32>
    %cst_92 = arith.constant 5.000000e-01 : f32
    %262 = vector.broadcast %cst_92 : f32 to vector<8x128xf32>
    %263 = arith.mulf %262, %261 : vector<8x128xf32>
    %cst_93 = arith.constant 5.000000e-01 : f32
    %264 = vector.broadcast %cst_93 : f32 to vector<8x128xf32>
    %265 = arith.addf %263, %264 : vector<8x128xf32>
    %266 = vector.extract_strided_slice %257 {offsets = [0, 128], sizes = [8, 128], strides = [1, 1]} : vector<8x512xf32> to vector<8x128xf32>
    %cst_94 = arith.constant 5.000000e-01 : f32
    %267 = vector.broadcast %cst_94 : f32 to vector<8x128xf32>
    %268 = arith.mulf %267, %266 : vector<8x128xf32>
    %269 = math.tanh %268 : vector<8x128xf32>
    %cst_95 = arith.constant 5.000000e-01 : f32
    %270 = vector.broadcast %cst_95 : f32 to vector<8x128xf32>
    %271 = arith.mulf %270, %269 : vector<8x128xf32>
    %cst_96 = arith.constant 5.000000e-01 : f32
    %272 = vector.broadcast %cst_96 : f32 to vector<8x128xf32>
    %273 = arith.addf %271, %272 : vector<8x128xf32>
    %274 = vector.extract_strided_slice %257 {offsets = [0, 256], sizes = [8, 128], strides = [1, 1]} : vector<8x512xf32> to vector<8x128xf32>
    %275 = math.tanh %274 : vector<8x128xf32>
    %276 = vector.extract_strided_slice %257 {offsets = [0, 384], sizes = [8, 128], strides = [1, 1]} : vector<8x512xf32> to vector<8x128xf32>
    %cst_97 = arith.constant 5.000000e-01 : f32
    %277 = vector.broadcast %cst_97 : f32 to vector<8x128xf32>
    %278 = arith.mulf %277, %276 : vector<8x128xf32>
    %279 = math.tanh %278 : vector<8x128xf32>
    %cst_98 = arith.constant 5.000000e-01 : f32
    %280 = vector.broadcast %cst_98 : f32 to vector<8x128xf32>
    %281 = arith.mulf %280, %279 : vector<8x128xf32>
    %cst_99 = arith.constant 5.000000e-01 : f32
    %282 = vector.broadcast %cst_99 : f32 to vector<8x128xf32>
    %283 = arith.addf %281, %282 : vector<8x128xf32>
    %284 = arith.mulf %273, %246 : vector<8x128xf32>
    %285 = arith.mulf %265, %275 : vector<8x128xf32>
    %286 = arith.addf %284, %285 : vector<8x128xf32>
    %287 = math.tanh %286 : vector<8x128xf32>
    %288 = arith.mulf %283, %287 : vector<8x128xf32>
    %289 = arith.index_cast %252 : i32 to index
    %c0_100 = arith.constant 0 : index
    %290 = vector.load %arg12[%289, %c0_100] : memref<128x128xf32, #tpu.memory_space<vmem>>, vector<8x128xf32>
    tpu.vector_store %arg12[%289, %c0_100], %288 {strides = array<i32>} : memref<128x128xf32, #tpu.memory_space<vmem>>, vector<8x128xf32>,
    %c7_i32 = arith.constant 7 : i32
    %c8_i32_101 = arith.constant 8 : i32
    %291 = arith.muli %c7_i32, %c8_i32_101 : i32
    %292 = tpu.assume_multiple %291, 8 : i32
    %293 = arith.index_cast %292 : i32 to index
    %c0_102 = arith.constant 0 : index
    %294 = vector.load %arg11[%293, %c0_102] : memref<128x512xf32, #tpu.memory_space<vmem>>, vector<8x512xf32>
    %295 = arith.truncf %288 : vector<8x128xf32> to vector<8x128xbf16>
    %cst_103 = arith.constant dense<0.000000e+00> : vector<8x512xf32>
    %296 = tpu.matmul %295, %9, %cst_103 {dimension_numbers = #tpu.dot_dimension_numbers<[1], [0], [0], [1], [0, 0, 1, 1], [], []>} : vector<8x128xbf16>, vector<128x512xbf16>, vector<8x512xf32> -> vector<8x512xf32>
    %297 = arith.addf %294, %296 : vector<8x512xf32>
    %298 = vector.extract_strided_slice %297 {offsets = [0, 0], sizes = [8, 128], strides = [1, 1]} : vector<8x512xf32> to vector<8x128xf32>
    %cst_104 = arith.constant 5.000000e-01 : f32
    %299 = vector.broadcast %cst_104 : f32 to vector<8x128xf32>
    %300 = arith.mulf %299, %298 : vector<8x128xf32>
    %301 = math.tanh %300 : vector<8x128xf32>
    %cst_105 = arith.constant 5.000000e-01 : f32
    %302 = vector.broadcast %cst_105 : f32 to vector<8x128xf32>
    %303 = arith.mulf %302, %301 : vector<8x128xf32>
    %cst_106 = arith.constant 5.000000e-01 : f32
    %304 = vector.broadcast %cst_106 : f32 to vector<8x128xf32>
    %305 = arith.addf %303, %304 : vector<8x128xf32>
    %306 = vector.extract_strided_slice %297 {offsets = [0, 128], sizes = [8, 128], strides = [1, 1]} : vector<8x512xf32> to vector<8x128xf32>
    %cst_107 = arith.constant 5.000000e-01 : f32
    %307 = vector.broadcast %cst_107 : f32 to vector<8x128xf32>
    %308 = arith.mulf %307, %306 : vector<8x128xf32>
    %309 = math.tanh %308 : vector<8x128xf32>
    %cst_108 = arith.constant 5.000000e-01 : f32
    %310 = vector.broadcast %cst_108 : f32 to vector<8x128xf32>
    %311 = arith.mulf %310, %309 : vector<8x128xf32>
    %cst_109 = arith.constant 5.000000e-01 : f32
    %312 = vector.broadcast %cst_109 : f32 to vector<8x128xf32>
    %313 = arith.addf %311, %312 : vector<8x128xf32>
    %314 = vector.extract_strided_slice %297 {offsets = [0, 256], sizes = [8, 128], strides = [1, 1]} : vector<8x512xf32> to vector<8x128xf32>
    %315 = math.tanh %314 : vector<8x128xf32>
    %316 = vector.extract_strided_slice %297 {offsets = [0, 384], sizes = [8, 128], strides = [1, 1]} : vector<8x512xf32> to vector<8x128xf32>
    %cst_110 = arith.constant 5.000000e-01 : f32
    %317 = vector.broadcast %cst_110 : f32 to vector<8x128xf32>
    %318 = arith.mulf %317, %316 : vector<8x128xf32>
    %319 = math.tanh %318 : vector<8x128xf32>
    %cst_111 = arith.constant 5.000000e-01 : f32
    %320 = vector.broadcast %cst_111 : f32 to vector<8x128xf32>
    %321 = arith.mulf %320, %319 : vector<8x128xf32>
    %cst_112 = arith.constant 5.000000e-01 : f32
    %322 = vector.broadcast %cst_112 : f32 to vector<8x128xf32>
    %323 = arith.addf %321, %322 : vector<8x128xf32>
    %324 = arith.mulf %313, %286 : vector<8x128xf32>
    %325 = arith.mulf %305, %315 : vector<8x128xf32>
    %326 = arith.addf %324, %325 : vector<8x128xf32>
    %327 = math.tanh %326 : vector<8x128xf32>
    %328 = arith.mulf %323, %327 : vector<8x128xf32>
    %329 = arith.index_cast %292 : i32 to index
    %c0_113 = arith.constant 0 : index
    %330 = vector.load %arg12[%329, %c0_113] : memref<128x128xf32, #tpu.memory_space<vmem>>, vector<8x128xf32>
    tpu.vector_store %arg12[%329, %c0_113], %328 {strides = array<i32>} : memref<128x128xf32, #tpu.memory_space<vmem>>, vector<8x128xf32>,
    %c8_i32_114 = arith.constant 8 : i32
    %c8_i32_115 = arith.constant 8 : i32
    %331 = arith.muli %c8_i32_114, %c8_i32_115 : i32
    %332 = tpu.assume_multiple %331, 8 : i32
    %333 = arith.index_cast %332 : i32 to index
    %c0_116 = arith.constant 0 : index
    %334 = vector.load %arg11[%333, %c0_116] : memref<128x512xf32, #tpu.memory_space<vmem>>, vector<8x512xf32>
    %335 = arith.truncf %328 : vector<8x128xf32> to vector<8x128xbf16>
    %cst_117 = arith.constant dense<0.000000e+00> : vector<8x512xf32>
    %336 = tpu.matmul %335, %9, %cst_117 {dimension_numbers = #tpu.dot_dimension_numbers<[1], [0], [0], [1], [0, 0, 1, 1], [], []>} : vector<8x128xbf16>, vector<128x512xbf16>, vector<8x512xf32> -> vector<8x512xf32>
    %337 = arith.addf %334, %336 : vector<8x512xf32>
    %338 = vector.extract_strided_slice %337 {offsets = [0, 0], sizes = [8, 128], strides = [1, 1]} : vector<8x512xf32> to vector<8x128xf32>
    %cst_118 = arith.constant 5.000000e-01 : f32
    %339 = vector.broadcast %cst_118 : f32 to vector<8x128xf32>
    %340 = arith.mulf %339, %338 : vector<8x128xf32>
    %341 = math.tanh %340 : vector<8x128xf32>
    %cst_119 = arith.constant 5.000000e-01 : f32
    %342 = vector.broadcast %cst_119 : f32 to vector<8x128xf32>
    %343 = arith.mulf %342, %341 : vector<8x128xf32>
    %cst_120 = arith.constant 5.000000e-01 : f32
    %344 = vector.broadcast %cst_120 : f32 to vector<8x128xf32>
    %345 = arith.addf %343, %344 : vector<8x128xf32>
    %346 = vector.extract_strided_slice %337 {offsets = [0, 128], sizes = [8, 128], strides = [1, 1]} : vector<8x512xf32> to vector<8x128xf32>
    %cst_121 = arith.constant 5.000000e-01 : f32
    %347 = vector.broadcast %cst_121 : f32 to vector<8x128xf32>
    %348 = arith.mulf %347, %346 : vector<8x128xf32>
    %349 = math.tanh %348 : vector<8x128xf32>
    %cst_122 = arith.constant 5.000000e-01 : f32
    %350 = vector.broadcast %cst_122 : f32 to vector<8x128xf32>
    %351 = arith.mulf %350, %349 : vector<8x128xf32>
    %cst_123 = arith.constant 5.000000e-01 : f32
    %352 = vector.broadcast %cst_123 : f32 to vector<8x128xf32>
    %353 = arith.addf %351, %352 : vector<8x128xf32>
    %354 = vector.extract_strided_slice %337 {offsets = [0, 256], sizes = [8, 128], strides = [1, 1]} : vector<8x512xf32> to vector<8x128xf32>
    %355 = math.tanh %354 : vector<8x128xf32>
    %356 = vector.extract_strided_slice %337 {offsets = [0, 384], sizes = [8, 128], strides = [1, 1]} : vector<8x512xf32> to vector<8x128xf32>
    %cst_124 = arith.constant 5.000000e-01 : f32
    %357 = vector.broadcast %cst_124 : f32 to vector<8x128xf32>
    %358 = arith.mulf %357, %356 : vector<8x128xf32>
    %359 = math.tanh %358 : vector<8x128xf32>
    %cst_125 = arith.constant 5.000000e-01 : f32
    %360 = vector.broadcast %cst_125 : f32 to vector<8x128xf32>
    %361 = arith.mulf %360, %359 : vector<8x128xf32>
    %cst_126 = arith.constant 5.000000e-01 : f32
    %362 = vector.broadcast %cst_126 : f32 to vector<8x128xf32>
    %363 = arith.addf %361, %362 : vector<8x128xf32>
    %364 = arith.mulf %353, %326 : vector<8x128xf32>
    %365 = arith.mulf %345, %355 : vector<8x128xf32>
    %366 = arith.addf %364, %365 : vector<8x128xf32>
    %367 = math.tanh %366 : vector<8x128xf32>
    %368 = arith.mulf %363, %367 : vector<8x128xf32>
    %369 = arith.index_cast %332 : i32 to index
    %c0_127 = arith.constant 0 : index
    %370 = vector.load %arg12[%369, %c0_127] : memref<128x128xf32, #tpu.memory_space<vmem>>, vector<8x128xf32>
    tpu.vector_store %arg12[%369, %c0_127], %368 {strides = array<i32>} : memref<128x128xf32, #tpu.memory_space<vmem>>, vector<8x128xf32>,
    %c9_i32 = arith.constant 9 : i32
    %c8_i32_128 = arith.constant 8 : i32
    %371 = arith.muli %c9_i32, %c8_i32_128 : i32
    %372 = tpu.assume_multiple %371, 8 : i32
    %373 = arith.index_cast %372 : i32 to index
    %c0_129 = arith.constant 0 : index
    %374 = vector.load %arg11[%373, %c0_129] : memref<128x512xf32, #tpu.memory_space<vmem>>, vector<8x512xf32>
    %375 = arith.truncf %368 : vector<8x128xf32> to vector<8x128xbf16>
    %cst_130 = arith.constant dense<0.000000e+00> : vector<8x512xf32>
    %376 = tpu.matmul %375, %9, %cst_130 {dimension_numbers = #tpu.dot_dimension_numbers<[1], [0], [0], [1], [0, 0, 1, 1], [], []>} : vector<8x128xbf16>, vector<128x512xbf16>, vector<8x512xf32> -> vector<8x512xf32>
    %377 = arith.addf %374, %376 : vector<8x512xf32>
    %378 = vector.extract_strided_slice %377 {offsets = [0, 0], sizes = [8, 128], strides = [1, 1]} : vector<8x512xf32> to vector<8x128xf32>
    %cst_131 = arith.constant 5.000000e-01 : f32
    %379 = vector.broadcast %cst_131 : f32 to vector<8x128xf32>
    %380 = arith.mulf %379, %378 : vector<8x128xf32>
    %381 = math.tanh %380 : vector<8x128xf32>
    %cst_132 = arith.constant 5.000000e-01 : f32
    %382 = vector.broadcast %cst_132 : f32 to vector<8x128xf32>
    %383 = arith.mulf %382, %381 : vector<8x128xf32>
    %cst_133 = arith.constant 5.000000e-01 : f32
    %384 = vector.broadcast %cst_133 : f32 to vector<8x128xf32>
    %385 = arith.addf %383, %384 : vector<8x128xf32>
    %386 = vector.extract_strided_slice %377 {offsets = [0, 128], sizes = [8, 128], strides = [1, 1]} : vector<8x512xf32> to vector<8x128xf32>
    %cst_134 = arith.constant 5.000000e-01 : f32
    %387 = vector.broadcast %cst_134 : f32 to vector<8x128xf32>
    %388 = arith.mulf %387, %386 : vector<8x128xf32>
    %389 = math.tanh %388 : vector<8x128xf32>
    %cst_135 = arith.constant 5.000000e-01 : f32
    %390 = vector.broadcast %cst_135 : f32 to vector<8x128xf32>
    %391 = arith.mulf %390, %389 : vector<8x128xf32>
    %cst_136 = arith.constant 5.000000e-01 : f32
    %392 = vector.broadcast %cst_136 : f32 to vector<8x128xf32>
    %393 = arith.addf %391, %392 : vector<8x128xf32>
    %394 = vector.extract_strided_slice %377 {offsets = [0, 256], sizes = [8, 128], strides = [1, 1]} : vector<8x512xf32> to vector<8x128xf32>
    %395 = math.tanh %394 : vector<8x128xf32>
    %396 = vector.extract_strided_slice %377 {offsets = [0, 384], sizes = [8, 128], strides = [1, 1]} : vector<8x512xf32> to vector<8x128xf32>
    %cst_137 = arith.constant 5.000000e-01 : f32
    %397 = vector.broadcast %cst_137 : f32 to vector<8x128xf32>
    %398 = arith.mulf %397, %396 : vector<8x128xf32>
    %399 = math.tanh %398 : vector<8x128xf32>
    %cst_138 = arith.constant 5.000000e-01 : f32
    %400 = vector.broadcast %cst_138 : f32 to vector<8x128xf32>
    %401 = arith.mulf %400, %399 : vector<8x128xf32>
    %cst_139 = arith.constant 5.000000e-01 : f32
    %402 = vector.broadcast %cst_139 : f32 to vector<8x128xf32>
    %403 = arith.addf %401, %402 : vector<8x128xf32>
    %404 = arith.mulf %393, %366 : vector<8x128xf32>
    %405 = arith.mulf %385, %395 : vector<8x128xf32>
    %406 = arith.addf %404, %405 : vector<8x128xf32>
    %407 = math.tanh %406 : vector<8x128xf32>
    %408 = arith.mulf %403, %407 : vector<8x128xf32>
    %409 = arith.index_cast %372 : i32 to index
    %c0_140 = arith.constant 0 : index
    %410 = vector.load %arg12[%409, %c0_140] : memref<128x128xf32, #tpu.memory_space<vmem>>, vector<8x128xf32>
    tpu.vector_store %arg12[%409, %c0_140], %408 {strides = array<i32>} : memref<128x128xf32, #tpu.memory_space<vmem>>, vector<8x128xf32>,
    %c10_i32 = arith.constant 10 : i32
    %c8_i32_141 = arith.constant 8 : i32
    %411 = arith.muli %c10_i32, %c8_i32_141 : i32
    %412 = tpu.assume_multiple %411, 8 : i32
    %413 = arith.index_cast %412 : i32 to index
    %c0_142 = arith.constant 0 : index
    %414 = vector.load %arg11[%413, %c0_142] : memref<128x512xf32, #tpu.memory_space<vmem>>, vector<8x512xf32>
    %415 = arith.truncf %408 : vector<8x128xf32> to vector<8x128xbf16>
    %cst_143 = arith.constant dense<0.000000e+00> : vector<8x512xf32>
    %416 = tpu.matmul %415, %9, %cst_143 {dimension_numbers = #tpu.dot_dimension_numbers<[1], [0], [0], [1], [0, 0, 1, 1], [], []>} : vector<8x128xbf16>, vector<128x512xbf16>, vector<8x512xf32> -> vector<8x512xf32>
    %417 = arith.addf %414, %416 : vector<8x512xf32>
    %418 = vector.extract_strided_slice %417 {offsets = [0, 0], sizes = [8, 128], strides = [1, 1]} : vector<8x512xf32> to vector<8x128xf32>
    %cst_144 = arith.constant 5.000000e-01 : f32
    %419 = vector.broadcast %cst_144 : f32 to vector<8x128xf32>
    %420 = arith.mulf %419, %418 : vector<8x128xf32>
    %421 = math.tanh %420 : vector<8x128xf32>
    %cst_145 = arith.constant 5.000000e-01 : f32
    %422 = vector.broadcast %cst_145 : f32 to vector<8x128xf32>
    %423 = arith.mulf %422, %421 : vector<8x128xf32>
    %cst_146 = arith.constant 5.000000e-01 : f32
    %424 = vector.broadcast %cst_146 : f32 to vector<8x128xf32>
    %425 = arith.addf %423, %424 : vector<8x128xf32>
    %426 = vector.extract_strided_slice %417 {offsets = [0, 128], sizes = [8, 128], strides = [1, 1]} : vector<8x512xf32> to vector<8x128xf32>
    %cst_147 = arith.constant 5.000000e-01 : f32
    %427 = vector.broadcast %cst_147 : f32 to vector<8x128xf32>
    %428 = arith.mulf %427, %426 : vector<8x128xf32>
    %429 = math.tanh %428 : vector<8x128xf32>
    %cst_148 = arith.constant 5.000000e-01 : f32
    %430 = vector.broadcast %cst_148 : f32 to vector<8x128xf32>
    %431 = arith.mulf %430, %429 : vector<8x128xf32>
    %cst_149 = arith.constant 5.000000e-01 : f32
    %432 = vector.broadcast %cst_149 : f32 to vector<8x128xf32>
    %433 = arith.addf %431, %432 : vector<8x128xf32>
    %434 = vector.extract_strided_slice %417 {offsets = [0, 256], sizes = [8, 128], strides = [1, 1]} : vector<8x512xf32> to vector<8x128xf32>
    %435 = math.tanh %434 : vector<8x128xf32>
    %436 = vector.extract_strided_slice %417 {offsets = [0, 384], sizes = [8, 128], strides = [1, 1]} : vector<8x512xf32> to vector<8x128xf32>
    %cst_150 = arith.constant 5.000000e-01 : f32
    %437 = vector.broadcast %cst_150 : f32 to vector<8x128xf32>
    %438 = arith.mulf %437, %436 : vector<8x128xf32>
    %439 = math.tanh %438 : vector<8x128xf32>
    %cst_151 = arith.constant 5.000000e-01 : f32
    %440 = vector.broadcast %cst_151 : f32 to vector<8x128xf32>
    %441 = arith.mulf %440, %439 : vector<8x128xf32>
    %cst_152 = arith.constant 5.000000e-01 : f32
    %442 = vector.broadcast %cst_152 : f32 to vector<8x128xf32>
    %443 = arith.addf %441, %442 : vector<8x128xf32>
    %444 = arith.mulf %433, %406 : vector<8x128xf32>
    %445 = arith.mulf %425, %435 : vector<8x128xf32>
    %446 = arith.addf %444, %445 : vector<8x128xf32>
    %447 = math.tanh %446 : vector<8x128xf32>
    %448 = arith.mulf %443, %447 : vector<8x128xf32>
    %449 = arith.index_cast %412 : i32 to index
    %c0_153 = arith.constant 0 : index
    %450 = vector.load %arg12[%449, %c0_153] : memref<128x128xf32, #tpu.memory_space<vmem>>, vector<8x128xf32>
    tpu.vector_store %arg12[%449, %c0_153], %448 {strides = array<i32>} : memref<128x128xf32, #tpu.memory_space<vmem>>, vector<8x128xf32>,
    %c11_i32 = arith.constant 11 : i32
    %c8_i32_154 = arith.constant 8 : i32
    %451 = arith.muli %c11_i32, %c8_i32_154 : i32
    %452 = tpu.assume_multiple %451, 8 : i32
    %453 = arith.index_cast %452 : i32 to index
    %c0_155 = arith.constant 0 : index
    %454 = vector.load %arg11[%453, %c0_155] : memref<128x512xf32, #tpu.memory_space<vmem>>, vector<8x512xf32>
    %455 = arith.truncf %448 : vector<8x128xf32> to vector<8x128xbf16>
    %cst_156 = arith.constant dense<0.000000e+00> : vector<8x512xf32>
    %456 = tpu.matmul %455, %9, %cst_156 {dimension_numbers = #tpu.dot_dimension_numbers<[1], [0], [0], [1], [0, 0, 1, 1], [], []>} : vector<8x128xbf16>, vector<128x512xbf16>, vector<8x512xf32> -> vector<8x512xf32>
    %457 = arith.addf %454, %456 : vector<8x512xf32>
    %458 = vector.extract_strided_slice %457 {offsets = [0, 0], sizes = [8, 128], strides = [1, 1]} : vector<8x512xf32> to vector<8x128xf32>
    %cst_157 = arith.constant 5.000000e-01 : f32
    %459 = vector.broadcast %cst_157 : f32 to vector<8x128xf32>
    %460 = arith.mulf %459, %458 : vector<8x128xf32>
    %461 = math.tanh %460 : vector<8x128xf32>
    %cst_158 = arith.constant 5.000000e-01 : f32
    %462 = vector.broadcast %cst_158 : f32 to vector<8x128xf32>
    %463 = arith.mulf %462, %461 : vector<8x128xf32>
    %cst_159 = arith.constant 5.000000e-01 : f32
    %464 = vector.broadcast %cst_159 : f32 to vector<8x128xf32>
    %465 = arith.addf %463, %464 : vector<8x128xf32>
    %466 = vector.extract_strided_slice %457 {offsets = [0, 128], sizes = [8, 128], strides = [1, 1]} : vector<8x512xf32> to vector<8x128xf32>
    %cst_160 = arith.constant 5.000000e-01 : f32
    %467 = vector.broadcast %cst_160 : f32 to vector<8x128xf32>
    %468 = arith.mulf %467, %466 : vector<8x128xf32>
    %469 = math.tanh %468 : vector<8x128xf32>
    %cst_161 = arith.constant 5.000000e-01 : f32
    %470 = vector.broadcast %cst_161 : f32 to vector<8x128xf32>
    %471 = arith.mulf %470, %469 : vector<8x128xf32>
    %cst_162 = arith.constant 5.000000e-01 : f32
    %472 = vector.broadcast %cst_162 : f32 to vector<8x128xf32>
    %473 = arith.addf %471, %472 : vector<8x128xf32>
    %474 = vector.extract_strided_slice %457 {offsets = [0, 256], sizes = [8, 128], strides = [1, 1]} : vector<8x512xf32> to vector<8x128xf32>
    %475 = math.tanh %474 : vector<8x128xf32>
    %476 = vector.extract_strided_slice %457 {offsets = [0, 384], sizes = [8, 128], strides = [1, 1]} : vector<8x512xf32> to vector<8x128xf32>
    %cst_163 = arith.constant 5.000000e-01 : f32
    %477 = vector.broadcast %cst_163 : f32 to vector<8x128xf32>
    %478 = arith.mulf %477, %476 : vector<8x128xf32>
    %479 = math.tanh %478 : vector<8x128xf32>
    %cst_164 = arith.constant 5.000000e-01 : f32
    %480 = vector.broadcast %cst_164 : f32 to vector<8x128xf32>
    %481 = arith.mulf %480, %479 : vector<8x128xf32>
    %cst_165 = arith.constant 5.000000e-01 : f32
    %482 = vector.broadcast %cst_165 : f32 to vector<8x128xf32>
    %483 = arith.addf %481, %482 : vector<8x128xf32>
    %484 = arith.mulf %473, %446 : vector<8x128xf32>
    %485 = arith.mulf %465, %475 : vector<8x128xf32>
    %486 = arith.addf %484, %485 : vector<8x128xf32>
    %487 = math.tanh %486 : vector<8x128xf32>
    %488 = arith.mulf %483, %487 : vector<8x128xf32>
    %489 = arith.index_cast %452 : i32 to index
    %c0_166 = arith.constant 0 : index
    %490 = vector.load %arg12[%489, %c0_166] : memref<128x128xf32, #tpu.memory_space<vmem>>, vector<8x128xf32>
    tpu.vector_store %arg12[%489, %c0_166], %488 {strides = array<i32>} : memref<128x128xf32, #tpu.memory_space<vmem>>, vector<8x128xf32>,
    %c12_i32 = arith.constant 12 : i32
    %c8_i32_167 = arith.constant 8 : i32
    %491 = arith.muli %c12_i32, %c8_i32_167 : i32
    %492 = tpu.assume_multiple %491, 8 : i32
    %493 = arith.index_cast %492 : i32 to index
    %c0_168 = arith.constant 0 : index
    %494 = vector.load %arg11[%493, %c0_168] : memref<128x512xf32, #tpu.memory_space<vmem>>, vector<8x512xf32>
    %495 = arith.truncf %488 : vector<8x128xf32> to vector<8x128xbf16>
    %cst_169 = arith.constant dense<0.000000e+00> : vector<8x512xf32>
    %496 = tpu.matmul %495, %9, %cst_169 {dimension_numbers = #tpu.dot_dimension_numbers<[1], [0], [0], [1], [0, 0, 1, 1], [], []>} : vector<8x128xbf16>, vector<128x512xbf16>, vector<8x512xf32> -> vector<8x512xf32>
    %497 = arith.addf %494, %496 : vector<8x512xf32>
    %498 = vector.extract_strided_slice %497 {offsets = [0, 0], sizes = [8, 128], strides = [1, 1]} : vector<8x512xf32> to vector<8x128xf32>
    %cst_170 = arith.constant 5.000000e-01 : f32
    %499 = vector.broadcast %cst_170 : f32 to vector<8x128xf32>
    %500 = arith.mulf %499, %498 : vector<8x128xf32>
    %501 = math.tanh %500 : vector<8x128xf32>
    %cst_171 = arith.constant 5.000000e-01 : f32
    %502 = vector.broadcast %cst_171 : f32 to vector<8x128xf32>
    %503 = arith.mulf %502, %501 : vector<8x128xf32>
    %cst_172 = arith.constant 5.000000e-01 : f32
    %504 = vector.broadcast %cst_172 : f32 to vector<8x128xf32>
    %505 = arith.addf %503, %504 : vector<8x128xf32>
    %506 = vector.extract_strided_slice %497 {offsets = [0, 128], sizes = [8, 128], strides = [1, 1]} : vector<8x512xf32> to vector<8x128xf32>
    %cst_173 = arith.constant 5.000000e-01 : f32
    %507 = vector.broadcast %cst_173 : f32 to vector<8x128xf32>
    %508 = arith.mulf %507, %506 : vector<8x128xf32>
    %509 = math.tanh %508 : vector<8x128xf32>
    %cst_174 = arith.constant 5.000000e-01 : f32
    %510 = vector.broadcast %cst_174 : f32 to vector<8x128xf32>
    %511 = arith.mulf %510, %509 : vector<8x128xf32>
    %cst_175 = arith.constant 5.000000e-01 : f32
    %512 = vector.broadcast %cst_175 : f32 to vector<8x128xf32>
    %513 = arith.addf %511, %512 : vector<8x128xf32>
    %514 = vector.extract_strided_slice %497 {offsets = [0, 256], sizes = [8, 128], strides = [1, 1]} : vector<8x512xf32> to vector<8x128xf32>
    %515 = math.tanh %514 : vector<8x128xf32>
    %516 = vector.extract_strided_slice %497 {offsets = [0, 384], sizes = [8, 128], strides = [1, 1]} : vector<8x512xf32> to vector<8x128xf32>
    %cst_176 = arith.constant 5.000000e-01 : f32
    %517 = vector.broadcast %cst_176 : f32 to vector<8x128xf32>
    %518 = arith.mulf %517, %516 : vector<8x128xf32>
    %519 = math.tanh %518 : vector<8x128xf32>
    %cst_177 = arith.constant 5.000000e-01 : f32
    %520 = vector.broadcast %cst_177 : f32 to vector<8x128xf32>
    %521 = arith.mulf %520, %519 : vector<8x128xf32>
    %cst_178 = arith.constant 5.000000e-01 : f32
    %522 = vector.broadcast %cst_178 : f32 to vector<8x128xf32>
    %523 = arith.addf %521, %522 : vector<8x128xf32>
    %524 = arith.mulf %513, %486 : vector<8x128xf32>
    %525 = arith.mulf %505, %515 : vector<8x128xf32>
    %526 = arith.addf %524, %525 : vector<8x128xf32>
    %527 = math.tanh %526 : vector<8x128xf32>
    %528 = arith.mulf %523, %527 : vector<8x128xf32>
    %529 = arith.index_cast %492 : i32 to index
    %c0_179 = arith.constant 0 : index
    %530 = vector.load %arg12[%529, %c0_179] : memref<128x128xf32, #tpu.memory_space<vmem>>, vector<8x128xf32>
    tpu.vector_store %arg12[%529, %c0_179], %528 {strides = array<i32>} : memref<128x128xf32, #tpu.memory_space<vmem>>, vector<8x128xf32>,
    %c13_i32 = arith.constant 13 : i32
    %c8_i32_180 = arith.constant 8 : i32
    %531 = arith.muli %c13_i32, %c8_i32_180 : i32
    %532 = tpu.assume_multiple %531, 8 : i32
    %533 = arith.index_cast %532 : i32 to index
    %c0_181 = arith.constant 0 : index
    %534 = vector.load %arg11[%533, %c0_181] : memref<128x512xf32, #tpu.memory_space<vmem>>, vector<8x512xf32>
    %535 = arith.truncf %528 : vector<8x128xf32> to vector<8x128xbf16>
    %cst_182 = arith.constant dense<0.000000e+00> : vector<8x512xf32>
    %536 = tpu.matmul %535, %9, %cst_182 {dimension_numbers = #tpu.dot_dimension_numbers<[1], [0], [0], [1], [0, 0, 1, 1], [], []>} : vector<8x128xbf16>, vector<128x512xbf16>, vector<8x512xf32> -> vector<8x512xf32>
    %537 = arith.addf %534, %536 : vector<8x512xf32>
    %538 = vector.extract_strided_slice %537 {offsets = [0, 0], sizes = [8, 128], strides = [1, 1]} : vector<8x512xf32> to vector<8x128xf32>
    %cst_183 = arith.constant 5.000000e-01 : f32
    %539 = vector.broadcast %cst_183 : f32 to vector<8x128xf32>
    %540 = arith.mulf %539, %538 : vector<8x128xf32>
    %541 = math.tanh %540 : vector<8x128xf32>
    %cst_184 = arith.constant 5.000000e-01 : f32
    %542 = vector.broadcast %cst_184 : f32 to vector<8x128xf32>
    %543 = arith.mulf %542, %541 : vector<8x128xf32>
    %cst_185 = arith.constant 5.000000e-01 : f32
    %544 = vector.broadcast %cst_185 : f32 to vector<8x128xf32>
    %545 = arith.addf %543, %544 : vector<8x128xf32>
    %546 = vector.extract_strided_slice %537 {offsets = [0, 128], sizes = [8, 128], strides = [1, 1]} : vector<8x512xf32> to vector<8x128xf32>
    %cst_186 = arith.constant 5.000000e-01 : f32
    %547 = vector.broadcast %cst_186 : f32 to vector<8x128xf32>
    %548 = arith.mulf %547, %546 : vector<8x128xf32>
    %549 = math.tanh %548 : vector<8x128xf32>
    %cst_187 = arith.constant 5.000000e-01 : f32
    %550 = vector.broadcast %cst_187 : f32 to vector<8x128xf32>
    %551 = arith.mulf %550, %549 : vector<8x128xf32>
    %cst_188 = arith.constant 5.000000e-01 : f32
    %552 = vector.broadcast %cst_188 : f32 to vector<8x128xf32>
    %553 = arith.addf %551, %552 : vector<8x128xf32>
    %554 = vector.extract_strided_slice %537 {offsets = [0, 256], sizes = [8, 128], strides = [1, 1]} : vector<8x512xf32> to vector<8x128xf32>
    %555 = math.tanh %554 : vector<8x128xf32>
    %556 = vector.extract_strided_slice %537 {offsets = [0, 384], sizes = [8, 128], strides = [1, 1]} : vector<8x512xf32> to vector<8x128xf32>
    %cst_189 = arith.constant 5.000000e-01 : f32
    %557 = vector.broadcast %cst_189 : f32 to vector<8x128xf32>
    %558 = arith.mulf %557, %556 : vector<8x128xf32>
    %559 = math.tanh %558 : vector<8x128xf32>
    %cst_190 = arith.constant 5.000000e-01 : f32
    %560 = vector.broadcast %cst_190 : f32 to vector<8x128xf32>
    %561 = arith.mulf %560, %559 : vector<8x128xf32>
    %cst_191 = arith.constant 5.000000e-01 : f32
    %562 = vector.broadcast %cst_191 : f32 to vector<8x128xf32>
    %563 = arith.addf %561, %562 : vector<8x128xf32>
    %564 = arith.mulf %553, %526 : vector<8x128xf32>
    %565 = arith.mulf %545, %555 : vector<8x128xf32>
    %566 = arith.addf %564, %565 : vector<8x128xf32>
    %567 = math.tanh %566 : vector<8x128xf32>
    %568 = arith.mulf %563, %567 : vector<8x128xf32>
    %569 = arith.index_cast %532 : i32 to index
    %c0_192 = arith.constant 0 : index
    %570 = vector.load %arg12[%569, %c0_192] : memref<128x128xf32, #tpu.memory_space<vmem>>, vector<8x128xf32>
    tpu.vector_store %arg12[%569, %c0_192], %568 {strides = array<i32>} : memref<128x128xf32, #tpu.memory_space<vmem>>, vector<8x128xf32>,
    %c14_i32 = arith.constant 14 : i32
    %c8_i32_193 = arith.constant 8 : i32
    %571 = arith.muli %c14_i32, %c8_i32_193 : i32
    %572 = tpu.assume_multiple %571, 8 : i32
    %573 = arith.index_cast %572 : i32 to index
    %c0_194 = arith.constant 0 : index
    %574 = vector.load %arg11[%573, %c0_194] : memref<128x512xf32, #tpu.memory_space<vmem>>, vector<8x512xf32>
    %575 = arith.truncf %568 : vector<8x128xf32> to vector<8x128xbf16>
    %cst_195 = arith.constant dense<0.000000e+00> : vector<8x512xf32>
    %576 = tpu.matmul %575, %9, %cst_195 {dimension_numbers = #tpu.dot_dimension_numbers<[1], [0], [0], [1], [0, 0, 1, 1], [], []>} : vector<8x128xbf16>, vector<128x512xbf16>, vector<8x512xf32> -> vector<8x512xf32>
    %577 = arith.addf %574, %576 : vector<8x512xf32>
    %578 = vector.extract_strided_slice %577 {offsets = [0, 0], sizes = [8, 128], strides = [1, 1]} : vector<8x512xf32> to vector<8x128xf32>
    %cst_196 = arith.constant 5.000000e-01 : f32
    %579 = vector.broadcast %cst_196 : f32 to vector<8x128xf32>
    %580 = arith.mulf %579, %578 : vector<8x128xf32>
    %581 = math.tanh %580 : vector<8x128xf32>
    %cst_197 = arith.constant 5.000000e-01 : f32
    %582 = vector.broadcast %cst_197 : f32 to vector<8x128xf32>
    %583 = arith.mulf %582, %581 : vector<8x128xf32>
    %cst_198 = arith.constant 5.000000e-01 : f32
    %584 = vector.broadcast %cst_198 : f32 to vector<8x128xf32>
    %585 = arith.addf %583, %584 : vector<8x128xf32>
    %586 = vector.extract_strided_slice %577 {offsets = [0, 128], sizes = [8, 128], strides = [1, 1]} : vector<8x512xf32> to vector<8x128xf32>
    %cst_199 = arith.constant 5.000000e-01 : f32
    %587 = vector.broadcast %cst_199 : f32 to vector<8x128xf32>
    %588 = arith.mulf %587, %586 : vector<8x128xf32>
    %589 = math.tanh %588 : vector<8x128xf32>
    %cst_200 = arith.constant 5.000000e-01 : f32
    %590 = vector.broadcast %cst_200 : f32 to vector<8x128xf32>
    %591 = arith.mulf %590, %589 : vector<8x128xf32>
    %cst_201 = arith.constant 5.000000e-01 : f32
    %592 = vector.broadcast %cst_201 : f32 to vector<8x128xf32>
    %593 = arith.addf %591, %592 : vector<8x128xf32>
    %594 = vector.extract_strided_slice %577 {offsets = [0, 256], sizes = [8, 128], strides = [1, 1]} : vector<8x512xf32> to vector<8x128xf32>
    %595 = math.tanh %594 : vector<8x128xf32>
    %596 = vector.extract_strided_slice %577 {offsets = [0, 384], sizes = [8, 128], strides = [1, 1]} : vector<8x512xf32> to vector<8x128xf32>
    %cst_202 = arith.constant 5.000000e-01 : f32
    %597 = vector.broadcast %cst_202 : f32 to vector<8x128xf32>
    %598 = arith.mulf %597, %596 : vector<8x128xf32>
    %599 = math.tanh %598 : vector<8x128xf32>
    %cst_203 = arith.constant 5.000000e-01 : f32
    %600 = vector.broadcast %cst_203 : f32 to vector<8x128xf32>
    %601 = arith.mulf %600, %599 : vector<8x128xf32>
    %cst_204 = arith.constant 5.000000e-01 : f32
    %602 = vector.broadcast %cst_204 : f32 to vector<8x128xf32>
    %603 = arith.addf %601, %602 : vector<8x128xf32>
    %604 = arith.mulf %593, %566 : vector<8x128xf32>
    %605 = arith.mulf %585, %595 : vector<8x128xf32>
    %606 = arith.addf %604, %605 : vector<8x128xf32>
    %607 = math.tanh %606 : vector<8x128xf32>
    %608 = arith.mulf %603, %607 : vector<8x128xf32>
    %609 = arith.index_cast %572 : i32 to index
    %c0_205 = arith.constant 0 : index
    %610 = vector.load %arg12[%609, %c0_205] : memref<128x128xf32, #tpu.memory_space<vmem>>, vector<8x128xf32>
    tpu.vector_store %arg12[%609, %c0_205], %608 {strides = array<i32>} : memref<128x128xf32, #tpu.memory_space<vmem>>, vector<8x128xf32>,
    %c15_i32 = arith.constant 15 : i32
    %c8_i32_206 = arith.constant 8 : i32
    %611 = arith.muli %c15_i32, %c8_i32_206 : i32
    %612 = tpu.assume_multiple %611, 8 : i32
    %613 = arith.index_cast %612 : i32 to index
    %c0_207 = arith.constant 0 : index
    %614 = vector.load %arg11[%613, %c0_207] : memref<128x512xf32, #tpu.memory_space<vmem>>, vector<8x512xf32>
    %615 = arith.truncf %608 : vector<8x128xf32> to vector<8x128xbf16>
    %cst_208 = arith.constant dense<0.000000e+00> : vector<8x512xf32>
    %616 = tpu.matmul %615, %9, %cst_208 {dimension_numbers = #tpu.dot_dimension_numbers<[1], [0], [0], [1], [0, 0, 1, 1], [], []>} : vector<8x128xbf16>, vector<128x512xbf16>, vector<8x512xf32> -> vector<8x512xf32>
    %617 = arith.addf %614, %616 : vector<8x512xf32>
    %618 = vector.extract_strided_slice %617 {offsets = [0, 0], sizes = [8, 128], strides = [1, 1]} : vector<8x512xf32> to vector<8x128xf32>
    %cst_209 = arith.constant 5.000000e-01 : f32
    %619 = vector.broadcast %cst_209 : f32 to vector<8x128xf32>
    %620 = arith.mulf %619, %618 : vector<8x128xf32>
    %621 = math.tanh %620 : vector<8x128xf32>
    %cst_210 = arith.constant 5.000000e-01 : f32
    %622 = vector.broadcast %cst_210 : f32 to vector<8x128xf32>
    %623 = arith.mulf %622, %621 : vector<8x128xf32>
    %cst_211 = arith.constant 5.000000e-01 : f32
    %624 = vector.broadcast %cst_211 : f32 to vector<8x128xf32>
    %625 = arith.addf %623, %624 : vector<8x128xf32>
    %626 = vector.extract_strided_slice %617 {offsets = [0, 128], sizes = [8, 128], strides = [1, 1]} : vector<8x512xf32> to vector<8x128xf32>
    %cst_212 = arith.constant 5.000000e-01 : f32
    %627 = vector.broadcast %cst_212 : f32 to vector<8x128xf32>
    %628 = arith.mulf %627, %626 : vector<8x128xf32>
    %629 = math.tanh %628 : vector<8x128xf32>
    %cst_213 = arith.constant 5.000000e-01 : f32
    %630 = vector.broadcast %cst_213 : f32 to vector<8x128xf32>
    %631 = arith.mulf %630, %629 : vector<8x128xf32>
    %cst_214 = arith.constant 5.000000e-01 : f32
    %632 = vector.broadcast %cst_214 : f32 to vector<8x128xf32>
    %633 = arith.addf %631, %632 : vector<8x128xf32>
    %634 = vector.extract_strided_slice %617 {offsets = [0, 256], sizes = [8, 128], strides = [1, 1]} : vector<8x512xf32> to vector<8x128xf32>
    %635 = math.tanh %634 : vector<8x128xf32>
    %636 = vector.extract_strided_slice %617 {offsets = [0, 384], sizes = [8, 128], strides = [1, 1]} : vector<8x512xf32> to vector<8x128xf32>
    %cst_215 = arith.constant 5.000000e-01 : f32
    %637 = vector.broadcast %cst_215 : f32 to vector<8x128xf32>
    %638 = arith.mulf %637, %636 : vector<8x128xf32>
    %639 = math.tanh %638 : vector<8x128xf32>
    %cst_216 = arith.constant 5.000000e-01 : f32
    %640 = vector.broadcast %cst_216 : f32 to vector<8x128xf32>
    %641 = arith.mulf %640, %639 : vector<8x128xf32>
    %cst_217 = arith.constant 5.000000e-01 : f32
    %642 = vector.broadcast %cst_217 : f32 to vector<8x128xf32>
    %643 = arith.addf %641, %642 : vector<8x128xf32>
    %644 = arith.mulf %633, %606 : vector<8x128xf32>
    %645 = arith.mulf %625, %635 : vector<8x128xf32>
    %646 = arith.addf %644, %645 : vector<8x128xf32>
    %647 = math.tanh %646 : vector<8x128xf32>
    %648 = arith.mulf %643, %647 : vector<8x128xf32>
    %649 = arith.index_cast %612 : i32 to index
    %c0_218 = arith.constant 0 : index
    %650 = vector.load %arg12[%649, %c0_218] : memref<128x128xf32, #tpu.memory_space<vmem>>, vector<8x128xf32>
    tpu.vector_store %arg12[%649, %c0_218], %648 {strides = array<i32>} : memref<128x128xf32, #tpu.memory_space<vmem>>, vector<8x128xf32>,
    %c16_i32 = arith.constant 16 : i32
    %c0_219 = arith.constant 0 : index
    %c0_220 = arith.constant 0 : index
    %651 = vector.load %arg12[%c0_219, %c0_220] : memref<128x128xf32, #tpu.memory_space<vmem>>, vector<128x128xf32>
    %652 = arith.truncf %651 : vector<128x128xf32> to vector<128x128xbf16>
    %c0_221 = arith.constant 0 : index
    %c0_222 = arith.constant 0 : index
    %653 = vector.load %arg5[%c0_221, %c0_222] : memref<128x512xbf16, #tpu.memory_space<vmem>>, vector<128x512xbf16>
    %cst_223 = arith.constant dense<0.000000e+00> : vector<128x512xf32>
    %654 = tpu.matmul %652, %653, %cst_223 {dimension_numbers = #tpu.dot_dimension_numbers<[1], [0], [0], [1], [0, 0, 1, 1], [], []>} : vector<128x128xbf16>, vector<128x512xbf16>, vector<128x512xf32> -> vector<128x512xf32>
    %c0_224 = arith.constant 0 : index
    %c0_225 = arith.constant 0 : index
    %655 = vector.load %arg7[%c0_224, %c0_225] : memref<1x512xf32, #tpu.memory_space<vmem>>, vector<1x512xf32>
    %656 = vector.broadcast %655 : vector<1x512xf32> to vector<128x512xf32>
    %657 = arith.addf %654, %656 : vector<128x512xf32>
    %c0_226 = arith.constant 0 : index
    %c0_227 = arith.constant 0 : index
    %658 = vector.load %arg11[%c0_226, %c0_227] : memref<128x512xf32, #tpu.memory_space<vmem>>, vector<128x512xf32>
    tpu.vector_store %arg11[%c0_226, %c0_227], %657 {strides = array<i32>} : memref<128x512xf32, #tpu.memory_space<vmem>>, vector<128x512xf32>,
    %c0_228 = arith.constant 0 : index
    %c0_229 = arith.constant 0 : index
    %659 = vector.load %arg6[%c0_228, %c0_229] : memref<128x512xbf16, #tpu.memory_space<vmem>>, vector<128x512xbf16>
    %cst_230 = arith.constant 0.000000e+00 : f32
    %660 = vector.broadcast %cst_230 : f32 to vector<8x128xf32>
    %c0_i32_231 = arith.constant 0 : i32
    %c8_i32_232 = arith.constant 8 : i32
    %661 = arith.muli %c0_i32_231, %c8_i32_232 : i32
    %662 = tpu.assume_multiple %661, 8 : i32
    %663 = arith.index_cast %662 : i32 to index
    %c0_233 = arith.constant 0 : index
    %664 = vector.load %arg11[%663, %c0_233] : memref<128x512xf32, #tpu.memory_space<vmem>>, vector<8x512xf32>
    %665 = arith.truncf %660 : vector<8x128xf32> to vector<8x128xbf16>
    %cst_234 = arith.constant dense<0.000000e+00> : vector<8x512xf32>
    %666 = tpu.matmul %665, %659, %cst_234 {dimension_numbers = #tpu.dot_dimension_numbers<[1], [0], [0], [1], [0, 0, 1, 1], [], []>} : vector<8x128xbf16>, vector<128x512xbf16>, vector<8x512xf32> -> vector<8x512xf32>
    %667 = arith.addf %664, %666 : vector<8x512xf32>
    %668 = vector.extract_strided_slice %667 {offsets = [0, 0], sizes = [8, 128], strides = [1, 1]} : vector<8x512xf32> to vector<8x128xf32>
    %cst_235 = arith.constant 5.000000e-01 : f32
    %669 = vector.broadcast %cst_235 : f32 to vector<8x128xf32>
    %670 = arith.mulf %669, %668 : vector<8x128xf32>
    %671 = math.tanh %670 : vector<8x128xf32>
    %cst_236 = arith.constant 5.000000e-01 : f32
    %672 = vector.broadcast %cst_236 : f32 to vector<8x128xf32>
    %673 = arith.mulf %672, %671 : vector<8x128xf32>
    %cst_237 = arith.constant 5.000000e-01 : f32
    %674 = vector.broadcast %cst_237 : f32 to vector<8x128xf32>
    %675 = arith.addf %673, %674 : vector<8x128xf32>
    %676 = vector.extract_strided_slice %667 {offsets = [0, 128], sizes = [8, 128], strides = [1, 1]} : vector<8x512xf32> to vector<8x128xf32>
    %cst_238 = arith.constant 5.000000e-01 : f32
    %677 = vector.broadcast %cst_238 : f32 to vector<8x128xf32>
    %678 = arith.mulf %677, %676 : vector<8x128xf32>
    %679 = math.tanh %678 : vector<8x128xf32>
    %cst_239 = arith.constant 5.000000e-01 : f32
    %680 = vector.broadcast %cst_239 : f32 to vector<8x128xf32>
    %681 = arith.mulf %680, %679 : vector<8x128xf32>
    %cst_240 = arith.constant 5.000000e-01 : f32
    %682 = vector.broadcast %cst_240 : f32 to vector<8x128xf32>
    %683 = arith.addf %681, %682 : vector<8x128xf32>
    %684 = vector.extract_strided_slice %667 {offsets = [0, 256], sizes = [8, 128], strides = [1, 1]} : vector<8x512xf32> to vector<8x128xf32>
    %685 = math.tanh %684 : vector<8x128xf32>
    %686 = vector.extract_strided_slice %667 {offsets = [0, 384], sizes = [8, 128], strides = [1, 1]} : vector<8x512xf32> to vector<8x128xf32>
    %cst_241 = arith.constant 5.000000e-01 : f32
    %687 = vector.broadcast %cst_241 : f32 to vector<8x128xf32>
    %688 = arith.mulf %687, %686 : vector<8x128xf32>
    %689 = math.tanh %688 : vector<8x128xf32>
    %cst_242 = arith.constant 5.000000e-01 : f32
    %690 = vector.broadcast %cst_242 : f32 to vector<8x128xf32>
    %691 = arith.mulf %690, %689 : vector<8x128xf32>
    %cst_243 = arith.constant 5.000000e-01 : f32
    %692 = vector.broadcast %cst_243 : f32 to vector<8x128xf32>
    %693 = arith.addf %691, %692 : vector<8x128xf32>
    %694 = arith.mulf %683, %660 : vector<8x128xf32>
    %695 = arith.mulf %675, %685 : vector<8x128xf32>
    %696 = arith.addf %694, %695 : vector<8x128xf32>
    %697 = math.tanh %696 : vector<8x128xf32>
    %698 = arith.mulf %693, %697 : vector<8x128xf32>
    %c1_i32_244 = arith.constant 1 : i32
    %c8_i32_245 = arith.constant 8 : i32
    %699 = arith.muli %c1_i32_244, %c8_i32_245 : i32
    %700 = tpu.assume_multiple %699, 8 : i32
    %701 = arith.index_cast %700 : i32 to index
    %c0_246 = arith.constant 0 : index
    %702 = vector.load %arg11[%701, %c0_246] : memref<128x512xf32, #tpu.memory_space<vmem>>, vector<8x512xf32>
    %703 = arith.truncf %698 : vector<8x128xf32> to vector<8x128xbf16>
    %cst_247 = arith.constant dense<0.000000e+00> : vector<8x512xf32>
    %704 = tpu.matmul %703, %659, %cst_247 {dimension_numbers = #tpu.dot_dimension_numbers<[1], [0], [0], [1], [0, 0, 1, 1], [], []>} : vector<8x128xbf16>, vector<128x512xbf16>, vector<8x512xf32> -> vector<8x512xf32>
    %705 = arith.addf %702, %704 : vector<8x512xf32>
    %706 = vector.extract_strided_slice %705 {offsets = [0, 0], sizes = [8, 128], strides = [1, 1]} : vector<8x512xf32> to vector<8x128xf32>
    %cst_248 = arith.constant 5.000000e-01 : f32
    %707 = vector.broadcast %cst_248 : f32 to vector<8x128xf32>
    %708 = arith.mulf %707, %706 : vector<8x128xf32>
    %709 = math.tanh %708 : vector<8x128xf32>
    %cst_249 = arith.constant 5.000000e-01 : f32
    %710 = vector.broadcast %cst_249 : f32 to vector<8x128xf32>
    %711 = arith.mulf %710, %709 : vector<8x128xf32>
    %cst_250 = arith.constant 5.000000e-01 : f32
    %712 = vector.broadcast %cst_250 : f32 to vector<8x128xf32>
    %713 = arith.addf %711, %712 : vector<8x128xf32>
    %714 = vector.extract_strided_slice %705 {offsets = [0, 128], sizes = [8, 128], strides = [1, 1]} : vector<8x512xf32> to vector<8x128xf32>
    %cst_251 = arith.constant 5.000000e-01 : f32
    %715 = vector.broadcast %cst_251 : f32 to vector<8x128xf32>
    %716 = arith.mulf %715, %714 : vector<8x128xf32>
    %717 = math.tanh %716 : vector<8x128xf32>
    %cst_252 = arith.constant 5.000000e-01 : f32
    %718 = vector.broadcast %cst_252 : f32 to vector<8x128xf32>
    %719 = arith.mulf %718, %717 : vector<8x128xf32>
    %cst_253 = arith.constant 5.000000e-01 : f32
    %720 = vector.broadcast %cst_253 : f32 to vector<8x128xf32>
    %721 = arith.addf %719, %720 : vector<8x128xf32>
    %722 = vector.extract_strided_slice %705 {offsets = [0, 256], sizes = [8, 128], strides = [1, 1]} : vector<8x512xf32> to vector<8x128xf32>
    %723 = math.tanh %722 : vector<8x128xf32>
    %724 = vector.extract_strided_slice %705 {offsets = [0, 384], sizes = [8, 128], strides = [1, 1]} : vector<8x512xf32> to vector<8x128xf32>
    %cst_254 = arith.constant 5.000000e-01 : f32
    %725 = vector.broadcast %cst_254 : f32 to vector<8x128xf32>
    %726 = arith.mulf %725, %724 : vector<8x128xf32>
    %727 = math.tanh %726 : vector<8x128xf32>
    %cst_255 = arith.constant 5.000000e-01 : f32
    %728 = vector.broadcast %cst_255 : f32 to vector<8x128xf32>
    %729 = arith.mulf %728, %727 : vector<8x128xf32>
    %cst_256 = arith.constant 5.000000e-01 : f32
    %730 = vector.broadcast %cst_256 : f32 to vector<8x128xf32>
    %731 = arith.addf %729, %730 : vector<8x128xf32>
    %732 = arith.mulf %721, %696 : vector<8x128xf32>
    %733 = arith.mulf %713, %723 : vector<8x128xf32>
    %734 = arith.addf %732, %733 : vector<8x128xf32>
    %735 = math.tanh %734 : vector<8x128xf32>
    %736 = arith.mulf %731, %735 : vector<8x128xf32>
    %c2_i32_257 = arith.constant 2 : i32
    %c8_i32_258 = arith.constant 8 : i32
    %737 = arith.muli %c2_i32_257, %c8_i32_258 : i32
    %738 = tpu.assume_multiple %737, 8 : i32
    %739 = arith.index_cast %738 : i32 to index
    %c0_259 = arith.constant 0 : index
    %740 = vector.load %arg11[%739, %c0_259] : memref<128x512xf32, #tpu.memory_space<vmem>>, vector<8x512xf32>
    %741 = arith.truncf %736 : vector<8x128xf32> to vector<8x128xbf16>
    %cst_260 = arith.constant dense<0.000000e+00> : vector<8x512xf32>
    %742 = tpu.matmul %741, %659, %cst_260 {dimension_numbers = #tpu.dot_dimension_numbers<[1], [0], [0], [1], [0, 0, 1, 1], [], []>} : vector<8x128xbf16>, vector<128x512xbf16>, vector<8x512xf32> -> vector<8x512xf32>
    %743 = arith.addf %740, %742 : vector<8x512xf32>
    %744 = vector.extract_strided_slice %743 {offsets = [0, 0], sizes = [8, 128], strides = [1, 1]} : vector<8x512xf32> to vector<8x128xf32>
    %cst_261 = arith.constant 5.000000e-01 : f32
    %745 = vector.broadcast %cst_261 : f32 to vector<8x128xf32>
    %746 = arith.mulf %745, %744 : vector<8x128xf32>
    %747 = math.tanh %746 : vector<8x128xf32>
    %cst_262 = arith.constant 5.000000e-01 : f32
    %748 = vector.broadcast %cst_262 : f32 to vector<8x128xf32>
    %749 = arith.mulf %748, %747 : vector<8x128xf32>
    %cst_263 = arith.constant 5.000000e-01 : f32
    %750 = vector.broadcast %cst_263 : f32 to vector<8x128xf32>
    %751 = arith.addf %749, %750 : vector<8x128xf32>
    %752 = vector.extract_strided_slice %743 {offsets = [0, 128], sizes = [8, 128], strides = [1, 1]} : vector<8x512xf32> to vector<8x128xf32>
    %cst_264 = arith.constant 5.000000e-01 : f32
    %753 = vector.broadcast %cst_264 : f32 to vector<8x128xf32>
    %754 = arith.mulf %753, %752 : vector<8x128xf32>
    %755 = math.tanh %754 : vector<8x128xf32>
    %cst_265 = arith.constant 5.000000e-01 : f32
    %756 = vector.broadcast %cst_265 : f32 to vector<8x128xf32>
    %757 = arith.mulf %756, %755 : vector<8x128xf32>
    %cst_266 = arith.constant 5.000000e-01 : f32
    %758 = vector.broadcast %cst_266 : f32 to vector<8x128xf32>
    %759 = arith.addf %757, %758 : vector<8x128xf32>
    %760 = vector.extract_strided_slice %743 {offsets = [0, 256], sizes = [8, 128], strides = [1, 1]} : vector<8x512xf32> to vector<8x128xf32>
    %761 = math.tanh %760 : vector<8x128xf32>
    %762 = vector.extract_strided_slice %743 {offsets = [0, 384], sizes = [8, 128], strides = [1, 1]} : vector<8x512xf32> to vector<8x128xf32>
    %cst_267 = arith.constant 5.000000e-01 : f32
    %763 = vector.broadcast %cst_267 : f32 to vector<8x128xf32>
    %764 = arith.mulf %763, %762 : vector<8x128xf32>
    %765 = math.tanh %764 : vector<8x128xf32>
    %cst_268 = arith.constant 5.000000e-01 : f32
    %766 = vector.broadcast %cst_268 : f32 to vector<8x128xf32>
    %767 = arith.mulf %766, %765 : vector<8x128xf32>
    %cst_269 = arith.constant 5.000000e-01 : f32
    %768 = vector.broadcast %cst_269 : f32 to vector<8x128xf32>
    %769 = arith.addf %767, %768 : vector<8x128xf32>
    %770 = arith.mulf %759, %734 : vector<8x128xf32>
    %771 = arith.mulf %751, %761 : vector<8x128xf32>
    %772 = arith.addf %770, %771 : vector<8x128xf32>
    %773 = math.tanh %772 : vector<8x128xf32>
    %774 = arith.mulf %769, %773 : vector<8x128xf32>
    %c3_i32_270 = arith.constant 3 : i32
    %c8_i32_271 = arith.constant 8 : i32
    %775 = arith.muli %c3_i32_270, %c8_i32_271 : i32
    %776 = tpu.assume_multiple %775, 8 : i32
    %777 = arith.index_cast %776 : i32 to index
    %c0_272 = arith.constant 0 : index
    %778 = vector.load %arg11[%777, %c0_272] : memref<128x512xf32, #tpu.memory_space<vmem>>, vector<8x512xf32>
    %779 = arith.truncf %774 : vector<8x128xf32> to vector<8x128xbf16>
    %cst_273 = arith.constant dense<0.000000e+00> : vector<8x512xf32>
    %780 = tpu.matmul %779, %659, %cst_273 {dimension_numbers = #tpu.dot_dimension_numbers<[1], [0], [0], [1], [0, 0, 1, 1], [], []>} : vector<8x128xbf16>, vector<128x512xbf16>, vector<8x512xf32> -> vector<8x512xf32>
    %781 = arith.addf %778, %780 : vector<8x512xf32>
    %782 = vector.extract_strided_slice %781 {offsets = [0, 0], sizes = [8, 128], strides = [1, 1]} : vector<8x512xf32> to vector<8x128xf32>
    %cst_274 = arith.constant 5.000000e-01 : f32
    %783 = vector.broadcast %cst_274 : f32 to vector<8x128xf32>
    %784 = arith.mulf %783, %782 : vector<8x128xf32>
    %785 = math.tanh %784 : vector<8x128xf32>
    %cst_275 = arith.constant 5.000000e-01 : f32
    %786 = vector.broadcast %cst_275 : f32 to vector<8x128xf32>
    %787 = arith.mulf %786, %785 : vector<8x128xf32>
    %cst_276 = arith.constant 5.000000e-01 : f32
    %788 = vector.broadcast %cst_276 : f32 to vector<8x128xf32>
    %789 = arith.addf %787, %788 : vector<8x128xf32>
    %790 = vector.extract_strided_slice %781 {offsets = [0, 128], sizes = [8, 128], strides = [1, 1]} : vector<8x512xf32> to vector<8x128xf32>
    %cst_277 = arith.constant 5.000000e-01 : f32
    %791 = vector.broadcast %cst_277 : f32 to vector<8x128xf32>
    %792 = arith.mulf %791, %790 : vector<8x128xf32>
    %793 = math.tanh %792 : vector<8x128xf32>
    %cst_278 = arith.constant 5.000000e-01 : f32
    %794 = vector.broadcast %cst_278 : f32 to vector<8x128xf32>
    %795 = arith.mulf %794, %793 : vector<8x128xf32>
    %cst_279 = arith.constant 5.000000e-01 : f32
    %796 = vector.broadcast %cst_279 : f32 to vector<8x128xf32>
    %797 = arith.addf %795, %796 : vector<8x128xf32>
    %798 = vector.extract_strided_slice %781 {offsets = [0, 256], sizes = [8, 128], strides = [1, 1]} : vector<8x512xf32> to vector<8x128xf32>
    %799 = math.tanh %798 : vector<8x128xf32>
    %800 = vector.extract_strided_slice %781 {offsets = [0, 384], sizes = [8, 128], strides = [1, 1]} : vector<8x512xf32> to vector<8x128xf32>
    %cst_280 = arith.constant 5.000000e-01 : f32
    %801 = vector.broadcast %cst_280 : f32 to vector<8x128xf32>
    %802 = arith.mulf %801, %800 : vector<8x128xf32>
    %803 = math.tanh %802 : vector<8x128xf32>
    %cst_281 = arith.constant 5.000000e-01 : f32
    %804 = vector.broadcast %cst_281 : f32 to vector<8x128xf32>
    %805 = arith.mulf %804, %803 : vector<8x128xf32>
    %cst_282 = arith.constant 5.000000e-01 : f32
    %806 = vector.broadcast %cst_282 : f32 to vector<8x128xf32>
    %807 = arith.addf %805, %806 : vector<8x128xf32>
    %808 = arith.mulf %797, %772 : vector<8x128xf32>
    %809 = arith.mulf %789, %799 : vector<8x128xf32>
    %810 = arith.addf %808, %809 : vector<8x128xf32>
    %811 = math.tanh %810 : vector<8x128xf32>
    %812 = arith.mulf %807, %811 : vector<8x128xf32>
    %c4_i32_283 = arith.constant 4 : i32
    %c8_i32_284 = arith.constant 8 : i32
    %813 = arith.muli %c4_i32_283, %c8_i32_284 : i32
    %814 = tpu.assume_multiple %813, 8 : i32
    %815 = arith.index_cast %814 : i32 to index
    %c0_285 = arith.constant 0 : index
    %816 = vector.load %arg11[%815, %c0_285] : memref<128x512xf32, #tpu.memory_space<vmem>>, vector<8x512xf32>
    %817 = arith.truncf %812 : vector<8x128xf32> to vector<8x128xbf16>
    %cst_286 = arith.constant dense<0.000000e+00> : vector<8x512xf32>
    %818 = tpu.matmul %817, %659, %cst_286 {dimension_numbers = #tpu.dot_dimension_numbers<[1], [0], [0], [1], [0, 0, 1, 1], [], []>} : vector<8x128xbf16>, vector<128x512xbf16>, vector<8x512xf32> -> vector<8x512xf32>
    %819 = arith.addf %816, %818 : vector<8x512xf32>
    %820 = vector.extract_strided_slice %819 {offsets = [0, 0], sizes = [8, 128], strides = [1, 1]} : vector<8x512xf32> to vector<8x128xf32>
    %cst_287 = arith.constant 5.000000e-01 : f32
    %821 = vector.broadcast %cst_287 : f32 to vector<8x128xf32>
    %822 = arith.mulf %821, %820 : vector<8x128xf32>
    %823 = math.tanh %822 : vector<8x128xf32>
    %cst_288 = arith.constant 5.000000e-01 : f32
    %824 = vector.broadcast %cst_288 : f32 to vector<8x128xf32>
    %825 = arith.mulf %824, %823 : vector<8x128xf32>
    %cst_289 = arith.constant 5.000000e-01 : f32
    %826 = vector.broadcast %cst_289 : f32 to vector<8x128xf32>
    %827 = arith.addf %825, %826 : vector<8x128xf32>
    %828 = vector.extract_strided_slice %819 {offsets = [0, 128], sizes = [8, 128], strides = [1, 1]} : vector<8x512xf32> to vector<8x128xf32>
    %cst_290 = arith.constant 5.000000e-01 : f32
    %829 = vector.broadcast %cst_290 : f32 to vector<8x128xf32>
    %830 = arith.mulf %829, %828 : vector<8x128xf32>
    %831 = math.tanh %830 : vector<8x128xf32>
    %cst_291 = arith.constant 5.000000e-01 : f32
    %832 = vector.broadcast %cst_291 : f32 to vector<8x128xf32>
    %833 = arith.mulf %832, %831 : vector<8x128xf32>
    %cst_292 = arith.constant 5.000000e-01 : f32
    %834 = vector.broadcast %cst_292 : f32 to vector<8x128xf32>
    %835 = arith.addf %833, %834 : vector<8x128xf32>
    %836 = vector.extract_strided_slice %819 {offsets = [0, 256], sizes = [8, 128], strides = [1, 1]} : vector<8x512xf32> to vector<8x128xf32>
    %837 = math.tanh %836 : vector<8x128xf32>
    %838 = vector.extract_strided_slice %819 {offsets = [0, 384], sizes = [8, 128], strides = [1, 1]} : vector<8x512xf32> to vector<8x128xf32>
    %cst_293 = arith.constant 5.000000e-01 : f32
    %839 = vector.broadcast %cst_293 : f32 to vector<8x128xf32>
    %840 = arith.mulf %839, %838 : vector<8x128xf32>
    %841 = math.tanh %840 : vector<8x128xf32>
    %cst_294 = arith.constant 5.000000e-01 : f32
    %842 = vector.broadcast %cst_294 : f32 to vector<8x128xf32>
    %843 = arith.mulf %842, %841 : vector<8x128xf32>
    %cst_295 = arith.constant 5.000000e-01 : f32
    %844 = vector.broadcast %cst_295 : f32 to vector<8x128xf32>
    %845 = arith.addf %843, %844 : vector<8x128xf32>
    %846 = arith.mulf %835, %810 : vector<8x128xf32>
    %847 = arith.mulf %827, %837 : vector<8x128xf32>
    %848 = arith.addf %846, %847 : vector<8x128xf32>
    %849 = math.tanh %848 : vector<8x128xf32>
    %850 = arith.mulf %845, %849 : vector<8x128xf32>
    %c5_i32_296 = arith.constant 5 : i32
    %c8_i32_297 = arith.constant 8 : i32
    %851 = arith.muli %c5_i32_296, %c8_i32_297 : i32
    %852 = tpu.assume_multiple %851, 8 : i32
    %853 = arith.index_cast %852 : i32 to index
    %c0_298 = arith.constant 0 : index
    %854 = vector.load %arg11[%853, %c0_298] : memref<128x512xf32, #tpu.memory_space<vmem>>, vector<8x512xf32>
    %855 = arith.truncf %850 : vector<8x128xf32> to vector<8x128xbf16>
    %cst_299 = arith.constant dense<0.000000e+00> : vector<8x512xf32>
    %856 = tpu.matmul %855, %659, %cst_299 {dimension_numbers = #tpu.dot_dimension_numbers<[1], [0], [0], [1], [0, 0, 1, 1], [], []>} : vector<8x128xbf16>, vector<128x512xbf16>, vector<8x512xf32> -> vector<8x512xf32>
    %857 = arith.addf %854, %856 : vector<8x512xf32>
    %858 = vector.extract_strided_slice %857 {offsets = [0, 0], sizes = [8, 128], strides = [1, 1]} : vector<8x512xf32> to vector<8x128xf32>
    %cst_300 = arith.constant 5.000000e-01 : f32
    %859 = vector.broadcast %cst_300 : f32 to vector<8x128xf32>
    %860 = arith.mulf %859, %858 : vector<8x128xf32>
    %861 = math.tanh %860 : vector<8x128xf32>
    %cst_301 = arith.constant 5.000000e-01 : f32
    %862 = vector.broadcast %cst_301 : f32 to vector<8x128xf32>
    %863 = arith.mulf %862, %861 : vector<8x128xf32>
    %cst_302 = arith.constant 5.000000e-01 : f32
    %864 = vector.broadcast %cst_302 : f32 to vector<8x128xf32>
    %865 = arith.addf %863, %864 : vector<8x128xf32>
    %866 = vector.extract_strided_slice %857 {offsets = [0, 128], sizes = [8, 128], strides = [1, 1]} : vector<8x512xf32> to vector<8x128xf32>
    %cst_303 = arith.constant 5.000000e-01 : f32
    %867 = vector.broadcast %cst_303 : f32 to vector<8x128xf32>
    %868 = arith.mulf %867, %866 : vector<8x128xf32>
    %869 = math.tanh %868 : vector<8x128xf32>
    %cst_304 = arith.constant 5.000000e-01 : f32
    %870 = vector.broadcast %cst_304 : f32 to vector<8x128xf32>
    %871 = arith.mulf %870, %869 : vector<8x128xf32>
    %cst_305 = arith.constant 5.000000e-01 : f32
    %872 = vector.broadcast %cst_305 : f32 to vector<8x128xf32>
    %873 = arith.addf %871, %872 : vector<8x128xf32>
    %874 = vector.extract_strided_slice %857 {offsets = [0, 256], sizes = [8, 128], strides = [1, 1]} : vector<8x512xf32> to vector<8x128xf32>
    %875 = math.tanh %874 : vector<8x128xf32>
    %876 = vector.extract_strided_slice %857 {offsets = [0, 384], sizes = [8, 128], strides = [1, 1]} : vector<8x512xf32> to vector<8x128xf32>
    %cst_306 = arith.constant 5.000000e-01 : f32
    %877 = vector.broadcast %cst_306 : f32 to vector<8x128xf32>
    %878 = arith.mulf %877, %876 : vector<8x128xf32>
    %879 = math.tanh %878 : vector<8x128xf32>
    %cst_307 = arith.constant 5.000000e-01 : f32
    %880 = vector.broadcast %cst_307 : f32 to vector<8x128xf32>
    %881 = arith.mulf %880, %879 : vector<8x128xf32>
    %cst_308 = arith.constant 5.000000e-01 : f32
    %882 = vector.broadcast %cst_308 : f32 to vector<8x128xf32>
    %883 = arith.addf %881, %882 : vector<8x128xf32>
    %884 = arith.mulf %873, %848 : vector<8x128xf32>
    %885 = arith.mulf %865, %875 : vector<8x128xf32>
    %886 = arith.addf %884, %885 : vector<8x128xf32>
    %887 = math.tanh %886 : vector<8x128xf32>
    %888 = arith.mulf %883, %887 : vector<8x128xf32>
    %c6_i32_309 = arith.constant 6 : i32
    %c8_i32_310 = arith.constant 8 : i32
    %889 = arith.muli %c6_i32_309, %c8_i32_310 : i32
    %890 = tpu.assume_multiple %889, 8 : i32
    %891 = arith.index_cast %890 : i32 to index
    %c0_311 = arith.constant 0 : index
    %892 = vector.load %arg11[%891, %c0_311] : memref<128x512xf32, #tpu.memory_space<vmem>>, vector<8x512xf32>
    %893 = arith.truncf %888 : vector<8x128xf32> to vector<8x128xbf16>
    %cst_312 = arith.constant dense<0.000000e+00> : vector<8x512xf32>
    %894 = tpu.matmul %893, %659, %cst_312 {dimension_numbers = #tpu.dot_dimension_numbers<[1], [0], [0], [1], [0, 0, 1, 1], [], []>} : vector<8x128xbf16>, vector<128x512xbf16>, vector<8x512xf32> -> vector<8x512xf32>
    %895 = arith.addf %892, %894 : vector<8x512xf32>
    %896 = vector.extract_strided_slice %895 {offsets = [0, 0], sizes = [8, 128], strides = [1, 1]} : vector<8x512xf32> to vector<8x128xf32>
    %cst_313 = arith.constant 5.000000e-01 : f32
    %897 = vector.broadcast %cst_313 : f32 to vector<8x128xf32>
    %898 = arith.mulf %897, %896 : vector<8x128xf32>
    %899 = math.tanh %898 : vector<8x128xf32>
    %cst_314 = arith.constant 5.000000e-01 : f32
    %900 = vector.broadcast %cst_314 : f32 to vector<8x128xf32>
    %901 = arith.mulf %900, %899 : vector<8x128xf32>
    %cst_315 = arith.constant 5.000000e-01 : f32
    %902 = vector.broadcast %cst_315 : f32 to vector<8x128xf32>
    %903 = arith.addf %901, %902 : vector<8x128xf32>
    %904 = vector.extract_strided_slice %895 {offsets = [0, 128], sizes = [8, 128], strides = [1, 1]} : vector<8x512xf32> to vector<8x128xf32>
    %cst_316 = arith.constant 5.000000e-01 : f32
    %905 = vector.broadcast %cst_316 : f32 to vector<8x128xf32>
    %906 = arith.mulf %905, %904 : vector<8x128xf32>
    %907 = math.tanh %906 : vector<8x128xf32>
    %cst_317 = arith.constant 5.000000e-01 : f32
    %908 = vector.broadcast %cst_317 : f32 to vector<8x128xf32>
    %909 = arith.mulf %908, %907 : vector<8x128xf32>
    %cst_318 = arith.constant 5.000000e-01 : f32
    %910 = vector.broadcast %cst_318 : f32 to vector<8x128xf32>
    %911 = arith.addf %909, %910 : vector<8x128xf32>
    %912 = vector.extract_strided_slice %895 {offsets = [0, 256], sizes = [8, 128], strides = [1, 1]} : vector<8x512xf32> to vector<8x128xf32>
    %913 = math.tanh %912 : vector<8x128xf32>
    %914 = vector.extract_strided_slice %895 {offsets = [0, 384], sizes = [8, 128], strides = [1, 1]} : vector<8x512xf32> to vector<8x128xf32>
    %cst_319 = arith.constant 5.000000e-01 : f32
    %915 = vector.broadcast %cst_319 : f32 to vector<8x128xf32>
    %916 = arith.mulf %915, %914 : vector<8x128xf32>
    %917 = math.tanh %916 : vector<8x128xf32>
    %cst_320 = arith.constant 5.000000e-01 : f32
    %918 = vector.broadcast %cst_320 : f32 to vector<8x128xf32>
    %919 = arith.mulf %918, %917 : vector<8x128xf32>
    %cst_321 = arith.constant 5.000000e-01 : f32
    %920 = vector.broadcast %cst_321 : f32 to vector<8x128xf32>
    %921 = arith.addf %919, %920 : vector<8x128xf32>
    %922 = arith.mulf %911, %886 : vector<8x128xf32>
    %923 = arith.mulf %903, %913 : vector<8x128xf32>
    %924 = arith.addf %922, %923 : vector<8x128xf32>
    %925 = math.tanh %924 : vector<8x128xf32>
    %926 = arith.mulf %921, %925 : vector<8x128xf32>
    %c7_i32_322 = arith.constant 7 : i32
    %c8_i32_323 = arith.constant 8 : i32
    %927 = arith.muli %c7_i32_322, %c8_i32_323 : i32
    %928 = tpu.assume_multiple %927, 8 : i32
    %929 = arith.index_cast %928 : i32 to index
    %c0_324 = arith.constant 0 : index
    %930 = vector.load %arg11[%929, %c0_324] : memref<128x512xf32, #tpu.memory_space<vmem>>, vector<8x512xf32>
    %931 = arith.truncf %926 : vector<8x128xf32> to vector<8x128xbf16>
    %cst_325 = arith.constant dense<0.000000e+00> : vector<8x512xf32>
    %932 = tpu.matmul %931, %659, %cst_325 {dimension_numbers = #tpu.dot_dimension_numbers<[1], [0], [0], [1], [0, 0, 1, 1], [], []>} : vector<8x128xbf16>, vector<128x512xbf16>, vector<8x512xf32> -> vector<8x512xf32>
    %933 = arith.addf %930, %932 : vector<8x512xf32>
    %934 = vector.extract_strided_slice %933 {offsets = [0, 0], sizes = [8, 128], strides = [1, 1]} : vector<8x512xf32> to vector<8x128xf32>
    %cst_326 = arith.constant 5.000000e-01 : f32
    %935 = vector.broadcast %cst_326 : f32 to vector<8x128xf32>
    %936 = arith.mulf %935, %934 : vector<8x128xf32>
    %937 = math.tanh %936 : vector<8x128xf32>
    %cst_327 = arith.constant 5.000000e-01 : f32
    %938 = vector.broadcast %cst_327 : f32 to vector<8x128xf32>
    %939 = arith.mulf %938, %937 : vector<8x128xf32>
    %cst_328 = arith.constant 5.000000e-01 : f32
    %940 = vector.broadcast %cst_328 : f32 to vector<8x128xf32>
    %941 = arith.addf %939, %940 : vector<8x128xf32>
    %942 = vector.extract_strided_slice %933 {offsets = [0, 128], sizes = [8, 128], strides = [1, 1]} : vector<8x512xf32> to vector<8x128xf32>
    %cst_329 = arith.constant 5.000000e-01 : f32
    %943 = vector.broadcast %cst_329 : f32 to vector<8x128xf32>
    %944 = arith.mulf %943, %942 : vector<8x128xf32>
    %945 = math.tanh %944 : vector<8x128xf32>
    %cst_330 = arith.constant 5.000000e-01 : f32
    %946 = vector.broadcast %cst_330 : f32 to vector<8x128xf32>
    %947 = arith.mulf %946, %945 : vector<8x128xf32>
    %cst_331 = arith.constant 5.000000e-01 : f32
    %948 = vector.broadcast %cst_331 : f32 to vector<8x128xf32>
    %949 = arith.addf %947, %948 : vector<8x128xf32>
    %950 = vector.extract_strided_slice %933 {offsets = [0, 256], sizes = [8, 128], strides = [1, 1]} : vector<8x512xf32> to vector<8x128xf32>
    %951 = math.tanh %950 : vector<8x128xf32>
    %952 = vector.extract_strided_slice %933 {offsets = [0, 384], sizes = [8, 128], strides = [1, 1]} : vector<8x512xf32> to vector<8x128xf32>
    %cst_332 = arith.constant 5.000000e-01 : f32
    %953 = vector.broadcast %cst_332 : f32 to vector<8x128xf32>
    %954 = arith.mulf %953, %952 : vector<8x128xf32>
    %955 = math.tanh %954 : vector<8x128xf32>
    %cst_333 = arith.constant 5.000000e-01 : f32
    %956 = vector.broadcast %cst_333 : f32 to vector<8x128xf32>
    %957 = arith.mulf %956, %955 : vector<8x128xf32>
    %cst_334 = arith.constant 5.000000e-01 : f32
    %958 = vector.broadcast %cst_334 : f32 to vector<8x128xf32>
    %959 = arith.addf %957, %958 : vector<8x128xf32>
    %960 = arith.mulf %949, %924 : vector<8x128xf32>
    %961 = arith.mulf %941, %951 : vector<8x128xf32>
    %962 = arith.addf %960, %961 : vector<8x128xf32>
    %963 = math.tanh %962 : vector<8x128xf32>
    %964 = arith.mulf %959, %963 : vector<8x128xf32>
    %c8_i32_335 = arith.constant 8 : i32
    %c8_i32_336 = arith.constant 8 : i32
    %965 = arith.muli %c8_i32_335, %c8_i32_336 : i32
    %966 = tpu.assume_multiple %965, 8 : i32
    %967 = arith.index_cast %966 : i32 to index
    %c0_337 = arith.constant 0 : index
    %968 = vector.load %arg11[%967, %c0_337] : memref<128x512xf32, #tpu.memory_space<vmem>>, vector<8x512xf32>
    %969 = arith.truncf %964 : vector<8x128xf32> to vector<8x128xbf16>
    %cst_338 = arith.constant dense<0.000000e+00> : vector<8x512xf32>
    %970 = tpu.matmul %969, %659, %cst_338 {dimension_numbers = #tpu.dot_dimension_numbers<[1], [0], [0], [1], [0, 0, 1, 1], [], []>} : vector<8x128xbf16>, vector<128x512xbf16>, vector<8x512xf32> -> vector<8x512xf32>
    %971 = arith.addf %968, %970 : vector<8x512xf32>
    %972 = vector.extract_strided_slice %971 {offsets = [0, 0], sizes = [8, 128], strides = [1, 1]} : vector<8x512xf32> to vector<8x128xf32>
    %cst_339 = arith.constant 5.000000e-01 : f32
    %973 = vector.broadcast %cst_339 : f32 to vector<8x128xf32>
    %974 = arith.mulf %973, %972 : vector<8x128xf32>
    %975 = math.tanh %974 : vector<8x128xf32>
    %cst_340 = arith.constant 5.000000e-01 : f32
    %976 = vector.broadcast %cst_340 : f32 to vector<8x128xf32>
    %977 = arith.mulf %976, %975 : vector<8x128xf32>
    %cst_341 = arith.constant 5.000000e-01 : f32
    %978 = vector.broadcast %cst_341 : f32 to vector<8x128xf32>
    %979 = arith.addf %977, %978 : vector<8x128xf32>
    %980 = vector.extract_strided_slice %971 {offsets = [0, 128], sizes = [8, 128], strides = [1, 1]} : vector<8x512xf32> to vector<8x128xf32>
    %cst_342 = arith.constant 5.000000e-01 : f32
    %981 = vector.broadcast %cst_342 : f32 to vector<8x128xf32>
    %982 = arith.mulf %981, %980 : vector<8x128xf32>
    %983 = math.tanh %982 : vector<8x128xf32>
    %cst_343 = arith.constant 5.000000e-01 : f32
    %984 = vector.broadcast %cst_343 : f32 to vector<8x128xf32>
    %985 = arith.mulf %984, %983 : vector<8x128xf32>
    %cst_344 = arith.constant 5.000000e-01 : f32
    %986 = vector.broadcast %cst_344 : f32 to vector<8x128xf32>
    %987 = arith.addf %985, %986 : vector<8x128xf32>
    %988 = vector.extract_strided_slice %971 {offsets = [0, 256], sizes = [8, 128], strides = [1, 1]} : vector<8x512xf32> to vector<8x128xf32>
    %989 = math.tanh %988 : vector<8x128xf32>
    %990 = vector.extract_strided_slice %971 {offsets = [0, 384], sizes = [8, 128], strides = [1, 1]} : vector<8x512xf32> to vector<8x128xf32>
    %cst_345 = arith.constant 5.000000e-01 : f32
    %991 = vector.broadcast %cst_345 : f32 to vector<8x128xf32>
    %992 = arith.mulf %991, %990 : vector<8x128xf32>
    %993 = math.tanh %992 : vector<8x128xf32>
    %cst_346 = arith.constant 5.000000e-01 : f32
    %994 = vector.broadcast %cst_346 : f32 to vector<8x128xf32>
    %995 = arith.mulf %994, %993 : vector<8x128xf32>
    %cst_347 = arith.constant 5.000000e-01 : f32
    %996 = vector.broadcast %cst_347 : f32 to vector<8x128xf32>
    %997 = arith.addf %995, %996 : vector<8x128xf32>
    %998 = arith.mulf %987, %962 : vector<8x128xf32>
    %999 = arith.mulf %979, %989 : vector<8x128xf32>
    %1000 = arith.addf %998, %999 : vector<8x128xf32>
    %1001 = math.tanh %1000 : vector<8x128xf32>
    %1002 = arith.mulf %997, %1001 : vector<8x128xf32>
    %c9_i32_348 = arith.constant 9 : i32
    %c8_i32_349 = arith.constant 8 : i32
    %1003 = arith.muli %c9_i32_348, %c8_i32_349 : i32
    %1004 = tpu.assume_multiple %1003, 8 : i32
    %1005 = arith.index_cast %1004 : i32 to index
    %c0_350 = arith.constant 0 : index
    %1006 = vector.load %arg11[%1005, %c0_350] : memref<128x512xf32, #tpu.memory_space<vmem>>, vector<8x512xf32>
    %1007 = arith.truncf %1002 : vector<8x128xf32> to vector<8x128xbf16>
    %cst_351 = arith.constant dense<0.000000e+00> : vector<8x512xf32>
    %1008 = tpu.matmul %1007, %659, %cst_351 {dimension_numbers = #tpu.dot_dimension_numbers<[1], [0], [0], [1], [0, 0, 1, 1], [], []>} : vector<8x128xbf16>, vector<128x512xbf16>, vector<8x512xf32> -> vector<8x512xf32>
    %1009 = arith.addf %1006, %1008 : vector<8x512xf32>
    %1010 = vector.extract_strided_slice %1009 {offsets = [0, 0], sizes = [8, 128], strides = [1, 1]} : vector<8x512xf32> to vector<8x128xf32>
    %cst_352 = arith.constant 5.000000e-01 : f32
    %1011 = vector.broadcast %cst_352 : f32 to vector<8x128xf32>
    %1012 = arith.mulf %1011, %1010 : vector<8x128xf32>
    %1013 = math.tanh %1012 : vector<8x128xf32>
    %cst_353 = arith.constant 5.000000e-01 : f32
    %1014 = vector.broadcast %cst_353 : f32 to vector<8x128xf32>
    %1015 = arith.mulf %1014, %1013 : vector<8x128xf32>
    %cst_354 = arith.constant 5.000000e-01 : f32
    %1016 = vector.broadcast %cst_354 : f32 to vector<8x128xf32>
    %1017 = arith.addf %1015, %1016 : vector<8x128xf32>
    %1018 = vector.extract_strided_slice %1009 {offsets = [0, 128], sizes = [8, 128], strides = [1, 1]} : vector<8x512xf32> to vector<8x128xf32>
    %cst_355 = arith.constant 5.000000e-01 : f32
    %1019 = vector.broadcast %cst_355 : f32 to vector<8x128xf32>
    %1020 = arith.mulf %1019, %1018 : vector<8x128xf32>
    %1021 = math.tanh %1020 : vector<8x128xf32>
    %cst_356 = arith.constant 5.000000e-01 : f32
    %1022 = vector.broadcast %cst_356 : f32 to vector<8x128xf32>
    %1023 = arith.mulf %1022, %1021 : vector<8x128xf32>
    %cst_357 = arith.constant 5.000000e-01 : f32
    %1024 = vector.broadcast %cst_357 : f32 to vector<8x128xf32>
    %1025 = arith.addf %1023, %1024 : vector<8x128xf32>
    %1026 = vector.extract_strided_slice %1009 {offsets = [0, 256], sizes = [8, 128], strides = [1, 1]} : vector<8x512xf32> to vector<8x128xf32>
    %1027 = math.tanh %1026 : vector<8x128xf32>
    %1028 = vector.extract_strided_slice %1009 {offsets = [0, 384], sizes = [8, 128], strides = [1, 1]} : vector<8x512xf32> to vector<8x128xf32>
    %cst_358 = arith.constant 5.000000e-01 : f32
    %1029 = vector.broadcast %cst_358 : f32 to vector<8x128xf32>
    %1030 = arith.mulf %1029, %1028 : vector<8x128xf32>
    %1031 = math.tanh %1030 : vector<8x128xf32>
    %cst_359 = arith.constant 5.000000e-01 : f32
    %1032 = vector.broadcast %cst_359 : f32 to vector<8x128xf32>
    %1033 = arith.mulf %1032, %1031 : vector<8x128xf32>
    %cst_360 = arith.constant 5.000000e-01 : f32
    %1034 = vector.broadcast %cst_360 : f32 to vector<8x128xf32>
    %1035 = arith.addf %1033, %1034 : vector<8x128xf32>
    %1036 = arith.mulf %1025, %1000 : vector<8x128xf32>
    %1037 = arith.mulf %1017, %1027 : vector<8x128xf32>
    %1038 = arith.addf %1036, %1037 : vector<8x128xf32>
    %1039 = math.tanh %1038 : vector<8x128xf32>
    %1040 = arith.mulf %1035, %1039 : vector<8x128xf32>
    %c10_i32_361 = arith.constant 10 : i32
    %c8_i32_362 = arith.constant 8 : i32
    %1041 = arith.muli %c10_i32_361, %c8_i32_362 : i32
    %1042 = tpu.assume_multiple %1041, 8 : i32
    %1043 = arith.index_cast %1042 : i32 to index
    %c0_363 = arith.constant 0 : index
    %1044 = vector.load %arg11[%1043, %c0_363] : memref<128x512xf32, #tpu.memory_space<vmem>>, vector<8x512xf32>
    %1045 = arith.truncf %1040 : vector<8x128xf32> to vector<8x128xbf16>
    %cst_364 = arith.constant dense<0.000000e+00> : vector<8x512xf32>
    %1046 = tpu.matmul %1045, %659, %cst_364 {dimension_numbers = #tpu.dot_dimension_numbers<[1], [0], [0], [1], [0, 0, 1, 1], [], []>} : vector<8x128xbf16>, vector<128x512xbf16>, vector<8x512xf32> -> vector<8x512xf32>
    %1047 = arith.addf %1044, %1046 : vector<8x512xf32>
    %1048 = vector.extract_strided_slice %1047 {offsets = [0, 0], sizes = [8, 128], strides = [1, 1]} : vector<8x512xf32> to vector<8x128xf32>
    %cst_365 = arith.constant 5.000000e-01 : f32
    %1049 = vector.broadcast %cst_365 : f32 to vector<8x128xf32>
    %1050 = arith.mulf %1049, %1048 : vector<8x128xf32>
    %1051 = math.tanh %1050 : vector<8x128xf32>
    %cst_366 = arith.constant 5.000000e-01 : f32
    %1052 = vector.broadcast %cst_366 : f32 to vector<8x128xf32>
    %1053 = arith.mulf %1052, %1051 : vector<8x128xf32>
    %cst_367 = arith.constant 5.000000e-01 : f32
    %1054 = vector.broadcast %cst_367 : f32 to vector<8x128xf32>
    %1055 = arith.addf %1053, %1054 : vector<8x128xf32>
    %1056 = vector.extract_strided_slice %1047 {offsets = [0, 128], sizes = [8, 128], strides = [1, 1]} : vector<8x512xf32> to vector<8x128xf32>
    %cst_368 = arith.constant 5.000000e-01 : f32
    %1057 = vector.broadcast %cst_368 : f32 to vector<8x128xf32>
    %1058 = arith.mulf %1057, %1056 : vector<8x128xf32>
    %1059 = math.tanh %1058 : vector<8x128xf32>
    %cst_369 = arith.constant 5.000000e-01 : f32
    %1060 = vector.broadcast %cst_369 : f32 to vector<8x128xf32>
    %1061 = arith.mulf %1060, %1059 : vector<8x128xf32>
    %cst_370 = arith.constant 5.000000e-01 : f32
    %1062 = vector.broadcast %cst_370 : f32 to vector<8x128xf32>
    %1063 = arith.addf %1061, %1062 : vector<8x128xf32>
    %1064 = vector.extract_strided_slice %1047 {offsets = [0, 256], sizes = [8, 128], strides = [1, 1]} : vector<8x512xf32> to vector<8x128xf32>
    %1065 = math.tanh %1064 : vector<8x128xf32>
    %1066 = vector.extract_strided_slice %1047 {offsets = [0, 384], sizes = [8, 128], strides = [1, 1]} : vector<8x512xf32> to vector<8x128xf32>
    %cst_371 = arith.constant 5.000000e-01 : f32
    %1067 = vector.broadcast %cst_371 : f32 to vector<8x128xf32>
    %1068 = arith.mulf %1067, %1066 : vector<8x128xf32>
    %1069 = math.tanh %1068 : vector<8x128xf32>
    %cst_372 = arith.constant 5.000000e-01 : f32
    %1070 = vector.broadcast %cst_372 : f32 to vector<8x128xf32>
    %1071 = arith.mulf %1070, %1069 : vector<8x128xf32>
    %cst_373 = arith.constant 5.000000e-01 : f32
    %1072 = vector.broadcast %cst_373 : f32 to vector<8x128xf32>
    %1073 = arith.addf %1071, %1072 : vector<8x128xf32>
    %1074 = arith.mulf %1063, %1038 : vector<8x128xf32>
    %1075 = arith.mulf %1055, %1065 : vector<8x128xf32>
    %1076 = arith.addf %1074, %1075 : vector<8x128xf32>
    %1077 = math.tanh %1076 : vector<8x128xf32>
    %1078 = arith.mulf %1073, %1077 : vector<8x128xf32>
    %c11_i32_374 = arith.constant 11 : i32
    %c8_i32_375 = arith.constant 8 : i32
    %1079 = arith.muli %c11_i32_374, %c8_i32_375 : i32
    %1080 = tpu.assume_multiple %1079, 8 : i32
    %1081 = arith.index_cast %1080 : i32 to index
    %c0_376 = arith.constant 0 : index
    %1082 = vector.load %arg11[%1081, %c0_376] : memref<128x512xf32, #tpu.memory_space<vmem>>, vector<8x512xf32>
    %1083 = arith.truncf %1078 : vector<8x128xf32> to vector<8x128xbf16>
    %cst_377 = arith.constant dense<0.000000e+00> : vector<8x512xf32>
    %1084 = tpu.matmul %1083, %659, %cst_377 {dimension_numbers = #tpu.dot_dimension_numbers<[1], [0], [0], [1], [0, 0, 1, 1], [], []>} : vector<8x128xbf16>, vector<128x512xbf16>, vector<8x512xf32> -> vector<8x512xf32>
    %1085 = arith.addf %1082, %1084 : vector<8x512xf32>
    %1086 = vector.extract_strided_slice %1085 {offsets = [0, 0], sizes = [8, 128], strides = [1, 1]} : vector<8x512xf32> to vector<8x128xf32>
    %cst_378 = arith.constant 5.000000e-01 : f32
    %1087 = vector.broadcast %cst_378 : f32 to vector<8x128xf32>
    %1088 = arith.mulf %1087, %1086 : vector<8x128xf32>
    %1089 = math.tanh %1088 : vector<8x128xf32>
    %cst_379 = arith.constant 5.000000e-01 : f32
    %1090 = vector.broadcast %cst_379 : f32 to vector<8x128xf32>
    %1091 = arith.mulf %1090, %1089 : vector<8x128xf32>
    %cst_380 = arith.constant 5.000000e-01 : f32
    %1092 = vector.broadcast %cst_380 : f32 to vector<8x128xf32>
    %1093 = arith.addf %1091, %1092 : vector<8x128xf32>
    %1094 = vector.extract_strided_slice %1085 {offsets = [0, 128], sizes = [8, 128], strides = [1, 1]} : vector<8x512xf32> to vector<8x128xf32>
    %cst_381 = arith.constant 5.000000e-01 : f32
    %1095 = vector.broadcast %cst_381 : f32 to vector<8x128xf32>
    %1096 = arith.mulf %1095, %1094 : vector<8x128xf32>
    %1097 = math.tanh %1096 : vector<8x128xf32>
    %cst_382 = arith.constant 5.000000e-01 : f32
    %1098 = vector.broadcast %cst_382 : f32 to vector<8x128xf32>
    %1099 = arith.mulf %1098, %1097 : vector<8x128xf32>
    %cst_383 = arith.constant 5.000000e-01 : f32
    %1100 = vector.broadcast %cst_383 : f32 to vector<8x128xf32>
    %1101 = arith.addf %1099, %1100 : vector<8x128xf32>
    %1102 = vector.extract_strided_slice %1085 {offsets = [0, 256], sizes = [8, 128], strides = [1, 1]} : vector<8x512xf32> to vector<8x128xf32>
    %1103 = math.tanh %1102 : vector<8x128xf32>
    %1104 = vector.extract_strided_slice %1085 {offsets = [0, 384], sizes = [8, 128], strides = [1, 1]} : vector<8x512xf32> to vector<8x128xf32>
    %cst_384 = arith.constant 5.000000e-01 : f32
    %1105 = vector.broadcast %cst_384 : f32 to vector<8x128xf32>
    %1106 = arith.mulf %1105, %1104 : vector<8x128xf32>
    %1107 = math.tanh %1106 : vector<8x128xf32>
    %cst_385 = arith.constant 5.000000e-01 : f32
    %1108 = vector.broadcast %cst_385 : f32 to vector<8x128xf32>
    %1109 = arith.mulf %1108, %1107 : vector<8x128xf32>
    %cst_386 = arith.constant 5.000000e-01 : f32
    %1110 = vector.broadcast %cst_386 : f32 to vector<8x128xf32>
    %1111 = arith.addf %1109, %1110 : vector<8x128xf32>
    %1112 = arith.mulf %1101, %1076 : vector<8x128xf32>
    %1113 = arith.mulf %1093, %1103 : vector<8x128xf32>
    %1114 = arith.addf %1112, %1113 : vector<8x128xf32>
    %1115 = math.tanh %1114 : vector<8x128xf32>
    %1116 = arith.mulf %1111, %1115 : vector<8x128xf32>
    %c12_i32_387 = arith.constant 12 : i32
    %c8_i32_388 = arith.constant 8 : i32
    %1117 = arith.muli %c12_i32_387, %c8_i32_388 : i32
    %1118 = tpu.assume_multiple %1117, 8 : i32
    %1119 = arith.index_cast %1118 : i32 to index
    %c0_389 = arith.constant 0 : index
    %1120 = vector.load %arg11[%1119, %c0_389] : memref<128x512xf32, #tpu.memory_space<vmem>>, vector<8x512xf32>
    %1121 = arith.truncf %1116 : vector<8x128xf32> to vector<8x128xbf16>
    %cst_390 = arith.constant dense<0.000000e+00> : vector<8x512xf32>
    %1122 = tpu.matmul %1121, %659, %cst_390 {dimension_numbers = #tpu.dot_dimension_numbers<[1], [0], [0], [1], [0, 0, 1, 1], [], []>} : vector<8x128xbf16>, vector<128x512xbf16>, vector<8x512xf32> -> vector<8x512xf32>
    %1123 = arith.addf %1120, %1122 : vector<8x512xf32>
    %1124 = vector.extract_strided_slice %1123 {offsets = [0, 0], sizes = [8, 128], strides = [1, 1]} : vector<8x512xf32> to vector<8x128xf32>
    %cst_391 = arith.constant 5.000000e-01 : f32
    %1125 = vector.broadcast %cst_391 : f32 to vector<8x128xf32>
    %1126 = arith.mulf %1125, %1124 : vector<8x128xf32>
    %1127 = math.tanh %1126 : vector<8x128xf32>
    %cst_392 = arith.constant 5.000000e-01 : f32
    %1128 = vector.broadcast %cst_392 : f32 to vector<8x128xf32>
    %1129 = arith.mulf %1128, %1127 : vector<8x128xf32>
    %cst_393 = arith.constant 5.000000e-01 : f32
    %1130 = vector.broadcast %cst_393 : f32 to vector<8x128xf32>
    %1131 = arith.addf %1129, %1130 : vector<8x128xf32>
    %1132 = vector.extract_strided_slice %1123 {offsets = [0, 128], sizes = [8, 128], strides = [1, 1]} : vector<8x512xf32> to vector<8x128xf32>
    %cst_394 = arith.constant 5.000000e-01 : f32
    %1133 = vector.broadcast %cst_394 : f32 to vector<8x128xf32>
    %1134 = arith.mulf %1133, %1132 : vector<8x128xf32>
    %1135 = math.tanh %1134 : vector<8x128xf32>
    %cst_395 = arith.constant 5.000000e-01 : f32
    %1136 = vector.broadcast %cst_395 : f32 to vector<8x128xf32>
    %1137 = arith.mulf %1136, %1135 : vector<8x128xf32>
    %cst_396 = arith.constant 5.000000e-01 : f32
    %1138 = vector.broadcast %cst_396 : f32 to vector<8x128xf32>
    %1139 = arith.addf %1137, %1138 : vector<8x128xf32>
    %1140 = vector.extract_strided_slice %1123 {offsets = [0, 256], sizes = [8, 128], strides = [1, 1]} : vector<8x512xf32> to vector<8x128xf32>
    %1141 = math.tanh %1140 : vector<8x128xf32>
    %1142 = vector.extract_strided_slice %1123 {offsets = [0, 384], sizes = [8, 128], strides = [1, 1]} : vector<8x512xf32> to vector<8x128xf32>
    %cst_397 = arith.constant 5.000000e-01 : f32
    %1143 = vector.broadcast %cst_397 : f32 to vector<8x128xf32>
    %1144 = arith.mulf %1143, %1142 : vector<8x128xf32>
    %1145 = math.tanh %1144 : vector<8x128xf32>
    %cst_398 = arith.constant 5.000000e-01 : f32
    %1146 = vector.broadcast %cst_398 : f32 to vector<8x128xf32>
    %1147 = arith.mulf %1146, %1145 : vector<8x128xf32>
    %cst_399 = arith.constant 5.000000e-01 : f32
    %1148 = vector.broadcast %cst_399 : f32 to vector<8x128xf32>
    %1149 = arith.addf %1147, %1148 : vector<8x128xf32>
    %1150 = arith.mulf %1139, %1114 : vector<8x128xf32>
    %1151 = arith.mulf %1131, %1141 : vector<8x128xf32>
    %1152 = arith.addf %1150, %1151 : vector<8x128xf32>
    %1153 = math.tanh %1152 : vector<8x128xf32>
    %1154 = arith.mulf %1149, %1153 : vector<8x128xf32>
    %c13_i32_400 = arith.constant 13 : i32
    %c8_i32_401 = arith.constant 8 : i32
    %1155 = arith.muli %c13_i32_400, %c8_i32_401 : i32
    %1156 = tpu.assume_multiple %1155, 8 : i32
    %1157 = arith.index_cast %1156 : i32 to index
    %c0_402 = arith.constant 0 : index
    %1158 = vector.load %arg11[%1157, %c0_402] : memref<128x512xf32, #tpu.memory_space<vmem>>, vector<8x512xf32>
    %1159 = arith.truncf %1154 : vector<8x128xf32> to vector<8x128xbf16>
    %cst_403 = arith.constant dense<0.000000e+00> : vector<8x512xf32>
    %1160 = tpu.matmul %1159, %659, %cst_403 {dimension_numbers = #tpu.dot_dimension_numbers<[1], [0], [0], [1], [0, 0, 1, 1], [], []>} : vector<8x128xbf16>, vector<128x512xbf16>, vector<8x512xf32> -> vector<8x512xf32>
    %1161 = arith.addf %1158, %1160 : vector<8x512xf32>
    %1162 = vector.extract_strided_slice %1161 {offsets = [0, 0], sizes = [8, 128], strides = [1, 1]} : vector<8x512xf32> to vector<8x128xf32>
    %cst_404 = arith.constant 5.000000e-01 : f32
    %1163 = vector.broadcast %cst_404 : f32 to vector<8x128xf32>
    %1164 = arith.mulf %1163, %1162 : vector<8x128xf32>
    %1165 = math.tanh %1164 : vector<8x128xf32>
    %cst_405 = arith.constant 5.000000e-01 : f32
    %1166 = vector.broadcast %cst_405 : f32 to vector<8x128xf32>
    %1167 = arith.mulf %1166, %1165 : vector<8x128xf32>
    %cst_406 = arith.constant 5.000000e-01 : f32
    %1168 = vector.broadcast %cst_406 : f32 to vector<8x128xf32>
    %1169 = arith.addf %1167, %1168 : vector<8x128xf32>
    %1170 = vector.extract_strided_slice %1161 {offsets = [0, 128], sizes = [8, 128], strides = [1, 1]} : vector<8x512xf32> to vector<8x128xf32>
    %cst_407 = arith.constant 5.000000e-01 : f32
    %1171 = vector.broadcast %cst_407 : f32 to vector<8x128xf32>
    %1172 = arith.mulf %1171, %1170 : vector<8x128xf32>
    %1173 = math.tanh %1172 : vector<8x128xf32>
    %cst_408 = arith.constant 5.000000e-01 : f32
    %1174 = vector.broadcast %cst_408 : f32 to vector<8x128xf32>
    %1175 = arith.mulf %1174, %1173 : vector<8x128xf32>
    %cst_409 = arith.constant 5.000000e-01 : f32
    %1176 = vector.broadcast %cst_409 : f32 to vector<8x128xf32>
    %1177 = arith.addf %1175, %1176 : vector<8x128xf32>
    %1178 = vector.extract_strided_slice %1161 {offsets = [0, 256], sizes = [8, 128], strides = [1, 1]} : vector<8x512xf32> to vector<8x128xf32>
    %1179 = math.tanh %1178 : vector<8x128xf32>
    %1180 = vector.extract_strided_slice %1161 {offsets = [0, 384], sizes = [8, 128], strides = [1, 1]} : vector<8x512xf32> to vector<8x128xf32>
    %cst_410 = arith.constant 5.000000e-01 : f32
    %1181 = vector.broadcast %cst_410 : f32 to vector<8x128xf32>
    %1182 = arith.mulf %1181, %1180 : vector<8x128xf32>
    %1183 = math.tanh %1182 : vector<8x128xf32>
    %cst_411 = arith.constant 5.000000e-01 : f32
    %1184 = vector.broadcast %cst_411 : f32 to vector<8x128xf32>
    %1185 = arith.mulf %1184, %1183 : vector<8x128xf32>
    %cst_412 = arith.constant 5.000000e-01 : f32
    %1186 = vector.broadcast %cst_412 : f32 to vector<8x128xf32>
    %1187 = arith.addf %1185, %1186 : vector<8x128xf32>
    %1188 = arith.mulf %1177, %1152 : vector<8x128xf32>
    %1189 = arith.mulf %1169, %1179 : vector<8x128xf32>
    %1190 = arith.addf %1188, %1189 : vector<8x128xf32>
    %1191 = math.tanh %1190 : vector<8x128xf32>
    %1192 = arith.mulf %1187, %1191 : vector<8x128xf32>
    %c14_i32_413 = arith.constant 14 : i32
    %c8_i32_414 = arith.constant 8 : i32
    %1193 = arith.muli %c14_i32_413, %c8_i32_414 : i32
    %1194 = tpu.assume_multiple %1193, 8 : i32
    %1195 = arith.index_cast %1194 : i32 to index
    %c0_415 = arith.constant 0 : index
    %1196 = vector.load %arg11[%1195, %c0_415] : memref<128x512xf32, #tpu.memory_space<vmem>>, vector<8x512xf32>
    %1197 = arith.truncf %1192 : vector<8x128xf32> to vector<8x128xbf16>
    %cst_416 = arith.constant dense<0.000000e+00> : vector<8x512xf32>
    %1198 = tpu.matmul %1197, %659, %cst_416 {dimension_numbers = #tpu.dot_dimension_numbers<[1], [0], [0], [1], [0, 0, 1, 1], [], []>} : vector<8x128xbf16>, vector<128x512xbf16>, vector<8x512xf32> -> vector<8x512xf32>
    %1199 = arith.addf %1196, %1198 : vector<8x512xf32>
    %1200 = vector.extract_strided_slice %1199 {offsets = [0, 0], sizes = [8, 128], strides = [1, 1]} : vector<8x512xf32> to vector<8x128xf32>
    %cst_417 = arith.constant 5.000000e-01 : f32
    %1201 = vector.broadcast %cst_417 : f32 to vector<8x128xf32>
    %1202 = arith.mulf %1201, %1200 : vector<8x128xf32>
    %1203 = math.tanh %1202 : vector<8x128xf32>
    %cst_418 = arith.constant 5.000000e-01 : f32
    %1204 = vector.broadcast %cst_418 : f32 to vector<8x128xf32>
    %1205 = arith.mulf %1204, %1203 : vector<8x128xf32>
    %cst_419 = arith.constant 5.000000e-01 : f32
    %1206 = vector.broadcast %cst_419 : f32 to vector<8x128xf32>
    %1207 = arith.addf %1205, %1206 : vector<8x128xf32>
    %1208 = vector.extract_strided_slice %1199 {offsets = [0, 128], sizes = [8, 128], strides = [1, 1]} : vector<8x512xf32> to vector<8x128xf32>
    %cst_420 = arith.constant 5.000000e-01 : f32
    %1209 = vector.broadcast %cst_420 : f32 to vector<8x128xf32>
    %1210 = arith.mulf %1209, %1208 : vector<8x128xf32>
    %1211 = math.tanh %1210 : vector<8x128xf32>
    %cst_421 = arith.constant 5.000000e-01 : f32
    %1212 = vector.broadcast %cst_421 : f32 to vector<8x128xf32>
    %1213 = arith.mulf %1212, %1211 : vector<8x128xf32>
    %cst_422 = arith.constant 5.000000e-01 : f32
    %1214 = vector.broadcast %cst_422 : f32 to vector<8x128xf32>
    %1215 = arith.addf %1213, %1214 : vector<8x128xf32>
    %1216 = vector.extract_strided_slice %1199 {offsets = [0, 256], sizes = [8, 128], strides = [1, 1]} : vector<8x512xf32> to vector<8x128xf32>
    %1217 = math.tanh %1216 : vector<8x128xf32>
    %1218 = vector.extract_strided_slice %1199 {offsets = [0, 384], sizes = [8, 128], strides = [1, 1]} : vector<8x512xf32> to vector<8x128xf32>
    %cst_423 = arith.constant 5.000000e-01 : f32
    %1219 = vector.broadcast %cst_423 : f32 to vector<8x128xf32>
    %1220 = arith.mulf %1219, %1218 : vector<8x128xf32>
    %1221 = math.tanh %1220 : vector<8x128xf32>
    %cst_424 = arith.constant 5.000000e-01 : f32
    %1222 = vector.broadcast %cst_424 : f32 to vector<8x128xf32>
    %1223 = arith.mulf %1222, %1221 : vector<8x128xf32>
    %cst_425 = arith.constant 5.000000e-01 : f32
    %1224 = vector.broadcast %cst_425 : f32 to vector<8x128xf32>
    %1225 = arith.addf %1223, %1224 : vector<8x128xf32>
    %1226 = arith.mulf %1215, %1190 : vector<8x128xf32>
    %1227 = arith.mulf %1207, %1217 : vector<8x128xf32>
    %1228 = arith.addf %1226, %1227 : vector<8x128xf32>
    %1229 = math.tanh %1228 : vector<8x128xf32>
    %1230 = arith.mulf %1225, %1229 : vector<8x128xf32>
    %c15_i32_426 = arith.constant 15 : i32
    %c8_i32_427 = arith.constant 8 : i32
    %1231 = arith.muli %c15_i32_426, %c8_i32_427 : i32
    %1232 = tpu.assume_multiple %1231, 8 : i32
    %1233 = arith.index_cast %1232 : i32 to index
    %c0_428 = arith.constant 0 : index
    %1234 = vector.load %arg11[%1233, %c0_428] : memref<128x512xf32, #tpu.memory_space<vmem>>, vector<8x512xf32>
    %1235 = arith.truncf %1230 : vector<8x128xf32> to vector<8x128xbf16>
    %cst_429 = arith.constant dense<0.000000e+00> : vector<8x512xf32>
    %1236 = tpu.matmul %1235, %659, %cst_429 {dimension_numbers = #tpu.dot_dimension_numbers<[1], [0], [0], [1], [0, 0, 1, 1], [], []>} : vector<8x128xbf16>, vector<128x512xbf16>, vector<8x512xf32> -> vector<8x512xf32>
    %1237 = arith.addf %1234, %1236 : vector<8x512xf32>
    %1238 = vector.extract_strided_slice %1237 {offsets = [0, 0], sizes = [8, 128], strides = [1, 1]} : vector<8x512xf32> to vector<8x128xf32>
    %cst_430 = arith.constant 5.000000e-01 : f32
    %1239 = vector.broadcast %cst_430 : f32 to vector<8x128xf32>
    %1240 = arith.mulf %1239, %1238 : vector<8x128xf32>
    %1241 = math.tanh %1240 : vector<8x128xf32>
    %cst_431 = arith.constant 5.000000e-01 : f32
    %1242 = vector.broadcast %cst_431 : f32 to vector<8x128xf32>
    %1243 = arith.mulf %1242, %1241 : vector<8x128xf32>
    %cst_432 = arith.constant 5.000000e-01 : f32
    %1244 = vector.broadcast %cst_432 : f32 to vector<8x128xf32>
    %1245 = arith.addf %1243, %1244 : vector<8x128xf32>
    %1246 = vector.extract_strided_slice %1237 {offsets = [0, 128], sizes = [8, 128], strides = [1, 1]} : vector<8x512xf32> to vector<8x128xf32>
    %cst_433 = arith.constant 5.000000e-01 : f32
    %1247 = vector.broadcast %cst_433 : f32 to vector<8x128xf32>
    %1248 = arith.mulf %1247, %1246 : vector<8x128xf32>
    %1249 = math.tanh %1248 : vector<8x128xf32>
    %cst_434 = arith.constant 5.000000e-01 : f32
    %1250 = vector.broadcast %cst_434 : f32 to vector<8x128xf32>
    %1251 = arith.mulf %1250, %1249 : vector<8x128xf32>
    %cst_435 = arith.constant 5.000000e-01 : f32
    %1252 = vector.broadcast %cst_435 : f32 to vector<8x128xf32>
    %1253 = arith.addf %1251, %1252 : vector<8x128xf32>
    %1254 = vector.extract_strided_slice %1237 {offsets = [0, 256], sizes = [8, 128], strides = [1, 1]} : vector<8x512xf32> to vector<8x128xf32>
    %1255 = math.tanh %1254 : vector<8x128xf32>
    %1256 = vector.extract_strided_slice %1237 {offsets = [0, 384], sizes = [8, 128], strides = [1, 1]} : vector<8x512xf32> to vector<8x128xf32>
    %cst_436 = arith.constant 5.000000e-01 : f32
    %1257 = vector.broadcast %cst_436 : f32 to vector<8x128xf32>
    %1258 = arith.mulf %1257, %1256 : vector<8x128xf32>
    %1259 = math.tanh %1258 : vector<8x128xf32>
    %cst_437 = arith.constant 5.000000e-01 : f32
    %1260 = vector.broadcast %cst_437 : f32 to vector<8x128xf32>
    %1261 = arith.mulf %1260, %1259 : vector<8x128xf32>
    %cst_438 = arith.constant 5.000000e-01 : f32
    %1262 = vector.broadcast %cst_438 : f32 to vector<8x128xf32>
    %1263 = arith.addf %1261, %1262 : vector<8x128xf32>
    %1264 = arith.mulf %1253, %1228 : vector<8x128xf32>
    %1265 = arith.mulf %1245, %1255 : vector<8x128xf32>
    %1266 = arith.addf %1264, %1265 : vector<8x128xf32>
    %1267 = math.tanh %1266 : vector<8x128xf32>
    %1268 = arith.mulf %1263, %1267 : vector<8x128xf32>
    %c16_i32_439 = arith.constant 16 : i32
    %1269 = arith.truncf %1268 : vector<8x128xf32> to vector<8x128xbf16>
    %c0_440 = arith.constant 0 : index
    %c0_441 = arith.constant 0 : index
    %1270 = vector.load %arg8[%c0_440, %c0_441] : memref<128x8xbf16, #tpu.memory_space<vmem>>, vector<128x8xbf16>
    %cst_442 = arith.constant dense<0.000000e+00> : vector<8x8xf32>
    %1271 = tpu.matmul %1269, %1270, %cst_442 {dimension_numbers = #tpu.dot_dimension_numbers<[1], [0], [0], [1], [0, 0, 1, 1], [], []>} : vector<8x128xbf16>, vector<128x8xbf16>, vector<8x8xf32> -> vector<8x8xf32>
    %c0_443 = arith.constant 0 : index
    %c0_444 = arith.constant 0 : index
    %1272 = vector.load %arg9[%c0_443, %c0_444] : memref<1x8xf32, #tpu.memory_space<vmem>>, vector<1x8xf32>
    %1273 = vector.broadcast %1272 : vector<1x8xf32> to vector<8x8xf32>
    %1274 = arith.addf %1271, %1273 : vector<8x8xf32>
    %c0_445 = arith.constant 0 : index
    %c0_446 = arith.constant 0 : index
    %1275 = vector.load %arg10[%c0_445, %c0_446] : memref<8x8xf32, #tpu.memory_space<vmem>>, vector<8x8xf32>
    tpu.vector_store %arg10[%c0_445, %c0_446], %1274 {strides = array<i32>} : memref<8x8xf32, #tpu.memory_space<vmem>>, vector<8x8xf32>,
    return
  }
  func.func @transform_0(%arg0: i32) -> (i32, i32, i32) {
    %c0_i32 = arith.constant 0 : i32
    %c0_i32_0 = arith.constant 0 : i32
    %c0_i32_1 = arith.constant 0 : i32
    return %c0_i32, %arg0, %c0_i32_0 : i32, i32, i32
  }
  func.func @transform_1(%arg0: i32) -> (i32, i32) {
    %c0_i32 = arith.constant 0 : i32
    %c0_i32_0 = arith.constant 0 : i32
    %c0_i32_1 = arith.constant 0 : i32
    return %c0_i32, %c0_i32_0 : i32, i32
  }
  func.func @transform_2(%arg0: i32) -> (i32, i32) {
    %c0_i32 = arith.constant 0 : i32
    %c0_i32_0 = arith.constant 0 : i32
    %c0_i32_1 = arith.constant 0 : i32
    return %c0_i32, %c0_i32_0 : i32, i32
  }
  func.func @transform_3(%arg0: i32) -> (i32, i32) {
    %c0_i32 = arith.constant 0 : i32
    %c0_i32_0 = arith.constant 0 : i32
    %c0_i32_1 = arith.constant 0 : i32
    return %c0_i32, %c0_i32_0 : i32, i32
  }
  func.func @transform_4(%arg0: i32) -> (i32, i32) {
    %c0_i32 = arith.constant 0 : i32
    %c0_i32_0 = arith.constant 0 : i32
    %c0_i32_1 = arith.constant 0 : i32
    return %c0_i32, %c0_i32_0 : i32, i32
  }
  func.func @transform_5(%arg0: i32) -> (i32, i32) {
    %c0_i32 = arith.constant 0 : i32
    %c0_i32_0 = arith.constant 0 : i32
    %c0_i32_1 = arith.constant 0 : i32
    return %c0_i32, %c0_i32_0 : i32, i32
  }
  func.func @transform_6(%arg0: i32) -> (i32, i32) {
    %c0_i32 = arith.constant 0 : i32
    %c0_i32_0 = arith.constant 0 : i32
    %c0_i32_1 = arith.constant 0 : i32
    return %c0_i32, %c0_i32_0 : i32, i32
  }
  func.func @transform_7(%arg0: i32) -> (i32, i32) {
    %c0_i32 = arith.constant 0 : i32
    %c0_i32_0 = arith.constant 0 : i32
    %c0_i32_1 = arith.constant 0 : i32
    return %c0_i32, %c0_i32_0 : i32, i32
  }
  func.func @transform_8(%arg0: i32) -> (i32, i32) {
    %c0_i32 = arith.constant 0 : i32
    %c0_i32_0 = arith.constant 0 : i32
    %c0_i32_1 = arith.constant 0 : i32
    return %c0_i32, %c0_i32_0 : i32, i32
  }
  func.func @transform_9(%arg0: i32) -> (i32, i32) {
    %c0_i32 = arith.constant 0 : i32
    %c0_i32_0 = arith.constant 0 : i32
    return %arg0, %c0_i32 : i32, i32
  }
}

</mosaic_0001>

<llo_original>
// kernel: lstm_model_forward.1
$region0: #{lstm_model_forward.1}
  #allocation0 [shape = 'u32[]', space=smem, size = 0x4, offset = 0x4, fixed_abs, tag = 'smem constant byte address 0x4 - core index']
  #allocation1 [shape = 'u32[144,128]{1,0:T(1,128)}', space=vmem, size = 0x12000, scoped, tag = 'internal scratch']
  #allocation2 [shape = 'f32[128,512]{1,0:T(8,128)}', space=vmem, size = 0x40000, scoped, tag = 'scratch operand']
  #allocation3 [shape = 'f32[128,128]{1,0:T(8,128)}', space=vmem, size = 0x10000, scoped, tag = 'scratch operand']
  %s0 = inlined_call_operand.vmem [shape: f32[16,8,8], index: 0, kind: input, shape index: {}]
  %s1 = inlined_call_operand.vmem [shape: bf16[8,512], index: 1, kind: input, shape index: {}]
  %s2 = inlined_call_operand.vmem [shape: bf16[128,512], index: 2, kind: input, shape index: {}]
  %s3 = inlined_call_operand.vmem [shape: f32[1,512], index: 3, kind: input, shape index: {}]
  %s4 = inlined_call_operand.vmem [shape: bf16[128,512], index: 4, kind: input, shape index: {}]
  %s5 = inlined_call_operand.vmem [shape: bf16[128,512], index: 5, kind: input, shape index: {}]
  %s6 = inlined_call_operand.vmem [shape: f32[1,512], index: 6, kind: input, shape index: {}]
  %s7 = inlined_call_operand.vmem [shape: bf16[128,8], index: 7, kind: input, shape index: {}]
  %s8 = inlined_call_operand.vmem [shape: f32[1,8], index: 8, kind: input, shape index: {}]
  %s9 = inlined_call_operand.hbm [shape: f32[8,8], index: 9, kind: output, shape index: {}]
  %s10 = sld [smem:[#allocation0]]
  $region46: #{lstm_model_forward.1} parent=0
    _
  %s12 = ssub.s32 1, %s10
  %s13 = scalar_select 0, %s12, %s10
  $region1: #{lstm_model_forward.1} parent=0
    #allocation4 [shape = 'u8[4096]{0}', space=vmem, size = 0x1000, scoped, tag = 'output window, operand 0, single buffered']
    #allocation5 [shape = 's32[1]{0}', space=sflag, size = 0x4, scoped, tag = 'scoped memory for lstm_model_forward.1']
    %14 = vsyncpa [#allocation5], 0
    // Predicated region
    $region2: #{lstm_model_forward.1} parent=1 // pred_check
      _
    $region3: #{lstm_model_forward.1} parent=1 // pred_check_branch
      %16 = sbr.rel (0) target = $region5
    $region4: #{lstm_model_forward.1} parent=1 // pred_region
      _
    $region5: #{lstm_model_forward.1} parent=1 // pred_fallthru
      _
    // Predicated region
    $region6: #{lstm_model_forward.1} parent=1 // pred_check
      _
    $region7: #{lstm_model_forward.1} parent=1 // pred_check_branch
      %18 = sbr.rel (0) target = $region9
    $region8: #{lstm_model_forward.1} parent=1 // pred_region
      _
    $region9: #{lstm_model_forward.1} parent=1 // pred_fallthru
      _
    // Predicated region
    $region10: #{lstm_model_forward.1} parent=1 // pred_check
      _
    $region11: #{lstm_model_forward.1} parent=1 // pred_check_branch
      %20 = sbr.rel (0) target = $region13
    $region12: #{lstm_model_forward.1} parent=1 // pred_region
      _
    $region13: #{lstm_model_forward.1} parent=1 // pred_fallthru
      _
    // Predicated region
    $region14: #{lstm_model_forward.1} parent=1 // pred_check
      _
    $region15: #{lstm_model_forward.1} parent=1 // pred_check_branch
      %22 = sbr.rel (0) target = $region17
    $region16: #{lstm_model_forward.1} parent=1 // pred_region
      _
    $region17: #{lstm_model_forward.1} parent=1 // pred_fallthru
      _
    // Predicated region
    $region18: #{lstm_model_forward.1} parent=1 // pred_check
      _
    $region19: #{lstm_model_forward.1} parent=1 // pred_check_branch
      %24 = sbr.rel (0) target = $region21
    $region20: #{lstm_model_forward.1} parent=1 // pred_region
      _
    $region21: #{lstm_model_forward.1} parent=1 // pred_fallthru
      _
    // Predicated region
    $region22: #{lstm_model_forward.1} parent=1 // pred_check
      _
    $region23: #{lstm_model_forward.1} parent=1 // pred_check_branch
      %26 = sbr.rel (0) target = $region25
    $region24: #{lstm_model_forward.1} parent=1 // pred_region
      _
    $region25: #{lstm_model_forward.1} parent=1 // pred_fallthru
      _
    // Predicated region
    $region26: #{lstm_model_forward.1} parent=1 // pred_check
      _
    $region27: #{lstm_model_forward.1} parent=1 // pred_check_branch
      %28 = sbr.rel (0) target = $region29
    $region28: #{lstm_model_forward.1} parent=1 // pred_region
      _
    $region29: #{lstm_model_forward.1} parent=1 // pred_fallthru
      _
    // Predicated region
    $region30: #{lstm_model_forward.1} parent=1 // pred_check
      _
    $region31: #{lstm_model_forward.1} parent=1 // pred_check_branch
      %30 = sbr.rel (0) target = $region33
    $region32: #{lstm_model_forward.1} parent=1 // pred_region
      _
    $region33: #{lstm_model_forward.1} parent=1 // pred_fallthru
      _
    // Predicated region
    $region34: #{lstm_model_forward.1} parent=1 // pred_check
      _
    $region35: #{lstm_model_forward.1} parent=1 // pred_check_branch
      %32 = sbr.rel (0) target = $region37
    $region36: #{lstm_model_forward.1} parent=1 // pred_region
      _
    $region37: #{lstm_model_forward.1} parent=1 // pred_fallthru
      _
    %v34 = vld [vmem:[%s0] sm:$0xff]
    %v35 = vld [vmem:[%s0 + $0x8] sm:$0xff]
    %v36 = vld [vmem:[%s0 + $0x10] sm:$0xff]
    %v37 = vld [vmem:[%s0 + $0x18] sm:$0xff]
    %v38 = vld [vmem:[%s0 + $0x20] sm:$0xff]
    %v39 = vld [vmem:[%s0 + $0x28] sm:$0xff]
    %v40 = vld [vmem:[%s0 + $0x30] sm:$0xff]
    %v41 = vld [vmem:[%s0 + $0x38] sm:$0xff]
    %v42 = vld [vmem:[%s0 + $0x40] sm:$0xff]
    %v43 = vld [vmem:[%s0 + $0x48] sm:$0xff]
    %v44 = vld [vmem:[%s0 + $0x50] sm:$0xff]
    %v45 = vld [vmem:[%s0 + $0x58] sm:$0xff]
    %v46 = vld [vmem:[%s0 + $0x60] sm:$0xff]
    %v47 = vld [vmem:[%s0 + $0x68] sm:$0xff]
    %v48 = vld [vmem:[%s0 + $0x70] sm:$0xff]
    %v49 = vld [vmem:[%s0 + $0x78] sm:$0xff]
    %v50 = vpack.c.bf16 %v35, %v34
    %v51 = vpack.c.bf16 %v37, %v36
    %v52 = vpack.c.bf16 %v39, %v38
    %v53 = vpack.c.bf16 %v41, %v40
    %v54 = vpack.c.bf16 %v43, %v42
    %v55 = vpack.c.bf16 %v45, %v44
    %v56 = vpack.c.bf16 %v47, %v46
    %v57 = vpack.c.bf16 %v49, %v48
    %v58 = vld [vmem:[%s1] sm:$0xff]
    %v59 = vld [vmem:[%s1 + $0x8] sm:$0xff]
    %v60 = vld [vmem:[%s3] sm:$0xf]
    %v62 = vlaneseq
    %v63 = vshrl.u32 %v62, 7
    %v64 = vsub.s32 0, %v63
    %v65 = vrot.slane %v60, %v64
    %v66 = vlaneseq
    %v67 = vshrl.u32 %v66, 7
    %v68 = vsub.s32 1, %v67
    %v69 = vrot.slane %v60, %v68
    %v70 = vlaneseq
    %v71 = vshrl.u32 %v70, 7
    %v72 = vsub.s32 2, %v71
    %v73 = vrot.slane %v60, %v72
    %v74 = vlaneseq
    %v75 = vshrl.u32 %v74, 7
    %v76 = vsub.s32 3, %v75
    %v77 = vrot.slane %v60, %v76
    %v84 = vunpack.c.l.b16 %v58
    %v85 = vunpack.c.h.b16 %v58
    %v86 = vunpack.c.l.b16 %v59
    %v87 = vunpack.c.h.b16 %v59
    %v88 = vpack.c.b16 %v84, %v84
    %v89 = vpack.c.b16 %v85, %v85
    %v90 = vpack.c.b16 %v86, %v86
    %v91 = vpack.c.b16 %v87, %v87
    %vm92 = vcmask 64512
    %v94 = vsel %vm92, %v50, 0
    %v97 = vsel %vm92, %v51, 0
    %v100 = vsel %vm92, %v52, 0
    %v103 = vsel %vm92, %v53, 0
    %v106 = vsel %vm92, %v54, 0
    %v109 = vsel %vm92, %v55, 0
    %v112 = vsel %vm92, %v56, 0
    %v115 = vsel %vm92, %v57, 0
    %vm117 = vcmask 1043456
    %v119 = vsel %vm117, %v88, 0
    %v122 = vsel %vm117, %v89, 0
    %v125 = vsel %vm117, %v90, 0
    %v128 = vsel %vm117, %v91, 0
    %130 = vmatprep.subr.bf16.mxu0 %v122
    %131 = vmatpush1.bf16.msra.mxu0 %v119
    %132 = vmatprep.subr.bf16.mxu0 0
    %133 = vmatpush1.bf16.msra.mxu0 0
    %134 = vmatprep.subr.bf16.mxu0 0
    %135 = vmatpush1.bf16.msra.mxu0 0
    %136 = vmatprep.subr.bf16.mxu0 0
    %137 = vmatpush1.bf16.msra.mxu0 0
    %138 = vmatprep.subr.bf16.mxu0 0
    %139 = vmatpush1.bf16.msra.mxu0 0
    %140 = vmatprep.subr.bf16.mxu0 0
    %141 = vmatpush1.bf16.msra.mxu0 0
    %142 = vmatprep.subr.bf16.mxu0 0
    %143 = vmatpush1.bf16.msra.mxu0 0
    %144 = vmatprep.subr.bf16.mxu0 0
    %145 = vmatpush1.bf16.msra.mxu0 0
    %146 = vmatprep.subr.bf16.mxu0 0
    %147 = vmatpush1.bf16.msra.mxu0 0
    %148 = vmatprep.subr.bf16.mxu0 0
    %149 = vmatpush1.bf16.msra.mxu0 0
    %150 = vmatprep.subr.bf16.mxu0 0
    %151 = vmatpush1.bf16.msra.mxu0 0
    %152 = vmatprep.subr.bf16.mxu0 0
    %153 = vmatpush1.bf16.msra.mxu0 0
    %154 = vmatprep.subr.bf16.mxu0 0
    %155 = vmatpush1.bf16.msra.mxu0 0
    %156 = vmatprep.subr.bf16.mxu0 0
    %157 = vmatpush1.bf16.msra.mxu0 0
    %158 = vmatprep.subr.bf16.mxu0 0
    %159 = vmatpush1.bf16.msra.mxu0 0
    %160 = vmatprep.subr.bf16.mxu0 0
    %161 = vmatpush1.bf16.msra.mxu0 0
    %162 = vmatprep.mubr.bf16.mxu0 0
    %163 = vmatmul.mubr.bf16.gmra.mrb[0].mxu0 %v94
    %v164 = vpop.f32.mrb[0].mxu0
    %v165 = vadd.f32 %v65, %v164
    %v166 = vpop.f32.mrb[0].mxu0
    %v167 = vadd.f32 %v69, %v166
    %v168 = vpop.f32.mrb[0].mxu0
    %v169 = vadd.f32 %v65, %v168
    %v170 = vpop.f32.mrb[0].mxu0
    %v171 = vadd.f32 %v69, %v170
    %172 = vmatprep.mubr.bf16.mxu0 0
    %173 = vmatmul.mubr.bf16.gmra.mrb[0].mxu0 %v97
    %v174 = vpop.f32.mrb[0].mxu0
    %v175 = vadd.f32 %v65, %v174
    %v176 = vpop.f32.mrb[0].mxu0
    %v177 = vadd.f32 %v69, %v176
    %v178 = vpop.f32.mrb[0].mxu0
    %v179 = vadd.f32 %v65, %v178
    %v180 = vpop.f32.mrb[0].mxu0
    %v181 = vadd.f32 %v69, %v180
    %182 = vmatprep.mubr.bf16.mxu0 0
    %183 = vmatmul.mubr.bf16.gmra.mrb[0].mxu0 %v100
    %v184 = vpop.f32.mrb[0].mxu0
    %v185 = vadd.f32 %v65, %v184
    %v186 = vpop.f32.mrb[0].mxu0
    %v187 = vadd.f32 %v69, %v186
    %v188 = vpop.f32.mrb[0].mxu0
    %v189 = vadd.f32 %v65, %v188
    %v190 = vpop.f32.mrb[0].mxu0
    %v191 = vadd.f32 %v69, %v190
    %192 = vmatprep.mubr.bf16.mxu0 0
    %193 = vmatmul.mubr.bf16.gmra.mrb[0].mxu0 %v103
    %v194 = vpop.f32.mrb[0].mxu0
    %v195 = vadd.f32 %v65, %v194
    %v196 = vpop.f32.mrb[0].mxu0
    %v197 = vadd.f32 %v69, %v196
    %v198 = vpop.f32.mrb[0].mxu0
    %v199 = vadd.f32 %v65, %v198
    %v200 = vpop.f32.mrb[0].mxu0
    %v201 = vadd.f32 %v69, %v200
    %202 = vmatprep.mubr.bf16.mxu0 0
    %203 = vmatmul.mubr.bf16.gmra.mrb[0].mxu0 %v106
    %v204 = vpop.f32.mrb[0].mxu0
    %v205 = vadd.f32 %v65, %v204
    %v206 = vpop.f32.mrb[0].mxu0
    %v207 = vadd.f32 %v69, %v206
    %v208 = vpop.f32.mrb[0].mxu0
    %v209 = vadd.f32 %v65, %v208
    %v210 = vpop.f32.mrb[0].mxu0
    %v211 = vadd.f32 %v69, %v210
    %212 = vmatprep.mubr.bf16.mxu0 0
    %213 = vmatmul.mubr.bf16.gmra.mrb[0].mxu0 %v109
    %v214 = vpop.f32.mrb[0].mxu0
    %v215 = vadd.f32 %v65, %v214
    %v216 = vpop.f32.mrb[0].mxu0
    %v217 = vadd.f32 %v69, %v216
    %v218 = vpop.f32.mrb[0].mxu0
    %v219 = vadd.f32 %v65, %v218
    %v220 = vpop.f32.mrb[0].mxu0
    %v221 = vadd.f32 %v69, %v220
    %222 = vmatprep.mubr.bf16.mxu0 0
    %223 = vmatmul.mubr.bf16.gmra.mrb[0].mxu0 %v112
    %v224 = vpop.f32.mrb[0].mxu0
    %v225 = vadd.f32 %v65, %v224
    %v226 = vpop.f32.mrb[0].mxu0
    %v227 = vadd.f32 %v69, %v226
    %v228 = vpop.f32.mrb[0].mxu0
    %v229 = vadd.f32 %v65, %v228
    %v230 = vpop.f32.mrb[0].mxu0
    %v231 = vadd.f32 %v69, %v230
    %232 = vmatprep.mubr.bf16.mxu0 0
    %233 = vmatmul.mubr.bf16.gmra.mrb[0].mxu0 %v115
    %v234 = vpop.f32.mrb[0].mxu0
    %v235 = vadd.f32 %v65, %v234
    %v236 = vpop.f32.mrb[0].mxu0
    %v237 = vadd.f32 %v69, %v236
    %v238 = vpop.f32.mrb[0].mxu0
    %v239 = vadd.f32 %v65, %v238
    %v240 = vpop.f32.mrb[0].mxu0
    %v241 = vadd.f32 %v69, %v240
    %242 = vdwg.mxu0
    %243 = vmatprep.subr.bf16.mxu0 %v128
    %244 = vmatpush1.bf16.msra.mxu0 %v125
    %245 = vmatprep.subr.bf16.mxu0 0
    %246 = vmatpush1.bf16.msra.mxu0 0
    %247 = vmatprep.subr.bf16.mxu0 0
    %248 = vmatpush1.bf16.msra.mxu0 0
    %249 = vmatprep.subr.bf16.mxu0 0
    %250 = vmatpush1.bf16.msra.mxu0 0
    %251 = vmatprep.subr.bf16.mxu0 0
    %252 = vmatpush1.bf16.msra.mxu0 0
    %253 = vmatprep.subr.bf16.mxu0 0
    %254 = vmatpush1.bf16.msra.mxu0 0
    %255 = vmatprep.subr.bf16.mxu0 0
    %256 = vmatpush1.bf16.msra.mxu0 0
    %257 = vmatprep.subr.bf16.mxu0 0
    %258 = vmatpush1.bf16.msra.mxu0 0
    %259 = vmatprep.subr.bf16.mxu0 0
    %260 = vmatpush1.bf16.msra.mxu0 0
    %261 = vmatprep.subr.bf16.mxu0 0
    %262 = vmatpush1.bf16.msra.mxu0 0
    %263 = vmatprep.subr.bf16.mxu0 0
    %264 = vmatpush1.bf16.msra.mxu0 0
    %265 = vmatprep.subr.bf16.mxu0 0
    %266 = vmatpush1.bf16.msra.mxu0 0
    %267 = vmatprep.subr.bf16.mxu0 0
    %268 = vmatpush1.bf16.msra.mxu0 0
    %269 = vmatprep.subr.bf16.mxu0 0
    %270 = vmatpush1.bf16.msra.mxu0 0
    %271 = vmatprep.subr.bf16.mxu0 0
    %272 = vmatpush1.bf16.msra.mxu0 0
    %273 = vmatprep.subr.bf16.mxu0 0
    %274 = vmatpush1.bf16.msra.mxu0 0
    %275 = vmatprep.mubr.bf16.mxu0 0
    %276 = vmatmul.mubr.bf16.gmra.mrb[0].mxu0 %v94
    %v277 = vpop.f32.mrb[0].mxu0
    %v278 = vadd.f32 %v73, %v277
    %v279 = vpop.f32.mrb[0].mxu0
    %v280 = vadd.f32 %v77, %v279
    %v281 = vpop.f32.mrb[0].mxu0
    %v282 = vadd.f32 %v73, %v281
    %v283 = vpop.f32.mrb[0].mxu0
    %v284 = vadd.f32 %v77, %v283
    %285 = vmatprep.mubr.bf16.mxu0 0
    %286 = vmatmul.mubr.bf16.gmra.mrb[0].mxu0 %v97
    %v287 = vpop.f32.mrb[0].mxu0
    %v288 = vadd.f32 %v73, %v287
    %v289 = vpop.f32.mrb[0].mxu0
    %v290 = vadd.f32 %v77, %v289
    %v291 = vpop.f32.mrb[0].mxu0
    %v292 = vadd.f32 %v73, %v291
    %v293 = vpop.f32.mrb[0].mxu0
    %v294 = vadd.f32 %v77, %v293
    %295 = vmatprep.mubr.bf16.mxu0 0
    %296 = vmatmul.mubr.bf16.gmra.mrb[0].mxu0 %v100
    %v297 = vpop.f32.mrb[0].mxu0
    %v298 = vadd.f32 %v73, %v297
    %v299 = vpop.f32.mrb[0].mxu0
    %v300 = vadd.f32 %v77, %v299
    %v301 = vpop.f32.mrb[0].mxu0
    %v302 = vadd.f32 %v73, %v301
    %v303 = vpop.f32.mrb[0].mxu0
    %v304 = vadd.f32 %v77, %v303
    %305 = vmatprep.mubr.bf16.mxu0 0
    %306 = vmatmul.mubr.bf16.gmra.mrb[0].mxu0 %v103
    %v307 = vpop.f32.mrb[0].mxu0
    %v308 = vadd.f32 %v73, %v307
    %v309 = vpop.f32.mrb[0].mxu0
    %v310 = vadd.f32 %v77, %v309
    %v311 = vpop.f32.mrb[0].mxu0
    %v312 = vadd.f32 %v73, %v311
    %v313 = vpop.f32.mrb[0].mxu0
    %v314 = vadd.f32 %v77, %v313
    %315 = vmatprep.mubr.bf16.mxu0 0
    %316 = vmatmul.mubr.bf16.gmra.mrb[0].mxu0 %v106
    %v317 = vpop.f32.mrb[0].mxu0
    %v318 = vadd.f32 %v73, %v317
    %v319 = vpop.f32.mrb[0].mxu0
    %v320 = vadd.f32 %v77, %v319
    %v321 = vpop.f32.mrb[0].mxu0
    %v322 = vadd.f32 %v73, %v321
    %v323 = vpop.f32.mrb[0].mxu0
    %v324 = vadd.f32 %v77, %v323
    %325 = vmatprep.mubr.bf16.mxu0 0
    %326 = vmatmul.mubr.bf16.gmra.mrb[0].mxu0 %v109
    %v327 = vpop.f32.mrb[0].mxu0
    %v328 = vadd.f32 %v73, %v327
    %v329 = vpop.f32.mrb[0].mxu0
    %v330 = vadd.f32 %v77, %v329
    %v331 = vpop.f32.mrb[0].mxu0
    %v332 = vadd.f32 %v73, %v331
    %v333 = vpop.f32.mrb[0].mxu0
    %v334 = vadd.f32 %v77, %v333
    %335 = vmatprep.mubr.bf16.mxu0 0
    %336 = vmatmul.mubr.bf16.gmra.mrb[0].mxu0 %v112
    %v337 = vpop.f32.mrb[0].mxu0
    %v338 = vadd.f32 %v73, %v337
    %v339 = vpop.f32.mrb[0].mxu0
    %v340 = vadd.f32 %v77, %v339
    %v341 = vpop.f32.mrb[0].mxu0
    %v342 = vadd.f32 %v73, %v341
    %v343 = vpop.f32.mrb[0].mxu0
    %v344 = vadd.f32 %v77, %v343
    %345 = vmatprep.mubr.bf16.mxu0 0
    %346 = vmatmul.mubr.bf16.gmra.mrb[0].mxu0 %v115
    %v347 = vpop.f32.mrb[0].mxu0
    %v348 = vadd.f32 %v73, %v347
    %v349 = vpop.f32.mrb[0].mxu0
    %v350 = vadd.f32 %v77, %v349
    %v351 = vpop.f32.mrb[0].mxu0
    %v352 = vadd.f32 %v73, %v351
    %v353 = vpop.f32.mrb[0].mxu0
    %v354 = vadd.f32 %v77, %v353
    %355 = vdwg.mxu0
    %356 = vst [vmem:[#allocation2] sm:$0xff] %v165
    %357 = vst [vmem:[#allocation2 + $0x8] sm:$0xff] %v167
    %358 = vst [vmem:[#allocation2 + $0x10] sm:$0xff] %v278
    %359 = vst [vmem:[#allocation2 + $0x18] sm:$0xff] %v280
    %360 = vst [vmem:[#allocation2 + $0x20] sm:$0xff] %v169
    %361 = vst [vmem:[#allocation2 + $0x28] sm:$0xff] %v171
    %362 = vst [vmem:[#allocation2 + $0x30] sm:$0xff] %v282
    %363 = vst [vmem:[#allocation2 + $0x38] sm:$0xff] %v284
    %364 = vst [vmem:[#allocation2 + $0x40] sm:$0xff] %v175
    %365 = vst [vmem:[#allocation2 + $0x48] sm:$0xff] %v177
    %366 = vst [vmem:[#allocation2 + $0x50] sm:$0xff] %v288
    %367 = vst [vmem:[#allocation2 + $0x58] sm:$0xff] %v290
    %368 = vst [vmem:[#allocation2 + $0x60] sm:$0xff] %v179
    %369 = vst [vmem:[#allocation2 + $0x68] sm:$0xff] %v181
    %370 = vst [vmem:[#allocation2 + $0x70] sm:$0xff] %v292
    %371 = vst [vmem:[#allocation2 + $0x78] sm:$0xff] %v294
    %372 = vst [vmem:[#allocation2 + $0x80] sm:$0xff] %v185
    %373 = vst [vmem:[#allocation2 + $0x88] sm:$0xff] %v187
    %374 = vst [vmem:[#allocation2 + $0x90] sm:$0xff] %v298
    %375 = vst [vmem:[#allocation2 + $0x98] sm:$0xff] %v300
    %376 = vst [vmem:[#allocation2 + $0xa0] sm:$0xff] %v189
    %377 = vst [vmem:[#allocation2 + $0xa8] sm:$0xff] %v191
    %378 = vst [vmem:[#allocation2 + $0xb0] sm:$0xff] %v302
    %379 = vst [vmem:[#allocation2 + $0xb8] sm:$0xff] %v304
    %380 = vst [vmem:[#allocation2 + $0xc0] sm:$0xff] %v195
    %381 = vst [vmem:[#allocation2 + $0xc8] sm:$0xff] %v197
    %382 = vst [vmem:[#allocation2 + $0xd0] sm:$0xff] %v308
    %383 = vst [vmem:[#allocation2 + $0xd8] sm:$0xff] %v310
    %384 = vst [vmem:[#allocation2 + $0xe0] sm:$0xff] %v199
    %385 = vst [vmem:[#allocation2 + $0xe8] sm:$0xff] %v201
    %386 = vst [vmem:[#allocation2 + $0xf0] sm:$0xff] %v312
    %387 = vst [vmem:[#allocation2 + $0xf8] sm:$0xff] %v314
    %388 = vst [vmem:[#allocation2 + $0x100] sm:$0xff] %v205
    %389 = vst [vmem:[#allocation2 + $0x108] sm:$0xff] %v207
    %390 = vst [vmem:[#allocation2 + $0x110] sm:$0xff] %v318
    %391 = vst [vmem:[#allocation2 + $0x118] sm:$0xff] %v320
    %392 = vst [vmem:[#allocation2 + $0x120] sm:$0xff] %v209
    %393 = vst [vmem:[#allocation2 + $0x128] sm:$0xff] %v211
    %394 = vst [vmem:[#allocation2 + $0x130] sm:$0xff] %v322
    %395 = vst [vmem:[#allocation2 + $0x138] sm:$0xff] %v324
    %396 = vst [vmem:[#allocation2 + $0x140] sm:$0xff] %v215
    %397 = vst [vmem:[#allocation2 + $0x148] sm:$0xff] %v217
    %398 = vst [vmem:[#allocation2 + $0x150] sm:$0xff] %v328
    %399 = vst [vmem:[#allocation2 + $0x158] sm:$0xff] %v330
    %400 = vst [vmem:[#allocation2 + $0x160] sm:$0xff] %v219
    %401 = vst [vmem:[#allocation2 + $0x168] sm:$0xff] %v221
    %402 = vst [vmem:[#allocation2 + $0x170] sm:$0xff] %v332
    %403 = vst [vmem:[#allocation2 + $0x178] sm:$0xff] %v334
    %404 = vst [vmem:[#allocation2 + $0x180] sm:$0xff] %v225
    %405 = vst [vmem:[#allocation2 + $0x188] sm:$0xff] %v227
    %406 = vst [vmem:[#allocation2 + $0x190] sm:$0xff] %v338
    %407 = vst [vmem:[#allocation2 + $0x198] sm:$0xff] %v340
    %408 = vst [vmem:[#allocation2 + $0x1a0] sm:$0xff] %v229
    %409 = vst [vmem:[#allocation2 + $0x1a8] sm:$0xff] %v231
    %410 = vst [vmem:[#allocation2 + $0x1b0] sm:$0xff] %v342
    %411 = vst [vmem:[#allocation2 + $0x1b8] sm:$0xff] %v344
    %412 = vst [vmem:[#allocation2 + $0x1c0] sm:$0xff] %v235
    %413 = vst [vmem:[#allocation2 + $0x1c8] sm:$0xff] %v237
    %414 = vst [vmem:[#allocation2 + $0x1d0] sm:$0xff] %v348
    %415 = vst [vmem:[#allocation2 + $0x1d8] sm:$0xff] %v350
    %416 = vst [vmem:[#allocation2 + $0x1e0] sm:$0xff] %v239
    %417 = vst [vmem:[#allocation2 + $0x1e8] sm:$0xff] %v241
    %418 = vst [vmem:[#allocation2 + $0x1f0] sm:$0xff] %v352
    %419 = vst [vmem:[#allocation2 + $0x1f8] sm:$0xff] %v354
    %v420 = vld [vmem:[%s2] sm:$0xff]
    %v421 = vld [vmem:[%s2 + $0x8] sm:$0xff]
    %v422 = vld [vmem:[%s2 + $0x10] sm:$0xff]
    %v423 = vld [vmem:[%s2 + $0x18] sm:$0xff]
    %v424 = vld [vmem:[%s2 + $0x20] sm:$0xff]
    %v425 = vld [vmem:[%s2 + $0x28] sm:$0xff]
    %v426 = vld [vmem:[%s2 + $0x30] sm:$0xff]
    %v427 = vld [vmem:[%s2 + $0x38] sm:$0xff]
    %v428 = vld [vmem:[%s2 + $0x40] sm:$0xff]
    %v429 = vld [vmem:[%s2 + $0x48] sm:$0xff]
    %v430 = vld [vmem:[%s2 + $0x50] sm:$0xff]
    %v431 = vld [vmem:[%s2 + $0x58] sm:$0xff]
    %v432 = vld [vmem:[%s2 + $0x60] sm:$0xff]
    %v433 = vld [vmem:[%s2 + $0x68] sm:$0xff]
    %v434 = vld [vmem:[%s2 + $0x70] sm:$0xff]
    %v435 = vld [vmem:[%s2 + $0x78] sm:$0xff]
    %v436 = vld [vmem:[%s2 + $0x80] sm:$0xff]
    %v437 = vld [vmem:[%s2 + $0x88] sm:$0xff]
    %v438 = vld [vmem:[%s2 + $0x90] sm:$0xff]
    %v439 = vld [vmem:[%s2 + $0x98] sm:$0xff]
    %v440 = vld [vmem:[%s2 + $0xa0] sm:$0xff]
    %v441 = vld [vmem:[%s2 + $0xa8] sm:$0xff]
    %v442 = vld [vmem:[%s2 + $0xb0] sm:$0xff]
    %v443 = vld [vmem:[%s2 + $0xb8] sm:$0xff]
    %v444 = vld [vmem:[%s2 + $0xc0] sm:$0xff]
    %v445 = vld [vmem:[%s2 + $0xc8] sm:$0xff]
    %v446 = vld [vmem:[%s2 + $0xd0] sm:$0xff]
    %v447 = vld [vmem:[%s2 + $0xd8] sm:$0xff]
    %v448 = vld [vmem:[%s2 + $0xe0] sm:$0xff]
    %v449 = vld [vmem:[%s2 + $0xe8] sm:$0xff]
    %v450 = vld [vmem:[%s2 + $0xf0] sm:$0xff]
    %v451 = vld [vmem:[%s2 + $0xf8] sm:$0xff]
    %s452 = smul.u32 0, 4
    %s453 = smul.addr %s452, 8
    %s454 = scalar_lea.vmem [#allocation2], %s453
    %v455 = vld [vmem:[%s454] sm:$0xff]
    %v456 = vld [vmem:[%s454 + $0x8] sm:$0xff]
    %v457 = vld [vmem:[%s454 + $0x10] sm:$0xff]
    %v458 = vld [vmem:[%s454 + $0x18] sm:$0xff]
    %v491 = vunpack.c.l.b16 %v420
    %v492 = vunpack.c.h.b16 %v420
    %v493 = vunpack.c.l.b16 %v421
    %v494 = vunpack.c.h.b16 %v421
    %v495 = vunpack.c.l.b16 %v422
    %v496 = vunpack.c.h.b16 %v422
    %v497 = vunpack.c.l.b16 %v423
    %v498 = vunpack.c.h.b16 %v423
    %v499 = vunpack.c.l.b16 %v424
    %v500 = vunpack.c.h.b16 %v424
    %v501 = vunpack.c.l.b16 %v425
    %v502 = vunpack.c.h.b16 %v425
    %v503 = vunpack.c.l.b16 %v426
    %v504 = vunpack.c.h.b16 %v426
    %v505 = vunpack.c.l.b16 %v427
    %v506 = vunpack.c.h.b16 %v427
    %v507 = vunpack.c.l.b16 %v428
    %v508 = vunpack.c.h.b16 %v428
    %v509 = vunpack.c.l.b16 %v429
    %v510 = vunpack.c.h.b16 %v429
    %v511 = vunpack.c.l.b16 %v430
    %v512 = vunpack.c.h.b16 %v430
    %v513 = vunpack.c.l.b16 %v431
    %v514 = vunpack.c.h.b16 %v431
    %v515 = vunpack.c.l.b16 %v432
    %v516 = vunpack.c.h.b16 %v432
    %v517 = vunpack.c.l.b16 %v433
    %v518 = vunpack.c.h.b16 %v433
    %v519 = vunpack.c.l.b16 %v434
    %v520 = vunpack.c.h.b16 %v434
    %v521 = vunpack.c.l.b16 %v435
    %v522 = vunpack.c.h.b16 %v435
    %v523 = vunpack.c.l.b16 %v436
    %v524 = vunpack.c.h.b16 %v436
    %v525 = vunpack.c.l.b16 %v437
    %v526 = vunpack.c.h.b16 %v437
    %v527 = vunpack.c.l.b16 %v438
    %v528 = vunpack.c.h.b16 %v438
    %v529 = vunpack.c.l.b16 %v439
    %v530 = vunpack.c.h.b16 %v439
    %v531 = vunpack.c.l.b16 %v440
    %v532 = vunpack.c.h.b16 %v440
    %v533 = vunpack.c.l.b16 %v441
    %v534 = vunpack.c.h.b16 %v441
    %v535 = vunpack.c.l.b16 %v442
    %v536 = vunpack.c.h.b16 %v442
    %v537 = vunpack.c.l.b16 %v443
    %v538 = vunpack.c.h.b16 %v443
    %v539 = vunpack.c.l.b16 %v444
    %v540 = vunpack.c.h.b16 %v444
    %v541 = vunpack.c.l.b16 %v445
    %v542 = vunpack.c.h.b16 %v445
    %v543 = vunpack.c.l.b16 %v446
    %v544 = vunpack.c.h.b16 %v446
    %v545 = vunpack.c.l.b16 %v447
    %v546 = vunpack.c.h.b16 %v447
    %v547 = vunpack.c.l.b16 %v448
    %v548 = vunpack.c.h.b16 %v448
    %v549 = vunpack.c.l.b16 %v449
    %v550 = vunpack.c.h.b16 %v449
    %v551 = vunpack.c.l.b16 %v450
    %v552 = vunpack.c.h.b16 %v450
    %v553 = vunpack.c.l.b16 %v451
    %v554 = vunpack.c.h.b16 %v451
    %v555 = vpack.c.b16 %v495, %v491
    %v556 = vpack.c.b16 %v496, %v492
    %v557 = vpack.c.b16 %v497, %v493
    %v558 = vpack.c.b16 %v498, %v494
    %v559 = vpack.c.b16 %v503, %v499
    %v560 = vpack.c.b16 %v504, %v500
    %v561 = vpack.c.b16 %v505, %v501
    %v562 = vpack.c.b16 %v506, %v502
    %v563 = vpack.c.b16 %v511, %v507
    %v564 = vpack.c.b16 %v512, %v508
    %v565 = vpack.c.b16 %v513, %v509
    %v566 = vpack.c.b16 %v514, %v510
    %v567 = vpack.c.b16 %v519, %v515
    %v568 = vpack.c.b16 %v520, %v516
    %v569 = vpack.c.b16 %v521, %v517
    %v570 = vpack.c.b16 %v522, %v518
    %v571 = vpack.c.b16 %v527, %v523
    %v572 = vpack.c.b16 %v528, %v524
    %v573 = vpack.c.b16 %v529, %v525
    %v574 = vpack.c.b16 %v530, %v526
    %v575 = vpack.c.b16 %v535, %v531
    %v576 = vpack.c.b16 %v536, %v532
    %v577 = vpack.c.b16 %v537, %v533
    %v578 = vpack.c.b16 %v538, %v534
    %v579 = vpack.c.b16 %v543, %v539
    %v580 = vpack.c.b16 %v544, %v540
    %v581 = vpack.c.b16 %v545, %v541
    %v582 = vpack.c.b16 %v546, %v542
    %v583 = vpack.c.b16 %v551, %v547
    %v584 = vpack.c.b16 %v552, %v548
    %v585 = vpack.c.b16 %v553, %v549
    %v586 = vpack.c.b16 %v554, %v550
    %619 = vmatprep.subr.bf16.mxu0 %v556
    %620 = vmatpush1.bf16.msra.mxu0 %v555
    %621 = vmatprep.subr.bf16.mxu0 %v560
    %622 = vmatpush1.bf16.msra.mxu0 %v559
    %623 = vmatprep.subr.bf16.mxu0 %v564
    %624 = vmatpush1.bf16.msra.mxu0 %v563
    %625 = vmatprep.subr.bf16.mxu0 %v568
    %626 = vmatpush1.bf16.msra.mxu0 %v567
    %627 = vmatprep.subr.bf16.mxu0 %v572
    %628 = vmatpush1.bf16.msra.mxu0 %v571
    %629 = vmatprep.subr.bf16.mxu0 %v576
    %630 = vmatpush1.bf16.msra.mxu0 %v575
    %631 = vmatprep.subr.bf16.mxu0 %v580
    %632 = vmatpush1.bf16.msra.mxu0 %v579
    %633 = vmatprep.subr.bf16.mxu0 %v584
    %634 = vmatpush1.bf16.msra.mxu0 %v583
    %635 = vmatprep.subr.bf16.mxu0 0
    %636 = vmatpush1.bf16.msra.mxu0 0
    %637 = vmatprep.subr.bf16.mxu0 0
    %638 = vmatpush1.bf16.msra.mxu0 0
    %639 = vmatprep.subr.bf16.mxu0 0
    %640 = vmatpush1.bf16.msra.mxu0 0
    %641 = vmatprep.subr.bf16.mxu0 0
    %642 = vmatpush1.bf16.msra.mxu0 0
    %643 = vmatprep.subr.bf16.mxu0 0
    %644 = vmatpush1.bf16.msra.mxu0 0
    %645 = vmatprep.subr.bf16.mxu0 0
    %646 = vmatpush1.bf16.msra.mxu0 0
    %647 = vmatprep.subr.bf16.mxu0 0
    %648 = vmatpush1.bf16.msra.mxu0 0
    %649 = vmatprep.subr.bf16.mxu0 0
    %650 = vmatpush1.bf16.msra.mxu0 0
    %651 = vmatprep.mubr.bf16.mxu0 0
    %652 = vmatmul.mubr.bf16.gmra.mrb[0].mxu0 0
    %v653 = vpop.f32.mrb[0].mxu0
    %v654 = vadd.f32 0.0, %v653
    %v655 = vpop.f32.mrb[0].mxu0
    %v656 = vadd.f32 0.0, %v655
    %v657 = vpop.f32.mrb[0].mxu0
    %v658 = vpop.f32.mrb[0].mxu0
    %659 = vdwg.mxu0
    %660 = vmatprep.subr.bf16.mxu0 %v558
    %661 = vmatpush1.bf16.msra.mxu0 %v557
    %662 = vmatprep.subr.bf16.mxu0 %v562
    %663 = vmatpush1.bf16.msra.mxu0 %v561
    %664 = vmatprep.subr.bf16.mxu0 %v566
    %665 = vmatpush1.bf16.msra.mxu0 %v565
    %666 = vmatprep.subr.bf16.mxu0 %v570
    %667 = vmatpush1.bf16.msra.mxu0 %v569
    %668 = vmatprep.subr.bf16.mxu0 %v574
    %669 = vmatpush1.bf16.msra.mxu0 %v573
    %670 = vmatprep.subr.bf16.mxu0 %v578
    %671 = vmatpush1.bf16.msra.mxu0 %v577
    %672 = vmatprep.subr.bf16.mxu0 %v582
    %673 = vmatpush1.bf16.msra.mxu0 %v581
    %674 = vmatprep.subr.bf16.mxu0 %v586
    %675 = vmatpush1.bf16.msra.mxu0 %v585
    %676 = vmatprep.subr.bf16.mxu0 0
    %677 = vmatpush1.bf16.msra.mxu0 0
    %678 = vmatprep.subr.bf16.mxu0 0
    %679 = vmatpush1.bf16.msra.mxu0 0
    %680 = vmatprep.subr.bf16.mxu0 0
    %681 = vmatpush1.bf16.msra.mxu0 0
    %682 = vmatprep.subr.bf16.mxu0 0
    %683 = vmatpush1.bf16.msra.mxu0 0
    %684 = vmatprep.subr.bf16.mxu0 0
    %685 = vmatpush1.bf16.msra.mxu0 0
    %686 = vmatprep.subr.bf16.mxu0 0
    %687 = vmatpush1.bf16.msra.mxu0 0
    %688 = vmatprep.subr.bf16.mxu0 0
    %689 = vmatpush1.bf16.msra.mxu0 0
    %690 = vmatprep.subr.bf16.mxu0 0
    %691 = vmatpush1.bf16.msra.mxu0 0
    %692 = vmatprep.mubr.bf16.mxu0 0
    %693 = vmatmul.mubr.bf16.gmra.mrb[0].mxu0 0
    %v694 = vpop.f32.mrb[0].mxu0
    %v695 = vadd.f32 0.0, %v694
    %v696 = vpop.f32.mrb[0].mxu0
    %v697 = vadd.f32 0.0, %v696
    %v698 = vpop.f32.mrb[0].mxu0
    %v699 = vpop.f32.mrb[0].mxu0
    %700 = vdwg.mxu0
    %v701 = vadd.f32 %v455, %v654
    %v702 = vadd.f32 %v456, %v656
    %v703 = vadd.f32 %v457, %v695
    %v704 = vadd.f32 %v458, %v697
    %v705 = vmul.f32 %v701, 0.5
    %v706 = vtanh.pop %v705
    %v707 = vmul.f32 %v706, 0.5
    %v708 = vadd.f32 %v707, 0.5
    %v709 = vmul.f32 %v702, 0.5
    %v710 = vtanh.pop %v709
    %v711 = vmul.f32 %v710, 0.5
    %v712 = vadd.f32 %v711, 0.5
    %v713 = vtanh.pop %v703
    %v714 = vmul.f32 %v704, 0.5
    %v715 = vtanh.pop %v714
    %v716 = vmul.f32 %v715, 0.5
    %v717 = vadd.f32 %v716, 0.5
    %v718 = vmul.f32 %v712, 0.0
    %v719 = vmul.f32 %v708, %v713
    %v720 = vadd.f32 %v718, %v719
    %v721 = vtanh.pop %v720
    %v722 = vmul.f32 %v717, %v721
    %723 = vst [vmem:[#allocation3] sm:$0xff] %v722
    %s724 = smul.u32 1, 4
    %s725 = smul.addr %s724, 8
    %s726 = scalar_lea.vmem [#allocation2], %s725
    %v727 = vld [vmem:[%s726] sm:$0xff]
    %v728 = vld [vmem:[%s726 + $0x8] sm:$0xff]
    %v729 = vld [vmem:[%s726 + $0x10] sm:$0xff]
    %v730 = vld [vmem:[%s726 + $0x18] sm:$0xff]
    %v731 = vpack.c.bf16 %v722, %v722
    %732 = vmatprep.subr.bf16.mxu0 %v556
    %733 = vmatpush1.bf16.msra.mxu0 %v555
    %734 = vmatprep.subr.bf16.mxu0 %v560
    %735 = vmatpush1.bf16.msra.mxu0 %v559
    %736 = vmatprep.subr.bf16.mxu0 %v564
    %737 = vmatpush1.bf16.msra.mxu0 %v563
    %738 = vmatprep.subr.bf16.mxu0 %v568
    %739 = vmatpush1.bf16.msra.mxu0 %v567
    %740 = vmatprep.subr.bf16.mxu0 %v572
    %741 = vmatpush1.bf16.msra.mxu0 %v571
    %742 = vmatprep.subr.bf16.mxu0 %v576
    %743 = vmatpush1.bf16.msra.mxu0 %v575
    %744 = vmatprep.subr.bf16.mxu0 %v580
    %745 = vmatpush1.bf16.msra.mxu0 %v579
    %746 = vmatprep.subr.bf16.mxu0 %v584
    %747 = vmatpush1.bf16.msra.mxu0 %v583
    %748 = vmatprep.subr.bf16.mxu0 0
    %749 = vmatpush1.bf16.msra.mxu0 0
    %750 = vmatprep.subr.bf16.mxu0 0
    %751 = vmatpush1.bf16.msra.mxu0 0
    %752 = vmatprep.subr.bf16.mxu0 0
    %753 = vmatpush1.bf16.msra.mxu0 0
    %754 = vmatprep.subr.bf16.mxu0 0
    %755 = vmatpush1.bf16.msra.mxu0 0
    %756 = vmatprep.subr.bf16.mxu0 0
    %757 = vmatpush1.bf16.msra.mxu0 0
    %758 = vmatprep.subr.bf16.mxu0 0
    %759 = vmatpush1.bf16.msra.mxu0 0
    %760 = vmatprep.subr.bf16.mxu0 0
    %761 = vmatpush1.bf16.msra.mxu0 0
    %762 = vmatprep.subr.bf16.mxu0 0
    %763 = vmatpush1.bf16.msra.mxu0 0
    %764 = vmatprep.mubr.bf16.mxu0 0
    %765 = vmatmul.mubr.bf16.gmra.mrb[0].mxu0 %v731
    %v766 = vpop.f32.mrb[0].mxu0
    %v767 = vadd.f32 0.0, %v766
    %v768 = vpop.f32.mrb[0].mxu0
    %v769 = vadd.f32 0.0, %v768
    %v770 = vpop.f32.mrb[0].mxu0
    %v771 = vpop.f32.mrb[0].mxu0
    %772 = vdwg.mxu0
    %773 = vmatprep.subr.bf16.mxu0 %v558
    %774 = vmatpush1.bf16.msra.mxu0 %v557
    %775 = vmatprep.subr.bf16.mxu0 %v562
    %776 = vmatpush1.bf16.msra.mxu0 %v561
    %777 = vmatprep.subr.bf16.mxu0 %v566
    %778 = vmatpush1.bf16.msra.mxu0 %v565
    %779 = vmatprep.subr.bf16.mxu0 %v570
    %780 = vmatpush1.bf16.msra.mxu0 %v569
    %781 = vmatprep.subr.bf16.mxu0 %v574
    %782 = vmatpush1.bf16.msra.mxu0 %v573
    %783 = vmatprep.subr.bf16.mxu0 %v578
    %784 = vmatpush1.bf16.msra.mxu0 %v577
    %785 = vmatprep.subr.bf16.mxu0 %v582
    %786 = vmatpush1.bf16.msra.mxu0 %v581
    %787 = vmatprep.subr.bf16.mxu0 %v586
    %788 = vmatpush1.bf16.msra.mxu0 %v585
    %789 = vmatprep.subr.bf16.mxu0 0
    %790 = vmatpush1.bf16.msra.mxu0 0
    %791 = vmatprep.subr.bf16.mxu0 0
    %792 = vmatpush1.bf16.msra.mxu0 0
    %793 = vmatprep.subr.bf16.mxu0 0
    %794 = vmatpush1.bf16.msra.mxu0 0
    %795 = vmatprep.subr.bf16.mxu0 0
    %796 = vmatpush1.bf16.msra.mxu0 0
    %797 = vmatprep.subr.bf16.mxu0 0
    %798 = vmatpush1.bf16.msra.mxu0 0
    %799 = vmatprep.subr.bf16.mxu0 0
    %800 = vmatpush1.bf16.msra.mxu0 0
    %801 = vmatprep.subr.bf16.mxu0 0
    %802 = vmatpush1.bf16.msra.mxu0 0
    %803 = vmatprep.subr.bf16.mxu0 0
    %804 = vmatpush1.bf16.msra.mxu0 0
    %805 = vmatprep.mubr.bf16.mxu0 0
    %806 = vmatmul.mubr.bf16.gmra.mrb[0].mxu0 %v731
    %v807 = vpop.f32.mrb[0].mxu0
    %v808 = vadd.f32 0.0, %v807
    %v809 = vpop.f32.mrb[0].mxu0
    %v810 = vadd.f32 0.0, %v809
    %v811 = vpop.f32.mrb[0].mxu0
    %v812 = vpop.f32.mrb[0].mxu0
    %813 = vdwg.mxu0
    %v814 = vadd.f32 %v727, %v767
    %v815 = vadd.f32 %v728, %v769
    %v816 = vadd.f32 %v729, %v808
    %v817 = vadd.f32 %v730, %v810
    %v818 = vmul.f32 %v814, 0.5
    %v819 = vtanh.pop %v818
    %v820 = vmul.f32 %v819, 0.5
    %v821 = vadd.f32 %v820, 0.5
    %v822 = vmul.f32 %v815, 0.5
    %v823 = vtanh.pop %v822
    %v824 = vmul.f32 %v823, 0.5
    %v825 = vadd.f32 %v824, 0.5
    %v826 = vtanh.pop %v816
    %v827 = vmul.f32 %v817, 0.5
    %v828 = vtanh.pop %v827
    %v829 = vmul.f32 %v828, 0.5
    %v830 = vadd.f32 %v829, 0.5
    %v831 = vmul.f32 %v825, %v720
    %v832 = vmul.f32 %v821, %v826
    %v833 = vadd.f32 %v831, %v832
    %v834 = vtanh.pop %v833
    %v835 = vmul.f32 %v830, %v834
    %s836 = scalar_lea.vmem [#allocation3], 8
    %837 = vst [vmem:[%s836] sm:$0xff] %v835
    %s838 = smul.u32 2, 4
    %s839 = smul.addr %s838, 8
    %s840 = scalar_lea.vmem [#allocation2], %s839
    %v841 = vld [vmem:[%s840] sm:$0xff]
    %v842 = vld [vmem:[%s840 + $0x8] sm:$0xff]
    %v843 = vld [vmem:[%s840 + $0x10] sm:$0xff]
    %v844 = vld [vmem:[%s840 + $0x18] sm:$0xff]
    %v845 = vpack.c.bf16 %v835, %v835
    %846 = vmatprep.subr.bf16.mxu0 %v556
    %847 = vmatpush1.bf16.msra.mxu0 %v555
    %848 = vmatprep.subr.bf16.mxu0 %v560
    %849 = vmatpush1.bf16.msra.mxu0 %v559
    %850 = vmatprep.subr.bf16.mxu0 %v564
    %851 = vmatpush1.bf16.msra.mxu0 %v563
    %852 = vmatprep.subr.bf16.mxu0 %v568
    %853 = vmatpush1.bf16.msra.mxu0 %v567
    %854 = vmatprep.subr.bf16.mxu0 %v572
    %855 = vmatpush1.bf16.msra.mxu0 %v571
    %856 = vmatprep.subr.bf16.mxu0 %v576
    %857 = vmatpush1.bf16.msra.mxu0 %v575
    %858 = vmatprep.subr.bf16.mxu0 %v580
    %859 = vmatpush1.bf16.msra.mxu0 %v579
    %860 = vmatprep.subr.bf16.mxu0 %v584
    %861 = vmatpush1.bf16.msra.mxu0 %v583
    %862 = vmatprep.subr.bf16.mxu0 0
    %863 = vmatpush1.bf16.msra.mxu0 0
    %864 = vmatprep.subr.bf16.mxu0 0
    %865 = vmatpush1.bf16.msra.mxu0 0
    %866 = vmatprep.subr.bf16.mxu0 0
    %867 = vmatpush1.bf16.msra.mxu0 0
    %868 = vmatprep.subr.bf16.mxu0 0
    %869 = vmatpush1.bf16.msra.mxu0 0
    %870 = vmatprep.subr.bf16.mxu0 0
    %871 = vmatpush1.bf16.msra.mxu0 0
    %872 = vmatprep.subr.bf16.mxu0 0
    %873 = vmatpush1.bf16.msra.mxu0 0
    %874 = vmatprep.subr.bf16.mxu0 0
    %875 = vmatpush1.bf16.msra.mxu0 0
    %876 = vmatprep.subr.bf16.mxu0 0
    %877 = vmatpush1.bf16.msra.mxu0 0
    %878 = vmatprep.mubr.bf16.mxu0 0
    %879 = vmatmul.mubr.bf16.gmra.mrb[0].mxu0 %v845
    %v880 = vpop.f32.mrb[0].mxu0
    %v881 = vadd.f32 0.0, %v880
    %v882 = vpop.f32.mrb[0].mxu0
    %v883 = vadd.f32 0.0, %v882
    %v884 = vpop.f32.mrb[0].mxu0
    %v885 = vpop.f32.mrb[0].mxu0
    %886 = vdwg.mxu0
    %887 = vmatprep.subr.bf16.mxu0 %v558
    %888 = vmatpush1.bf16.msra.mxu0 %v557
    %889 = vmatprep.subr.bf16.mxu0 %v562
    %890 = vmatpush1.bf16.msra.mxu0 %v561
    %891 = vmatprep.subr.bf16.mxu0 %v566
    %892 = vmatpush1.bf16.msra.mxu0 %v565
    %893 = vmatprep.subr.bf16.mxu0 %v570
    %894 = vmatpush1.bf16.msra.mxu0 %v569
    %895 = vmatprep.subr.bf16.mxu0 %v574
    %896 = vmatpush1.bf16.msra.mxu0 %v573
    %897 = vmatprep.subr.bf16.mxu0 %v578
    %898 = vmatpush1.bf16.msra.mxu0 %v577
    %899 = vmatprep.subr.bf16.mxu0 %v582
    %900 = vmatpush1.bf16.msra.mxu0 %v581
    %901 = vmatprep.subr.bf16.mxu0 %v586
    %902 = vmatpush1.bf16.msra.mxu0 %v585
    %903 = vmatprep.subr.bf16.mxu0 0
    %904 = vmatpush1.bf16.msra.mxu0 0
    %905 = vmatprep.subr.bf16.mxu0 0
    %906 = vmatpush1.bf16.msra.mxu0 0
    %907 = vmatprep.subr.bf16.mxu0 0
    %908 = vmatpush1.bf16.msra.mxu0 0
    %909 = vmatprep.subr.bf16.mxu0 0
    %910 = vmatpush1.bf16.msra.mxu0 0
    %911 = vmatprep.subr.bf16.mxu0 0
    %912 = vmatpush1.bf16.msra.mxu0 0
    %913 = vmatprep.subr.bf16.mxu0 0
    %914 = vmatpush1.bf16.msra.mxu0 0
    %915 = vmatprep.subr.bf16.mxu0 0
    %916 = vmatpush1.bf16.msra.mxu0 0
    %917 = vmatprep.subr.bf16.mxu0 0
    %918 = vmatpush1.bf16.msra.mxu0 0
    %919 = vmatprep.mubr.bf16.mxu0 0
    %920 = vmatmul.mubr.bf16.gmra.mrb[0].mxu0 %v845
    %v921 = vpop.f32.mrb[0].mxu0
    %v922 = vadd.f32 0.0, %v921
    %v923 = vpop.f32.mrb[0].mxu0
    %v924 = vadd.f32 0.0, %v923
    %v925 = vpop.f32.mrb[0].mxu0
    %v926 = vpop.f32.mrb[0].mxu0
    %927 = vdwg.mxu0
    %v928 = vadd.f32 %v841, %v881
    %v929 = vadd.f32 %v842, %v883
    %v930 = vadd.f32 %v843, %v922
    %v931 = vadd.f32 %v844, %v924
    %v932 = vmul.f32 %v928, 0.5
    %v933 = vtanh.pop %v932
    %v934 = vmul.f32 %v933, 0.5
    %v935 = vadd.f32 %v934, 0.5
    %v936 = vmul.f32 %v929, 0.5
    %v937 = vtanh.pop %v936
    %v938 = vmul.f32 %v937, 0.5
    %v939 = vadd.f32 %v938, 0.5
    %v940 = vtanh.pop %v930
    %v941 = vmul.f32 %v931, 0.5
    %v942 = vtanh.pop %v941
    %v943 = vmul.f32 %v942, 0.5
    %v944 = vadd.f32 %v943, 0.5
    %v945 = vmul.f32 %v939, %v833
    %v946 = vmul.f32 %v935, %v940
    %v947 = vadd.f32 %v945, %v946
    %v948 = vtanh.pop %v947
    %v949 = vmul.f32 %v944, %v948
    %s950 = scalar_lea.vmem [#allocation3], 16
    %951 = vst [vmem:[%s950] sm:$0xff] %v949
    %s952 = smul.u32 3, 4
    %s953 = smul.addr %s952, 8
    %s954 = scalar_lea.vmem [#allocation2], %s953
    %v955 = vld [vmem:[%s954] sm:$0xff]
    %v956 = vld [vmem:[%s954 + $0x8] sm:$0xff]
    %v957 = vld [vmem:[%s954 + $0x10] sm:$0xff]
    %v958 = vld [vmem:[%s954 + $0x18] sm:$0xff]
    %v959 = vpack.c.bf16 %v949, %v949
    %960 = vmatprep.subr.bf16.mxu0 %v556
    %961 = vmatpush1.bf16.msra.mxu0 %v555
    %962 = vmatprep.subr.bf16.mxu0 %v560
    %963 = vmatpush1.bf16.msra.mxu0 %v559
    %964 = vmatprep.subr.bf16.mxu0 %v564
    %965 = vmatpush1.bf16.msra.mxu0 %v563
    %966 = vmatprep.subr.bf16.mxu0 %v568
    %967 = vmatpush1.bf16.msra.mxu0 %v567
    %968 = vmatprep.subr.bf16.mxu0 %v572
    %969 = vmatpush1.bf16.msra.mxu0 %v571
    %970 = vmatprep.subr.bf16.mxu0 %v576
    %971 = vmatpush1.bf16.msra.mxu0 %v575
    %972 = vmatprep.subr.bf16.mxu0 %v580
    %973 = vmatpush1.bf16.msra.mxu0 %v579
    %974 = vmatprep.subr.bf16.mxu0 %v584
    %975 = vmatpush1.bf16.msra.mxu0 %v583
    %976 = vmatprep.subr.bf16.mxu0 0
    %977 = vmatpush1.bf16.msra.mxu0 0
    %978 = vmatprep.subr.bf16.mxu0 0
    %979 = vmatpush1.bf16.msra.mxu0 0
    %980 = vmatprep.subr.bf16.mxu0 0
    %981 = vmatpush1.bf16.msra.mxu0 0
    %982 = vmatprep.subr.bf16.mxu0 0
    %983 = vmatpush1.bf16.msra.mxu0 0
    %984 = vmatprep.subr.bf16.mxu0 0
    %985 = vmatpush1.bf16.msra.mxu0 0
    %986 = vmatprep.subr.bf16.mxu0 0
    %987 = vmatpush1.bf16.msra.mxu0 0
    %988 = vmatprep.subr.bf16.mxu0 0
    %989 = vmatpush1.bf16.msra.mxu0 0
    %990 = vmatprep.subr.bf16.mxu0 0
    %991 = vmatpush1.bf16.msra.mxu0 0
    %992 = vmatprep.mubr.bf16.mxu0 0
    %993 = vmatmul.mubr.bf16.gmra.mrb[0].mxu0 %v959
    %v994 = vpop.f32.mrb[0].mxu0
    %v995 = vadd.f32 0.0, %v994
    %v996 = vpop.f32.mrb[0].mxu0
    %v997 = vadd.f32 0.0, %v996
    %v998 = vpop.f32.mrb[0].mxu0
    %v999 = vpop.f32.mrb[0].mxu0
    %1000 = vdwg.mxu0
    %1001 = vmatprep.subr.bf16.mxu0 %v558
    %1002 = vmatpush1.bf16.msra.mxu0 %v557
    %1003 = vmatprep.subr.bf16.mxu0 %v562
    %1004 = vmatpush1.bf16.msra.mxu0 %v561
    %1005 = vmatprep.subr.bf16.mxu0 %v566
    %1006 = vmatpush1.bf16.msra.mxu0 %v565
    %1007 = vmatprep.subr.bf16.mxu0 %v570
    %1008 = vmatpush1.bf16.msra.mxu0 %v569
    %1009 = vmatprep.subr.bf16.mxu0 %v574
    %1010 = vmatpush1.bf16.msra.mxu0 %v573
    %1011 = vmatprep.subr.bf16.mxu0 %v578
    %1012 = vmatpush1.bf16.msra.mxu0 %v577
    %1013 = vmatprep.subr.bf16.mxu0 %v582
    %1014 = vmatpush1.bf16.msra.mxu0 %v581
    %1015 = vmatprep.subr.bf16.mxu0 %v586
    %1016 = vmatpush1.bf16.msra.mxu0 %v585
    %1017 = vmatprep.subr.bf16.mxu0 0
    %1018 = vmatpush1.bf16.msra.mxu0 0
    %1019 = vmatprep.subr.bf16.mxu0 0
    %1020 = vmatpush1.bf16.msra.mxu0 0
    %1021 = vmatprep.subr.bf16.mxu0 0
    %1022 = vmatpush1.bf16.msra.mxu0 0
    %1023 = vmatprep.subr.bf16.mxu0 0
    %1024 = vmatpush1.bf16.msra.mxu0 0
    %1025 = vmatprep.subr.bf16.mxu0 0
    %1026 = vmatpush1.bf16.msra.mxu0 0
    %1027 = vmatprep.subr.bf16.mxu0 0
    %1028 = vmatpush1.bf16.msra.mxu0 0
    %1029 = vmatprep.subr.bf16.mxu0 0
    %1030 = vmatpush1.bf16.msra.mxu0 0
    %1031 = vmatprep.subr.bf16.mxu0 0
    %1032 = vmatpush1.bf16.msra.mxu0 0
    %1033 = vmatprep.mubr.bf16.mxu0 0
    %1034 = vmatmul.mubr.bf16.gmra.mrb[0].mxu0 %v959
    %v1035 = vpop.f32.mrb[0].mxu0
    %v1036 = vadd.f32 0.0, %v1035
    %v1037 = vpop.f32.mrb[0].mxu0
    %v1038 = vadd.f32 0.0, %v1037
    %v1039 = vpop.f32.mrb[0].mxu0
    %v1040 = vpop.f32.mrb[0].mxu0
    %1041 = vdwg.mxu0
    %v1042 = vadd.f32 %v955, %v995
    %v1043 = vadd.f32 %v956, %v997
    %v1044 = vadd.f32 %v957, %v1036
    %v1045 = vadd.f32 %v958, %v1038
    %v1046 = vmul.f32 %v1042, 0.5
    %v1047 = vtanh.pop %v1046
    %v1048 = vmul.f32 %v1047, 0.5
    %v1049 = vadd.f32 %v1048, 0.5
    %v1050 = vmul.f32 %v1043, 0.5
    %v1051 = vtanh.pop %v1050
    %v1052 = vmul.f32 %v1051, 0.5
    %v1053 = vadd.f32 %v1052, 0.5
    %v1054 = vtanh.pop %v1044
    %v1055 = vmul.f32 %v1045, 0.5
    %v1056 = vtanh.pop %v1055
    %v1057 = vmul.f32 %v1056, 0.5
    %v1058 = vadd.f32 %v1057, 0.5
    %v1059 = vmul.f32 %v1053, %v947
    %v1060 = vmul.f32 %v1049, %v1054
    %v1061 = vadd.f32 %v1059, %v1060
    %v1062 = vtanh.pop %v1061
    %v1063 = vmul.f32 %v1058, %v1062
    %s1064 = scalar_lea.vmem [#allocation3], 24
    %1065 = vst [vmem:[%s1064] sm:$0xff] %v1063
    %s1066 = smul.u32 4, 4
    %s1067 = smul.addr %s1066, 8
    %s1068 = scalar_lea.vmem [#allocation2], %s1067
    %v1069 = vld [vmem:[%s1068] sm:$0xff]
    %v1070 = vld [vmem:[%s1068 + $0x8] sm:$0xff]
    %v1071 = vld [vmem:[%s1068 + $0x10] sm:$0xff]
    %v1072 = vld [vmem:[%s1068 + $0x18] sm:$0xff]
    %v1073 = vpack.c.bf16 %v1063, %v1063
    %1074 = vmatprep.subr.bf16.mxu0 %v556
    %1075 = vmatpush1.bf16.msra.mxu0 %v555
    %1076 = vmatprep.subr.bf16.mxu0 %v560
    %1077 = vmatpush1.bf16.msra.mxu0 %v559
    %1078 = vmatprep.subr.bf16.mxu0 %v564
    %1079 = vmatpush1.bf16.msra.mxu0 %v563
    %1080 = vmatprep.subr.bf16.mxu0 %v568
    %1081 = vmatpush1.bf16.msra.mxu0 %v567
    %1082 = vmatprep.subr.bf16.mxu0 %v572
    %1083 = vmatpush1.bf16.msra.mxu0 %v571
    %1084 = vmatprep.subr.bf16.mxu0 %v576
    %1085 = vmatpush1.bf16.msra.mxu0 %v575
    %1086 = vmatprep.subr.bf16.mxu0 %v580
    %1087 = vmatpush1.bf16.msra.mxu0 %v579
    %1088 = vmatprep.subr.bf16.mxu0 %v584
    %1089 = vmatpush1.bf16.msra.mxu0 %v583
    %1090 = vmatprep.subr.bf16.mxu0 0
    %1091 = vmatpush1.bf16.msra.mxu0 0
    %1092 = vmatprep.subr.bf16.mxu0 0
    %1093 = vmatpush1.bf16.msra.mxu0 0
    %1094 = vmatprep.subr.bf16.mxu0 0
    %1095 = vmatpush1.bf16.msra.mxu0 0
    %1096 = vmatprep.subr.bf16.mxu0 0
    %1097 = vmatpush1.bf16.msra.mxu0 0
    %1098 = vmatprep.subr.bf16.mxu0 0
    %1099 = vmatpush1.bf16.msra.mxu0 0
    %1100 = vmatprep.subr.bf16.mxu0 0
    %1101 = vmatpush1.bf16.msra.mxu0 0
    %1102 = vmatprep.subr.bf16.mxu0 0
    %1103 = vmatpush1.bf16.msra.mxu0 0
    %1104 = vmatprep.subr.bf16.mxu0 0
    %1105 = vmatpush1.bf16.msra.mxu0 0
    %1106 = vmatprep.mubr.bf16.mxu0 0
    %1107 = vmatmul.mubr.bf16.gmra.mrb[0].mxu0 %v1073
    %v1108 = vpop.f32.mrb[0].mxu0
    %v1109 = vadd.f32 0.0, %v1108
    %v1110 = vpop.f32.mrb[0].mxu0
    %v1111 = vadd.f32 0.0, %v1110
    %v1112 = vpop.f32.mrb[0].mxu0
    %v1113 = vpop.f32.mrb[0].mxu0
    %1114 = vdwg.mxu0
    %1115 = vmatprep.subr.bf16.mxu0 %v558
    %1116 = vmatpush1.bf16.msra.mxu0 %v557
    %1117 = vmatprep.subr.bf16.mxu0 %v562
    %1118 = vmatpush1.bf16.msra.mxu0 %v561
    %1119 = vmatprep.subr.bf16.mxu0 %v566
    %1120 = vmatpush1.bf16.msra.mxu0 %v565
    %1121 = vmatprep.subr.bf16.mxu0 %v570
    %1122 = vmatpush1.bf16.msra.mxu0 %v569
    %1123 = vmatprep.subr.bf16.mxu0 %v574
    %1124 = vmatpush1.bf16.msra.mxu0 %v573
    %1125 = vmatprep.subr.bf16.mxu0 %v578
    %1126 = vmatpush1.bf16.msra.mxu0 %v577
    %1127 = vmatprep.subr.bf16.mxu0 %v582
    %1128 = vmatpush1.bf16.msra.mxu0 %v581
    %1129 = vmatprep.subr.bf16.mxu0 %v586
    %1130 = vmatpush1.bf16.msra.mxu0 %v585
    %1131 = vmatprep.subr.bf16.mxu0 0
    %1132 = vmatpush1.bf16.msra.mxu0 0
    %1133 = vmatprep.subr.bf16.mxu0 0
    %1134 = vmatpush1.bf16.msra.mxu0 0
    %1135 = vmatprep.subr.bf16.mxu0 0
    %1136 = vmatpush1.bf16.msra.mxu0 0
    %1137 = vmatprep.subr.bf16.mxu0 0
    %1138 = vmatpush1.bf16.msra.mxu0 0
    %1139 = vmatprep.subr.bf16.mxu0 0
    %1140 = vmatpush1.bf16.msra.mxu0 0
    %1141 = vmatprep.subr.bf16.mxu0 0
    %1142 = vmatpush1.bf16.msra.mxu0 0
    %1143 = vmatprep.subr.bf16.mxu0 0
    %1144 = vmatpush1.bf16.msra.mxu0 0
    %1145 = vmatprep.subr.bf16.mxu0 0
    %1146 = vmatpush1.bf16.msra.mxu0 0
    %1147 = vmatprep.mubr.bf16.mxu0 0
    %1148 = vmatmul.mubr.bf16.gmra.mrb[0].mxu0 %v1073
    %v1149 = vpop.f32.mrb[0].mxu0
    %v1150 = vadd.f32 0.0, %v1149
    %v1151 = vpop.f32.mrb[0].mxu0
    %v1152 = vadd.f32 0.0, %v1151
    %v1153 = vpop.f32.mrb[0].mxu0
    %v1154 = vpop.f32.mrb[0].mxu0
    %1155 = vdwg.mxu0
    %v1156 = vadd.f32 %v1069, %v1109
    %v1157 = vadd.f32 %v1070, %v1111
    %v1158 = vadd.f32 %v1071, %v1150
    %v1159 = vadd.f32 %v1072, %v1152
    %v1160 = vmul.f32 %v1156, 0.5
    %v1161 = vtanh.pop %v1160
    %v1162 = vmul.f32 %v1161, 0.5
    %v1163 = vadd.f32 %v1162, 0.5
    %v1164 = vmul.f32 %v1157, 0.5
    %v1165 = vtanh.pop %v1164
    %v1166 = vmul.f32 %v1165, 0.5
    %v1167 = vadd.f32 %v1166, 0.5
    %v1168 = vtanh.pop %v1158
    %v1169 = vmul.f32 %v1159, 0.5
    %v1170 = vtanh.pop %v1169
    %v1171 = vmul.f32 %v1170, 0.5
    %v1172 = vadd.f32 %v1171, 0.5
    %v1173 = vmul.f32 %v1167, %v1061
    %v1174 = vmul.f32 %v1163, %v1168
    %v1175 = vadd.f32 %v1173, %v1174
    %v1176 = vtanh.pop %v1175
    %v1177 = vmul.f32 %v1172, %v1176
    %s1178 = scalar_lea.vmem [#allocation3], 32
    %1179 = vst [vmem:[%s1178] sm:$0xff] %v1177
    %s1180 = smul.u32 5, 4
    %s1181 = smul.addr %s1180, 8
    %s1182 = scalar_lea.vmem [#allocation2], %s1181
    %v1183 = vld [vmem:[%s1182] sm:$0xff]
    %v1184 = vld [vmem:[%s1182 + $0x8] sm:$0xff]
    %v1185 = vld [vmem:[%s1182 + $0x10] sm:$0xff]
    %v1186 = vld [vmem:[%s1182 + $0x18] sm:$0xff]
    %v1187 = vpack.c.bf16 %v1177, %v1177
    %1188 = vmatprep.subr.bf16.mxu0 %v556
    %1189 = vmatpush1.bf16.msra.mxu0 %v555
    %1190 = vmatprep.subr.bf16.mxu0 %v560
    %1191 = vmatpush1.bf16.msra.mxu0 %v559
    %1192 = vmatprep.subr.bf16.mxu0 %v564
    %1193 = vmatpush1.bf16.msra.mxu0 %v563
    %1194 = vmatprep.subr.bf16.mxu0 %v568
    %1195 = vmatpush1.bf16.msra.mxu0 %v567
    %1196 = vmatprep.subr.bf16.mxu0 %v572
    %1197 = vmatpush1.bf16.msra.mxu0 %v571
    %1198 = vmatprep.subr.bf16.mxu0 %v576
    %1199 = vmatpush1.bf16.msra.mxu0 %v575
    %1200 = vmatprep.subr.bf16.mxu0 %v580
    %1201 = vmatpush1.bf16.msra.mxu0 %v579
    %1202 = vmatprep.subr.bf16.mxu0 %v584
    %1203 = vmatpush1.bf16.msra.mxu0 %v583
    %1204 = vmatprep.subr.bf16.mxu0 0
    %1205 = vmatpush1.bf16.msra.mxu0 0
    %1206 = vmatprep.subr.bf16.mxu0 0
    %1207 = vmatpush1.bf16.msra.mxu0 0
    %1208 = vmatprep.subr.bf16.mxu0 0
    %1209 = vmatpush1.bf16.msra.mxu0 0
    %1210 = vmatprep.subr.bf16.mxu0 0
    %1211 = vmatpush1.bf16.msra.mxu0 0
    %1212 = vmatprep.subr.bf16.mxu0 0
    %1213 = vmatpush1.bf16.msra.mxu0 0
    %1214 = vmatprep.subr.bf16.mxu0 0
    %1215 = vmatpush1.bf16.msra.mxu0 0
    %1216 = vmatprep.subr.bf16.mxu0 0
    %1217 = vmatpush1.bf16.msra.mxu0 0
    %1218 = vmatprep.subr.bf16.mxu0 0
    %1219 = vmatpush1.bf16.msra.mxu0 0
    %1220 = vmatprep.mubr.bf16.mxu0 0
    %1221 = vmatmul.mubr.bf16.gmra.mrb[0].mxu0 %v1187
    %v1222 = vpop.f32.mrb[0].mxu0
    %v1223 = vadd.f32 0.0, %v1222
    %v1224 = vpop.f32.mrb[0].mxu0
    %v1225 = vadd.f32 0.0, %v1224
    %v1226 = vpop.f32.mrb[0].mxu0
    %v1227 = vpop.f32.mrb[0].mxu0
    %1228 = vdwg.mxu0
    %1229 = vmatprep.subr.bf16.mxu0 %v558
    %1230 = vmatpush1.bf16.msra.mxu0 %v557
    %1231 = vmatprep.subr.bf16.mxu0 %v562
    %1232 = vmatpush1.bf16.msra.mxu0 %v561
    %1233 = vmatprep.subr.bf16.mxu0 %v566
    %1234 = vmatpush1.bf16.msra.mxu0 %v565
    %1235 = vmatprep.subr.bf16.mxu0 %v570
    %1236 = vmatpush1.bf16.msra.mxu0 %v569
    %1237 = vmatprep.subr.bf16.mxu0 %v574
    %1238 = vmatpush1.bf16.msra.mxu0 %v573
    %1239 = vmatprep.subr.bf16.mxu0 %v578
    %1240 = vmatpush1.bf16.msra.mxu0 %v577
    %1241 = vmatprep.subr.bf16.mxu0 %v582
    %1242 = vmatpush1.bf16.msra.mxu0 %v581
    %1243 = vmatprep.subr.bf16.mxu0 %v586
    %1244 = vmatpush1.bf16.msra.mxu0 %v585
    %1245 = vmatprep.subr.bf16.mxu0 0
    %1246 = vmatpush1.bf16.msra.mxu0 0
    %1247 = vmatprep.subr.bf16.mxu0 0
    %1248 = vmatpush1.bf16.msra.mxu0 0
    %1249 = vmatprep.subr.bf16.mxu0 0
    %1250 = vmatpush1.bf16.msra.mxu0 0
    %1251 = vmatprep.subr.bf16.mxu0 0
    %1252 = vmatpush1.bf16.msra.mxu0 0
    %1253 = vmatprep.subr.bf16.mxu0 0
    %1254 = vmatpush1.bf16.msra.mxu0 0
    %1255 = vmatprep.subr.bf16.mxu0 0
    %1256 = vmatpush1.bf16.msra.mxu0 0
    %1257 = vmatprep.subr.bf16.mxu0 0
    %1258 = vmatpush1.bf16.msra.mxu0 0
    %1259 = vmatprep.subr.bf16.mxu0 0
    %1260 = vmatpush1.bf16.msra.mxu0 0
    %1261 = vmatprep.mubr.bf16.mxu0 0
    %1262 = vmatmul.mubr.bf16.gmra.mrb[0].mxu0 %v1187
    %v1263 = vpop.f32.mrb[0].mxu0
    %v1264 = vadd.f32 0.0, %v1263
    %v1265 = vpop.f32.mrb[0].mxu0
    %v1266 = vadd.f32 0.0, %v1265
    %v1267 = vpop.f32.mrb[0].mxu0
    %v1268 = vpop.f32.mrb[0].mxu0
    %1269 = vdwg.mxu0
    %v1270 = vadd.f32 %v1183, %v1223
    %v1271 = vadd.f32 %v1184, %v1225
    %v1272 = vadd.f32 %v1185, %v1264
    %v1273 = vadd.f32 %v1186, %v1266
    %v1274 = vmul.f32 %v1270, 0.5
    %v1275 = vtanh.pop %v1274
    %v1276 = vmul.f32 %v1275, 0.5
    %v1277 = vadd.f32 %v1276, 0.5
    %v1278 = vmul.f32 %v1271, 0.5
    %v1279 = vtanh.pop %v1278
    %v1280 = vmul.f32 %v1279, 0.5
    %v1281 = vadd.f32 %v1280, 0.5
    %v1282 = vtanh.pop %v1272
    %v1283 = vmul.f32 %v1273, 0.5
    %v1284 = vtanh.pop %v1283
    %v1285 = vmul.f32 %v1284, 0.5
    %v1286 = vadd.f32 %v1285, 0.5
    %v1287 = vmul.f32 %v1281, %v1175
    %v1288 = vmul.f32 %v1277, %v1282
    %v1289 = vadd.f32 %v1287, %v1288
    %v1290 = vtanh.pop %v1289
    %v1291 = vmul.f32 %v1286, %v1290
    %s1292 = scalar_lea.vmem [#allocation3], 40
    %1293 = vst [vmem:[%s1292] sm:$0xff] %v1291
    %s1294 = smul.u32 6, 4
    %s1295 = smul.addr %s1294, 8
    %s1296 = scalar_lea.vmem [#allocation2], %s1295
    %v1297 = vld [vmem:[%s1296] sm:$0xff]
    %v1298 = vld [vmem:[%s1296 + $0x8] sm:$0xff]
    %v1299 = vld [vmem:[%s1296 + $0x10] sm:$0xff]
    %v1300 = vld [vmem:[%s1296 + $0x18] sm:$0xff]
    %v1301 = vpack.c.bf16 %v1291, %v1291
    %1302 = vmatprep.subr.bf16.mxu0 %v556
    %1303 = vmatpush1.bf16.msra.mxu0 %v555
    %1304 = vmatprep.subr.bf16.mxu0 %v560
    %1305 = vmatpush1.bf16.msra.mxu0 %v559
    %1306 = vmatprep.subr.bf16.mxu0 %v564
    %1307 = vmatpush1.bf16.msra.mxu0 %v563
    %1308 = vmatprep.subr.bf16.mxu0 %v568
    %1309 = vmatpush1.bf16.msra.mxu0 %v567
    %1310 = vmatprep.subr.bf16.mxu0 %v572
    %1311 = vmatpush1.bf16.msra.mxu0 %v571
    %1312 = vmatprep.subr.bf16.mxu0 %v576
    %1313 = vmatpush1.bf16.msra.mxu0 %v575
    %1314 = vmatprep.subr.bf16.mxu0 %v580
    %1315 = vmatpush1.bf16.msra.mxu0 %v579
    %1316 = vmatprep.subr.bf16.mxu0 %v584
    %1317 = vmatpush1.bf16.msra.mxu0 %v583
    %1318 = vmatprep.subr.bf16.mxu0 0
    %1319 = vmatpush1.bf16.msra.mxu0 0
    %1320 = vmatprep.subr.bf16.mxu0 0
    %1321 = vmatpush1.bf16.msra.mxu0 0
    %1322 = vmatprep.subr.bf16.mxu0 0
    %1323 = vmatpush1.bf16.msra.mxu0 0
    %1324 = vmatprep.subr.bf16.mxu0 0
    %1325 = vmatpush1.bf16.msra.mxu0 0
    %1326 = vmatprep.subr.bf16.mxu0 0
    %1327 = vmatpush1.bf16.msra.mxu0 0
    %1328 = vmatprep.subr.bf16.mxu0 0
    %1329 = vmatpush1.bf16.msra.mxu0 0
    %1330 = vmatprep.subr.bf16.mxu0 0
    %1331 = vmatpush1.bf16.msra.mxu0 0
    %1332 = vmatprep.subr.bf16.mxu0 0
    %1333 = vmatpush1.bf16.msra.mxu0 0
    %1334 = vmatprep.mubr.bf16.mxu0 0
    %1335 = vmatmul.mubr.bf16.gmra.mrb[0].mxu0 %v1301
    %v1336 = vpop.f32.mrb[0].mxu0
    %v1337 = vadd.f32 0.0, %v1336
    %v1338 = vpop.f32.mrb[0].mxu0
    %v1339 = vadd.f32 0.0, %v1338
    %v1340 = vpop.f32.mrb[0].mxu0
    %v1341 = vpop.f32.mrb[0].mxu0
    %1342 = vdwg.mxu0
    %1343 = vmatprep.subr.bf16.mxu0 %v558
    %1344 = vmatpush1.bf16.msra.mxu0 %v557
    %1345 = vmatprep.subr.bf16.mxu0 %v562
    %1346 = vmatpush1.bf16.msra.mxu0 %v561
    %1347 = vmatprep.subr.bf16.mxu0 %v566
    %1348 = vmatpush1.bf16.msra.mxu0 %v565
    %1349 = vmatprep.subr.bf16.mxu0 %v570
    %1350 = vmatpush1.bf16.msra.mxu0 %v569
    %1351 = vmatprep.subr.bf16.mxu0 %v574
    %1352 = vmatpush1.bf16.msra.mxu0 %v573
    %1353 = vmatprep.subr.bf16.mxu0 %v578
    %1354 = vmatpush1.bf16.msra.mxu0 %v577
    %1355 = vmatprep.subr.bf16.mxu0 %v582
    %1356 = vmatpush1.bf16.msra.mxu0 %v581
    %1357 = vmatprep.subr.bf16.mxu0 %v586
    %1358 = vmatpush1.bf16.msra.mxu0 %v585
    %1359 = vmatprep.subr.bf16.mxu0 0
    %1360 = vmatpush1.bf16.msra.mxu0 0
    %1361 = vmatprep.subr.bf16.mxu0 0
    %1362 = vmatpush1.bf16.msra.mxu0 0
    %1363 = vmatprep.subr.bf16.mxu0 0
    %1364 = vmatpush1.bf16.msra.mxu0 0
    %1365 = vmatprep.subr.bf16.mxu0 0
    %1366 = vmatpush1.bf16.msra.mxu0 0
    %1367 = vmatprep.subr.bf16.mxu0 0
    %1368 = vmatpush1.bf16.msra.mxu0 0
    %1369 = vmatprep.subr.bf16.mxu0 0
    %1370 = vmatpush1.bf16.msra.mxu0 0
    %1371 = vmatprep.subr.bf16.mxu0 0
    %1372 = vmatpush1.bf16.msra.mxu0 0
    %1373 = vmatprep.subr.bf16.mxu0 0
    %1374 = vmatpush1.bf16.msra.mxu0 0
    %1375 = vmatprep.mubr.bf16.mxu0 0
    %1376 = vmatmul.mubr.bf16.gmra.mrb[0].mxu0 %v1301
    %v1377 = vpop.f32.mrb[0].mxu0
    %v1378 = vadd.f32 0.0, %v1377
    %v1379 = vpop.f32.mrb[0].mxu0
    %v1380 = vadd.f32 0.0, %v1379
    %v1381 = vpop.f32.mrb[0].mxu0
    %v1382 = vpop.f32.mrb[0].mxu0
    %1383 = vdwg.mxu0
    %v1384 = vadd.f32 %v1297, %v1337
    %v1385 = vadd.f32 %v1298, %v1339
    %v1386 = vadd.f32 %v1299, %v1378
    %v1387 = vadd.f32 %v1300, %v1380
    %v1388 = vmul.f32 %v1384, 0.5
    %v1389 = vtanh.pop %v1388
    %v1390 = vmul.f32 %v1389, 0.5
    %v1391 = vadd.f32 %v1390, 0.5
    %v1392 = vmul.f32 %v1385, 0.5
    %v1393 = vtanh.pop %v1392
    %v1394 = vmul.f32 %v1393, 0.5
    %v1395 = vadd.f32 %v1394, 0.5
    %v1396 = vtanh.pop %v1386
    %v1397 = vmul.f32 %v1387, 0.5
    %v1398 = vtanh.pop %v1397
    %v1399 = vmul.f32 %v1398, 0.5
    %v1400 = vadd.f32 %v1399, 0.5
    %v1401 = vmul.f32 %v1395, %v1289
    %v1402 = vmul.f32 %v1391, %v1396
    %v1403 = vadd.f32 %v1401, %v1402
    %v1404 = vtanh.pop %v1403
    %v1405 = vmul.f32 %v1400, %v1404
    %s1406 = scalar_lea.vmem [#allocation3], 48
    %1407 = vst [vmem:[%s1406] sm:$0xff] %v1405
    %s1408 = smul.u32 7, 4
    %s1409 = smul.addr %s1408, 8
    %s1410 = scalar_lea.vmem [#allocation2], %s1409
    %v1411 = vld [vmem:[%s1410] sm:$0xff]
    %v1412 = vld [vmem:[%s1410 + $0x8] sm:$0xff]
    %v1413 = vld [vmem:[%s1410 + $0x10] sm:$0xff]
    %v1414 = vld [vmem:[%s1410 + $0x18] sm:$0xff]
    %v1415 = vpack.c.bf16 %v1405, %v1405
    %1416 = vmatprep.subr.bf16.mxu0 %v556
    %1417 = vmatpush1.bf16.msra.mxu0 %v555
    %1418 = vmatprep.subr.bf16.mxu0 %v560
    %1419 = vmatpush1.bf16.msra.mxu0 %v559
    %1420 = vmatprep.subr.bf16.mxu0 %v564
    %1421 = vmatpush1.bf16.msra.mxu0 %v563
    %1422 = vmatprep.subr.bf16.mxu0 %v568
    %1423 = vmatpush1.bf16.msra.mxu0 %v567
    %1424 = vmatprep.subr.bf16.mxu0 %v572
    %1425 = vmatpush1.bf16.msra.mxu0 %v571
    %1426 = vmatprep.subr.bf16.mxu0 %v576
    %1427 = vmatpush1.bf16.msra.mxu0 %v575
    %1428 = vmatprep.subr.bf16.mxu0 %v580
    %1429 = vmatpush1.bf16.msra.mxu0 %v579
    %1430 = vmatprep.subr.bf16.mxu0 %v584
    %1431 = vmatpush1.bf16.msra.mxu0 %v583
    %1432 = vmatprep.subr.bf16.mxu0 0
    %1433 = vmatpush1.bf16.msra.mxu0 0
    %1434 = vmatprep.subr.bf16.mxu0 0
    %1435 = vmatpush1.bf16.msra.mxu0 0
    %1436 = vmatprep.subr.bf16.mxu0 0
    %1437 = vmatpush1.bf16.msra.mxu0 0
    %1438 = vmatprep.subr.bf16.mxu0 0
    %1439 = vmatpush1.bf16.msra.mxu0 0
    %1440 = vmatprep.subr.bf16.mxu0 0
    %1441 = vmatpush1.bf16.msra.mxu0 0
    %1442 = vmatprep.subr.bf16.mxu0 0
    %1443 = vmatpush1.bf16.msra.mxu0 0
    %1444 = vmatprep.subr.bf16.mxu0 0
    %1445 = vmatpush1.bf16.msra.mxu0 0
    %1446 = vmatprep.subr.bf16.mxu0 0
    %1447 = vmatpush1.bf16.msra.mxu0 0
    %1448 = vmatprep.mubr.bf16.mxu0 0
    %1449 = vmatmul.mubr.bf16.gmra.mrb[0].mxu0 %v1415
    %v1450 = vpop.f32.mrb[0].mxu0
    %v1451 = vadd.f32 0.0, %v1450
    %v1452 = vpop.f32.mrb[0].mxu0
    %v1453 = vadd.f32 0.0, %v1452
    %v1454 = vpop.f32.mrb[0].mxu0
    %v1455 = vpop.f32.mrb[0].mxu0
    %1456 = vdwg.mxu0
    %1457 = vmatprep.subr.bf16.mxu0 %v558
    %1458 = vmatpush1.bf16.msra.mxu0 %v557
    %1459 = vmatprep.subr.bf16.mxu0 %v562
    %1460 = vmatpush1.bf16.msra.mxu0 %v561
    %1461 = vmatprep.subr.bf16.mxu0 %v566
    %1462 = vmatpush1.bf16.msra.mxu0 %v565
    %1463 = vmatprep.subr.bf16.mxu0 %v570
    %1464 = vmatpush1.bf16.msra.mxu0 %v569
    %1465 = vmatprep.subr.bf16.mxu0 %v574
    %1466 = vmatpush1.bf16.msra.mxu0 %v573
    %1467 = vmatprep.subr.bf16.mxu0 %v578
    %1468 = vmatpush1.bf16.msra.mxu0 %v577
    %1469 = vmatprep.subr.bf16.mxu0 %v582
    %1470 = vmatpush1.bf16.msra.mxu0 %v581
    %1471 = vmatprep.subr.bf16.mxu0 %v586
    %1472 = vmatpush1.bf16.msra.mxu0 %v585
    %1473 = vmatprep.subr.bf16.mxu0 0
    %1474 = vmatpush1.bf16.msra.mxu0 0
    %1475 = vmatprep.subr.bf16.mxu0 0
    %1476 = vmatpush1.bf16.msra.mxu0 0
    %1477 = vmatprep.subr.bf16.mxu0 0
    %1478 = vmatpush1.bf16.msra.mxu0 0
    %1479 = vmatprep.subr.bf16.mxu0 0
    %1480 = vmatpush1.bf16.msra.mxu0 0
    %1481 = vmatprep.subr.bf16.mxu0 0
    %1482 = vmatpush1.bf16.msra.mxu0 0
    %1483 = vmatprep.subr.bf16.mxu0 0
    %1484 = vmatpush1.bf16.msra.mxu0 0
    %1485 = vmatprep.subr.bf16.mxu0 0
    %1486 = vmatpush1.bf16.msra.mxu0 0
    %1487 = vmatprep.subr.bf16.mxu0 0
    %1488 = vmatpush1.bf16.msra.mxu0 0
    %1489 = vmatprep.mubr.bf16.mxu0 0
    %1490 = vmatmul.mubr.bf16.gmra.mrb[0].mxu0 %v1415
    %v1491 = vpop.f32.mrb[0].mxu0
    %v1492 = vadd.f32 0.0, %v1491
    %v1493 = vpop.f32.mrb[0].mxu0
    %v1494 = vadd.f32 0.0, %v1493
    %v1495 = vpop.f32.mrb[0].mxu0
    %v1496 = vpop.f32.mrb[0].mxu0
    %1497 = vdwg.mxu0
    %v1498 = vadd.f32 %v1411, %v1451
    %v1499 = vadd.f32 %v1412, %v1453
    %v1500 = vadd.f32 %v1413, %v1492
    %v1501 = vadd.f32 %v1414, %v1494
    %v1502 = vmul.f32 %v1498, 0.5
    %v1503 = vtanh.pop %v1502
    %v1504 = vmul.f32 %v1503, 0.5
    %v1505 = vadd.f32 %v1504, 0.5
    %v1506 = vmul.f32 %v1499, 0.5
    %v1507 = vtanh.pop %v1506
    %v1508 = vmul.f32 %v1507, 0.5
    %v1509 = vadd.f32 %v1508, 0.5
    %v1510 = vtanh.pop %v1500
    %v1511 = vmul.f32 %v1501, 0.5
    %v1512 = vtanh.pop %v1511
    %v1513 = vmul.f32 %v1512, 0.5
    %v1514 = vadd.f32 %v1513, 0.5
    %v1515 = vmul.f32 %v1509, %v1403
    %v1516 = vmul.f32 %v1505, %v1510
    %v1517 = vadd.f32 %v1515, %v1516
    %v1518 = vtanh.pop %v1517
    %v1519 = vmul.f32 %v1514, %v1518
    %s1520 = scalar_lea.vmem [#allocation3], 56
    %1521 = vst [vmem:[%s1520] sm:$0xff] %v1519
    %s1522 = smul.u32 8, 4
    %s1523 = smul.addr %s1522, 8
    %s1524 = scalar_lea.vmem [#allocation2], %s1523
    %v1525 = vld [vmem:[%s1524] sm:$0xff]
    %v1526 = vld [vmem:[%s1524 + $0x8] sm:$0xff]
    %v1527 = vld [vmem:[%s1524 + $0x10] sm:$0xff]
    %v1528 = vld [vmem:[%s1524 + $0x18] sm:$0xff]
    %v1529 = vpack.c.bf16 %v1519, %v1519
    %1530 = vmatprep.subr.bf16.mxu0 %v556
    %1531 = vmatpush1.bf16.msra.mxu0 %v555
    %1532 = vmatprep.subr.bf16.mxu0 %v560
    %1533 = vmatpush1.bf16.msra.mxu0 %v559
    %1534 = vmatprep.subr.bf16.mxu0 %v564
    %1535 = vmatpush1.bf16.msra.mxu0 %v563
    %1536 = vmatprep.subr.bf16.mxu0 %v568
    %1537 = vmatpush1.bf16.msra.mxu0 %v567
    %1538 = vmatprep.subr.bf16.mxu0 %v572
    %1539 = vmatpush1.bf16.msra.mxu0 %v571
    %1540 = vmatprep.subr.bf16.mxu0 %v576
    %1541 = vmatpush1.bf16.msra.mxu0 %v575
    %1542 = vmatprep.subr.bf16.mxu0 %v580
    %1543 = vmatpush1.bf16.msra.mxu0 %v579
    %1544 = vmatprep.subr.bf16.mxu0 %v584
    %1545 = vmatpush1.bf16.msra.mxu0 %v583
    %1546 = vmatprep.subr.bf16.mxu0 0
    %1547 = vmatpush1.bf16.msra.mxu0 0
    %1548 = vmatprep.subr.bf16.mxu0 0
    %1549 = vmatpush1.bf16.msra.mxu0 0
    %1550 = vmatprep.subr.bf16.mxu0 0
    %1551 = vmatpush1.bf16.msra.mxu0 0
    %1552 = vmatprep.subr.bf16.mxu0 0
    %1553 = vmatpush1.bf16.msra.mxu0 0
    %1554 = vmatprep.subr.bf16.mxu0 0
    %1555 = vmatpush1.bf16.msra.mxu0 0
    %1556 = vmatprep.subr.bf16.mxu0 0
    %1557 = vmatpush1.bf16.msra.mxu0 0
    %1558 = vmatprep.subr.bf16.mxu0 0
    %1559 = vmatpush1.bf16.msra.mxu0 0
    %1560 = vmatprep.subr.bf16.mxu0 0
    %1561 = vmatpush1.bf16.msra.mxu0 0
    %1562 = vmatprep.mubr.bf16.mxu0 0
    %1563 = vmatmul.mubr.bf16.gmra.mrb[0].mxu0 %v1529
    %v1564 = vpop.f32.mrb[0].mxu0
    %v1565 = vadd.f32 0.0, %v1564
    %v1566 = vpop.f32.mrb[0].mxu0
    %v1567 = vadd.f32 0.0, %v1566
    %v1568 = vpop.f32.mrb[0].mxu0
    %v1569 = vpop.f32.mrb[0].mxu0
    %1570 = vdwg.mxu0
    %1571 = vmatprep.subr.bf16.mxu0 %v558
    %1572 = vmatpush1.bf16.msra.mxu0 %v557
    %1573 = vmatprep.subr.bf16.mxu0 %v562
    %1574 = vmatpush1.bf16.msra.mxu0 %v561
    %1575 = vmatprep.subr.bf16.mxu0 %v566
    %1576 = vmatpush1.bf16.msra.mxu0 %v565
    %1577 = vmatprep.subr.bf16.mxu0 %v570
    %1578 = vmatpush1.bf16.msra.mxu0 %v569
    %1579 = vmatprep.subr.bf16.mxu0 %v574
    %1580 = vmatpush1.bf16.msra.mxu0 %v573
    %1581 = vmatprep.subr.bf16.mxu0 %v578
    %1582 = vmatpush1.bf16.msra.mxu0 %v577
    %1583 = vmatprep.subr.bf16.mxu0 %v582
    %1584 = vmatpush1.bf16.msra.mxu0 %v581
    %1585 = vmatprep.subr.bf16.mxu0 %v586
    %1586 = vmatpush1.bf16.msra.mxu0 %v585
    %1587 = vmatprep.subr.bf16.mxu0 0
    %1588 = vmatpush1.bf16.msra.mxu0 0
    %1589 = vmatprep.subr.bf16.mxu0 0
    %1590 = vmatpush1.bf16.msra.mxu0 0
    %1591 = vmatprep.subr.bf16.mxu0 0
    %1592 = vmatpush1.bf16.msra.mxu0 0
    %1593 = vmatprep.subr.bf16.mxu0 0
    %1594 = vmatpush1.bf16.msra.mxu0 0
    %1595 = vmatprep.subr.bf16.mxu0 0
    %1596 = vmatpush1.bf16.msra.mxu0 0
    %1597 = vmatprep.subr.bf16.mxu0 0
    %1598 = vmatpush1.bf16.msra.mxu0 0
    %1599 = vmatprep.subr.bf16.mxu0 0
    %1600 = vmatpush1.bf16.msra.mxu0 0
    %1601 = vmatprep.subr.bf16.mxu0 0
    %1602 = vmatpush1.bf16.msra.mxu0 0
    %1603 = vmatprep.mubr.bf16.mxu0 0
    %1604 = vmatmul.mubr.bf16.gmra.mrb[0].mxu0 %v1529
    %v1605 = vpop.f32.mrb[0].mxu0
    %v1606 = vadd.f32 0.0, %v1605
    %v1607 = vpop.f32.mrb[0].mxu0
    %v1608 = vadd.f32 0.0, %v1607
    %v1609 = vpop.f32.mrb[0].mxu0
    %v1610 = vpop.f32.mrb[0].mxu0
    %1611 = vdwg.mxu0
    %v1612 = vadd.f32 %v1525, %v1565
    %v1613 = vadd.f32 %v1526, %v1567
    %v1614 = vadd.f32 %v1527, %v1606
    %v1615 = vadd.f32 %v1528, %v1608
    %v1616 = vmul.f32 %v1612, 0.5
    %v1617 = vtanh.pop %v1616
    %v1618 = vmul.f32 %v1617, 0.5
    %v1619 = vadd.f32 %v1618, 0.5
    %v1620 = vmul.f32 %v1613, 0.5
    %v1621 = vtanh.pop %v1620
    %v1622 = vmul.f32 %v1621, 0.5
    %v1623 = vadd.f32 %v1622, 0.5
    %v1624 = vtanh.pop %v1614
    %v1625 = vmul.f32 %v1615, 0.5
    %v1626 = vtanh.pop %v1625
    %v1627 = vmul.f32 %v1626, 0.5
    %v1628 = vadd.f32 %v1627, 0.5
    %v1629 = vmul.f32 %v1623, %v1517
    %v1630 = vmul.f32 %v1619, %v1624
    %v1631 = vadd.f32 %v1629, %v1630
    %v1632 = vtanh.pop %v1631
    %v1633 = vmul.f32 %v1628, %v1632
    %s1634 = scalar_lea.vmem [#allocation3], 64
    %1635 = vst [vmem:[%s1634] sm:$0xff] %v1633
    %s1636 = smul.u32 9, 4
    %s1637 = smul.addr %s1636, 8
    %s1638 = scalar_lea.vmem [#allocation2], %s1637
    %v1639 = vld [vmem:[%s1638] sm:$0xff]
    %v1640 = vld [vmem:[%s1638 + $0x8] sm:$0xff]
    %v1641 = vld [vmem:[%s1638 + $0x10] sm:$0xff]
    %v1642 = vld [vmem:[%s1638 + $0x18] sm:$0xff]
    %v1643 = vpack.c.bf16 %v1633, %v1633
    %1644 = vmatprep.subr.bf16.mxu0 %v556
    %1645 = vmatpush1.bf16.msra.mxu0 %v555
    %1646 = vmatprep.subr.bf16.mxu0 %v560
    %1647 = vmatpush1.bf16.msra.mxu0 %v559
    %1648 = vmatprep.subr.bf16.mxu0 %v564
    %1649 = vmatpush1.bf16.msra.mxu0 %v563
    %1650 = vmatprep.subr.bf16.mxu0 %v568
    %1651 = vmatpush1.bf16.msra.mxu0 %v567
    %1652 = vmatprep.subr.bf16.mxu0 %v572
    %1653 = vmatpush1.bf16.msra.mxu0 %v571
    %1654 = vmatprep.subr.bf16.mxu0 %v576
    %1655 = vmatpush1.bf16.msra.mxu0 %v575
    %1656 = vmatprep.subr.bf16.mxu0 %v580
    %1657 = vmatpush1.bf16.msra.mxu0 %v579
    %1658 = vmatprep.subr.bf16.mxu0 %v584
    %1659 = vmatpush1.bf16.msra.mxu0 %v583
    %1660 = vmatprep.subr.bf16.mxu0 0
    %1661 = vmatpush1.bf16.msra.mxu0 0
    %1662 = vmatprep.subr.bf16.mxu0 0
    %1663 = vmatpush1.bf16.msra.mxu0 0
    %1664 = vmatprep.subr.bf16.mxu0 0
    %1665 = vmatpush1.bf16.msra.mxu0 0
    %1666 = vmatprep.subr.bf16.mxu0 0
    %1667 = vmatpush1.bf16.msra.mxu0 0
    %1668 = vmatprep.subr.bf16.mxu0 0
    %1669 = vmatpush1.bf16.msra.mxu0 0
    %1670 = vmatprep.subr.bf16.mxu0 0
    %1671 = vmatpush1.bf16.msra.mxu0 0
    %1672 = vmatprep.subr.bf16.mxu0 0
    %1673 = vmatpush1.bf16.msra.mxu0 0
    %1674 = vmatprep.subr.bf16.mxu0 0
    %1675 = vmatpush1.bf16.msra.mxu0 0
    %1676 = vmatprep.mubr.bf16.mxu0 0
    %1677 = vmatmul.mubr.bf16.gmra.mrb[0].mxu0 %v1643
    %v1678 = vpop.f32.mrb[0].mxu0
    %v1679 = vadd.f32 0.0, %v1678
    %v1680 = vpop.f32.mrb[0].mxu0
    %v1681 = vadd.f32 0.0, %v1680
    %v1682 = vpop.f32.mrb[0].mxu0
    %v1683 = vpop.f32.mrb[0].mxu0
    %1684 = vdwg.mxu0
    %1685 = vmatprep.subr.bf16.mxu0 %v558
    %1686 = vmatpush1.bf16.msra.mxu0 %v557
    %1687 = vmatprep.subr.bf16.mxu0 %v562
    %1688 = vmatpush1.bf16.msra.mxu0 %v561
    %1689 = vmatprep.subr.bf16.mxu0 %v566
    %1690 = vmatpush1.bf16.msra.mxu0 %v565
    %1691 = vmatprep.subr.bf16.mxu0 %v570
    %1692 = vmatpush1.bf16.msra.mxu0 %v569
    %1693 = vmatprep.subr.bf16.mxu0 %v574
    %1694 = vmatpush1.bf16.msra.mxu0 %v573
    %1695 = vmatprep.subr.bf16.mxu0 %v578
    %1696 = vmatpush1.bf16.msra.mxu0 %v577
    %1697 = vmatprep.subr.bf16.mxu0 %v582
    %1698 = vmatpush1.bf16.msra.mxu0 %v581
    %1699 = vmatprep.subr.bf16.mxu0 %v586
    %1700 = vmatpush1.bf16.msra.mxu0 %v585
    %1701 = vmatprep.subr.bf16.mxu0 0
    %1702 = vmatpush1.bf16.msra.mxu0 0
    %1703 = vmatprep.subr.bf16.mxu0 0
    %1704 = vmatpush1.bf16.msra.mxu0 0
    %1705 = vmatprep.subr.bf16.mxu0 0
    %1706 = vmatpush1.bf16.msra.mxu0 0
    %1707 = vmatprep.subr.bf16.mxu0 0
    %1708 = vmatpush1.bf16.msra.mxu0 0
    %1709 = vmatprep.subr.bf16.mxu0 0
    %1710 = vmatpush1.bf16.msra.mxu0 0
    %1711 = vmatprep.subr.bf16.mxu0 0
    %1712 = vmatpush1.bf16.msra.mxu0 0
    %1713 = vmatprep.subr.bf16.mxu0 0
    %1714 = vmatpush1.bf16.msra.mxu0 0
    %1715 = vmatprep.subr.bf16.mxu0 0
    %1716 = vmatpush1.bf16.msra.mxu0 0
    %1717 = vmatprep.mubr.bf16.mxu0 0
    %1718 = vmatmul.mubr.bf16.gmra.mrb[0].mxu0 %v1643
    %v1719 = vpop.f32.mrb[0].mxu0
    %v1720 = vadd.f32 0.0, %v1719
    %v1721 = vpop.f32.mrb[0].mxu0
    %v1722 = vadd.f32 0.0, %v1721
    %v1723 = vpop.f32.mrb[0].mxu0
    %v1724 = vpop.f32.mrb[0].mxu0
    %1725 = vdwg.mxu0
    %v1726 = vadd.f32 %v1639, %v1679
    %v1727 = vadd.f32 %v1640, %v1681
    %v1728 = vadd.f32 %v1641, %v1720
    %v1729 = vadd.f32 %v1642, %v1722
    %v1730 = vmul.f32 %v1726, 0.5
    %v1731 = vtanh.pop %v1730
    %v1732 = vmul.f32 %v1731, 0.5
    %v1733 = vadd.f32 %v1732, 0.5
    %v1734 = vmul.f32 %v1727, 0.5
    %v1735 = vtanh.pop %v1734
    %v1736 = vmul.f32 %v1735, 0.5
    %v1737 = vadd.f32 %v1736, 0.5
    %v1738 = vtanh.pop %v1728
    %v1739 = vmul.f32 %v1729, 0.5
    %v1740 = vtanh.pop %v1739
    %v1741 = vmul.f32 %v1740, 0.5
    %v1742 = vadd.f32 %v1741, 0.5
    %v1743 = vmul.f32 %v1737, %v1631
    %v1744 = vmul.f32 %v1733, %v1738
    %v1745 = vadd.f32 %v1743, %v1744
    %v1746 = vtanh.pop %v1745
    %v1747 = vmul.f32 %v1742, %v1746
    %s1748 = scalar_lea.vmem [#allocation3], 72
    %1749 = vst [vmem:[%s1748] sm:$0xff] %v1747
    %s1750 = smul.u32 10, 4
    %s1751 = smul.addr %s1750, 8
    %s1752 = scalar_lea.vmem [#allocation2], %s1751
    %v1753 = vld [vmem:[%s1752] sm:$0xff]
    %v1754 = vld [vmem:[%s1752 + $0x8] sm:$0xff]
    %v1755 = vld [vmem:[%s1752 + $0x10] sm:$0xff]
    %v1756 = vld [vmem:[%s1752 + $0x18] sm:$0xff]
    %v1757 = vpack.c.bf16 %v1747, %v1747
    %1758 = vmatprep.subr.bf16.mxu0 %v556
    %1759 = vmatpush1.bf16.msra.mxu0 %v555
    %1760 = vmatprep.subr.bf16.mxu0 %v560
    %1761 = vmatpush1.bf16.msra.mxu0 %v559
    %1762 = vmatprep.subr.bf16.mxu0 %v564
    %1763 = vmatpush1.bf16.msra.mxu0 %v563
    %1764 = vmatprep.subr.bf16.mxu0 %v568
    %1765 = vmatpush1.bf16.msra.mxu0 %v567
    %1766 = vmatprep.subr.bf16.mxu0 %v572
    %1767 = vmatpush1.bf16.msra.mxu0 %v571
    %1768 = vmatprep.subr.bf16.mxu0 %v576
    %1769 = vmatpush1.bf16.msra.mxu0 %v575
    %1770 = vmatprep.subr.bf16.mxu0 %v580
    %1771 = vmatpush1.bf16.msra.mxu0 %v579
    %1772 = vmatprep.subr.bf16.mxu0 %v584
    %1773 = vmatpush1.bf16.msra.mxu0 %v583
    %1774 = vmatprep.subr.bf16.mxu0 0
    %1775 = vmatpush1.bf16.msra.mxu0 0
    %1776 = vmatprep.subr.bf16.mxu0 0
    %1777 = vmatpush1.bf16.msra.mxu0 0
    %1778 = vmatprep.subr.bf16.mxu0 0
    %1779 = vmatpush1.bf16.msra.mxu0 0
    %1780 = vmatprep.subr.bf16.mxu0 0
    %1781 = vmatpush1.bf16.msra.mxu0 0
    %1782 = vmatprep.subr.bf16.mxu0 0
    %1783 = vmatpush1.bf16.msra.mxu0 0
    %1784 = vmatprep.subr.bf16.mxu0 0
    %1785 = vmatpush1.bf16.msra.mxu0 0
    %1786 = vmatprep.subr.bf16.mxu0 0
    %1787 = vmatpush1.bf16.msra.mxu0 0
    %1788 = vmatprep.subr.bf16.mxu0 0
    %1789 = vmatpush1.bf16.msra.mxu0 0
    %1790 = vmatprep.mubr.bf16.mxu0 0
    %1791 = vmatmul.mubr.bf16.gmra.mrb[0].mxu0 %v1757
    %v1792 = vpop.f32.mrb[0].mxu0
    %v1793 = vadd.f32 0.0, %v1792
    %v1794 = vpop.f32.mrb[0].mxu0
    %v1795 = vadd.f32 0.0, %v1794
    %v1796 = vpop.f32.mrb[0].mxu0
    %v1797 = vpop.f32.mrb[0].mxu0
    %1798 = vdwg.mxu0
    %1799 = vmatprep.subr.bf16.mxu0 %v558
    %1800 = vmatpush1.bf16.msra.mxu0 %v557
    %1801 = vmatprep.subr.bf16.mxu0 %v562
    %1802 = vmatpush1.bf16.msra.mxu0 %v561
    %1803 = vmatprep.subr.bf16.mxu0 %v566
    %1804 = vmatpush1.bf16.msra.mxu0 %v565
    %1805 = vmatprep.subr.bf16.mxu0 %v570
    %1806 = vmatpush1.bf16.msra.mxu0 %v569
    %1807 = vmatprep.subr.bf16.mxu0 %v574
    %1808 = vmatpush1.bf16.msra.mxu0 %v573
    %1809 = vmatprep.subr.bf16.mxu0 %v578
    %1810 = vmatpush1.bf16.msra.mxu0 %v577
    %1811 = vmatprep.subr.bf16.mxu0 %v582
    %1812 = vmatpush1.bf16.msra.mxu0 %v581
    %1813 = vmatprep.subr.bf16.mxu0 %v586
    %1814 = vmatpush1.bf16.msra.mxu0 %v585
    %1815 = vmatprep.subr.bf16.mxu0 0
    %1816 = vmatpush1.bf16.msra.mxu0 0
    %1817 = vmatprep.subr.bf16.mxu0 0
    %1818 = vmatpush1.bf16.msra.mxu0 0
    %1819 = vmatprep.subr.bf16.mxu0 0
    %1820 = vmatpush1.bf16.msra.mxu0 0
    %1821 = vmatprep.subr.bf16.mxu0 0
    %1822 = vmatpush1.bf16.msra.mxu0 0
    %1823 = vmatprep.subr.bf16.mxu0 0
    %1824 = vmatpush1.bf16.msra.mxu0 0
    %1825 = vmatprep.subr.bf16.mxu0 0
    %1826 = vmatpush1.bf16.msra.mxu0 0
    %1827 = vmatprep.subr.bf16.mxu0 0
    %1828 = vmatpush1.bf16.msra.mxu0 0
    %1829 = vmatprep.subr.bf16.mxu0 0
    %1830 = vmatpush1.bf16.msra.mxu0 0
    %1831 = vmatprep.mubr.bf16.mxu0 0
    %1832 = vmatmul.mubr.bf16.gmra.mrb[0].mxu0 %v1757
    %v1833 = vpop.f32.mrb[0].mxu0
    %v1834 = vadd.f32 0.0, %v1833
    %v1835 = vpop.f32.mrb[0].mxu0
    %v1836 = vadd.f32 0.0, %v1835
    %v1837 = vpop.f32.mrb[0].mxu0
    %v1838 = vpop.f32.mrb[0].mxu0
    %1839 = vdwg.mxu0
    %v1840 = vadd.f32 %v1753, %v1793
    %v1841 = vadd.f32 %v1754, %v1795
    %v1842 = vadd.f32 %v1755, %v1834
    %v1843 = vadd.f32 %v1756, %v1836
    %v1844 = vmul.f32 %v1840, 0.5
    %v1845 = vtanh.pop %v1844
    %v1846 = vmul.f32 %v1845, 0.5
    %v1847 = vadd.f32 %v1846, 0.5
    %v1848 = vmul.f32 %v1841, 0.5
    %v1849 = vtanh.pop %v1848
    %v1850 = vmul.f32 %v1849, 0.5
    %v1851 = vadd.f32 %v1850, 0.5
    %v1852 = vtanh.pop %v1842
    %v1853 = vmul.f32 %v1843, 0.5
    %v1854 = vtanh.pop %v1853
    %v1855 = vmul.f32 %v1854, 0.5
    %v1856 = vadd.f32 %v1855, 0.5
    %v1857 = vmul.f32 %v1851, %v1745
    %v1858 = vmul.f32 %v1847, %v1852
    %v1859 = vadd.f32 %v1857, %v1858
    %v1860 = vtanh.pop %v1859
    %v1861 = vmul.f32 %v1856, %v1860
    %s1862 = scalar_lea.vmem [#allocation3], 80
    %1863 = vst [vmem:[%s1862] sm:$0xff] %v1861
    %s1864 = smul.u32 11, 4
    %s1865 = smul.addr %s1864, 8
    %s1866 = scalar_lea.vmem [#allocation2], %s1865
    %v1867 = vld [vmem:[%s1866] sm:$0xff]
    %v1868 = vld [vmem:[%s1866 + $0x8] sm:$0xff]
    %v1869 = vld [vmem:[%s1866 + $0x10] sm:$0xff]
    %v1870 = vld [vmem:[%s1866 + $0x18] sm:$0xff]
    %v1871 = vpack.c.bf16 %v1861, %v1861
    %1872 = vmatprep.subr.bf16.mxu0 %v556
    %1873 = vmatpush1.bf16.msra.mxu0 %v555
    %1874 = vmatprep.subr.bf16.mxu0 %v560
    %1875 = vmatpush1.bf16.msra.mxu0 %v559
    %1876 = vmatprep.subr.bf16.mxu0 %v564
    %1877 = vmatpush1.bf16.msra.mxu0 %v563
    %1878 = vmatprep.subr.bf16.mxu0 %v568
    %1879 = vmatpush1.bf16.msra.mxu0 %v567
    %1880 = vmatprep.subr.bf16.mxu0 %v572
    %1881 = vmatpush1.bf16.msra.mxu0 %v571
    %1882 = vmatprep.subr.bf16.mxu0 %v576
    %1883 = vmatpush1.bf16.msra.mxu0 %v575
    %1884 = vmatprep.subr.bf16.mxu0 %v580
    %1885 = vmatpush1.bf16.msra.mxu0 %v579
    %1886 = vmatprep.subr.bf16.mxu0 %v584
    %1887 = vmatpush1.bf16.msra.mxu0 %v583
    %1888 = vmatprep.subr.bf16.mxu0 0
    %1889 = vmatpush1.bf16.msra.mxu0 0
    %1890 = vmatprep.subr.bf16.mxu0 0
    %1891 = vmatpush1.bf16.msra.mxu0 0
    %1892 = vmatprep.subr.bf16.mxu0 0
    %1893 = vmatpush1.bf16.msra.mxu0 0
    %1894 = vmatprep.subr.bf16.mxu0 0
    %1895 = vmatpush1.bf16.msra.mxu0 0
    %1896 = vmatprep.subr.bf16.mxu0 0
    %1897 = vmatpush1.bf16.msra.mxu0 0
    %1898 = vmatprep.subr.bf16.mxu0 0
    %1899 = vmatpush1.bf16.msra.mxu0 0
    %1900 = vmatprep.subr.bf16.mxu0 0
    %1901 = vmatpush1.bf16.msra.mxu0 0
    %1902 = vmatprep.subr.bf16.mxu0 0
    %1903 = vmatpush1.bf16.msra.mxu0 0
    %1904 = vmatprep.mubr.bf16.mxu0 0
    %1905 = vmatmul.mubr.bf16.gmra.mrb[0].mxu0 %v1871
    %v1906 = vpop.f32.mrb[0].mxu0
    %v1907 = vadd.f32 0.0, %v1906
    %v1908 = vpop.f32.mrb[0].mxu0
    %v1909 = vadd.f32 0.0, %v1908
    %v1910 = vpop.f32.mrb[0].mxu0
    %v1911 = vpop.f32.mrb[0].mxu0
    %1912 = vdwg.mxu0
    %1913 = vmatprep.subr.bf16.mxu0 %v558
    %1914 = vmatpush1.bf16.msra.mxu0 %v557
    %1915 = vmatprep.subr.bf16.mxu0 %v562
    %1916 = vmatpush1.bf16.msra.mxu0 %v561
    %1917 = vmatprep.subr.bf16.mxu0 %v566
    %1918 = vmatpush1.bf16.msra.mxu0 %v565
    %1919 = vmatprep.subr.bf16.mxu0 %v570
    %1920 = vmatpush1.bf16.msra.mxu0 %v569
    %1921 = vmatprep.subr.bf16.mxu0 %v574
    %1922 = vmatpush1.bf16.msra.mxu0 %v573
    %1923 = vmatprep.subr.bf16.mxu0 %v578
    %1924 = vmatpush1.bf16.msra.mxu0 %v577
    %1925 = vmatprep.subr.bf16.mxu0 %v582
    %1926 = vmatpush1.bf16.msra.mxu0 %v581
    %1927 = vmatprep.subr.bf16.mxu0 %v586
    %1928 = vmatpush1.bf16.msra.mxu0 %v585
    %1929 = vmatprep.subr.bf16.mxu0 0
    %1930 = vmatpush1.bf16.msra.mxu0 0
    %1931 = vmatprep.subr.bf16.mxu0 0
    %1932 = vmatpush1.bf16.msra.mxu0 0
    %1933 = vmatprep.subr.bf16.mxu0 0
    %1934 = vmatpush1.bf16.msra.mxu0 0
    %1935 = vmatprep.subr.bf16.mxu0 0
    %1936 = vmatpush1.bf16.msra.mxu0 0
    %1937 = vmatprep.subr.bf16.mxu0 0
    %1938 = vmatpush1.bf16.msra.mxu0 0
    %1939 = vmatprep.subr.bf16.mxu0 0
    %1940 = vmatpush1.bf16.msra.mxu0 0
    %1941 = vmatprep.subr.bf16.mxu0 0
    %1942 = vmatpush1.bf16.msra.mxu0 0
    %1943 = vmatprep.subr.bf16.mxu0 0
    %1944 = vmatpush1.bf16.msra.mxu0 0
    %1945 = vmatprep.mubr.bf16.mxu0 0
    %1946 = vmatmul.mubr.bf16.gmra.mrb[0].mxu0 %v1871
    %v1947 = vpop.f32.mrb[0].mxu0
    %v1948 = vadd.f32 0.0, %v1947
    %v1949 = vpop.f32.mrb[0].mxu0
    %v1950 = vadd.f32 0.0, %v1949
    %v1951 = vpop.f32.mrb[0].mxu0
    %v1952 = vpop.f32.mrb[0].mxu0
    %1953 = vdwg.mxu0
    %v1954 = vadd.f32 %v1867, %v1907
    %v1955 = vadd.f32 %v1868, %v1909
    %v1956 = vadd.f32 %v1869, %v1948
    %v1957 = vadd.f32 %v1870, %v1950
    %v1958 = vmul.f32 %v1954, 0.5
    %v1959 = vtanh.pop %v1958
    %v1960 = vmul.f32 %v1959, 0.5
    %v1961 = vadd.f32 %v1960, 0.5
    %v1962 = vmul.f32 %v1955, 0.5
    %v1963 = vtanh.pop %v1962
    %v1964 = vmul.f32 %v1963, 0.5
    %v1965 = vadd.f32 %v1964, 0.5
    %v1966 = vtanh.pop %v1956
    %v1967 = vmul.f32 %v1957, 0.5
    %v1968 = vtanh.pop %v1967
    %v1969 = vmul.f32 %v1968, 0.5
    %v1970 = vadd.f32 %v1969, 0.5
    %v1971 = vmul.f32 %v1965, %v1859
    %v1972 = vmul.f32 %v1961, %v1966
    %v1973 = vadd.f32 %v1971, %v1972
    %v1974 = vtanh.pop %v1973
    %v1975 = vmul.f32 %v1970, %v1974
    %s1976 = scalar_lea.vmem [#allocation3], 88
    %1977 = vst [vmem:[%s1976] sm:$0xff] %v1975
    %s1978 = smul.u32 12, 4
    %s1979 = smul.addr %s1978, 8
    %s1980 = scalar_lea.vmem [#allocation2], %s1979
    %v1981 = vld [vmem:[%s1980] sm:$0xff]
    %v1982 = vld [vmem:[%s1980 + $0x8] sm:$0xff]
    %v1983 = vld [vmem:[%s1980 + $0x10] sm:$0xff]
    %v1984 = vld [vmem:[%s1980 + $0x18] sm:$0xff]
    %v1985 = vpack.c.bf16 %v1975, %v1975
    %1986 = vmatprep.subr.bf16.mxu0 %v556
    %1987 = vmatpush1.bf16.msra.mxu0 %v555
    %1988 = vmatprep.subr.bf16.mxu0 %v560
    %1989 = vmatpush1.bf16.msra.mxu0 %v559
    %1990 = vmatprep.subr.bf16.mxu0 %v564
    %1991 = vmatpush1.bf16.msra.mxu0 %v563
    %1992 = vmatprep.subr.bf16.mxu0 %v568
    %1993 = vmatpush1.bf16.msra.mxu0 %v567
    %1994 = vmatprep.subr.bf16.mxu0 %v572
    %1995 = vmatpush1.bf16.msra.mxu0 %v571
    %1996 = vmatprep.subr.bf16.mxu0 %v576
    %1997 = vmatpush1.bf16.msra.mxu0 %v575
    %1998 = vmatprep.subr.bf16.mxu0 %v580
    %1999 = vmatpush1.bf16.msra.mxu0 %v579
    %2000 = vmatprep.subr.bf16.mxu0 %v584
    %2001 = vmatpush1.bf16.msra.mxu0 %v583
    %2002 = vmatprep.subr.bf16.mxu0 0
    %2003 = vmatpush1.bf16.msra.mxu0 0
    %2004 = vmatprep.subr.bf16.mxu0 0
    %2005 = vmatpush1.bf16.msra.mxu0 0
    %2006 = vmatprep.subr.bf16.mxu0 0
    %2007 = vmatpush1.bf16.msra.mxu0 0
    %2008 = vmatprep.subr.bf16.mxu0 0
    %2009 = vmatpush1.bf16.msra.mxu0 0
    %2010 = vmatprep.subr.bf16.mxu0 0
    %2011 = vmatpush1.bf16.msra.mxu0 0
    %2012 = vmatprep.subr.bf16.mxu0 0
    %2013 = vmatpush1.bf16.msra.mxu0 0
    %2014 = vmatprep.subr.bf16.mxu0 0
    %2015 = vmatpush1.bf16.msra.mxu0 0
    %2016 = vmatprep.subr.bf16.mxu0 0
    %2017 = vmatpush1.bf16.msra.mxu0 0
    %2018 = vmatprep.mubr.bf16.mxu0 0
    %2019 = vmatmul.mubr.bf16.gmra.mrb[0].mxu0 %v1985
    %v2020 = vpop.f32.mrb[0].mxu0
    %v2021 = vadd.f32 0.0, %v2020
    %v2022 = vpop.f32.mrb[0].mxu0
    %v2023 = vadd.f32 0.0, %v2022
    %v2024 = vpop.f32.mrb[0].mxu0
    %v2025 = vpop.f32.mrb[0].mxu0
    %2026 = vdwg.mxu0
    %2027 = vmatprep.subr.bf16.mxu0 %v558
    %2028 = vmatpush1.bf16.msra.mxu0 %v557
    %2029 = vmatprep.subr.bf16.mxu0 %v562
    %2030 = vmatpush1.bf16.msra.mxu0 %v561
    %2031 = vmatprep.subr.bf16.mxu0 %v566
    %2032 = vmatpush1.bf16.msra.mxu0 %v565
    %2033 = vmatprep.subr.bf16.mxu0 %v570
    %2034 = vmatpush1.bf16.msra.mxu0 %v569
    %2035 = vmatprep.subr.bf16.mxu0 %v574
    %2036 = vmatpush1.bf16.msra.mxu0 %v573
    %2037 = vmatprep.subr.bf16.mxu0 %v578
    %2038 = vmatpush1.bf16.msra.mxu0 %v577
    %2039 = vmatprep.subr.bf16.mxu0 %v582
    %2040 = vmatpush1.bf16.msra.mxu0 %v581
    %2041 = vmatprep.subr.bf16.mxu0 %v586
    %2042 = vmatpush1.bf16.msra.mxu0 %v585
    %2043 = vmatprep.subr.bf16.mxu0 0
    %2044 = vmatpush1.bf16.msra.mxu0 0
    %2045 = vmatprep.subr.bf16.mxu0 0
    %2046 = vmatpush1.bf16.msra.mxu0 0
    %2047 = vmatprep.subr.bf16.mxu0 0
    %2048 = vmatpush1.bf16.msra.mxu0 0
    %2049 = vmatprep.subr.bf16.mxu0 0
    %2050 = vmatpush1.bf16.msra.mxu0 0
    %2051 = vmatprep.subr.bf16.mxu0 0
    %2052 = vmatpush1.bf16.msra.mxu0 0
    %2053 = vmatprep.subr.bf16.mxu0 0
    %2054 = vmatpush1.bf16.msra.mxu0 0
    %2055 = vmatprep.subr.bf16.mxu0 0
    %2056 = vmatpush1.bf16.msra.mxu0 0
    %2057 = vmatprep.subr.bf16.mxu0 0
    %2058 = vmatpush1.bf16.msra.mxu0 0
    %2059 = vmatprep.mubr.bf16.mxu0 0
    %2060 = vmatmul.mubr.bf16.gmra.mrb[0].mxu0 %v1985
    %v2061 = vpop.f32.mrb[0].mxu0
    %v2062 = vadd.f32 0.0, %v2061
    %v2063 = vpop.f32.mrb[0].mxu0
    %v2064 = vadd.f32 0.0, %v2063
    %v2065 = vpop.f32.mrb[0].mxu0
    %v2066 = vpop.f32.mrb[0].mxu0
    %2067 = vdwg.mxu0
    %v2068 = vadd.f32 %v1981, %v2021
    %v2069 = vadd.f32 %v1982, %v2023
    %v2070 = vadd.f32 %v1983, %v2062
    %v2071 = vadd.f32 %v1984, %v2064
    %v2072 = vmul.f32 %v2068, 0.5
    %v2073 = vtanh.pop %v2072
    %v2074 = vmul.f32 %v2073, 0.5
    %v2075 = vadd.f32 %v2074, 0.5
    %v2076 = vmul.f32 %v2069, 0.5
    %v2077 = vtanh.pop %v2076
    %v2078 = vmul.f32 %v2077, 0.5
    %v2079 = vadd.f32 %v2078, 0.5
    %v2080 = vtanh.pop %v2070
    %v2081 = vmul.f32 %v2071, 0.5
    %v2082 = vtanh.pop %v2081
    %v2083 = vmul.f32 %v2082, 0.5
    %v2084 = vadd.f32 %v2083, 0.5
    %v2085 = vmul.f32 %v2079, %v1973
    %v2086 = vmul.f32 %v2075, %v2080
    %v2087 = vadd.f32 %v2085, %v2086
    %v2088 = vtanh.pop %v2087
    %v2089 = vmul.f32 %v2084, %v2088
    %s2090 = scalar_lea.vmem [#allocation3], 96
    %2091 = vst [vmem:[%s2090] sm:$0xff] %v2089
    %s2092 = smul.u32 13, 4
    %s2093 = smul.addr %s2092, 8
    %s2094 = scalar_lea.vmem [#allocation2], %s2093
    %v2095 = vld [vmem:[%s2094] sm:$0xff]
    %v2096 = vld [vmem:[%s2094 + $0x8] sm:$0xff]
    %v2097 = vld [vmem:[%s2094 + $0x10] sm:$0xff]
    %v2098 = vld [vmem:[%s2094 + $0x18] sm:$0xff]
    %v2099 = vpack.c.bf16 %v2089, %v2089
    %2100 = vmatprep.subr.bf16.mxu0 %v556
    %2101 = vmatpush1.bf16.msra.mxu0 %v555
    %2102 = vmatprep.subr.bf16.mxu0 %v560
    %2103 = vmatpush1.bf16.msra.mxu0 %v559
    %2104 = vmatprep.subr.bf16.mxu0 %v564
    %2105 = vmatpush1.bf16.msra.mxu0 %v563
    %2106 = vmatprep.subr.bf16.mxu0 %v568
    %2107 = vmatpush1.bf16.msra.mxu0 %v567
    %2108 = vmatprep.subr.bf16.mxu0 %v572
    %2109 = vmatpush1.bf16.msra.mxu0 %v571
    %2110 = vmatprep.subr.bf16.mxu0 %v576
    %2111 = vmatpush1.bf16.msra.mxu0 %v575
    %2112 = vmatprep.subr.bf16.mxu0 %v580
    %2113 = vmatpush1.bf16.msra.mxu0 %v579
    %2114 = vmatprep.subr.bf16.mxu0 %v584
    %2115 = vmatpush1.bf16.msra.mxu0 %v583
    %2116 = vmatprep.subr.bf16.mxu0 0
    %2117 = vmatpush1.bf16.msra.mxu0 0
    %2118 = vmatprep.subr.bf16.mxu0 0
    %2119 = vmatpush1.bf16.msra.mxu0 0
    %2120 = vmatprep.subr.bf16.mxu0 0
    %2121 = vmatpush1.bf16.msra.mxu0 0
    %2122 = vmatprep.subr.bf16.mxu0 0
    %2123 = vmatpush1.bf16.msra.mxu0 0
    %2124 = vmatprep.subr.bf16.mxu0 0
    %2125 = vmatpush1.bf16.msra.mxu0 0
    %2126 = vmatprep.subr.bf16.mxu0 0
    %2127 = vmatpush1.bf16.msra.mxu0 0
    %2128 = vmatprep.subr.bf16.mxu0 0
    %2129 = vmatpush1.bf16.msra.mxu0 0
    %2130 = vmatprep.subr.bf16.mxu0 0
    %2131 = vmatpush1.bf16.msra.mxu0 0
    %2132 = vmatprep.mubr.bf16.mxu0 0
    %2133 = vmatmul.mubr.bf16.gmra.mrb[0].mxu0 %v2099
    %v2134 = vpop.f32.mrb[0].mxu0
    %v2135 = vadd.f32 0.0, %v2134
    %v2136 = vpop.f32.mrb[0].mxu0
    %v2137 = vadd.f32 0.0, %v2136
    %v2138 = vpop.f32.mrb[0].mxu0
    %v2139 = vpop.f32.mrb[0].mxu0
    %2140 = vdwg.mxu0
    %2141 = vmatprep.subr.bf16.mxu0 %v558
    %2142 = vmatpush1.bf16.msra.mxu0 %v557
    %2143 = vmatprep.subr.bf16.mxu0 %v562
    %2144 = vmatpush1.bf16.msra.mxu0 %v561
    %2145 = vmatprep.subr.bf16.mxu0 %v566
    %2146 = vmatpush1.bf16.msra.mxu0 %v565
    %2147 = vmatprep.subr.bf16.mxu0 %v570
    %2148 = vmatpush1.bf16.msra.mxu0 %v569
    %2149 = vmatprep.subr.bf16.mxu0 %v574
    %2150 = vmatpush1.bf16.msra.mxu0 %v573
    %2151 = vmatprep.subr.bf16.mxu0 %v578
    %2152 = vmatpush1.bf16.msra.mxu0 %v577
    %2153 = vmatprep.subr.bf16.mxu0 %v582
    %2154 = vmatpush1.bf16.msra.mxu0 %v581
    %2155 = vmatprep.subr.bf16.mxu0 %v586
    %2156 = vmatpush1.bf16.msra.mxu0 %v585
    %2157 = vmatprep.subr.bf16.mxu0 0
    %2158 = vmatpush1.bf16.msra.mxu0 0
    %2159 = vmatprep.subr.bf16.mxu0 0
    %2160 = vmatpush1.bf16.msra.mxu0 0
    %2161 = vmatprep.subr.bf16.mxu0 0
    %2162 = vmatpush1.bf16.msra.mxu0 0
    %2163 = vmatprep.subr.bf16.mxu0 0
    %2164 = vmatpush1.bf16.msra.mxu0 0
    %2165 = vmatprep.subr.bf16.mxu0 0
    %2166 = vmatpush1.bf16.msra.mxu0 0
    %2167 = vmatprep.subr.bf16.mxu0 0
    %2168 = vmatpush1.bf16.msra.mxu0 0
    %2169 = vmatprep.subr.bf16.mxu0 0
    %2170 = vmatpush1.bf16.msra.mxu0 0
    %2171 = vmatprep.subr.bf16.mxu0 0
    %2172 = vmatpush1.bf16.msra.mxu0 0
    %2173 = vmatprep.mubr.bf16.mxu0 0
    %2174 = vmatmul.mubr.bf16.gmra.mrb[0].mxu0 %v2099
    %v2175 = vpop.f32.mrb[0].mxu0
    %v2176 = vadd.f32 0.0, %v2175
    %v2177 = vpop.f32.mrb[0].mxu0
    %v2178 = vadd.f32 0.0, %v2177
    %v2179 = vpop.f32.mrb[0].mxu0
    %v2180 = vpop.f32.mrb[0].mxu0
    %2181 = vdwg.mxu0
    %v2182 = vadd.f32 %v2095, %v2135
    %v2183 = vadd.f32 %v2096, %v2137
    %v2184 = vadd.f32 %v2097, %v2176
    %v2185 = vadd.f32 %v2098, %v2178
    %v2186 = vmul.f32 %v2182, 0.5
    %v2187 = vtanh.pop %v2186
    %v2188 = vmul.f32 %v2187, 0.5
    %v2189 = vadd.f32 %v2188, 0.5
    %v2190 = vmul.f32 %v2183, 0.5
    %v2191 = vtanh.pop %v2190
    %v2192 = vmul.f32 %v2191, 0.5
    %v2193 = vadd.f32 %v2192, 0.5
    %v2194 = vtanh.pop %v2184
    %v2195 = vmul.f32 %v2185, 0.5
    %v2196 = vtanh.pop %v2195
    %v2197 = vmul.f32 %v2196, 0.5
    %v2198 = vadd.f32 %v2197, 0.5
    %v2199 = vmul.f32 %v2193, %v2087
    %v2200 = vmul.f32 %v2189, %v2194
    %v2201 = vadd.f32 %v2199, %v2200
    %v2202 = vtanh.pop %v2201
    %v2203 = vmul.f32 %v2198, %v2202
    %s2204 = scalar_lea.vmem [#allocation3], 104
    %2205 = vst [vmem:[%s2204] sm:$0xff] %v2203
    %s2206 = smul.u32 14, 4
    %s2207 = smul.addr %s2206, 8
    %s2208 = scalar_lea.vmem [#allocation2], %s2207
    %v2209 = vld [vmem:[%s2208] sm:$0xff]
    %v2210 = vld [vmem:[%s2208 + $0x8] sm:$0xff]
    %v2211 = vld [vmem:[%s2208 + $0x10] sm:$0xff]
    %v2212 = vld [vmem:[%s2208 + $0x18] sm:$0xff]
    %v2213 = vpack.c.bf16 %v2203, %v2203
    %2214 = vmatprep.subr.bf16.mxu0 %v556
    %2215 = vmatpush1.bf16.msra.mxu0 %v555
    %2216 = vmatprep.subr.bf16.mxu0 %v560
    %2217 = vmatpush1.bf16.msra.mxu0 %v559
    %2218 = vmatprep.subr.bf16.mxu0 %v564
    %2219 = vmatpush1.bf16.msra.mxu0 %v563
    %2220 = vmatprep.subr.bf16.mxu0 %v568
    %2221 = vmatpush1.bf16.msra.mxu0 %v567
    %2222 = vmatprep.subr.bf16.mxu0 %v572
    %2223 = vmatpush1.bf16.msra.mxu0 %v571
    %2224 = vmatprep.subr.bf16.mxu0 %v576
    %2225 = vmatpush1.bf16.msra.mxu0 %v575
    %2226 = vmatprep.subr.bf16.mxu0 %v580
    %2227 = vmatpush1.bf16.msra.mxu0 %v579
    %2228 = vmatprep.subr.bf16.mxu0 %v584
    %2229 = vmatpush1.bf16.msra.mxu0 %v583
    %2230 = vmatprep.subr.bf16.mxu0 0
    %2231 = vmatpush1.bf16.msra.mxu0 0
    %2232 = vmatprep.subr.bf16.mxu0 0
    %2233 = vmatpush1.bf16.msra.mxu0 0
    %2234 = vmatprep.subr.bf16.mxu0 0
    %2235 = vmatpush1.bf16.msra.mxu0 0
    %2236 = vmatprep.subr.bf16.mxu0 0
    %2237 = vmatpush1.bf16.msra.mxu0 0
    %2238 = vmatprep.subr.bf16.mxu0 0
    %2239 = vmatpush1.bf16.msra.mxu0 0
    %2240 = vmatprep.subr.bf16.mxu0 0
    %2241 = vmatpush1.bf16.msra.mxu0 0
    %2242 = vmatprep.subr.bf16.mxu0 0
    %2243 = vmatpush1.bf16.msra.mxu0 0
    %2244 = vmatprep.subr.bf16.mxu0 0
    %2245 = vmatpush1.bf16.msra.mxu0 0
    %2246 = vmatprep.mubr.bf16.mxu0 0
    %2247 = vmatmul.mubr.bf16.gmra.mrb[0].mxu0 %v2213
    %v2248 = vpop.f32.mrb[0].mxu0
    %v2249 = vadd.f32 0.0, %v2248
    %v2250 = vpop.f32.mrb[0].mxu0
    %v2251 = vadd.f32 0.0, %v2250
    %v2252 = vpop.f32.mrb[0].mxu0
    %v2253 = vpop.f32.mrb[0].mxu0
    %2254 = vdwg.mxu0
    %2255 = vmatprep.subr.bf16.mxu0 %v558
    %2256 = vmatpush1.bf16.msra.mxu0 %v557
    %2257 = vmatprep.subr.bf16.mxu0 %v562
    %2258 = vmatpush1.bf16.msra.mxu0 %v561
    %2259 = vmatprep.subr.bf16.mxu0 %v566
    %2260 = vmatpush1.bf16.msra.mxu0 %v565
    %2261 = vmatprep.subr.bf16.mxu0 %v570
    %2262 = vmatpush1.bf16.msra.mxu0 %v569
    %2263 = vmatprep.subr.bf16.mxu0 %v574
    %2264 = vmatpush1.bf16.msra.mxu0 %v573
    %2265 = vmatprep.subr.bf16.mxu0 %v578
    %2266 = vmatpush1.bf16.msra.mxu0 %v577
    %2267 = vmatprep.subr.bf16.mxu0 %v582
    %2268 = vmatpush1.bf16.msra.mxu0 %v581
    %2269 = vmatprep.subr.bf16.mxu0 %v586
    %2270 = vmatpush1.bf16.msra.mxu0 %v585
    %2271 = vmatprep.subr.bf16.mxu0 0
    %2272 = vmatpush1.bf16.msra.mxu0 0
    %2273 = vmatprep.subr.bf16.mxu0 0
    %2274 = vmatpush1.bf16.msra.mxu0 0
    %2275 = vmatprep.subr.bf16.mxu0 0
    %2276 = vmatpush1.bf16.msra.mxu0 0
    %2277 = vmatprep.subr.bf16.mxu0 0
    %2278 = vmatpush1.bf16.msra.mxu0 0
    %2279 = vmatprep.subr.bf16.mxu0 0
    %2280 = vmatpush1.bf16.msra.mxu0 0
    %2281 = vmatprep.subr.bf16.mxu0 0
    %2282 = vmatpush1.bf16.msra.mxu0 0
    %2283 = vmatprep.subr.bf16.mxu0 0
    %2284 = vmatpush1.bf16.msra.mxu0 0
    %2285 = vmatprep.subr.bf16.mxu0 0
    %2286 = vmatpush1.bf16.msra.mxu0 0
    %2287 = vmatprep.mubr.bf16.mxu0 0
    %2288 = vmatmul.mubr.bf16.gmra.mrb[0].mxu0 %v2213
    %v2289 = vpop.f32.mrb[0].mxu0
    %v2290 = vadd.f32 0.0, %v2289
    %v2291 = vpop.f32.mrb[0].mxu0
    %v2292 = vadd.f32 0.0, %v2291
    %v2293 = vpop.f32.mrb[0].mxu0
    %v2294 = vpop.f32.mrb[0].mxu0
    %2295 = vdwg.mxu0
    %v2296 = vadd.f32 %v2209, %v2249
    %v2297 = vadd.f32 %v2210, %v2251
    %v2298 = vadd.f32 %v2211, %v2290
    %v2299 = vadd.f32 %v2212, %v2292
    %v2300 = vmul.f32 %v2296, 0.5
    %v2301 = vtanh.pop %v2300
    %v2302 = vmul.f32 %v2301, 0.5
    %v2303 = vadd.f32 %v2302, 0.5
    %v2304 = vmul.f32 %v2297, 0.5
    %v2305 = vtanh.pop %v2304
    %v2306 = vmul.f32 %v2305, 0.5
    %v2307 = vadd.f32 %v2306, 0.5
    %v2308 = vtanh.pop %v2298
    %v2309 = vmul.f32 %v2299, 0.5
    %v2310 = vtanh.pop %v2309
    %v2311 = vmul.f32 %v2310, 0.5
    %v2312 = vadd.f32 %v2311, 0.5
    %v2313 = vmul.f32 %v2307, %v2201
    %v2314 = vmul.f32 %v2303, %v2308
    %v2315 = vadd.f32 %v2313, %v2314
    %v2316 = vtanh.pop %v2315
    %v2317 = vmul.f32 %v2312, %v2316
    %s2318 = scalar_lea.vmem [#allocation3], 112
    %2319 = vst [vmem:[%s2318] sm:$0xff] %v2317
    %s2320 = smul.u32 15, 4
    %s2321 = smul.addr %s2320, 8
    %s2322 = scalar_lea.vmem [#allocation2], %s2321
    %v2323 = vld [vmem:[%s2322] sm:$0xff]
    %v2324 = vld [vmem:[%s2322 + $0x8] sm:$0xff]
    %v2325 = vld [vmem:[%s2322 + $0x10] sm:$0xff]
    %v2326 = vld [vmem:[%s2322 + $0x18] sm:$0xff]
    %v2327 = vpack.c.bf16 %v2317, %v2317
    %2328 = vmatprep.subr.bf16.mxu0 %v556
    %2329 = vmatpush1.bf16.msra.mxu0 %v555
    %2330 = vmatprep.subr.bf16.mxu0 %v560
    %2331 = vmatpush1.bf16.msra.mxu0 %v559
    %2332 = vmatprep.subr.bf16.mxu0 %v564
    %2333 = vmatpush1.bf16.msra.mxu0 %v563
    %2334 = vmatprep.subr.bf16.mxu0 %v568
    %2335 = vmatpush1.bf16.msra.mxu0 %v567
    %2336 = vmatprep.subr.bf16.mxu0 %v572
    %2337 = vmatpush1.bf16.msra.mxu0 %v571
    %2338 = vmatprep.subr.bf16.mxu0 %v576
    %2339 = vmatpush1.bf16.msra.mxu0 %v575
    %2340 = vmatprep.subr.bf16.mxu0 %v580
    %2341 = vmatpush1.bf16.msra.mxu0 %v579
    %2342 = vmatprep.subr.bf16.mxu0 %v584
    %2343 = vmatpush1.bf16.msra.mxu0 %v583
    %2344 = vmatprep.subr.bf16.mxu0 0
    %2345 = vmatpush1.bf16.msra.mxu0 0
    %2346 = vmatprep.subr.bf16.mxu0 0
    %2347 = vmatpush1.bf16.msra.mxu0 0
    %2348 = vmatprep.subr.bf16.mxu0 0
    %2349 = vmatpush1.bf16.msra.mxu0 0
    %2350 = vmatprep.subr.bf16.mxu0 0
    %2351 = vmatpush1.bf16.msra.mxu0 0
    %2352 = vmatprep.subr.bf16.mxu0 0
    %2353 = vmatpush1.bf16.msra.mxu0 0
    %2354 = vmatprep.subr.bf16.mxu0 0
    %2355 = vmatpush1.bf16.msra.mxu0 0
    %2356 = vmatprep.subr.bf16.mxu0 0
    %2357 = vmatpush1.bf16.msra.mxu0 0
    %2358 = vmatprep.subr.bf16.mxu0 0
    %2359 = vmatpush1.bf16.msra.mxu0 0
    %2360 = vmatprep.mubr.bf16.mxu0 0
    %2361 = vmatmul.mubr.bf16.gmra.mrb[0].mxu0 %v2327
    %v2362 = vpop.f32.mrb[0].mxu0
    %v2363 = vadd.f32 0.0, %v2362
    %v2364 = vpop.f32.mrb[0].mxu0
    %v2365 = vadd.f32 0.0, %v2364
    %v2366 = vpop.f32.mrb[0].mxu0
    %v2367 = vpop.f32.mrb[0].mxu0
    %2368 = vdwg.mxu0
    %2369 = vmatprep.subr.bf16.mxu0 %v558
    %2370 = vmatpush1.bf16.msra.mxu0 %v557
    %2371 = vmatprep.subr.bf16.mxu0 %v562
    %2372 = vmatpush1.bf16.msra.mxu0 %v561
    %2373 = vmatprep.subr.bf16.mxu0 %v566
    %2374 = vmatpush1.bf16.msra.mxu0 %v565
    %2375 = vmatprep.subr.bf16.mxu0 %v570
    %2376 = vmatpush1.bf16.msra.mxu0 %v569
    %2377 = vmatprep.subr.bf16.mxu0 %v574
    %2378 = vmatpush1.bf16.msra.mxu0 %v573
    %2379 = vmatprep.subr.bf16.mxu0 %v578
    %2380 = vmatpush1.bf16.msra.mxu0 %v577
    %2381 = vmatprep.subr.bf16.mxu0 %v582
    %2382 = vmatpush1.bf16.msra.mxu0 %v581
    %2383 = vmatprep.subr.bf16.mxu0 %v586
    %2384 = vmatpush1.bf16.msra.mxu0 %v585
    %2385 = vmatprep.subr.bf16.mxu0 0
    %2386 = vmatpush1.bf16.msra.mxu0 0
    %2387 = vmatprep.subr.bf16.mxu0 0
    %2388 = vmatpush1.bf16.msra.mxu0 0
    %2389 = vmatprep.subr.bf16.mxu0 0
    %2390 = vmatpush1.bf16.msra.mxu0 0
    %2391 = vmatprep.subr.bf16.mxu0 0
    %2392 = vmatpush1.bf16.msra.mxu0 0
    %2393 = vmatprep.subr.bf16.mxu0 0
    %2394 = vmatpush1.bf16.msra.mxu0 0
    %2395 = vmatprep.subr.bf16.mxu0 0
    %2396 = vmatpush1.bf16.msra.mxu0 0
    %2397 = vmatprep.subr.bf16.mxu0 0
    %2398 = vmatpush1.bf16.msra.mxu0 0
    %2399 = vmatprep.subr.bf16.mxu0 0
    %2400 = vmatpush1.bf16.msra.mxu0 0
    %2401 = vmatprep.mubr.bf16.mxu0 0
    %2402 = vmatmul.mubr.bf16.gmra.mrb[0].mxu0 %v2327
    %v2403 = vpop.f32.mrb[0].mxu0
    %v2404 = vadd.f32 0.0, %v2403
    %v2405 = vpop.f32.mrb[0].mxu0
    %v2406 = vadd.f32 0.0, %v2405
    %v2407 = vpop.f32.mrb[0].mxu0
    %v2408 = vpop.f32.mrb[0].mxu0
    %2409 = vdwg.mxu0
    %v2410 = vadd.f32 %v2323, %v2363
    %v2411 = vadd.f32 %v2324, %v2365
    %v2412 = vadd.f32 %v2325, %v2404
    %v2413 = vadd.f32 %v2326, %v2406
    %v2414 = vmul.f32 %v2410, 0.5
    %v2415 = vtanh.pop %v2414
    %v2416 = vmul.f32 %v2415, 0.5
    %v2417 = vadd.f32 %v2416, 0.5
    %v2418 = vmul.f32 %v2411, 0.5
    %v2419 = vtanh.pop %v2418
    %v2420 = vmul.f32 %v2419, 0.5
    %v2421 = vadd.f32 %v2420, 0.5
    %v2422 = vtanh.pop %v2412
    %v2423 = vmul.f32 %v2413, 0.5
    %v2424 = vtanh.pop %v2423
    %v2425 = vmul.f32 %v2424, 0.5
    %v2426 = vadd.f32 %v2425, 0.5
    %v2427 = vmul.f32 %v2421, %v2315
    %v2428 = vmul.f32 %v2417, %v2422
    %v2429 = vadd.f32 %v2427, %v2428
    %v2430 = vtanh.pop %v2429
    %v2431 = vmul.f32 %v2426, %v2430
    %s2432 = scalar_lea.vmem [#allocation3], 120
    %2433 = vst [vmem:[%s2432] sm:$0xff] %v2431
    %v2434 = vld [vmem:[#allocation3] sm:$0xff]
    %v2435 = vld [vmem:[#allocation3 + $0x8] sm:$0xff]
    %v2436 = vld [vmem:[#allocation3 + $0x10] sm:$0xff]
    %v2437 = vld [vmem:[#allocation3 + $0x18] sm:$0xff]
    %v2438 = vld [vmem:[#allocation3 + $0x20] sm:$0xff]
    %v2439 = vld [vmem:[#allocation3 + $0x28] sm:$0xff]
    %v2440 = vld [vmem:[#allocation3 + $0x30] sm:$0xff]
    %v2441 = vld [vmem:[#allocation3 + $0x38] sm:$0xff]
    %v2442 = vld [vmem:[#allocation3 + $0x40] sm:$0xff]
    %v2443 = vld [vmem:[#allocation3 + $0x48] sm:$0xff]
    %v2444 = vld [vmem:[#allocation3 + $0x50] sm:$0xff]
    %v2445 = vld [vmem:[#allocation3 + $0x58] sm:$0xff]
    %v2446 = vld [vmem:[#allocation3 + $0x60] sm:$0xff]
    %v2447 = vld [vmem:[#allocation3 + $0x68] sm:$0xff]
    %v2448 = vld [vmem:[#allocation3 + $0x70] sm:$0xff]
    %v2449 = vld [vmem:[#allocation3 + $0x78] sm:$0xff]
    %v2450 = vpack.c.bf16 %v2435, %v2434
    %v2451 = vpack.c.bf16 %v2437, %v2436
    %v2452 = vpack.c.bf16 %v2439, %v2438
    %v2453 = vpack.c.bf16 %v2441, %v2440
    %v2454 = vpack.c.bf16 %v2443, %v2442
    %v2455 = vpack.c.bf16 %v2445, %v2444
    %v2456 = vpack.c.bf16 %v2447, %v2446
    %v2457 = vpack.c.bf16 %v2449, %v2448
    %v2458 = vld [vmem:[%s4] sm:$0xff]
    %v2459 = vld [vmem:[%s4 + $0x8] sm:$0xff]
    %v2460 = vld [vmem:[%s4 + $0x10] sm:$0xff]
    %v2461 = vld [vmem:[%s4 + $0x18] sm:$0xff]
    %v2462 = vld [vmem:[%s4 + $0x20] sm:$0xff]
    %v2463 = vld [vmem:[%s4 + $0x28] sm:$0xff]
    %v2464 = vld [vmem:[%s4 + $0x30] sm:$0xff]
    %v2465 = vld [vmem:[%s4 + $0x38] sm:$0xff]
    %v2466 = vld [vmem:[%s4 + $0x40] sm:$0xff]
    %v2467 = vld [vmem:[%s4 + $0x48] sm:$0xff]
    %v2468 = vld [vmem:[%s4 + $0x50] sm:$0xff]
    %v2469 = vld [vmem:[%s4 + $0x58] sm:$0xff]
    %v2470 = vld [vmem:[%s4 + $0x60] sm:$0xff]
    %v2471 = vld [vmem:[%s4 + $0x68] sm:$0xff]
    %v2472 = vld [vmem:[%s4 + $0x70] sm:$0xff]
    %v2473 = vld [vmem:[%s4 + $0x78] sm:$0xff]
    %v2474 = vld [vmem:[%s4 + $0x80] sm:$0xff]
    %v2475 = vld [vmem:[%s4 + $0x88] sm:$0xff]
    %v2476 = vld [vmem:[%s4 + $0x90] sm:$0xff]
    %v2477 = vld [vmem:[%s4 + $0x98] sm:$0xff]
    %v2478 = vld [vmem:[%s4 + $0xa0] sm:$0xff]
    %v2479 = vld [vmem:[%s4 + $0xa8] sm:$0xff]
    %v2480 = vld [vmem:[%s4 + $0xb0] sm:$0xff]
    %v2481 = vld [vmem:[%s4 + $0xb8] sm:$0xff]
    %v2482 = vld [vmem:[%s4 + $0xc0] sm:$0xff]
    %v2483 = vld [vmem:[%s4 + $0xc8] sm:$0xff]
    %v2484 = vld [vmem:[%s4 + $0xd0] sm:$0xff]
    %v2485 = vld [vmem:[%s4 + $0xd8] sm:$0xff]
    %v2486 = vld [vmem:[%s4 + $0xe0] sm:$0xff]
    %v2487 = vld [vmem:[%s4 + $0xe8] sm:$0xff]
    %v2488 = vld [vmem:[%s4 + $0xf0] sm:$0xff]
    %v2489 = vld [vmem:[%s4 + $0xf8] sm:$0xff]
    %v2490 = vld [vmem:[%s6] sm:$0xf]
    %v2492 = vlaneseq
    %v2493 = vshrl.u32 %v2492, 7
    %v2494 = vsub.s32 0, %v2493
    %v2495 = vrot.slane %v2490, %v2494
    %v2496 = vlaneseq
    %v2497 = vshrl.u32 %v2496, 7
    %v2498 = vsub.s32 1, %v2497
    %v2499 = vrot.slane %v2490, %v2498
    %v2500 = vlaneseq
    %v2501 = vshrl.u32 %v2500, 7
    %v2502 = vsub.s32 2, %v2501
    %v2503 = vrot.slane %v2490, %v2502
    %v2504 = vlaneseq
    %v2505 = vshrl.u32 %v2504, 7
    %v2506 = vsub.s32 3, %v2505
    %v2507 = vrot.slane %v2490, %v2506
    %v2544 = vunpack.c.l.b16 %v2458
    %v2545 = vunpack.c.h.b16 %v2458
    %v2546 = vunpack.c.l.b16 %v2459
    %v2547 = vunpack.c.h.b16 %v2459
    %v2548 = vunpack.c.l.b16 %v2460
    %v2549 = vunpack.c.h.b16 %v2460
    %v2550 = vunpack.c.l.b16 %v2461
    %v2551 = vunpack.c.h.b16 %v2461
    %v2552 = vunpack.c.l.b16 %v2462
    %v2553 = vunpack.c.h.b16 %v2462
    %v2554 = vunpack.c.l.b16 %v2463
    %v2555 = vunpack.c.h.b16 %v2463
    %v2556 = vunpack.c.l.b16 %v2464
    %v2557 = vunpack.c.h.b16 %v2464
    %v2558 = vunpack.c.l.b16 %v2465
    %v2559 = vunpack.c.h.b16 %v2465
    %v2560 = vunpack.c.l.b16 %v2466
    %v2561 = vunpack.c.h.b16 %v2466
    %v2562 = vunpack.c.l.b16 %v2467
    %v2563 = vunpack.c.h.b16 %v2467
    %v2564 = vunpack.c.l.b16 %v2468
    %v2565 = vunpack.c.h.b16 %v2468
    %v2566 = vunpack.c.l.b16 %v2469
    %v2567 = vunpack.c.h.b16 %v2469
    %v2568 = vunpack.c.l.b16 %v2470
    %v2569 = vunpack.c.h.b16 %v2470
    %v2570 = vunpack.c.l.b16 %v2471
    %v2571 = vunpack.c.h.b16 %v2471
    %v2572 = vunpack.c.l.b16 %v2472
    %v2573 = vunpack.c.h.b16 %v2472
    %v2574 = vunpack.c.l.b16 %v2473
    %v2575 = vunpack.c.h.b16 %v2473
    %v2576 = vunpack.c.l.b16 %v2474
    %v2577 = vunpack.c.h.b16 %v2474
    %v2578 = vunpack.c.l.b16 %v2475
    %v2579 = vunpack.c.h.b16 %v2475
    %v2580 = vunpack.c.l.b16 %v2476
    %v2581 = vunpack.c.h.b16 %v2476
    %v2582 = vunpack.c.l.b16 %v2477
    %v2583 = vunpack.c.h.b16 %v2477
    %v2584 = vunpack.c.l.b16 %v2478
    %v2585 = vunpack.c.h.b16 %v2478
    %v2586 = vunpack.c.l.b16 %v2479
    %v2587 = vunpack.c.h.b16 %v2479
    %v2588 = vunpack.c.l.b16 %v2480
    %v2589 = vunpack.c.h.b16 %v2480
    %v2590 = vunpack.c.l.b16 %v2481
    %v2591 = vunpack.c.h.b16 %v2481
    %v2592 = vunpack.c.l.b16 %v2482
    %v2593 = vunpack.c.h.b16 %v2482
    %v2594 = vunpack.c.l.b16 %v2483
    %v2595 = vunpack.c.h.b16 %v2483
    %v2596 = vunpack.c.l.b16 %v2484
    %v2597 = vunpack.c.h.b16 %v2484
    %v2598 = vunpack.c.l.b16 %v2485
    %v2599 = vunpack.c.h.b16 %v2485
    %v2600 = vunpack.c.l.b16 %v2486
    %v2601 = vunpack.c.h.b16 %v2486
    %v2602 = vunpack.c.l.b16 %v2487
    %v2603 = vunpack.c.h.b16 %v2487
    %v2604 = vunpack.c.l.b16 %v2488
    %v2605 = vunpack.c.h.b16 %v2488
    %v2606 = vunpack.c.l.b16 %v2489
    %v2607 = vunpack.c.h.b16 %v2489
    %v2608 = vpack.c.b16 %v2548, %v2544
    %v2609 = vpack.c.b16 %v2549, %v2545
    %v2610 = vpack.c.b16 %v2550, %v2546
    %v2611 = vpack.c.b16 %v2551, %v2547
    %v2612 = vpack.c.b16 %v2556, %v2552
    %v2613 = vpack.c.b16 %v2557, %v2553
    %v2614 = vpack.c.b16 %v2558, %v2554
    %v2615 = vpack.c.b16 %v2559, %v2555
    %v2616 = vpack.c.b16 %v2564, %v2560
    %v2617 = vpack.c.b16 %v2565, %v2561
    %v2618 = vpack.c.b16 %v2566, %v2562
    %v2619 = vpack.c.b16 %v2567, %v2563
    %v2620 = vpack.c.b16 %v2572, %v2568
    %v2621 = vpack.c.b16 %v2573, %v2569
    %v2622 = vpack.c.b16 %v2574, %v2570
    %v2623 = vpack.c.b16 %v2575, %v2571
    %v2624 = vpack.c.b16 %v2580, %v2576
    %v2625 = vpack.c.b16 %v2581, %v2577
    %v2626 = vpack.c.b16 %v2582, %v2578
    %v2627 = vpack.c.b16 %v2583, %v2579
    %v2628 = vpack.c.b16 %v2588, %v2584
    %v2629 = vpack.c.b16 %v2589, %v2585
    %v2630 = vpack.c.b16 %v2590, %v2586
    %v2631 = vpack.c.b16 %v2591, %v2587
    %v2632 = vpack.c.b16 %v2596, %v2592
    %v2633 = vpack.c.b16 %v2597, %v2593
    %v2634 = vpack.c.b16 %v2598, %v2594
    %v2635 = vpack.c.b16 %v2599, %v2595
    %v2636 = vpack.c.b16 %v2604, %v2600
    %v2637 = vpack.c.b16 %v2605, %v2601
    %v2638 = vpack.c.b16 %v2606, %v2602
    %v2639 = vpack.c.b16 %v2607, %v2603
    %2672 = vmatprep.subr.bf16.mxu0 %v2609
    %2673 = vmatpush1.bf16.msra.mxu0 %v2608
    %2674 = vmatprep.subr.bf16.mxu0 %v2613
    %2675 = vmatpush1.bf16.msra.mxu0 %v2612
    %2676 = vmatprep.subr.bf16.mxu0 %v2617
    %2677 = vmatpush1.bf16.msra.mxu0 %v2616
    %2678 = vmatprep.subr.bf16.mxu0 %v2621
    %2679 = vmatpush1.bf16.msra.mxu0 %v2620
    %2680 = vmatprep.subr.bf16.mxu0 %v2625
    %2681 = vmatpush1.bf16.msra.mxu0 %v2624
    %2682 = vmatprep.subr.bf16.mxu0 %v2629
    %2683 = vmatpush1.bf16.msra.mxu0 %v2628
    %2684 = vmatprep.subr.bf16.mxu0 %v2633
    %2685 = vmatpush1.bf16.msra.mxu0 %v2632
    %2686 = vmatprep.subr.bf16.mxu0 %v2637
    %2687 = vmatpush1.bf16.msra.mxu0 %v2636
    %2688 = vmatprep.subr.bf16.mxu0 0
    %2689 = vmatpush1.bf16.msra.mxu0 0
    %2690 = vmatprep.subr.bf16.mxu0 0
    %2691 = vmatpush1.bf16.msra.mxu0 0
    %2692 = vmatprep.subr.bf16.mxu0 0
    %2693 = vmatpush1.bf16.msra.mxu0 0
    %2694 = vmatprep.subr.bf16.mxu0 0
    %2695 = vmatpush1.bf16.msra.mxu0 0
    %2696 = vmatprep.subr.bf16.mxu0 0
    %2697 = vmatpush1.bf16.msra.mxu0 0
    %2698 = vmatprep.subr.bf16.mxu0 0
    %2699 = vmatpush1.bf16.msra.mxu0 0
    %2700 = vmatprep.subr.bf16.mxu0 0
    %2701 = vmatpush1.bf16.msra.mxu0 0
    %2702 = vmatprep.subr.bf16.mxu0 0
    %2703 = vmatpush1.bf16.msra.mxu0 0
    %2704 = vmatprep.mubr.bf16.mxu0 0
    %2705 = vmatmul.mubr.bf16.gmra.mrb[0].mxu0 %v2450
    %v2706 = vpop.f32.mrb[0].mxu0
    %v2707 = vadd.f32 %v2495, %v2706
    %v2708 = vpop.f32.mrb[0].mxu0
    %v2709 = vadd.f32 %v2499, %v2708
    %v2710 = vpop.f32.mrb[0].mxu0
    %v2711 = vadd.f32 %v2495, %v2710
    %v2712 = vpop.f32.mrb[0].mxu0
    %v2713 = vadd.f32 %v2499, %v2712
    %2714 = vmatprep.mubr.bf16.mxu0 0
    %2715 = vmatmul.mubr.bf16.gmra.mrb[0].mxu0 %v2451
    %v2716 = vpop.f32.mrb[0].mxu0
    %v2717 = vadd.f32 %v2495, %v2716
    %v2718 = vpop.f32.mrb[0].mxu0
    %v2719 = vadd.f32 %v2499, %v2718
    %v2720 = vpop.f32.mrb[0].mxu0
    %v2721 = vadd.f32 %v2495, %v2720
    %v2722 = vpop.f32.mrb[0].mxu0
    %v2723 = vadd.f32 %v2499, %v2722
    %2724 = vmatprep.mubr.bf16.mxu0 0
    %2725 = vmatmul.mubr.bf16.gmra.mrb[0].mxu0 %v2452
    %v2726 = vpop.f32.mrb[0].mxu0
    %v2727 = vadd.f32 %v2495, %v2726
    %v2728 = vpop.f32.mrb[0].mxu0
    %v2729 = vadd.f32 %v2499, %v2728
    %v2730 = vpop.f32.mrb[0].mxu0
    %v2731 = vadd.f32 %v2495, %v2730
    %v2732 = vpop.f32.mrb[0].mxu0
    %v2733 = vadd.f32 %v2499, %v2732
    %2734 = vmatprep.mubr.bf16.mxu0 0
    %2735 = vmatmul.mubr.bf16.gmra.mrb[0].mxu0 %v2453
    %v2736 = vpop.f32.mrb[0].mxu0
    %v2737 = vadd.f32 %v2495, %v2736
    %v2738 = vpop.f32.mrb[0].mxu0
    %v2739 = vadd.f32 %v2499, %v2738
    %v2740 = vpop.f32.mrb[0].mxu0
    %v2741 = vadd.f32 %v2495, %v2740
    %v2742 = vpop.f32.mrb[0].mxu0
    %v2743 = vadd.f32 %v2499, %v2742
    %2744 = vmatprep.mubr.bf16.mxu0 0
    %2745 = vmatmul.mubr.bf16.gmra.mrb[0].mxu0 %v2454
    %v2746 = vpop.f32.mrb[0].mxu0
    %v2747 = vadd.f32 %v2495, %v2746
    %v2748 = vpop.f32.mrb[0].mxu0
    %v2749 = vadd.f32 %v2499, %v2748
    %v2750 = vpop.f32.mrb[0].mxu0
    %v2751 = vadd.f32 %v2495, %v2750
    %v2752 = vpop.f32.mrb[0].mxu0
    %v2753 = vadd.f32 %v2499, %v2752
    %2754 = vmatprep.mubr.bf16.mxu0 0
    %2755 = vmatmul.mubr.bf16.gmra.mrb[0].mxu0 %v2455
    %v2756 = vpop.f32.mrb[0].mxu0
    %v2757 = vadd.f32 %v2495, %v2756
    %v2758 = vpop.f32.mrb[0].mxu0
    %v2759 = vadd.f32 %v2499, %v2758
    %v2760 = vpop.f32.mrb[0].mxu0
    %v2761 = vadd.f32 %v2495, %v2760
    %v2762 = vpop.f32.mrb[0].mxu0
    %v2763 = vadd.f32 %v2499, %v2762
    %2764 = vmatprep.mubr.bf16.mxu0 0
    %2765 = vmatmul.mubr.bf16.gmra.mrb[0].mxu0 %v2456
    %v2766 = vpop.f32.mrb[0].mxu0
    %v2767 = vadd.f32 %v2495, %v2766
    %v2768 = vpop.f32.mrb[0].mxu0
    %v2769 = vadd.f32 %v2499, %v2768
    %v2770 = vpop.f32.mrb[0].mxu0
    %v2771 = vadd.f32 %v2495, %v2770
    %v2772 = vpop.f32.mrb[0].mxu0
    %v2773 = vadd.f32 %v2499, %v2772
    %2774 = vmatprep.mubr.bf16.mxu0 0
    %2775 = vmatmul.mubr.bf16.gmra.mrb[0].mxu0 %v2457
    %v2776 = vpop.f32.mrb[0].mxu0
    %v2777 = vadd.f32 %v2495, %v2776
    %v2778 = vpop.f32.mrb[0].mxu0
    %v2779 = vadd.f32 %v2499, %v2778
    %v2780 = vpop.f32.mrb[0].mxu0
    %v2781 = vadd.f32 %v2495, %v2780
    %v2782 = vpop.f32.mrb[0].mxu0
    %v2783 = vadd.f32 %v2499, %v2782
    %2784 = vdwg.mxu0
    %2785 = vmatprep.subr.bf16.mxu0 %v2611
    %2786 = vmatpush1.bf16.msra.mxu0 %v2610
    %2787 = vmatprep.subr.bf16.mxu0 %v2615
    %2788 = vmatpush1.bf16.msra.mxu0 %v2614
    %2789 = vmatprep.subr.bf16.mxu0 %v2619
    %2790 = vmatpush1.bf16.msra.mxu0 %v2618
    %2791 = vmatprep.subr.bf16.mxu0 %v2623
    %2792 = vmatpush1.bf16.msra.mxu0 %v2622
    %2793 = vmatprep.subr.bf16.mxu0 %v2627
    %2794 = vmatpush1.bf16.msra.mxu0 %v2626
    %2795 = vmatprep.subr.bf16.mxu0 %v2631
    %2796 = vmatpush1.bf16.msra.mxu0 %v2630
    %2797 = vmatprep.subr.bf16.mxu0 %v2635
    %2798 = vmatpush1.bf16.msra.mxu0 %v2634
    %2799 = vmatprep.subr.bf16.mxu0 %v2639
    %2800 = vmatpush1.bf16.msra.mxu0 %v2638
    %2801 = vmatprep.subr.bf16.mxu0 0
    %2802 = vmatpush1.bf16.msra.mxu0 0
    %2803 = vmatprep.subr.bf16.mxu0 0
    %2804 = vmatpush1.bf16.msra.mxu0 0
    %2805 = vmatprep.subr.bf16.mxu0 0
    %2806 = vmatpush1.bf16.msra.mxu0 0
    %2807 = vmatprep.subr.bf16.mxu0 0
    %2808 = vmatpush1.bf16.msra.mxu0 0
    %2809 = vmatprep.subr.bf16.mxu0 0
    %2810 = vmatpush1.bf16.msra.mxu0 0
    %2811 = vmatprep.subr.bf16.mxu0 0
    %2812 = vmatpush1.bf16.msra.mxu0 0
    %2813 = vmatprep.subr.bf16.mxu0 0
    %2814 = vmatpush1.bf16.msra.mxu0 0
    %2815 = vmatprep.subr.bf16.mxu0 0
    %2816 = vmatpush1.bf16.msra.mxu0 0
    %2817 = vmatprep.mubr.bf16.mxu0 0
    %2818 = vmatmul.mubr.bf16.gmra.mrb[0].mxu0 %v2450
    %v2819 = vpop.f32.mrb[0].mxu0
    %v2820 = vadd.f32 %v2503, %v2819
    %v2821 = vpop.f32.mrb[0].mxu0
    %v2822 = vadd.f32 %v2507, %v2821
    %v2823 = vpop.f32.mrb[0].mxu0
    %v2824 = vadd.f32 %v2503, %v2823
    %v2825 = vpop.f32.mrb[0].mxu0
    %v2826 = vadd.f32 %v2507, %v2825
    %2827 = vmatprep.mubr.bf16.mxu0 0
    %2828 = vmatmul.mubr.bf16.gmra.mrb[0].mxu0 %v2451
    %v2829 = vpop.f32.mrb[0].mxu0
    %v2830 = vadd.f32 %v2503, %v2829
    %v2831 = vpop.f32.mrb[0].mxu0
    %v2832 = vadd.f32 %v2507, %v2831
    %v2833 = vpop.f32.mrb[0].mxu0
    %v2834 = vadd.f32 %v2503, %v2833
    %v2835 = vpop.f32.mrb[0].mxu0
    %v2836 = vadd.f32 %v2507, %v2835
    %2837 = vmatprep.mubr.bf16.mxu0 0
    %2838 = vmatmul.mubr.bf16.gmra.mrb[0].mxu0 %v2452
    %v2839 = vpop.f32.mrb[0].mxu0
    %v2840 = vadd.f32 %v2503, %v2839
    %v2841 = vpop.f32.mrb[0].mxu0
    %v2842 = vadd.f32 %v2507, %v2841
    %v2843 = vpop.f32.mrb[0].mxu0
    %v2844 = vadd.f32 %v2503, %v2843
    %v2845 = vpop.f32.mrb[0].mxu0
    %v2846 = vadd.f32 %v2507, %v2845
    %2847 = vmatprep.mubr.bf16.mxu0 0
    %2848 = vmatmul.mubr.bf16.gmra.mrb[0].mxu0 %v2453
    %v2849 = vpop.f32.mrb[0].mxu0
    %v2850 = vadd.f32 %v2503, %v2849
    %v2851 = vpop.f32.mrb[0].mxu0
    %v2852 = vadd.f32 %v2507, %v2851
    %v2853 = vpop.f32.mrb[0].mxu0
    %v2854 = vadd.f32 %v2503, %v2853
    %v2855 = vpop.f32.mrb[0].mxu0
    %v2856 = vadd.f32 %v2507, %v2855
    %2857 = vmatprep.mubr.bf16.mxu0 0
    %2858 = vmatmul.mubr.bf16.gmra.mrb[0].mxu0 %v2454
    %v2859 = vpop.f32.mrb[0].mxu0
    %v2860 = vadd.f32 %v2503, %v2859
    %v2861 = vpop.f32.mrb[0].mxu0
    %v2862 = vadd.f32 %v2507, %v2861
    %v2863 = vpop.f32.mrb[0].mxu0
    %v2864 = vadd.f32 %v2503, %v2863
    %v2865 = vpop.f32.mrb[0].mxu0
    %v2866 = vadd.f32 %v2507, %v2865
    %2867 = vmatprep.mubr.bf16.mxu0 0
    %2868 = vmatmul.mubr.bf16.gmra.mrb[0].mxu0 %v2455
    %v2869 = vpop.f32.mrb[0].mxu0
    %v2870 = vadd.f32 %v2503, %v2869
    %v2871 = vpop.f32.mrb[0].mxu0
    %v2872 = vadd.f32 %v2507, %v2871
    %v2873 = vpop.f32.mrb[0].mxu0
    %v2874 = vadd.f32 %v2503, %v2873
    %v2875 = vpop.f32.mrb[0].mxu0
    %v2876 = vadd.f32 %v2507, %v2875
    %2877 = vmatprep.mubr.bf16.mxu0 0
    %2878 = vmatmul.mubr.bf16.gmra.mrb[0].mxu0 %v2456
    %v2879 = vpop.f32.mrb[0].mxu0
    %v2880 = vadd.f32 %v2503, %v2879
    %v2881 = vpop.f32.mrb[0].mxu0
    %v2882 = vadd.f32 %v2507, %v2881
    %v2883 = vpop.f32.mrb[0].mxu0
    %v2884 = vadd.f32 %v2503, %v2883
    %v2885 = vpop.f32.mrb[0].mxu0
    %v2886 = vadd.f32 %v2507, %v2885
    %2887 = vmatprep.mubr.bf16.mxu0 0
    %2888 = vmatmul.mubr.bf16.gmra.mrb[0].mxu0 %v2457
    %v2889 = vpop.f32.mrb[0].mxu0
    %v2890 = vadd.f32 %v2503, %v2889
    %v2891 = vpop.f32.mrb[0].mxu0
    %v2892 = vadd.f32 %v2507, %v2891
    %v2893 = vpop.f32.mrb[0].mxu0
    %v2894 = vadd.f32 %v2503, %v2893
    %v2895 = vpop.f32.mrb[0].mxu0
    %v2896 = vadd.f32 %v2507, %v2895
    %2897 = vdwg.mxu0
    %2898 = vst [vmem:[#allocation2] sm:$0xff] %v2707
    %2899 = vst [vmem:[#allocation2 + $0x8] sm:$0xff] %v2709
    %2900 = vst [vmem:[#allocation2 + $0x10] sm:$0xff] %v2820
    %2901 = vst [vmem:[#allocation2 + $0x18] sm:$0xff] %v2822
    %2902 = vst [vmem:[#allocation2 + $0x20] sm:$0xff] %v2711
    %2903 = vst [vmem:[#allocation2 + $0x28] sm:$0xff] %v2713
    %2904 = vst [vmem:[#allocation2 + $0x30] sm:$0xff] %v2824
    %2905 = vst [vmem:[#allocation2 + $0x38] sm:$0xff] %v2826
    %2906 = vst [vmem:[#allocation2 + $0x40] sm:$0xff] %v2717
    %2907 = vst [vmem:[#allocation2 + $0x48] sm:$0xff] %v2719
    %2908 = vst [vmem:[#allocation2 + $0x50] sm:$0xff] %v2830
    %2909 = vst [vmem:[#allocation2 + $0x58] sm:$0xff] %v2832
    %2910 = vst [vmem:[#allocation2 + $0x60] sm:$0xff] %v2721
    %2911 = vst [vmem:[#allocation2 + $0x68] sm:$0xff] %v2723
    %2912 = vst [vmem:[#allocation2 + $0x70] sm:$0xff] %v2834
    %2913 = vst [vmem:[#allocation2 + $0x78] sm:$0xff] %v2836
    %2914 = vst [vmem:[#allocation2 + $0x80] sm:$0xff] %v2727
    %2915 = vst [vmem:[#allocation2 + $0x88] sm:$0xff] %v2729
    %2916 = vst [vmem:[#allocation2 + $0x90] sm:$0xff] %v2840
    %2917 = vst [vmem:[#allocation2 + $0x98] sm:$0xff] %v2842
    %2918 = vst [vmem:[#allocation2 + $0xa0] sm:$0xff] %v2731
    %2919 = vst [vmem:[#allocation2 + $0xa8] sm:$0xff] %v2733
    %2920 = vst [vmem:[#allocation2 + $0xb0] sm:$0xff] %v2844
    %2921 = vst [vmem:[#allocation2 + $0xb8] sm:$0xff] %v2846
    %2922 = vst [vmem:[#allocation2 + $0xc0] sm:$0xff] %v2737
    %2923 = vst [vmem:[#allocation2 + $0xc8] sm:$0xff] %v2739
    %2924 = vst [vmem:[#allocation2 + $0xd0] sm:$0xff] %v2850
    %2925 = vst [vmem:[#allocation2 + $0xd8] sm:$0xff] %v2852
    %2926 = vst [vmem:[#allocation2 + $0xe0] sm:$0xff] %v2741
    %2927 = vst [vmem:[#allocation2 + $0xe8] sm:$0xff] %v2743
    %2928 = vst [vmem:[#allocation2 + $0xf0] sm:$0xff] %v2854
    %2929 = vst [vmem:[#allocation2 + $0xf8] sm:$0xff] %v2856
    %2930 = vst [vmem:[#allocation2 + $0x100] sm:$0xff] %v2747
    %2931 = vst [vmem:[#allocation2 + $0x108] sm:$0xff] %v2749
    %2932 = vst [vmem:[#allocation2 + $0x110] sm:$0xff] %v2860
    %2933 = vst [vmem:[#allocation2 + $0x118] sm:$0xff] %v2862
    %2934 = vst [vmem:[#allocation2 + $0x120] sm:$0xff] %v2751
    %2935 = vst [vmem:[#allocation2 + $0x128] sm:$0xff] %v2753
    %2936 = vst [vmem:[#allocation2 + $0x130] sm:$0xff] %v2864
    %2937 = vst [vmem:[#allocation2 + $0x138] sm:$0xff] %v2866
    %2938 = vst [vmem:[#allocation2 + $0x140] sm:$0xff] %v2757
    %2939 = vst [vmem:[#allocation2 + $0x148] sm:$0xff] %v2759
    %2940 = vst [vmem:[#allocation2 + $0x150] sm:$0xff] %v2870
    %2941 = vst [vmem:[#allocation2 + $0x158] sm:$0xff] %v2872
    %2942 = vst [vmem:[#allocation2 + $0x160] sm:$0xff] %v2761
    %2943 = vst [vmem:[#allocation2 + $0x168] sm:$0xff] %v2763
    %2944 = vst [vmem:[#allocation2 + $0x170] sm:$0xff] %v2874
    %2945 = vst [vmem:[#allocation2 + $0x178] sm:$0xff] %v2876
    %2946 = vst [vmem:[#allocation2 + $0x180] sm:$0xff] %v2767
    %2947 = vst [vmem:[#allocation2 + $0x188] sm:$0xff] %v2769
    %2948 = vst [vmem:[#allocation2 + $0x190] sm:$0xff] %v2880
    %2949 = vst [vmem:[#allocation2 + $0x198] sm:$0xff] %v2882
    %2950 = vst [vmem:[#allocation2 + $0x1a0] sm:$0xff] %v2771
    %2951 = vst [vmem:[#allocation2 + $0x1a8] sm:$0xff] %v2773
    %2952 = vst [vmem:[#allocation2 + $0x1b0] sm:$0xff] %v2884
    %2953 = vst [vmem:[#allocation2 + $0x1b8] sm:$0xff] %v2886
    %2954 = vst [vmem:[#allocation2 + $0x1c0] sm:$0xff] %v2777
    %2955 = vst [vmem:[#allocation2 + $0x1c8] sm:$0xff] %v2779
    %2956 = vst [vmem:[#allocation2 + $0x1d0] sm:$0xff] %v2890
    %2957 = vst [vmem:[#allocation2 + $0x1d8] sm:$0xff] %v2892
    %2958 = vst [vmem:[#allocation2 + $0x1e0] sm:$0xff] %v2781
    %2959 = vst [vmem:[#allocation2 + $0x1e8] sm:$0xff] %v2783
    %2960 = vst [vmem:[#allocation2 + $0x1f0] sm:$0xff] %v2894
    %2961 = vst [vmem:[#allocation2 + $0x1f8] sm:$0xff] %v2896
    %v2962 = vld [vmem:[%s5] sm:$0xff]
    %v2963 = vld [vmem:[%s5 + $0x8] sm:$0xff]
    %v2964 = vld [vmem:[%s5 + $0x10] sm:$0xff]
    %v2965 = vld [vmem:[%s5 + $0x18] sm:$0xff]
    %v2966 = vld [vmem:[%s5 + $0x20] sm:$0xff]
    %v2967 = vld [vmem:[%s5 + $0x28] sm:$0xff]
    %v2968 = vld [vmem:[%s5 + $0x30] sm:$0xff]
    %v2969 = vld [vmem:[%s5 + $0x38] sm:$0xff]
    %v2970 = vld [vmem:[%s5 + $0x40] sm:$0xff]
    %v2971 = vld [vmem:[%s5 + $0x48] sm:$0xff]
    %v2972 = vld [vmem:[%s5 + $0x50] sm:$0xff]
    %v2973 = vld [vmem:[%s5 + $0x58] sm:$0xff]
    %v2974 = vld [vmem:[%s5 + $0x60] sm:$0xff]
    %v2975 = vld [vmem:[%s5 + $0x68] sm:$0xff]
    %v2976 = vld [vmem:[%s5 + $0x70] sm:$0xff]
    %v2977 = vld [vmem:[%s5 + $0x78] sm:$0xff]
    %v2978 = vld [vmem:[%s5 + $0x80] sm:$0xff]
    %v2979 = vld [vmem:[%s5 + $0x88] sm:$0xff]
    %v2980 = vld [vmem:[%s5 + $0x90] sm:$0xff]
    %v2981 = vld [vmem:[%s5 + $0x98] sm:$0xff]
    %v2982 = vld [vmem:[%s5 + $0xa0] sm:$0xff]
    %v2983 = vld [vmem:[%s5 + $0xa8] sm:$0xff]
    %v2984 = vld [vmem:[%s5 + $0xb0] sm:$0xff]
    %v2985 = vld [vmem:[%s5 + $0xb8] sm:$0xff]
    %v2986 = vld [vmem:[%s5 + $0xc0] sm:$0xff]
    %v2987 = vld [vmem:[%s5 + $0xc8] sm:$0xff]
    %v2988 = vld [vmem:[%s5 + $0xd0] sm:$0xff]
    %v2989 = vld [vmem:[%s5 + $0xd8] sm:$0xff]
    %v2990 = vld [vmem:[%s5 + $0xe0] sm:$0xff]
    %v2991 = vld [vmem:[%s5 + $0xe8] sm:$0xff]
    %v2992 = vld [vmem:[%s5 + $0xf0] sm:$0xff]
    %v2993 = vld [vmem:[%s5 + $0xf8] sm:$0xff]
    %v2994 = vld [vmem:[%s454] sm:$0xff]
    %v2995 = vld [vmem:[%s454 + $0x8] sm:$0xff]
    %v2996 = vld [vmem:[%s454 + $0x10] sm:$0xff]
    %v2997 = vld [vmem:[%s454 + $0x18] sm:$0xff]
    %v3030 = vunpack.c.l.b16 %v2962
    %v3031 = vunpack.c.h.b16 %v2962
    %v3032 = vunpack.c.l.b16 %v2963
    %v3033 = vunpack.c.h.b16 %v2963
    %v3034 = vunpack.c.l.b16 %v2964
    %v3035 = vunpack.c.h.b16 %v2964
    %v3036 = vunpack.c.l.b16 %v2965
    %v3037 = vunpack.c.h.b16 %v2965
    %v3038 = vunpack.c.l.b16 %v2966
    %v3039 = vunpack.c.h.b16 %v2966
    %v3040 = vunpack.c.l.b16 %v2967
    %v3041 = vunpack.c.h.b16 %v2967
    %v3042 = vunpack.c.l.b16 %v2968
    %v3043 = vunpack.c.h.b16 %v2968
    %v3044 = vunpack.c.l.b16 %v2969
    %v3045 = vunpack.c.h.b16 %v2969
    %v3046 = vunpack.c.l.b16 %v2970
    %v3047 = vunpack.c.h.b16 %v2970
    %v3048 = vunpack.c.l.b16 %v2971
    %v3049 = vunpack.c.h.b16 %v2971
    %v3050 = vunpack.c.l.b16 %v2972
    %v3051 = vunpack.c.h.b16 %v2972
    %v3052 = vunpack.c.l.b16 %v2973
    %v3053 = vunpack.c.h.b16 %v2973
    %v3054 = vunpack.c.l.b16 %v2974
    %v3055 = vunpack.c.h.b16 %v2974
    %v3056 = vunpack.c.l.b16 %v2975
    %v3057 = vunpack.c.h.b16 %v2975
    %v3058 = vunpack.c.l.b16 %v2976
    %v3059 = vunpack.c.h.b16 %v2976
    %v3060 = vunpack.c.l.b16 %v2977
    %v3061 = vunpack.c.h.b16 %v2977
    %v3062 = vunpack.c.l.b16 %v2978
    %v3063 = vunpack.c.h.b16 %v2978
    %v3064 = vunpack.c.l.b16 %v2979
    %v3065 = vunpack.c.h.b16 %v2979
    %v3066 = vunpack.c.l.b16 %v2980
    %v3067 = vunpack.c.h.b16 %v2980
    %v3068 = vunpack.c.l.b16 %v2981
    %v3069 = vunpack.c.h.b16 %v2981
    %v3070 = vunpack.c.l.b16 %v2982
    %v3071 = vunpack.c.h.b16 %v2982
    %v3072 = vunpack.c.l.b16 %v2983
    %v3073 = vunpack.c.h.b16 %v2983
    %v3074 = vunpack.c.l.b16 %v2984
    %v3075 = vunpack.c.h.b16 %v2984
    %v3076 = vunpack.c.l.b16 %v2985
    %v3077 = vunpack.c.h.b16 %v2985
    %v3078 = vunpack.c.l.b16 %v2986
    %v3079 = vunpack.c.h.b16 %v2986
    %v3080 = vunpack.c.l.b16 %v2987
    %v3081 = vunpack.c.h.b16 %v2987
    %v3082 = vunpack.c.l.b16 %v2988
    %v3083 = vunpack.c.h.b16 %v2988
    %v3084 = vunpack.c.l.b16 %v2989
    %v3085 = vunpack.c.h.b16 %v2989
    %v3086 = vunpack.c.l.b16 %v2990
    %v3087 = vunpack.c.h.b16 %v2990
    %v3088 = vunpack.c.l.b16 %v2991
    %v3089 = vunpack.c.h.b16 %v2991
    %v3090 = vunpack.c.l.b16 %v2992
    %v3091 = vunpack.c.h.b16 %v2992
    %v3092 = vunpack.c.l.b16 %v2993
    %v3093 = vunpack.c.h.b16 %v2993
    %v3094 = vpack.c.b16 %v3034, %v3030
    %v3095 = vpack.c.b16 %v3035, %v3031
    %v3096 = vpack.c.b16 %v3036, %v3032
    %v3097 = vpack.c.b16 %v3037, %v3033
    %v3098 = vpack.c.b16 %v3042, %v3038
    %v3099 = vpack.c.b16 %v3043, %v3039
    %v3100 = vpack.c.b16 %v3044, %v3040
    %v3101 = vpack.c.b16 %v3045, %v3041
    %v3102 = vpack.c.b16 %v3050, %v3046
    %v3103 = vpack.c.b16 %v3051, %v3047
    %v3104 = vpack.c.b16 %v3052, %v3048
    %v3105 = vpack.c.b16 %v3053, %v3049
    %v3106 = vpack.c.b16 %v3058, %v3054
    %v3107 = vpack.c.b16 %v3059, %v3055
    %v3108 = vpack.c.b16 %v3060, %v3056
    %v3109 = vpack.c.b16 %v3061, %v3057
    %v3110 = vpack.c.b16 %v3066, %v3062
    %v3111 = vpack.c.b16 %v3067, %v3063
    %v3112 = vpack.c.b16 %v3068, %v3064
    %v3113 = vpack.c.b16 %v3069, %v3065
    %v3114 = vpack.c.b16 %v3074, %v3070
    %v3115 = vpack.c.b16 %v3075, %v3071
    %v3116 = vpack.c.b16 %v3076, %v3072
    %v3117 = vpack.c.b16 %v3077, %v3073
    %v3118 = vpack.c.b16 %v3082, %v3078
    %v3119 = vpack.c.b16 %v3083, %v3079
    %v3120 = vpack.c.b16 %v3084, %v3080
    %v3121 = vpack.c.b16 %v3085, %v3081
    %v3122 = vpack.c.b16 %v3090, %v3086
    %v3123 = vpack.c.b16 %v3091, %v3087
    %v3124 = vpack.c.b16 %v3092, %v3088
    %v3125 = vpack.c.b16 %v3093, %v3089
    %3158 = vmatprep.subr.bf16.mxu0 %v3095
    %3159 = vmatpush1.bf16.msra.mxu0 %v3094
    %3160 = vmatprep.subr.bf16.mxu0 %v3099
    %3161 = vmatpush1.bf16.msra.mxu0 %v3098
    %3162 = vmatprep.subr.bf16.mxu0 %v3103
    %3163 = vmatpush1.bf16.msra.mxu0 %v3102
    %3164 = vmatprep.subr.bf16.mxu0 %v3107
    %3165 = vmatpush1.bf16.msra.mxu0 %v3106
    %3166 = vmatprep.subr.bf16.mxu0 %v3111
    %3167 = vmatpush1.bf16.msra.mxu0 %v3110
    %3168 = vmatprep.subr.bf16.mxu0 %v3115
    %3169 = vmatpush1.bf16.msra.mxu0 %v3114
    %3170 = vmatprep.subr.bf16.mxu0 %v3119
    %3171 = vmatpush1.bf16.msra.mxu0 %v3118
    %3172 = vmatprep.subr.bf16.mxu0 %v3123
    %3173 = vmatpush1.bf16.msra.mxu0 %v3122
    %3174 = vmatprep.subr.bf16.mxu0 0
    %3175 = vmatpush1.bf16.msra.mxu0 0
    %3176 = vmatprep.subr.bf16.mxu0 0
    %3177 = vmatpush1.bf16.msra.mxu0 0
    %3178 = vmatprep.subr.bf16.mxu0 0
    %3179 = vmatpush1.bf16.msra.mxu0 0
    %3180 = vmatprep.subr.bf16.mxu0 0
    %3181 = vmatpush1.bf16.msra.mxu0 0
    %3182 = vmatprep.subr.bf16.mxu0 0
    %3183 = vmatpush1.bf16.msra.mxu0 0
    %3184 = vmatprep.subr.bf16.mxu0 0
    %3185 = vmatpush1.bf16.msra.mxu0 0
    %3186 = vmatprep.subr.bf16.mxu0 0
    %3187 = vmatpush1.bf16.msra.mxu0 0
    %3188 = vmatprep.subr.bf16.mxu0 0
    %3189 = vmatpush1.bf16.msra.mxu0 0
    %3190 = vmatprep.mubr.bf16.mxu0 0
    %3191 = vmatmul.mubr.bf16.gmra.mrb[0].mxu0 0
    %v3192 = vpop.f32.mrb[0].mxu0
    %v3193 = vadd.f32 0.0, %v3192
    %v3194 = vpop.f32.mrb[0].mxu0
    %v3195 = vadd.f32 0.0, %v3194
    %v3196 = vpop.f32.mrb[0].mxu0
    %v3197 = vpop.f32.mrb[0].mxu0
    %3198 = vdwg.mxu0
    %3199 = vmatprep.subr.bf16.mxu0 %v3097
    %3200 = vmatpush1.bf16.msra.mxu0 %v3096
    %3201 = vmatprep.subr.bf16.mxu0 %v3101
    %3202 = vmatpush1.bf16.msra.mxu0 %v3100
    %3203 = vmatprep.subr.bf16.mxu0 %v3105
    %3204 = vmatpush1.bf16.msra.mxu0 %v3104
    %3205 = vmatprep.subr.bf16.mxu0 %v3109
    %3206 = vmatpush1.bf16.msra.mxu0 %v3108
    %3207 = vmatprep.subr.bf16.mxu0 %v3113
    %3208 = vmatpush1.bf16.msra.mxu0 %v3112
    %3209 = vmatprep.subr.bf16.mxu0 %v3117
    %3210 = vmatpush1.bf16.msra.mxu0 %v3116
    %3211 = vmatprep.subr.bf16.mxu0 %v3121
    %3212 = vmatpush1.bf16.msra.mxu0 %v3120
    %3213 = vmatprep.subr.bf16.mxu0 %v3125
    %3214 = vmatpush1.bf16.msra.mxu0 %v3124
    %3215 = vmatprep.subr.bf16.mxu0 0
    %3216 = vmatpush1.bf16.msra.mxu0 0
    %3217 = vmatprep.subr.bf16.mxu0 0
    %3218 = vmatpush1.bf16.msra.mxu0 0
    %3219 = vmatprep.subr.bf16.mxu0 0
    %3220 = vmatpush1.bf16.msra.mxu0 0
    %3221 = vmatprep.subr.bf16.mxu0 0
    %3222 = vmatpush1.bf16.msra.mxu0 0
    %3223 = vmatprep.subr.bf16.mxu0 0
    %3224 = vmatpush1.bf16.msra.mxu0 0
    %3225 = vmatprep.subr.bf16.mxu0 0
    %3226 = vmatpush1.bf16.msra.mxu0 0
    %3227 = vmatprep.subr.bf16.mxu0 0
    %3228 = vmatpush1.bf16.msra.mxu0 0
    %3229 = vmatprep.subr.bf16.mxu0 0
    %3230 = vmatpush1.bf16.msra.mxu0 0
    %3231 = vmatprep.mubr.bf16.mxu0 0
    %3232 = vmatmul.mubr.bf16.gmra.mrb[0].mxu0 0
    %v3233 = vpop.f32.mrb[0].mxu0
    %v3234 = vadd.f32 0.0, %v3233
    %v3235 = vpop.f32.mrb[0].mxu0
    %v3236 = vadd.f32 0.0, %v3235
    %v3237 = vpop.f32.mrb[0].mxu0
    %v3238 = vpop.f32.mrb[0].mxu0
    %3239 = vdwg.mxu0
    %v3240 = vadd.f32 %v2994, %v3193
    %v3241 = vadd.f32 %v2995, %v3195
    %v3242 = vadd.f32 %v2996, %v3234
    %v3243 = vadd.f32 %v2997, %v3236
    %v3244 = vmul.f32 %v3240, 0.5
    %v3245 = vtanh.pop %v3244
    %v3246 = vmul.f32 %v3245, 0.5
    %v3247 = vadd.f32 %v3246, 0.5
    %v3248 = vmul.f32 %v3241, 0.5
    %v3249 = vtanh.pop %v3248
    %v3250 = vmul.f32 %v3249, 0.5
    %v3251 = vadd.f32 %v3250, 0.5
    %v3252 = vtanh.pop %v3242
    %v3253 = vmul.f32 %v3243, 0.5
    %v3254 = vtanh.pop %v3253
    %v3255 = vmul.f32 %v3254, 0.5
    %v3256 = vadd.f32 %v3255, 0.5
    %v3257 = vmul.f32 %v3251, 0.0
    %v3258 = vmul.f32 %v3247, %v3252
    %v3259 = vadd.f32 %v3257, %v3258
    %v3260 = vtanh.pop %v3259
    %v3261 = vmul.f32 %v3256, %v3260
    %v3262 = vld [vmem:[%s726] sm:$0xff]
    %v3263 = vld [vmem:[%s726 + $0x8] sm:$0xff]
    %v3264 = vld [vmem:[%s726 + $0x10] sm:$0xff]
    %v3265 = vld [vmem:[%s726 + $0x18] sm:$0xff]
    %v3266 = vpack.c.bf16 %v3261, %v3261
    %3267 = vmatprep.subr.bf16.mxu0 %v3095
    %3268 = vmatpush1.bf16.msra.mxu0 %v3094
    %3269 = vmatprep.subr.bf16.mxu0 %v3099
    %3270 = vmatpush1.bf16.msra.mxu0 %v3098
    %3271 = vmatprep.subr.bf16.mxu0 %v3103
    %3272 = vmatpush1.bf16.msra.mxu0 %v3102
    %3273 = vmatprep.subr.bf16.mxu0 %v3107
    %3274 = vmatpush1.bf16.msra.mxu0 %v3106
    %3275 = vmatprep.subr.bf16.mxu0 %v3111
    %3276 = vmatpush1.bf16.msra.mxu0 %v3110
    %3277 = vmatprep.subr.bf16.mxu0 %v3115
    %3278 = vmatpush1.bf16.msra.mxu0 %v3114
    %3279 = vmatprep.subr.bf16.mxu0 %v3119
    %3280 = vmatpush1.bf16.msra.mxu0 %v3118
    %3281 = vmatprep.subr.bf16.mxu0 %v3123
    %3282 = vmatpush1.bf16.msra.mxu0 %v3122
    %3283 = vmatprep.subr.bf16.mxu0 0
    %3284 = vmatpush1.bf16.msra.mxu0 0
    %3285 = vmatprep.subr.bf16.mxu0 0
    %3286 = vmatpush1.bf16.msra.mxu0 0
    %3287 = vmatprep.subr.bf16.mxu0 0
    %3288 = vmatpush1.bf16.msra.mxu0 0
    %3289 = vmatprep.subr.bf16.mxu0 0
    %3290 = vmatpush1.bf16.msra.mxu0 0
    %3291 = vmatprep.subr.bf16.mxu0 0
    %3292 = vmatpush1.bf16.msra.mxu0 0
    %3293 = vmatprep.subr.bf16.mxu0 0
    %3294 = vmatpush1.bf16.msra.mxu0 0
    %3295 = vmatprep.subr.bf16.mxu0 0
    %3296 = vmatpush1.bf16.msra.mxu0 0
    %3297 = vmatprep.subr.bf16.mxu0 0
    %3298 = vmatpush1.bf16.msra.mxu0 0
    %3299 = vmatprep.mubr.bf16.mxu0 0
    %3300 = vmatmul.mubr.bf16.gmra.mrb[0].mxu0 %v3266
    %v3301 = vpop.f32.mrb[0].mxu0
    %v3302 = vadd.f32 0.0, %v3301
    %v3303 = vpop.f32.mrb[0].mxu0
    %v3304 = vadd.f32 0.0, %v3303
    %v3305 = vpop.f32.mrb[0].mxu0
    %v3306 = vpop.f32.mrb[0].mxu0
    %3307 = vdwg.mxu0
    %3308 = vmatprep.subr.bf16.mxu0 %v3097
    %3309 = vmatpush1.bf16.msra.mxu0 %v3096
    %3310 = vmatprep.subr.bf16.mxu0 %v3101
    %3311 = vmatpush1.bf16.msra.mxu0 %v3100
    %3312 = vmatprep.subr.bf16.mxu0 %v3105
    %3313 = vmatpush1.bf16.msra.mxu0 %v3104
    %3314 = vmatprep.subr.bf16.mxu0 %v3109
    %3315 = vmatpush1.bf16.msra.mxu0 %v3108
    %3316 = vmatprep.subr.bf16.mxu0 %v3113
    %3317 = vmatpush1.bf16.msra.mxu0 %v3112
    %3318 = vmatprep.subr.bf16.mxu0 %v3117
    %3319 = vmatpush1.bf16.msra.mxu0 %v3116
    %3320 = vmatprep.subr.bf16.mxu0 %v3121
    %3321 = vmatpush1.bf16.msra.mxu0 %v3120
    %3322 = vmatprep.subr.bf16.mxu0 %v3125
    %3323 = vmatpush1.bf16.msra.mxu0 %v3124
    %3324 = vmatprep.subr.bf16.mxu0 0
    %3325 = vmatpush1.bf16.msra.mxu0 0
    %3326 = vmatprep.subr.bf16.mxu0 0
    %3327 = vmatpush1.bf16.msra.mxu0 0
    %3328 = vmatprep.subr.bf16.mxu0 0
    %3329 = vmatpush1.bf16.msra.mxu0 0
    %3330 = vmatprep.subr.bf16.mxu0 0
    %3331 = vmatpush1.bf16.msra.mxu0 0
    %3332 = vmatprep.subr.bf16.mxu0 0
    %3333 = vmatpush1.bf16.msra.mxu0 0
    %3334 = vmatprep.subr.bf16.mxu0 0
    %3335 = vmatpush1.bf16.msra.mxu0 0
    %3336 = vmatprep.subr.bf16.mxu0 0
    %3337 = vmatpush1.bf16.msra.mxu0 0
    %3338 = vmatprep.subr.bf16.mxu0 0
    %3339 = vmatpush1.bf16.msra.mxu0 0
    %3340 = vmatprep.mubr.bf16.mxu0 0
    %3341 = vmatmul.mubr.bf16.gmra.mrb[0].mxu0 %v3266
    %v3342 = vpop.f32.mrb[0].mxu0
    %v3343 = vadd.f32 0.0, %v3342
    %v3344 = vpop.f32.mrb[0].mxu0
    %v3345 = vadd.f32 0.0, %v3344
    %v3346 = vpop.f32.mrb[0].mxu0
    %v3347 = vpop.f32.mrb[0].mxu0
    %3348 = vdwg.mxu0
    %v3349 = vadd.f32 %v3262, %v3302
    %v3350 = vadd.f32 %v3263, %v3304
    %v3351 = vadd.f32 %v3264, %v3343
    %v3352 = vadd.f32 %v3265, %v3345
    %v3353 = vmul.f32 %v3349, 0.5
    %v3354 = vtanh.pop %v3353
    %v3355 = vmul.f32 %v3354, 0.5
    %v3356 = vadd.f32 %v3355, 0.5
    %v3357 = vmul.f32 %v3350, 0.5
    %v3358 = vtanh.pop %v3357
    %v3359 = vmul.f32 %v3358, 0.5
    %v3360 = vadd.f32 %v3359, 0.5
    %v3361 = vtanh.pop %v3351
    %v3362 = vmul.f32 %v3352, 0.5
    %v3363 = vtanh.pop %v3362
    %v3364 = vmul.f32 %v3363, 0.5
    %v3365 = vadd.f32 %v3364, 0.5
    %v3366 = vmul.f32 %v3360, %v3259
    %v3367 = vmul.f32 %v3356, %v3361
    %v3368 = vadd.f32 %v3366, %v3367
    %v3369 = vtanh.pop %v3368
    %v3370 = vmul.f32 %v3365, %v3369
    %v3371 = vld [vmem:[%s840] sm:$0xff]
    %v3372 = vld [vmem:[%s840 + $0x8] sm:$0xff]
    %v3373 = vld [vmem:[%s840 + $0x10] sm:$0xff]
    %v3374 = vld [vmem:[%s840 + $0x18] sm:$0xff]
    %v3375 = vpack.c.bf16 %v3370, %v3370
    %3376 = vmatprep.subr.bf16.mxu0 %v3095
    %3377 = vmatpush1.bf16.msra.mxu0 %v3094
    %3378 = vmatprep.subr.bf16.mxu0 %v3099
    %3379 = vmatpush1.bf16.msra.mxu0 %v3098
    %3380 = vmatprep.subr.bf16.mxu0 %v3103
    %3381 = vmatpush1.bf16.msra.mxu0 %v3102
    %3382 = vmatprep.subr.bf16.mxu0 %v3107
    %3383 = vmatpush1.bf16.msra.mxu0 %v3106
    %3384 = vmatprep.subr.bf16.mxu0 %v3111
    %3385 = vmatpush1.bf16.msra.mxu0 %v3110
    %3386 = vmatprep.subr.bf16.mxu0 %v3115
    %3387 = vmatpush1.bf16.msra.mxu0 %v3114
    %3388 = vmatprep.subr.bf16.mxu0 %v3119
    %3389 = vmatpush1.bf16.msra.mxu0 %v3118
    %3390 = vmatprep.subr.bf16.mxu0 %v3123
    %3391 = vmatpush1.bf16.msra.mxu0 %v3122
    %3392 = vmatprep.subr.bf16.mxu0 0
    %3393 = vmatpush1.bf16.msra.mxu0 0
    %3394 = vmatprep.subr.bf16.mxu0 0
    %3395 = vmatpush1.bf16.msra.mxu0 0
    %3396 = vmatprep.subr.bf16.mxu0 0
    %3397 = vmatpush1.bf16.msra.mxu0 0
    %3398 = vmatprep.subr.bf16.mxu0 0
    %3399 = vmatpush1.bf16.msra.mxu0 0
    %3400 = vmatprep.subr.bf16.mxu0 0
    %3401 = vmatpush1.bf16.msra.mxu0 0
    %3402 = vmatprep.subr.bf16.mxu0 0
    %3403 = vmatpush1.bf16.msra.mxu0 0
    %3404 = vmatprep.subr.bf16.mxu0 0
    %3405 = vmatpush1.bf16.msra.mxu0 0
    %3406 = vmatprep.subr.bf16.mxu0 0
    %3407 = vmatpush1.bf16.msra.mxu0 0
    %3408 = vmatprep.mubr.bf16.mxu0 0
    %3409 = vmatmul.mubr.bf16.gmra.mrb[0].mxu0 %v3375
    %v3410 = vpop.f32.mrb[0].mxu0
    %v3411 = vadd.f32 0.0, %v3410
    %v3412 = vpop.f32.mrb[0].mxu0
    %v3413 = vadd.f32 0.0, %v3412
    %v3414 = vpop.f32.mrb[0].mxu0
    %v3415 = vpop.f32.mrb[0].mxu0
    %3416 = vdwg.mxu0
    %3417 = vmatprep.subr.bf16.mxu0 %v3097
    %3418 = vmatpush1.bf16.msra.mxu0 %v3096
    %3419 = vmatprep.subr.bf16.mxu0 %v3101
    %3420 = vmatpush1.bf16.msra.mxu0 %v3100
    %3421 = vmatprep.subr.bf16.mxu0 %v3105
    %3422 = vmatpush1.bf16.msra.mxu0 %v3104
    %3423 = vmatprep.subr.bf16.mxu0 %v3109
    %3424 = vmatpush1.bf16.msra.mxu0 %v3108
    %3425 = vmatprep.subr.bf16.mxu0 %v3113
    %3426 = vmatpush1.bf16.msra.mxu0 %v3112
    %3427 = vmatprep.subr.bf16.mxu0 %v3117
    %3428 = vmatpush1.bf16.msra.mxu0 %v3116
    %3429 = vmatprep.subr.bf16.mxu0 %v3121
    %3430 = vmatpush1.bf16.msra.mxu0 %v3120
    %3431 = vmatprep.subr.bf16.mxu0 %v3125
    %3432 = vmatpush1.bf16.msra.mxu0 %v3124
    %3433 = vmatprep.subr.bf16.mxu0 0
    %3434 = vmatpush1.bf16.msra.mxu0 0
    %3435 = vmatprep.subr.bf16.mxu0 0
    %3436 = vmatpush1.bf16.msra.mxu0 0
    %3437 = vmatprep.subr.bf16.mxu0 0
    %3438 = vmatpush1.bf16.msra.mxu0 0
    %3439 = vmatprep.subr.bf16.mxu0 0
    %3440 = vmatpush1.bf16.msra.mxu0 0
    %3441 = vmatprep.subr.bf16.mxu0 0
    %3442 = vmatpush1.bf16.msra.mxu0 0
    %3443 = vmatprep.subr.bf16.mxu0 0
    %3444 = vmatpush1.bf16.msra.mxu0 0
    %3445 = vmatprep.subr.bf16.mxu0 0
    %3446 = vmatpush1.bf16.msra.mxu0 0
    %3447 = vmatprep.subr.bf16.mxu0 0
    %3448 = vmatpush1.bf16.msra.mxu0 0
    %3449 = vmatprep.mubr.bf16.mxu0 0
    %3450 = vmatmul.mubr.bf16.gmra.mrb[0].mxu0 %v3375
    %v3451 = vpop.f32.mrb[0].mxu0
    %v3452 = vadd.f32 0.0, %v3451
    %v3453 = vpop.f32.mrb[0].mxu0
    %v3454 = vadd.f32 0.0, %v3453
    %v3455 = vpop.f32.mrb[0].mxu0
    %v3456 = vpop.f32.mrb[0].mxu0
    %3457 = vdwg.mxu0
    %v3458 = vadd.f32 %v3371, %v3411
    %v3459 = vadd.f32 %v3372, %v3413
    %v3460 = vadd.f32 %v3373, %v3452
    %v3461 = vadd.f32 %v3374, %v3454
    %v3462 = vmul.f32 %v3458, 0.5
    %v3463 = vtanh.pop %v3462
    %v3464 = vmul.f32 %v3463, 0.5
    %v3465 = vadd.f32 %v3464, 0.5
    %v3466 = vmul.f32 %v3459, 0.5
    %v3467 = vtanh.pop %v3466
    %v3468 = vmul.f32 %v3467, 0.5
    %v3469 = vadd.f32 %v3468, 0.5
    %v3470 = vtanh.pop %v3460
    %v3471 = vmul.f32 %v3461, 0.5
    %v3472 = vtanh.pop %v3471
    %v3473 = vmul.f32 %v3472, 0.5
    %v3474 = vadd.f32 %v3473, 0.5
    %v3475 = vmul.f32 %v3469, %v3368
    %v3476 = vmul.f32 %v3465, %v3470
    %v3477 = vadd.f32 %v3475, %v3476
    %v3478 = vtanh.pop %v3477
    %v3479 = vmul.f32 %v3474, %v3478
    %v3480 = vld [vmem:[%s954] sm:$0xff]
    %v3481 = vld [vmem:[%s954 + $0x8] sm:$0xff]
    %v3482 = vld [vmem:[%s954 + $0x10] sm:$0xff]
    %v3483 = vld [vmem:[%s954 + $0x18] sm:$0xff]
    %v3484 = vpack.c.bf16 %v3479, %v3479
    %3485 = vmatprep.subr.bf16.mxu0 %v3095
    %3486 = vmatpush1.bf16.msra.mxu0 %v3094
    %3487 = vmatprep.subr.bf16.mxu0 %v3099
    %3488 = vmatpush1.bf16.msra.mxu0 %v3098
    %3489 = vmatprep.subr.bf16.mxu0 %v3103
    %3490 = vmatpush1.bf16.msra.mxu0 %v3102
    %3491 = vmatprep.subr.bf16.mxu0 %v3107
    %3492 = vmatpush1.bf16.msra.mxu0 %v3106
    %3493 = vmatprep.subr.bf16.mxu0 %v3111
    %3494 = vmatpush1.bf16.msra.mxu0 %v3110
    %3495 = vmatprep.subr.bf16.mxu0 %v3115
    %3496 = vmatpush1.bf16.msra.mxu0 %v3114
    %3497 = vmatprep.subr.bf16.mxu0 %v3119
    %3498 = vmatpush1.bf16.msra.mxu0 %v3118
    %3499 = vmatprep.subr.bf16.mxu0 %v3123
    %3500 = vmatpush1.bf16.msra.mxu0 %v3122
    %3501 = vmatprep.subr.bf16.mxu0 0
    %3502 = vmatpush1.bf16.msra.mxu0 0
    %3503 = vmatprep.subr.bf16.mxu0 0
    %3504 = vmatpush1.bf16.msra.mxu0 0
    %3505 = vmatprep.subr.bf16.mxu0 0
    %3506 = vmatpush1.bf16.msra.mxu0 0
    %3507 = vmatprep.subr.bf16.mxu0 0
    %3508 = vmatpush1.bf16.msra.mxu0 0
    %3509 = vmatprep.subr.bf16.mxu0 0
    %3510 = vmatpush1.bf16.msra.mxu0 0
    %3511 = vmatprep.subr.bf16.mxu0 0
    %3512 = vmatpush1.bf16.msra.mxu0 0
    %3513 = vmatprep.subr.bf16.mxu0 0
    %3514 = vmatpush1.bf16.msra.mxu0 0
    %3515 = vmatprep.subr.bf16.mxu0 0
    %3516 = vmatpush1.bf16.msra.mxu0 0
    %3517 = vmatprep.mubr.bf16.mxu0 0
    %3518 = vmatmul.mubr.bf16.gmra.mrb[0].mxu0 %v3484
    %v3519 = vpop.f32.mrb[0].mxu0
    %v3520 = vadd.f32 0.0, %v3519
    %v3521 = vpop.f32.mrb[0].mxu0
    %v3522 = vadd.f32 0.0, %v3521
    %v3523 = vpop.f32.mrb[0].mxu0
    %v3524 = vpop.f32.mrb[0].mxu0
    %3525 = vdwg.mxu0
    %3526 = vmatprep.subr.bf16.mxu0 %v3097
    %3527 = vmatpush1.bf16.msra.mxu0 %v3096
    %3528 = vmatprep.subr.bf16.mxu0 %v3101
    %3529 = vmatpush1.bf16.msra.mxu0 %v3100
    %3530 = vmatprep.subr.bf16.mxu0 %v3105
    %3531 = vmatpush1.bf16.msra.mxu0 %v3104
    %3532 = vmatprep.subr.bf16.mxu0 %v3109
    %3533 = vmatpush1.bf16.msra.mxu0 %v3108
    %3534 = vmatprep.subr.bf16.mxu0 %v3113
    %3535 = vmatpush1.bf16.msra.mxu0 %v3112
    %3536 = vmatprep.subr.bf16.mxu0 %v3117
    %3537 = vmatpush1.bf16.msra.mxu0 %v3116
    %3538 = vmatprep.subr.bf16.mxu0 %v3121
    %3539 = vmatpush1.bf16.msra.mxu0 %v3120
    %3540 = vmatprep.subr.bf16.mxu0 %v3125
    %3541 = vmatpush1.bf16.msra.mxu0 %v3124
    %3542 = vmatprep.subr.bf16.mxu0 0
    %3543 = vmatpush1.bf16.msra.mxu0 0
    %3544 = vmatprep.subr.bf16.mxu0 0
    %3545 = vmatpush1.bf16.msra.mxu0 0
    %3546 = vmatprep.subr.bf16.mxu0 0
    %3547 = vmatpush1.bf16.msra.mxu0 0
    %3548 = vmatprep.subr.bf16.mxu0 0
    %3549 = vmatpush1.bf16.msra.mxu0 0
    %3550 = vmatprep.subr.bf16.mxu0 0
    %3551 = vmatpush1.bf16.msra.mxu0 0
    %3552 = vmatprep.subr.bf16.mxu0 0
    %3553 = vmatpush1.bf16.msra.mxu0 0
    %3554 = vmatprep.subr.bf16.mxu0 0
    %3555 = vmatpush1.bf16.msra.mxu0 0
    %3556 = vmatprep.subr.bf16.mxu0 0
    %3557 = vmatpush1.bf16.msra.mxu0 0
    %3558 = vmatprep.mubr.bf16.mxu0 0
    %3559 = vmatmul.mubr.bf16.gmra.mrb[0].mxu0 %v3484
    %v3560 = vpop.f32.mrb[0].mxu0
    %v3561 = vadd.f32 0.0, %v3560
    %v3562 = vpop.f32.mrb[0].mxu0
    %v3563 = vadd.f32 0.0, %v3562
    %v3564 = vpop.f32.mrb[0].mxu0
    %v3565 = vpop.f32.mrb[0].mxu0
    %3566 = vdwg.mxu0
    %v3567 = vadd.f32 %v3480, %v3520
    %v3568 = vadd.f32 %v3481, %v3522
    %v3569 = vadd.f32 %v3482, %v3561
    %v3570 = vadd.f32 %v3483, %v3563
    %v3571 = vmul.f32 %v3567, 0.5
    %v3572 = vtanh.pop %v3571
    %v3573 = vmul.f32 %v3572, 0.5
    %v3574 = vadd.f32 %v3573, 0.5
    %v3575 = vmul.f32 %v3568, 0.5
    %v3576 = vtanh.pop %v3575
    %v3577 = vmul.f32 %v3576, 0.5
    %v3578 = vadd.f32 %v3577, 0.5
    %v3579 = vtanh.pop %v3569
    %v3580 = vmul.f32 %v3570, 0.5
    %v3581 = vtanh.pop %v3580
    %v3582 = vmul.f32 %v3581, 0.5
    %v3583 = vadd.f32 %v3582, 0.5
    %v3584 = vmul.f32 %v3578, %v3477
    %v3585 = vmul.f32 %v3574, %v3579
    %v3586 = vadd.f32 %v3584, %v3585
    %v3587 = vtanh.pop %v3586
    %v3588 = vmul.f32 %v3583, %v3587
    %v3589 = vld [vmem:[%s1068] sm:$0xff]
    %v3590 = vld [vmem:[%s1068 + $0x8] sm:$0xff]
    %v3591 = vld [vmem:[%s1068 + $0x10] sm:$0xff]
    %v3592 = vld [vmem:[%s1068 + $0x18] sm:$0xff]
    %v3593 = vpack.c.bf16 %v3588, %v3588
    %3594 = vmatprep.subr.bf16.mxu0 %v3095
    %3595 = vmatpush1.bf16.msra.mxu0 %v3094
    %3596 = vmatprep.subr.bf16.mxu0 %v3099
    %3597 = vmatpush1.bf16.msra.mxu0 %v3098
    %3598 = vmatprep.subr.bf16.mxu0 %v3103
    %3599 = vmatpush1.bf16.msra.mxu0 %v3102
    %3600 = vmatprep.subr.bf16.mxu0 %v3107
    %3601 = vmatpush1.bf16.msra.mxu0 %v3106
    %3602 = vmatprep.subr.bf16.mxu0 %v3111
    %3603 = vmatpush1.bf16.msra.mxu0 %v3110
    %3604 = vmatprep.subr.bf16.mxu0 %v3115
    %3605 = vmatpush1.bf16.msra.mxu0 %v3114
    %3606 = vmatprep.subr.bf16.mxu0 %v3119
    %3607 = vmatpush1.bf16.msra.mxu0 %v3118
    %3608 = vmatprep.subr.bf16.mxu0 %v3123
    %3609 = vmatpush1.bf16.msra.mxu0 %v3122
    %3610 = vmatprep.subr.bf16.mxu0 0
    %3611 = vmatpush1.bf16.msra.mxu0 0
    %3612 = vmatprep.subr.bf16.mxu0 0
    %3613 = vmatpush1.bf16.msra.mxu0 0
    %3614 = vmatprep.subr.bf16.mxu0 0
    %3615 = vmatpush1.bf16.msra.mxu0 0
    %3616 = vmatprep.subr.bf16.mxu0 0
    %3617 = vmatpush1.bf16.msra.mxu0 0
    %3618 = vmatprep.subr.bf16.mxu0 0
    %3619 = vmatpush1.bf16.msra.mxu0 0
    %3620 = vmatprep.subr.bf16.mxu0 0
    %3621 = vmatpush1.bf16.msra.mxu0 0
    %3622 = vmatprep.subr.bf16.mxu0 0
    %3623 = vmatpush1.bf16.msra.mxu0 0
    %3624 = vmatprep.subr.bf16.mxu0 0
    %3625 = vmatpush1.bf16.msra.mxu0 0
    %3626 = vmatprep.mubr.bf16.mxu0 0
    %3627 = vmatmul.mubr.bf16.gmra.mrb[0].mxu0 %v3593
    %v3628 = vpop.f32.mrb[0].mxu0
    %v3629 = vadd.f32 0.0, %v3628
    %v3630 = vpop.f32.mrb[0].mxu0
    %v3631 = vadd.f32 0.0, %v3630
    %v3632 = vpop.f32.mrb[0].mxu0
    %v3633 = vpop.f32.mrb[0].mxu0
    %3634 = vdwg.mxu0
    %3635 = vmatprep.subr.bf16.mxu0 %v3097
    %3636 = vmatpush1.bf16.msra.mxu0 %v3096
    %3637 = vmatprep.subr.bf16.mxu0 %v3101
    %3638 = vmatpush1.bf16.msra.mxu0 %v3100
    %3639 = vmatprep.subr.bf16.mxu0 %v3105
    %3640 = vmatpush1.bf16.msra.mxu0 %v3104
    %3641 = vmatprep.subr.bf16.mxu0 %v3109
    %3642 = vmatpush1.bf16.msra.mxu0 %v3108
    %3643 = vmatprep.subr.bf16.mxu0 %v3113
    %3644 = vmatpush1.bf16.msra.mxu0 %v3112
    %3645 = vmatprep.subr.bf16.mxu0 %v3117
    %3646 = vmatpush1.bf16.msra.mxu0 %v3116
    %3647 = vmatprep.subr.bf16.mxu0 %v3121
    %3648 = vmatpush1.bf16.msra.mxu0 %v3120
    %3649 = vmatprep.subr.bf16.mxu0 %v3125
    %3650 = vmatpush1.bf16.msra.mxu0 %v3124
    %3651 = vmatprep.subr.bf16.mxu0 0
    %3652 = vmatpush1.bf16.msra.mxu0 0
    %3653 = vmatprep.subr.bf16.mxu0 0
    %3654 = vmatpush1.bf16.msra.mxu0 0
    %3655 = vmatprep.subr.bf16.mxu0 0
    %3656 = vmatpush1.bf16.msra.mxu0 0
    %3657 = vmatprep.subr.bf16.mxu0 0
    %3658 = vmatpush1.bf16.msra.mxu0 0
    %3659 = vmatprep.subr.bf16.mxu0 0
    %3660 = vmatpush1.bf16.msra.mxu0 0
    %3661 = vmatprep.subr.bf16.mxu0 0
    %3662 = vmatpush1.bf16.msra.mxu0 0
    %3663 = vmatprep.subr.bf16.mxu0 0
    %3664 = vmatpush1.bf16.msra.mxu0 0
    %3665 = vmatprep.subr.bf16.mxu0 0
    %3666 = vmatpush1.bf16.msra.mxu0 0
    %3667 = vmatprep.mubr.bf16.mxu0 0
    %3668 = vmatmul.mubr.bf16.gmra.mrb[0].mxu0 %v3593
    %v3669 = vpop.f32.mrb[0].mxu0
    %v3670 = vadd.f32 0.0, %v3669
    %v3671 = vpop.f32.mrb[0].mxu0
    %v3672 = vadd.f32 0.0, %v3671
    %v3673 = vpop.f32.mrb[0].mxu0
    %v3674 = vpop.f32.mrb[0].mxu0
    %3675 = vdwg.mxu0
    %v3676 = vadd.f32 %v3589, %v3629
    %v3677 = vadd.f32 %v3590, %v3631
    %v3678 = vadd.f32 %v3591, %v3670
    %v3679 = vadd.f32 %v3592, %v3672
    %v3680 = vmul.f32 %v3676, 0.5
    %v3681 = vtanh.pop %v3680
    %v3682 = vmul.f32 %v3681, 0.5
    %v3683 = vadd.f32 %v3682, 0.5
    %v3684 = vmul.f32 %v3677, 0.5
    %v3685 = vtanh.pop %v3684
    %v3686 = vmul.f32 %v3685, 0.5
    %v3687 = vadd.f32 %v3686, 0.5
    %v3688 = vtanh.pop %v3678
    %v3689 = vmul.f32 %v3679, 0.5
    %v3690 = vtanh.pop %v3689
    %v3691 = vmul.f32 %v3690, 0.5
    %v3692 = vadd.f32 %v3691, 0.5
    %v3693 = vmul.f32 %v3687, %v3586
    %v3694 = vmul.f32 %v3683, %v3688
    %v3695 = vadd.f32 %v3693, %v3694
    %v3696 = vtanh.pop %v3695
    %v3697 = vmul.f32 %v3692, %v3696
    %v3698 = vld [vmem:[%s1182] sm:$0xff]
    %v3699 = vld [vmem:[%s1182 + $0x8] sm:$0xff]
    %v3700 = vld [vmem:[%s1182 + $0x10] sm:$0xff]
    %v3701 = vld [vmem:[%s1182 + $0x18] sm:$0xff]
    %v3702 = vpack.c.bf16 %v3697, %v3697
    %3703 = vmatprep.subr.bf16.mxu0 %v3095
    %3704 = vmatpush1.bf16.msra.mxu0 %v3094
    %3705 = vmatprep.subr.bf16.mxu0 %v3099
    %3706 = vmatpush1.bf16.msra.mxu0 %v3098
    %3707 = vmatprep.subr.bf16.mxu0 %v3103
    %3708 = vmatpush1.bf16.msra.mxu0 %v3102
    %3709 = vmatprep.subr.bf16.mxu0 %v3107
    %3710 = vmatpush1.bf16.msra.mxu0 %v3106
    %3711 = vmatprep.subr.bf16.mxu0 %v3111
    %3712 = vmatpush1.bf16.msra.mxu0 %v3110
    %3713 = vmatprep.subr.bf16.mxu0 %v3115
    %3714 = vmatpush1.bf16.msra.mxu0 %v3114
    %3715 = vmatprep.subr.bf16.mxu0 %v3119
    %3716 = vmatpush1.bf16.msra.mxu0 %v3118
    %3717 = vmatprep.subr.bf16.mxu0 %v3123
    %3718 = vmatpush1.bf16.msra.mxu0 %v3122
    %3719 = vmatprep.subr.bf16.mxu0 0
    %3720 = vmatpush1.bf16.msra.mxu0 0
    %3721 = vmatprep.subr.bf16.mxu0 0
    %3722 = vmatpush1.bf16.msra.mxu0 0
    %3723 = vmatprep.subr.bf16.mxu0 0
    %3724 = vmatpush1.bf16.msra.mxu0 0
    %3725 = vmatprep.subr.bf16.mxu0 0
    %3726 = vmatpush1.bf16.msra.mxu0 0
    %3727 = vmatprep.subr.bf16.mxu0 0
    %3728 = vmatpush1.bf16.msra.mxu0 0
    %3729 = vmatprep.subr.bf16.mxu0 0
    %3730 = vmatpush1.bf16.msra.mxu0 0
    %3731 = vmatprep.subr.bf16.mxu0 0
    %3732 = vmatpush1.bf16.msra.mxu0 0
    %3733 = vmatprep.subr.bf16.mxu0 0
    %3734 = vmatpush1.bf16.msra.mxu0 0
    %3735 = vmatprep.mubr.bf16.mxu0 0
    %3736 = vmatmul.mubr.bf16.gmra.mrb[0].mxu0 %v3702
    %v3737 = vpop.f32.mrb[0].mxu0
    %v3738 = vadd.f32 0.0, %v3737
    %v3739 = vpop.f32.mrb[0].mxu0
    %v3740 = vadd.f32 0.0, %v3739
    %v3741 = vpop.f32.mrb[0].mxu0
    %v3742 = vpop.f32.mrb[0].mxu0
    %3743 = vdwg.mxu0
    %3744 = vmatprep.subr.bf16.mxu0 %v3097
    %3745 = vmatpush1.bf16.msra.mxu0 %v3096
    %3746 = vmatprep.subr.bf16.mxu0 %v3101
    %3747 = vmatpush1.bf16.msra.mxu0 %v3100
    %3748 = vmatprep.subr.bf16.mxu0 %v3105
    %3749 = vmatpush1.bf16.msra.mxu0 %v3104
    %3750 = vmatprep.subr.bf16.mxu0 %v3109
    %3751 = vmatpush1.bf16.msra.mxu0 %v3108
    %3752 = vmatprep.subr.bf16.mxu0 %v3113
    %3753 = vmatpush1.bf16.msra.mxu0 %v3112
    %3754 = vmatprep.subr.bf16.mxu0 %v3117
    %3755 = vmatpush1.bf16.msra.mxu0 %v3116
    %3756 = vmatprep.subr.bf16.mxu0 %v3121
    %3757 = vmatpush1.bf16.msra.mxu0 %v3120
    %3758 = vmatprep.subr.bf16.mxu0 %v3125
    %3759 = vmatpush1.bf16.msra.mxu0 %v3124
    %3760 = vmatprep.subr.bf16.mxu0 0
    %3761 = vmatpush1.bf16.msra.mxu0 0
    %3762 = vmatprep.subr.bf16.mxu0 0
    %3763 = vmatpush1.bf16.msra.mxu0 0
    %3764 = vmatprep.subr.bf16.mxu0 0
    %3765 = vmatpush1.bf16.msra.mxu0 0
    %3766 = vmatprep.subr.bf16.mxu0 0
    %3767 = vmatpush1.bf16.msra.mxu0 0
    %3768 = vmatprep.subr.bf16.mxu0 0
    %3769 = vmatpush1.bf16.msra.mxu0 0
    %3770 = vmatprep.subr.bf16.mxu0 0
    %3771 = vmatpush1.bf16.msra.mxu0 0
    %3772 = vmatprep.subr.bf16.mxu0 0
    %3773 = vmatpush1.bf16.msra.mxu0 0
    %3774 = vmatprep.subr.bf16.mxu0 0
    %3775 = vmatpush1.bf16.msra.mxu0 0
    %3776 = vmatprep.mubr.bf16.mxu0 0
    %3777 = vmatmul.mubr.bf16.gmra.mrb[0].mxu0 %v3702
    %v3778 = vpop.f32.mrb[0].mxu0
    %v3779 = vadd.f32 0.0, %v3778
    %v3780 = vpop.f32.mrb[0].mxu0
    %v3781 = vadd.f32 0.0, %v3780
    %v3782 = vpop.f32.mrb[0].mxu0
    %v3783 = vpop.f32.mrb[0].mxu0
    %3784 = vdwg.mxu0
    %v3785 = vadd.f32 %v3698, %v3738
    %v3786 = vadd.f32 %v3699, %v3740
    %v3787 = vadd.f32 %v3700, %v3779
    %v3788 = vadd.f32 %v3701, %v3781
    %v3789 = vmul.f32 %v3785, 0.5
    %v3790 = vtanh.pop %v3789
    %v3791 = vmul.f32 %v3790, 0.5
    %v3792 = vadd.f32 %v3791, 0.5
    %v3793 = vmul.f32 %v3786, 0.5
    %v3794 = vtanh.pop %v3793
    %v3795 = vmul.f32 %v3794, 0.5
    %v3796 = vadd.f32 %v3795, 0.5
    %v3797 = vtanh.pop %v3787
    %v3798 = vmul.f32 %v3788, 0.5
    %v3799 = vtanh.pop %v3798
    %v3800 = vmul.f32 %v3799, 0.5
    %v3801 = vadd.f32 %v3800, 0.5
    %v3802 = vmul.f32 %v3796, %v3695
    %v3803 = vmul.f32 %v3792, %v3797
    %v3804 = vadd.f32 %v3802, %v3803
    %v3805 = vtanh.pop %v3804
    %v3806 = vmul.f32 %v3801, %v3805
    %v3807 = vld [vmem:[%s1296] sm:$0xff]
    %v3808 = vld [vmem:[%s1296 + $0x8] sm:$0xff]
    %v3809 = vld [vmem:[%s1296 + $0x10] sm:$0xff]
    %v3810 = vld [vmem:[%s1296 + $0x18] sm:$0xff]
    %v3811 = vpack.c.bf16 %v3806, %v3806
    %3812 = vmatprep.subr.bf16.mxu0 %v3095
    %3813 = vmatpush1.bf16.msra.mxu0 %v3094
    %3814 = vmatprep.subr.bf16.mxu0 %v3099
    %3815 = vmatpush1.bf16.msra.mxu0 %v3098
    %3816 = vmatprep.subr.bf16.mxu0 %v3103
    %3817 = vmatpush1.bf16.msra.mxu0 %v3102
    %3818 = vmatprep.subr.bf16.mxu0 %v3107
    %3819 = vmatpush1.bf16.msra.mxu0 %v3106
    %3820 = vmatprep.subr.bf16.mxu0 %v3111
    %3821 = vmatpush1.bf16.msra.mxu0 %v3110
    %3822 = vmatprep.subr.bf16.mxu0 %v3115
    %3823 = vmatpush1.bf16.msra.mxu0 %v3114
    %3824 = vmatprep.subr.bf16.mxu0 %v3119
    %3825 = vmatpush1.bf16.msra.mxu0 %v3118
    %3826 = vmatprep.subr.bf16.mxu0 %v3123
    %3827 = vmatpush1.bf16.msra.mxu0 %v3122
    %3828 = vmatprep.subr.bf16.mxu0 0
    %3829 = vmatpush1.bf16.msra.mxu0 0
    %3830 = vmatprep.subr.bf16.mxu0 0
    %3831 = vmatpush1.bf16.msra.mxu0 0
    %3832 = vmatprep.subr.bf16.mxu0 0
    %3833 = vmatpush1.bf16.msra.mxu0 0
    %3834 = vmatprep.subr.bf16.mxu0 0
    %3835 = vmatpush1.bf16.msra.mxu0 0
    %3836 = vmatprep.subr.bf16.mxu0 0
    %3837 = vmatpush1.bf16.msra.mxu0 0
    %3838 = vmatprep.subr.bf16.mxu0 0
    %3839 = vmatpush1.bf16.msra.mxu0 0
    %3840 = vmatprep.subr.bf16.mxu0 0
    %3841 = vmatpush1.bf16.msra.mxu0 0
    %3842 = vmatprep.subr.bf16.mxu0 0
    %3843 = vmatpush1.bf16.msra.mxu0 0
    %3844 = vmatprep.mubr.bf16.mxu0 0
    %3845 = vmatmul.mubr.bf16.gmra.mrb[0].mxu0 %v3811
    %v3846 = vpop.f32.mrb[0].mxu0
    %v3847 = vadd.f32 0.0, %v3846
    %v3848 = vpop.f32.mrb[0].mxu0
    %v3849 = vadd.f32 0.0, %v3848
    %v3850 = vpop.f32.mrb[0].mxu0
    %v3851 = vpop.f32.mrb[0].mxu0
    %3852 = vdwg.mxu0
    %3853 = vmatprep.subr.bf16.mxu0 %v3097
    %3854 = vmatpush1.bf16.msra.mxu0 %v3096
    %3855 = vmatprep.subr.bf16.mxu0 %v3101
    %3856 = vmatpush1.bf16.msra.mxu0 %v3100
    %3857 = vmatprep.subr.bf16.mxu0 %v3105
    %3858 = vmatpush1.bf16.msra.mxu0 %v3104
    %3859 = vmatprep.subr.bf16.mxu0 %v3109
    %3860 = vmatpush1.bf16.msra.mxu0 %v3108
    %3861 = vmatprep.subr.bf16.mxu0 %v3113
    %3862 = vmatpush1.bf16.msra.mxu0 %v3112
    %3863 = vmatprep.subr.bf16.mxu0 %v3117
    %3864 = vmatpush1.bf16.msra.mxu0 %v3116
    %3865 = vmatprep.subr.bf16.mxu0 %v3121
    %3866 = vmatpush1.bf16.msra.mxu0 %v3120
    %3867 = vmatprep.subr.bf16.mxu0 %v3125
    %3868 = vmatpush1.bf16.msra.mxu0 %v3124
    %3869 = vmatprep.subr.bf16.mxu0 0
    %3870 = vmatpush1.bf16.msra.mxu0 0
    %3871 = vmatprep.subr.bf16.mxu0 0
    %3872 = vmatpush1.bf16.msra.mxu0 0
    %3873 = vmatprep.subr.bf16.mxu0 0
    %3874 = vmatpush1.bf16.msra.mxu0 0
    %3875 = vmatprep.subr.bf16.mxu0 0
    %3876 = vmatpush1.bf16.msra.mxu0 0
    %3877 = vmatprep.subr.bf16.mxu0 0
    %3878 = vmatpush1.bf16.msra.mxu0 0
    %3879 = vmatprep.subr.bf16.mxu0 0
    %3880 = vmatpush1.bf16.msra.mxu0 0
    %3881 = vmatprep.subr.bf16.mxu0 0
    %3882 = vmatpush1.bf16.msra.mxu0 0
    %3883 = vmatprep.subr.bf16.mxu0 0
    %3884 = vmatpush1.bf16.msra.mxu0 0
    %3885 = vmatprep.mubr.bf16.mxu0 0
    %3886 = vmatmul.mubr.bf16.gmra.mrb[0].mxu0 %v3811
    %v3887 = vpop.f32.mrb[0].mxu0
    %v3888 = vadd.f32 0.0, %v3887
    %v3889 = vpop.f32.mrb[0].mxu0
    %v3890 = vadd.f32 0.0, %v3889
    %v3891 = vpop.f32.mrb[0].mxu0
    %v3892 = vpop.f32.mrb[0].mxu0
    %3893 = vdwg.mxu0
    %v3894 = vadd.f32 %v3807, %v3847
    %v3895 = vadd.f32 %v3808, %v3849
    %v3896 = vadd.f32 %v3809, %v3888
    %v3897 = vadd.f32 %v3810, %v3890
    %v3898 = vmul.f32 %v3894, 0.5
    %v3899 = vtanh.pop %v3898
    %v3900 = vmul.f32 %v3899, 0.5
    %v3901 = vadd.f32 %v3900, 0.5
    %v3902 = vmul.f32 %v3895, 0.5
    %v3903 = vtanh.pop %v3902
    %v3904 = vmul.f32 %v3903, 0.5
    %v3905 = vadd.f32 %v3904, 0.5
    %v3906 = vtanh.pop %v3896
    %v3907 = vmul.f32 %v3897, 0.5
    %v3908 = vtanh.pop %v3907
    %v3909 = vmul.f32 %v3908, 0.5
    %v3910 = vadd.f32 %v3909, 0.5
    %v3911 = vmul.f32 %v3905, %v3804
    %v3912 = vmul.f32 %v3901, %v3906
    %v3913 = vadd.f32 %v3911, %v3912
    %v3914 = vtanh.pop %v3913
    %v3915 = vmul.f32 %v3910, %v3914
    %v3916 = vld [vmem:[%s1410] sm:$0xff]
    %v3917 = vld [vmem:[%s1410 + $0x8] sm:$0xff]
    %v3918 = vld [vmem:[%s1410 + $0x10] sm:$0xff]
    %v3919 = vld [vmem:[%s1410 + $0x18] sm:$0xff]
    %v3920 = vpack.c.bf16 %v3915, %v3915
    %3921 = vmatprep.subr.bf16.mxu0 %v3095
    %3922 = vmatpush1.bf16.msra.mxu0 %v3094
    %3923 = vmatprep.subr.bf16.mxu0 %v3099
    %3924 = vmatpush1.bf16.msra.mxu0 %v3098
    %3925 = vmatprep.subr.bf16.mxu0 %v3103
    %3926 = vmatpush1.bf16.msra.mxu0 %v3102
    %3927 = vmatprep.subr.bf16.mxu0 %v3107
    %3928 = vmatpush1.bf16.msra.mxu0 %v3106
    %3929 = vmatprep.subr.bf16.mxu0 %v3111
    %3930 = vmatpush1.bf16.msra.mxu0 %v3110
    %3931 = vmatprep.subr.bf16.mxu0 %v3115
    %3932 = vmatpush1.bf16.msra.mxu0 %v3114
    %3933 = vmatprep.subr.bf16.mxu0 %v3119
    %3934 = vmatpush1.bf16.msra.mxu0 %v3118
    %3935 = vmatprep.subr.bf16.mxu0 %v3123
    %3936 = vmatpush1.bf16.msra.mxu0 %v3122
    %3937 = vmatprep.subr.bf16.mxu0 0
    %3938 = vmatpush1.bf16.msra.mxu0 0
    %3939 = vmatprep.subr.bf16.mxu0 0
    %3940 = vmatpush1.bf16.msra.mxu0 0
    %3941 = vmatprep.subr.bf16.mxu0 0
    %3942 = vmatpush1.bf16.msra.mxu0 0
    %3943 = vmatprep.subr.bf16.mxu0 0
    %3944 = vmatpush1.bf16.msra.mxu0 0
    %3945 = vmatprep.subr.bf16.mxu0 0
    %3946 = vmatpush1.bf16.msra.mxu0 0
    %3947 = vmatprep.subr.bf16.mxu0 0
    %3948 = vmatpush1.bf16.msra.mxu0 0
    %3949 = vmatprep.subr.bf16.mxu0 0
    %3950 = vmatpush1.bf16.msra.mxu0 0
    %3951 = vmatprep.subr.bf16.mxu0 0
    %3952 = vmatpush1.bf16.msra.mxu0 0
    %3953 = vmatprep.mubr.bf16.mxu0 0
    %3954 = vmatmul.mubr.bf16.gmra.mrb[0].mxu0 %v3920
    %v3955 = vpop.f32.mrb[0].mxu0
    %v3956 = vadd.f32 0.0, %v3955
    %v3957 = vpop.f32.mrb[0].mxu0
    %v3958 = vadd.f32 0.0, %v3957
    %v3959 = vpop.f32.mrb[0].mxu0
    %v3960 = vpop.f32.mrb[0].mxu0
    %3961 = vdwg.mxu0
    %3962 = vmatprep.subr.bf16.mxu0 %v3097
    %3963 = vmatpush1.bf16.msra.mxu0 %v3096
    %3964 = vmatprep.subr.bf16.mxu0 %v3101
    %3965 = vmatpush1.bf16.msra.mxu0 %v3100
    %3966 = vmatprep.subr.bf16.mxu0 %v3105
    %3967 = vmatpush1.bf16.msra.mxu0 %v3104
    %3968 = vmatprep.subr.bf16.mxu0 %v3109
    %3969 = vmatpush1.bf16.msra.mxu0 %v3108
    %3970 = vmatprep.subr.bf16.mxu0 %v3113
    %3971 = vmatpush1.bf16.msra.mxu0 %v3112
    %3972 = vmatprep.subr.bf16.mxu0 %v3117
    %3973 = vmatpush1.bf16.msra.mxu0 %v3116
    %3974 = vmatprep.subr.bf16.mxu0 %v3121
    %3975 = vmatpush1.bf16.msra.mxu0 %v3120
    %3976 = vmatprep.subr.bf16.mxu0 %v3125
    %3977 = vmatpush1.bf16.msra.mxu0 %v3124
    %3978 = vmatprep.subr.bf16.mxu0 0
    %3979 = vmatpush1.bf16.msra.mxu0 0
    %3980 = vmatprep.subr.bf16.mxu0 0
    %3981 = vmatpush1.bf16.msra.mxu0 0
    %3982 = vmatprep.subr.bf16.mxu0 0
    %3983 = vmatpush1.bf16.msra.mxu0 0
    %3984 = vmatprep.subr.bf16.mxu0 0
    %3985 = vmatpush1.bf16.msra.mxu0 0
    %3986 = vmatprep.subr.bf16.mxu0 0
    %3987 = vmatpush1.bf16.msra.mxu0 0
    %3988 = vmatprep.subr.bf16.mxu0 0
    %3989 = vmatpush1.bf16.msra.mxu0 0
    %3990 = vmatprep.subr.bf16.mxu0 0
    %3991 = vmatpush1.bf16.msra.mxu0 0
    %3992 = vmatprep.subr.bf16.mxu0 0
    %3993 = vmatpush1.bf16.msra.mxu0 0
    %3994 = vmatprep.mubr.bf16.mxu0 0
    %3995 = vmatmul.mubr.bf16.gmra.mrb[0].mxu0 %v3920
    %v3996 = vpop.f32.mrb[0].mxu0
    %v3997 = vadd.f32 0.0, %v3996
    %v3998 = vpop.f32.mrb[0].mxu0
    %v3999 = vadd.f32 0.0, %v3998
    %v4000 = vpop.f32.mrb[0].mxu0
    %v4001 = vpop.f32.mrb[0].mxu0
    %4002 = vdwg.mxu0
    %v4003 = vadd.f32 %v3916, %v3956
    %v4004 = vadd.f32 %v3917, %v3958
    %v4005 = vadd.f32 %v3918, %v3997
    %v4006 = vadd.f32 %v3919, %v3999
    %v4007 = vmul.f32 %v4003, 0.5
    %v4008 = vtanh.pop %v4007
    %v4009 = vmul.f32 %v4008, 0.5
    %v4010 = vadd.f32 %v4009, 0.5
    %v4011 = vmul.f32 %v4004, 0.5
    %v4012 = vtanh.pop %v4011
    %v4013 = vmul.f32 %v4012, 0.5
    %v4014 = vadd.f32 %v4013, 0.5
    %v4015 = vtanh.pop %v4005
    %v4016 = vmul.f32 %v4006, 0.5
    %v4017 = vtanh.pop %v4016
    %v4018 = vmul.f32 %v4017, 0.5
    %v4019 = vadd.f32 %v4018, 0.5
    %v4020 = vmul.f32 %v4014, %v3913
    %v4021 = vmul.f32 %v4010, %v4015
    %v4022 = vadd.f32 %v4020, %v4021
    %v4023 = vtanh.pop %v4022
    %v4024 = vmul.f32 %v4019, %v4023
    %v4025 = vld [vmem:[%s1524] sm:$0xff]
    %v4026 = vld [vmem:[%s1524 + $0x8] sm:$0xff]
    %v4027 = vld [vmem:[%s1524 + $0x10] sm:$0xff]
    %v4028 = vld [vmem:[%s1524 + $0x18] sm:$0xff]
    %v4029 = vpack.c.bf16 %v4024, %v4024
    %4030 = vmatprep.subr.bf16.mxu0 %v3095
    %4031 = vmatpush1.bf16.msra.mxu0 %v3094
    %4032 = vmatprep.subr.bf16.mxu0 %v3099
    %4033 = vmatpush1.bf16.msra.mxu0 %v3098
    %4034 = vmatprep.subr.bf16.mxu0 %v3103
    %4035 = vmatpush1.bf16.msra.mxu0 %v3102
    %4036 = vmatprep.subr.bf16.mxu0 %v3107
    %4037 = vmatpush1.bf16.msra.mxu0 %v3106
    %4038 = vmatprep.subr.bf16.mxu0 %v3111
    %4039 = vmatpush1.bf16.msra.mxu0 %v3110
    %4040 = vmatprep.subr.bf16.mxu0 %v3115
    %4041 = vmatpush1.bf16.msra.mxu0 %v3114
    %4042 = vmatprep.subr.bf16.mxu0 %v3119
    %4043 = vmatpush1.bf16.msra.mxu0 %v3118
    %4044 = vmatprep.subr.bf16.mxu0 %v3123
    %4045 = vmatpush1.bf16.msra.mxu0 %v3122
    %4046 = vmatprep.subr.bf16.mxu0 0
    %4047 = vmatpush1.bf16.msra.mxu0 0
    %4048 = vmatprep.subr.bf16.mxu0 0
    %4049 = vmatpush1.bf16.msra.mxu0 0
    %4050 = vmatprep.subr.bf16.mxu0 0
    %4051 = vmatpush1.bf16.msra.mxu0 0
    %4052 = vmatprep.subr.bf16.mxu0 0
    %4053 = vmatpush1.bf16.msra.mxu0 0
    %4054 = vmatprep.subr.bf16.mxu0 0
    %4055 = vmatpush1.bf16.msra.mxu0 0
    %4056 = vmatprep.subr.bf16.mxu0 0
    %4057 = vmatpush1.bf16.msra.mxu0 0
    %4058 = vmatprep.subr.bf16.mxu0 0
    %4059 = vmatpush1.bf16.msra.mxu0 0
    %4060 = vmatprep.subr.bf16.mxu0 0
    %4061 = vmatpush1.bf16.msra.mxu0 0
    %4062 = vmatprep.mubr.bf16.mxu0 0
    %4063 = vmatmul.mubr.bf16.gmra.mrb[0].mxu0 %v4029
    %v4064 = vpop.f32.mrb[0].mxu0
    %v4065 = vadd.f32 0.0, %v4064
    %v4066 = vpop.f32.mrb[0].mxu0
    %v4067 = vadd.f32 0.0, %v4066
    %v4068 = vpop.f32.mrb[0].mxu0
    %v4069 = vpop.f32.mrb[0].mxu0
    %4070 = vdwg.mxu0
    %4071 = vmatprep.subr.bf16.mxu0 %v3097
    %4072 = vmatpush1.bf16.msra.mxu0 %v3096
    %4073 = vmatprep.subr.bf16.mxu0 %v3101
    %4074 = vmatpush1.bf16.msra.mxu0 %v3100
    %4075 = vmatprep.subr.bf16.mxu0 %v3105
    %4076 = vmatpush1.bf16.msra.mxu0 %v3104
    %4077 = vmatprep.subr.bf16.mxu0 %v3109
    %4078 = vmatpush1.bf16.msra.mxu0 %v3108
    %4079 = vmatprep.subr.bf16.mxu0 %v3113
    %4080 = vmatpush1.bf16.msra.mxu0 %v3112
    %4081 = vmatprep.subr.bf16.mxu0 %v3117
    %4082 = vmatpush1.bf16.msra.mxu0 %v3116
    %4083 = vmatprep.subr.bf16.mxu0 %v3121
    %4084 = vmatpush1.bf16.msra.mxu0 %v3120
    %4085 = vmatprep.subr.bf16.mxu0 %v3125
    %4086 = vmatpush1.bf16.msra.mxu0 %v3124
    %4087 = vmatprep.subr.bf16.mxu0 0
    %4088 = vmatpush1.bf16.msra.mxu0 0
    %4089 = vmatprep.subr.bf16.mxu0 0
    %4090 = vmatpush1.bf16.msra.mxu0 0
    %4091 = vmatprep.subr.bf16.mxu0 0
    %4092 = vmatpush1.bf16.msra.mxu0 0
    %4093 = vmatprep.subr.bf16.mxu0 0
    %4094 = vmatpush1.bf16.msra.mxu0 0
    %4095 = vmatprep.subr.bf16.mxu0 0
    %4096 = vmatpush1.bf16.msra.mxu0 0
    %4097 = vmatprep.subr.bf16.mxu0 0
    %4098 = vmatpush1.bf16.msra.mxu0 0
    %4099 = vmatprep.subr.bf16.mxu0 0
    %4100 = vmatpush1.bf16.msra.mxu0 0
    %4101 = vmatprep.subr.bf16.mxu0 0
    %4102 = vmatpush1.bf16.msra.mxu0 0
    %4103 = vmatprep.mubr.bf16.mxu0 0
    %4104 = vmatmul.mubr.bf16.gmra.mrb[0].mxu0 %v4029
    %v4105 = vpop.f32.mrb[0].mxu0
    %v4106 = vadd.f32 0.0, %v4105
    %v4107 = vpop.f32.mrb[0].mxu0
    %v4108 = vadd.f32 0.0, %v4107
    %v4109 = vpop.f32.mrb[0].mxu0
    %v4110 = vpop.f32.mrb[0].mxu0
    %4111 = vdwg.mxu0
    %v4112 = vadd.f32 %v4025, %v4065
    %v4113 = vadd.f32 %v4026, %v4067
    %v4114 = vadd.f32 %v4027, %v4106
    %v4115 = vadd.f32 %v4028, %v4108
    %v4116 = vmul.f32 %v4112, 0.5
    %v4117 = vtanh.pop %v4116
    %v4118 = vmul.f32 %v4117, 0.5
    %v4119 = vadd.f32 %v4118, 0.5
    %v4120 = vmul.f32 %v4113, 0.5
    %v4121 = vtanh.pop %v4120
    %v4122 = vmul.f32 %v4121, 0.5
    %v4123 = vadd.f32 %v4122, 0.5
    %v4124 = vtanh.pop %v4114
    %v4125 = vmul.f32 %v4115, 0.5
    %v4126 = vtanh.pop %v4125
    %v4127 = vmul.f32 %v4126, 0.5
    %v4128 = vadd.f32 %v4127, 0.5
    %v4129 = vmul.f32 %v4123, %v4022
    %v4130 = vmul.f32 %v4119, %v4124
    %v4131 = vadd.f32 %v4129, %v4130
    %v4132 = vtanh.pop %v4131
    %v4133 = vmul.f32 %v4128, %v4132
    %v4134 = vld [vmem:[%s1638] sm:$0xff]
    %v4135 = vld [vmem:[%s1638 + $0x8] sm:$0xff]
    %v4136 = vld [vmem:[%s1638 + $0x10] sm:$0xff]
    %v4137 = vld [vmem:[%s1638 + $0x18] sm:$0xff]
    %v4138 = vpack.c.bf16 %v4133, %v4133
    %4139 = vmatprep.subr.bf16.mxu0 %v3095
    %4140 = vmatpush1.bf16.msra.mxu0 %v3094
    %4141 = vmatprep.subr.bf16.mxu0 %v3099
    %4142 = vmatpush1.bf16.msra.mxu0 %v3098
    %4143 = vmatprep.subr.bf16.mxu0 %v3103
    %4144 = vmatpush1.bf16.msra.mxu0 %v3102
    %4145 = vmatprep.subr.bf16.mxu0 %v3107
    %4146 = vmatpush1.bf16.msra.mxu0 %v3106
    %4147 = vmatprep.subr.bf16.mxu0 %v3111
    %4148 = vmatpush1.bf16.msra.mxu0 %v3110
    %4149 = vmatprep.subr.bf16.mxu0 %v3115
    %4150 = vmatpush1.bf16.msra.mxu0 %v3114
    %4151 = vmatprep.subr.bf16.mxu0 %v3119
    %4152 = vmatpush1.bf16.msra.mxu0 %v3118
    %4153 = vmatprep.subr.bf16.mxu0 %v3123
    %4154 = vmatpush1.bf16.msra.mxu0 %v3122
    %4155 = vmatprep.subr.bf16.mxu0 0
    %4156 = vmatpush1.bf16.msra.mxu0 0
    %4157 = vmatprep.subr.bf16.mxu0 0
    %4158 = vmatpush1.bf16.msra.mxu0 0
    %4159 = vmatprep.subr.bf16.mxu0 0
    %4160 = vmatpush1.bf16.msra.mxu0 0
    %4161 = vmatprep.subr.bf16.mxu0 0
    %4162 = vmatpush1.bf16.msra.mxu0 0
    %4163 = vmatprep.subr.bf16.mxu0 0
    %4164 = vmatpush1.bf16.msra.mxu0 0
    %4165 = vmatprep.subr.bf16.mxu0 0
    %4166 = vmatpush1.bf16.msra.mxu0 0
    %4167 = vmatprep.subr.bf16.mxu0 0
    %4168 = vmatpush1.bf16.msra.mxu0 0
    %4169 = vmatprep.subr.bf16.mxu0 0
    %4170 = vmatpush1.bf16.msra.mxu0 0
    %4171 = vmatprep.mubr.bf16.mxu0 0
    %4172 = vmatmul.mubr.bf16.gmra.mrb[0].mxu0 %v4138
    %v4173 = vpop.f32.mrb[0].mxu0
    %v4174 = vadd.f32 0.0, %v4173
    %v4175 = vpop.f32.mrb[0].mxu0
    %v4176 = vadd.f32 0.0, %v4175
    %v4177 = vpop.f32.mrb[0].mxu0
    %v4178 = vpop.f32.mrb[0].mxu0
    %4179 = vdwg.mxu0
    %4180 = vmatprep.subr.bf16.mxu0 %v3097
    %4181 = vmatpush1.bf16.msra.mxu0 %v3096
    %4182 = vmatprep.subr.bf16.mxu0 %v3101
    %4183 = vmatpush1.bf16.msra.mxu0 %v3100
    %4184 = vmatprep.subr.bf16.mxu0 %v3105
    %4185 = vmatpush1.bf16.msra.mxu0 %v3104
    %4186 = vmatprep.subr.bf16.mxu0 %v3109
    %4187 = vmatpush1.bf16.msra.mxu0 %v3108
    %4188 = vmatprep.subr.bf16.mxu0 %v3113
    %4189 = vmatpush1.bf16.msra.mxu0 %v3112
    %4190 = vmatprep.subr.bf16.mxu0 %v3117
    %4191 = vmatpush1.bf16.msra.mxu0 %v3116
    %4192 = vmatprep.subr.bf16.mxu0 %v3121
    %4193 = vmatpush1.bf16.msra.mxu0 %v3120
    %4194 = vmatprep.subr.bf16.mxu0 %v3125
    %4195 = vmatpush1.bf16.msra.mxu0 %v3124
    %4196 = vmatprep.subr.bf16.mxu0 0
    %4197 = vmatpush1.bf16.msra.mxu0 0
    %4198 = vmatprep.subr.bf16.mxu0 0
    %4199 = vmatpush1.bf16.msra.mxu0 0
    %4200 = vmatprep.subr.bf16.mxu0 0
    %4201 = vmatpush1.bf16.msra.mxu0 0
    %4202 = vmatprep.subr.bf16.mxu0 0
    %4203 = vmatpush1.bf16.msra.mxu0 0
    %4204 = vmatprep.subr.bf16.mxu0 0
    %4205 = vmatpush1.bf16.msra.mxu0 0
    %4206 = vmatprep.subr.bf16.mxu0 0
    %4207 = vmatpush1.bf16.msra.mxu0 0
    %4208 = vmatprep.subr.bf16.mxu0 0
    %4209 = vmatpush1.bf16.msra.mxu0 0
    %4210 = vmatprep.subr.bf16.mxu0 0
    %4211 = vmatpush1.bf16.msra.mxu0 0
    %4212 = vmatprep.mubr.bf16.mxu0 0
    %4213 = vmatmul.mubr.bf16.gmra.mrb[0].mxu0 %v4138
    %v4214 = vpop.f32.mrb[0].mxu0
    %v4215 = vadd.f32 0.0, %v4214
    %v4216 = vpop.f32.mrb[0].mxu0
    %v4217 = vadd.f32 0.0, %v4216
    %v4218 = vpop.f32.mrb[0].mxu0
    %v4219 = vpop.f32.mrb[0].mxu0
    %4220 = vdwg.mxu0
    %v4221 = vadd.f32 %v4134, %v4174
    %v4222 = vadd.f32 %v4135, %v4176
    %v4223 = vadd.f32 %v4136, %v4215
    %v4224 = vadd.f32 %v4137, %v4217
    %v4225 = vmul.f32 %v4221, 0.5
    %v4226 = vtanh.pop %v4225
    %v4227 = vmul.f32 %v4226, 0.5
    %v4228 = vadd.f32 %v4227, 0.5
    %v4229 = vmul.f32 %v4222, 0.5
    %v4230 = vtanh.pop %v4229
    %v4231 = vmul.f32 %v4230, 0.5
    %v4232 = vadd.f32 %v4231, 0.5
    %v4233 = vtanh.pop %v4223
    %v4234 = vmul.f32 %v4224, 0.5
    %v4235 = vtanh.pop %v4234
    %v4236 = vmul.f32 %v4235, 0.5
    %v4237 = vadd.f32 %v4236, 0.5
    %v4238 = vmul.f32 %v4232, %v4131
    %v4239 = vmul.f32 %v4228, %v4233
    %v4240 = vadd.f32 %v4238, %v4239
    %v4241 = vtanh.pop %v4240
    %v4242 = vmul.f32 %v4237, %v4241
    %v4243 = vld [vmem:[%s1752] sm:$0xff]
    %v4244 = vld [vmem:[%s1752 + $0x8] sm:$0xff]
    %v4245 = vld [vmem:[%s1752 + $0x10] sm:$0xff]
    %v4246 = vld [vmem:[%s1752 + $0x18] sm:$0xff]
    %v4247 = vpack.c.bf16 %v4242, %v4242
    %4248 = vmatprep.subr.bf16.mxu0 %v3095
    %4249 = vmatpush1.bf16.msra.mxu0 %v3094
    %4250 = vmatprep.subr.bf16.mxu0 %v3099
    %4251 = vmatpush1.bf16.msra.mxu0 %v3098
    %4252 = vmatprep.subr.bf16.mxu0 %v3103
    %4253 = vmatpush1.bf16.msra.mxu0 %v3102
    %4254 = vmatprep.subr.bf16.mxu0 %v3107
    %4255 = vmatpush1.bf16.msra.mxu0 %v3106
    %4256 = vmatprep.subr.bf16.mxu0 %v3111
    %4257 = vmatpush1.bf16.msra.mxu0 %v3110
    %4258 = vmatprep.subr.bf16.mxu0 %v3115
    %4259 = vmatpush1.bf16.msra.mxu0 %v3114
    %4260 = vmatprep.subr.bf16.mxu0 %v3119
    %4261 = vmatpush1.bf16.msra.mxu0 %v3118
    %4262 = vmatprep.subr.bf16.mxu0 %v3123
    %4263 = vmatpush1.bf16.msra.mxu0 %v3122
    %4264 = vmatprep.subr.bf16.mxu0 0
    %4265 = vmatpush1.bf16.msra.mxu0 0
    %4266 = vmatprep.subr.bf16.mxu0 0
    %4267 = vmatpush1.bf16.msra.mxu0 0
    %4268 = vmatprep.subr.bf16.mxu0 0
    %4269 = vmatpush1.bf16.msra.mxu0 0
    %4270 = vmatprep.subr.bf16.mxu0 0
    %4271 = vmatpush1.bf16.msra.mxu0 0
    %4272 = vmatprep.subr.bf16.mxu0 0
    %4273 = vmatpush1.bf16.msra.mxu0 0
    %4274 = vmatprep.subr.bf16.mxu0 0
    %4275 = vmatpush1.bf16.msra.mxu0 0
    %4276 = vmatprep.subr.bf16.mxu0 0
    %4277 = vmatpush1.bf16.msra.mxu0 0
    %4278 = vmatprep.subr.bf16.mxu0 0
    %4279 = vmatpush1.bf16.msra.mxu0 0
    %4280 = vmatprep.mubr.bf16.mxu0 0
    %4281 = vmatmul.mubr.bf16.gmra.mrb[0].mxu0 %v4247
    %v4282 = vpop.f32.mrb[0].mxu0
    %v4283 = vadd.f32 0.0, %v4282
    %v4284 = vpop.f32.mrb[0].mxu0
    %v4285 = vadd.f32 0.0, %v4284
    %v4286 = vpop.f32.mrb[0].mxu0
    %v4287 = vpop.f32.mrb[0].mxu0
    %4288 = vdwg.mxu0
    %4289 = vmatprep.subr.bf16.mxu0 %v3097
    %4290 = vmatpush1.bf16.msra.mxu0 %v3096
    %4291 = vmatprep.subr.bf16.mxu0 %v3101
    %4292 = vmatpush1.bf16.msra.mxu0 %v3100
    %4293 = vmatprep.subr.bf16.mxu0 %v3105
    %4294 = vmatpush1.bf16.msra.mxu0 %v3104
    %4295 = vmatprep.subr.bf16.mxu0 %v3109
    %4296 = vmatpush1.bf16.msra.mxu0 %v3108
    %4297 = vmatprep.subr.bf16.mxu0 %v3113
    %4298 = vmatpush1.bf16.msra.mxu0 %v3112
    %4299 = vmatprep.subr.bf16.mxu0 %v3117
    %4300 = vmatpush1.bf16.msra.mxu0 %v3116
    %4301 = vmatprep.subr.bf16.mxu0 %v3121
    %4302 = vmatpush1.bf16.msra.mxu0 %v3120
    %4303 = vmatprep.subr.bf16.mxu0 %v3125
    %4304 = vmatpush1.bf16.msra.mxu0 %v3124
    %4305 = vmatprep.subr.bf16.mxu0 0
    %4306 = vmatpush1.bf16.msra.mxu0 0
    %4307 = vmatprep.subr.bf16.mxu0 0
    %4308 = vmatpush1.bf16.msra.mxu0 0
    %4309 = vmatprep.subr.bf16.mxu0 0
    %4310 = vmatpush1.bf16.msra.mxu0 0
    %4311 = vmatprep.subr.bf16.mxu0 0
    %4312 = vmatpush1.bf16.msra.mxu0 0
    %4313 = vmatprep.subr.bf16.mxu0 0
    %4314 = vmatpush1.bf16.msra.mxu0 0
    %4315 = vmatprep.subr.bf16.mxu0 0
    %4316 = vmatpush1.bf16.msra.mxu0 0
    %4317 = vmatprep.subr.bf16.mxu0 0
    %4318 = vmatpush1.bf16.msra.mxu0 0
    %4319 = vmatprep.subr.bf16.mxu0 0
    %4320 = vmatpush1.bf16.msra.mxu0 0
    %4321 = vmatprep.mubr.bf16.mxu0 0
    %4322 = vmatmul.mubr.bf16.gmra.mrb[0].mxu0 %v4247
    %v4323 = vpop.f32.mrb[0].mxu0
    %v4324 = vadd.f32 0.0, %v4323
    %v4325 = vpop.f32.mrb[0].mxu0
    %v4326 = vadd.f32 0.0, %v4325
    %v4327 = vpop.f32.mrb[0].mxu0
    %v4328 = vpop.f32.mrb[0].mxu0
    %4329 = vdwg.mxu0
    %v4330 = vadd.f32 %v4243, %v4283
    %v4331 = vadd.f32 %v4244, %v4285
    %v4332 = vadd.f32 %v4245, %v4324
    %v4333 = vadd.f32 %v4246, %v4326
    %v4334 = vmul.f32 %v4330, 0.5
    %v4335 = vtanh.pop %v4334
    %v4336 = vmul.f32 %v4335, 0.5
    %v4337 = vadd.f32 %v4336, 0.5
    %v4338 = vmul.f32 %v4331, 0.5
    %v4339 = vtanh.pop %v4338
    %v4340 = vmul.f32 %v4339, 0.5
    %v4341 = vadd.f32 %v4340, 0.5
    %v4342 = vtanh.pop %v4332
    %v4343 = vmul.f32 %v4333, 0.5
    %v4344 = vtanh.pop %v4343
    %v4345 = vmul.f32 %v4344, 0.5
    %v4346 = vadd.f32 %v4345, 0.5
    %v4347 = vmul.f32 %v4341, %v4240
    %v4348 = vmul.f32 %v4337, %v4342
    %v4349 = vadd.f32 %v4347, %v4348
    %v4350 = vtanh.pop %v4349
    %v4351 = vmul.f32 %v4346, %v4350
    %v4352 = vld [vmem:[%s1866] sm:$0xff]
    %v4353 = vld [vmem:[%s1866 + $0x8] sm:$0xff]
    %v4354 = vld [vmem:[%s1866 + $0x10] sm:$0xff]
    %v4355 = vld [vmem:[%s1866 + $0x18] sm:$0xff]
    %v4356 = vpack.c.bf16 %v4351, %v4351
    %4357 = vmatprep.subr.bf16.mxu0 %v3095
    %4358 = vmatpush1.bf16.msra.mxu0 %v3094
    %4359 = vmatprep.subr.bf16.mxu0 %v3099
    %4360 = vmatpush1.bf16.msra.mxu0 %v3098
    %4361 = vmatprep.subr.bf16.mxu0 %v3103
    %4362 = vmatpush1.bf16.msra.mxu0 %v3102
    %4363 = vmatprep.subr.bf16.mxu0 %v3107
    %4364 = vmatpush1.bf16.msra.mxu0 %v3106
    %4365 = vmatprep.subr.bf16.mxu0 %v3111
    %4366 = vmatpush1.bf16.msra.mxu0 %v3110
    %4367 = vmatprep.subr.bf16.mxu0 %v3115
    %4368 = vmatpush1.bf16.msra.mxu0 %v3114
    %4369 = vmatprep.subr.bf16.mxu0 %v3119
    %4370 = vmatpush1.bf16.msra.mxu0 %v3118
    %4371 = vmatprep.subr.bf16.mxu0 %v3123
    %4372 = vmatpush1.bf16.msra.mxu0 %v3122
    %4373 = vmatprep.subr.bf16.mxu0 0
    %4374 = vmatpush1.bf16.msra.mxu0 0
    %4375 = vmatprep.subr.bf16.mxu0 0
    %4376 = vmatpush1.bf16.msra.mxu0 0
    %4377 = vmatprep.subr.bf16.mxu0 0
    %4378 = vmatpush1.bf16.msra.mxu0 0
    %4379 = vmatprep.subr.bf16.mxu0 0
    %4380 = vmatpush1.bf16.msra.mxu0 0
    %4381 = vmatprep.subr.bf16.mxu0 0
    %4382 = vmatpush1.bf16.msra.mxu0 0
    %4383 = vmatprep.subr.bf16.mxu0 0
    %4384 = vmatpush1.bf16.msra.mxu0 0
    %4385 = vmatprep.subr.bf16.mxu0 0
    %4386 = vmatpush1.bf16.msra.mxu0 0
    %4387 = vmatprep.subr.bf16.mxu0 0
    %4388 = vmatpush1.bf16.msra.mxu0 0
    %4389 = vmatprep.mubr.bf16.mxu0 0
    %4390 = vmatmul.mubr.bf16.gmra.mrb[0].mxu0 %v4356
    %v4391 = vpop.f32.mrb[0].mxu0
    %v4392 = vadd.f32 0.0, %v4391
    %v4393 = vpop.f32.mrb[0].mxu0
    %v4394 = vadd.f32 0.0, %v4393
    %v4395 = vpop.f32.mrb[0].mxu0
    %v4396 = vpop.f32.mrb[0].mxu0
    %4397 = vdwg.mxu0
    %4398 = vmatprep.subr.bf16.mxu0 %v3097
    %4399 = vmatpush1.bf16.msra.mxu0 %v3096
    %4400 = vmatprep.subr.bf16.mxu0 %v3101
    %4401 = vmatpush1.bf16.msra.mxu0 %v3100
    %4402 = vmatprep.subr.bf16.mxu0 %v3105
    %4403 = vmatpush1.bf16.msra.mxu0 %v3104
    %4404 = vmatprep.subr.bf16.mxu0 %v3109
    %4405 = vmatpush1.bf16.msra.mxu0 %v3108
    %4406 = vmatprep.subr.bf16.mxu0 %v3113
    %4407 = vmatpush1.bf16.msra.mxu0 %v3112
    %4408 = vmatprep.subr.bf16.mxu0 %v3117
    %4409 = vmatpush1.bf16.msra.mxu0 %v3116
    %4410 = vmatprep.subr.bf16.mxu0 %v3121
    %4411 = vmatpush1.bf16.msra.mxu0 %v3120
    %4412 = vmatprep.subr.bf16.mxu0 %v3125
    %4413 = vmatpush1.bf16.msra.mxu0 %v3124
    %4414 = vmatprep.subr.bf16.mxu0 0
    %4415 = vmatpush1.bf16.msra.mxu0 0
    %4416 = vmatprep.subr.bf16.mxu0 0
    %4417 = vmatpush1.bf16.msra.mxu0 0
    %4418 = vmatprep.subr.bf16.mxu0 0
    %4419 = vmatpush1.bf16.msra.mxu0 0
    %4420 = vmatprep.subr.bf16.mxu0 0
    %4421 = vmatpush1.bf16.msra.mxu0 0
    %4422 = vmatprep.subr.bf16.mxu0 0
    %4423 = vmatpush1.bf16.msra.mxu0 0
    %4424 = vmatprep.subr.bf16.mxu0 0
    %4425 = vmatpush1.bf16.msra.mxu0 0
    %4426 = vmatprep.subr.bf16.mxu0 0
    %4427 = vmatpush1.bf16.msra.mxu0 0
    %4428 = vmatprep.subr.bf16.mxu0 0
    %4429 = vmatpush1.bf16.msra.mxu0 0
    %4430 = vmatprep.mubr.bf16.mxu0 0
    %4431 = vmatmul.mubr.bf16.gmra.mrb[0].mxu0 %v4356
    %v4432 = vpop.f32.mrb[0].mxu0
    %v4433 = vadd.f32 0.0, %v4432
    %v4434 = vpop.f32.mrb[0].mxu0
    %v4435 = vadd.f32 0.0, %v4434
    %v4436 = vpop.f32.mrb[0].mxu0
    %v4437 = vpop.f32.mrb[0].mxu0
    %4438 = vdwg.mxu0
    %v4439 = vadd.f32 %v4352, %v4392
    %v4440 = vadd.f32 %v4353, %v4394
    %v4441 = vadd.f32 %v4354, %v4433
    %v4442 = vadd.f32 %v4355, %v4435
    %v4443 = vmul.f32 %v4439, 0.5
    %v4444 = vtanh.pop %v4443
    %v4445 = vmul.f32 %v4444, 0.5
    %v4446 = vadd.f32 %v4445, 0.5
    %v4447 = vmul.f32 %v4440, 0.5
    %v4448 = vtanh.pop %v4447
    %v4449 = vmul.f32 %v4448, 0.5
    %v4450 = vadd.f32 %v4449, 0.5
    %v4451 = vtanh.pop %v4441
    %v4452 = vmul.f32 %v4442, 0.5
    %v4453 = vtanh.pop %v4452
    %v4454 = vmul.f32 %v4453, 0.5
    %v4455 = vadd.f32 %v4454, 0.5
    %v4456 = vmul.f32 %v4450, %v4349
    %v4457 = vmul.f32 %v4446, %v4451
    %v4458 = vadd.f32 %v4456, %v4457
    %v4459 = vtanh.pop %v4458
    %v4460 = vmul.f32 %v4455, %v4459
    %v4461 = vld [vmem:[%s1980] sm:$0xff]
    %v4462 = vld [vmem:[%s1980 + $0x8] sm:$0xff]
    %v4463 = vld [vmem:[%s1980 + $0x10] sm:$0xff]
    %v4464 = vld [vmem:[%s1980 + $0x18] sm:$0xff]
    %v4465 = vpack.c.bf16 %v4460, %v4460
    %4466 = vmatprep.subr.bf16.mxu0 %v3095
    %4467 = vmatpush1.bf16.msra.mxu0 %v3094
    %4468 = vmatprep.subr.bf16.mxu0 %v3099
    %4469 = vmatpush1.bf16.msra.mxu0 %v3098
    %4470 = vmatprep.subr.bf16.mxu0 %v3103
    %4471 = vmatpush1.bf16.msra.mxu0 %v3102
    %4472 = vmatprep.subr.bf16.mxu0 %v3107
    %4473 = vmatpush1.bf16.msra.mxu0 %v3106
    %4474 = vmatprep.subr.bf16.mxu0 %v3111
    %4475 = vmatpush1.bf16.msra.mxu0 %v3110
    %4476 = vmatprep.subr.bf16.mxu0 %v3115
    %4477 = vmatpush1.bf16.msra.mxu0 %v3114
    %4478 = vmatprep.subr.bf16.mxu0 %v3119
    %4479 = vmatpush1.bf16.msra.mxu0 %v3118
    %4480 = vmatprep.subr.bf16.mxu0 %v3123
    %4481 = vmatpush1.bf16.msra.mxu0 %v3122
    %4482 = vmatprep.subr.bf16.mxu0 0
    %4483 = vmatpush1.bf16.msra.mxu0 0
    %4484 = vmatprep.subr.bf16.mxu0 0
    %4485 = vmatpush1.bf16.msra.mxu0 0
    %4486 = vmatprep.subr.bf16.mxu0 0
    %4487 = vmatpush1.bf16.msra.mxu0 0
    %4488 = vmatprep.subr.bf16.mxu0 0
    %4489 = vmatpush1.bf16.msra.mxu0 0
    %4490 = vmatprep.subr.bf16.mxu0 0
    %4491 = vmatpush1.bf16.msra.mxu0 0
    %4492 = vmatprep.subr.bf16.mxu0 0
    %4493 = vmatpush1.bf16.msra.mxu0 0
    %4494 = vmatprep.subr.bf16.mxu0 0
    %4495 = vmatpush1.bf16.msra.mxu0 0
    %4496 = vmatprep.subr.bf16.mxu0 0
    %4497 = vmatpush1.bf16.msra.mxu0 0
    %4498 = vmatprep.mubr.bf16.mxu0 0
    %4499 = vmatmul.mubr.bf16.gmra.mrb[0].mxu0 %v4465
    %v4500 = vpop.f32.mrb[0].mxu0
    %v4501 = vadd.f32 0.0, %v4500
    %v4502 = vpop.f32.mrb[0].mxu0
    %v4503 = vadd.f32 0.0, %v4502
    %v4504 = vpop.f32.mrb[0].mxu0
    %v4505 = vpop.f32.mrb[0].mxu0
    %4506 = vdwg.mxu0
    %4507 = vmatprep.subr.bf16.mxu0 %v3097
    %4508 = vmatpush1.bf16.msra.mxu0 %v3096
    %4509 = vmatprep.subr.bf16.mxu0 %v3101
    %4510 = vmatpush1.bf16.msra.mxu0 %v3100
    %4511 = vmatprep.subr.bf16.mxu0 %v3105
    %4512 = vmatpush1.bf16.msra.mxu0 %v3104
    %4513 = vmatprep.subr.bf16.mxu0 %v3109
    %4514 = vmatpush1.bf16.msra.mxu0 %v3108
    %4515 = vmatprep.subr.bf16.mxu0 %v3113
    %4516 = vmatpush1.bf16.msra.mxu0 %v3112
    %4517 = vmatprep.subr.bf16.mxu0 %v3117
    %4518 = vmatpush1.bf16.msra.mxu0 %v3116
    %4519 = vmatprep.subr.bf16.mxu0 %v3121
    %4520 = vmatpush1.bf16.msra.mxu0 %v3120
    %4521 = vmatprep.subr.bf16.mxu0 %v3125
    %4522 = vmatpush1.bf16.msra.mxu0 %v3124
    %4523 = vmatprep.subr.bf16.mxu0 0
    %4524 = vmatpush1.bf16.msra.mxu0 0
    %4525 = vmatprep.subr.bf16.mxu0 0
    %4526 = vmatpush1.bf16.msra.mxu0 0
    %4527 = vmatprep.subr.bf16.mxu0 0
    %4528 = vmatpush1.bf16.msra.mxu0 0
    %4529 = vmatprep.subr.bf16.mxu0 0
    %4530 = vmatpush1.bf16.msra.mxu0 0
    %4531 = vmatprep.subr.bf16.mxu0 0
    %4532 = vmatpush1.bf16.msra.mxu0 0
    %4533 = vmatprep.subr.bf16.mxu0 0
    %4534 = vmatpush1.bf16.msra.mxu0 0
    %4535 = vmatprep.subr.bf16.mxu0 0
    %4536 = vmatpush1.bf16.msra.mxu0 0
    %4537 = vmatprep.subr.bf16.mxu0 0
    %4538 = vmatpush1.bf16.msra.mxu0 0
    %4539 = vmatprep.mubr.bf16.mxu0 0
    %4540 = vmatmul.mubr.bf16.gmra.mrb[0].mxu0 %v4465
    %v4541 = vpop.f32.mrb[0].mxu0
    %v4542 = vadd.f32 0.0, %v4541
    %v4543 = vpop.f32.mrb[0].mxu0
    %v4544 = vadd.f32 0.0, %v4543
    %v4545 = vpop.f32.mrb[0].mxu0
    %v4546 = vpop.f32.mrb[0].mxu0
    %4547 = vdwg.mxu0
    %v4548 = vadd.f32 %v4461, %v4501
    %v4549 = vadd.f32 %v4462, %v4503
    %v4550 = vadd.f32 %v4463, %v4542
    %v4551 = vadd.f32 %v4464, %v4544
    %v4552 = vmul.f32 %v4548, 0.5
    %v4553 = vtanh.pop %v4552
    %v4554 = vmul.f32 %v4553, 0.5
    %v4555 = vadd.f32 %v4554, 0.5
    %v4556 = vmul.f32 %v4549, 0.5
    %v4557 = vtanh.pop %v4556
    %v4558 = vmul.f32 %v4557, 0.5
    %v4559 = vadd.f32 %v4558, 0.5
    %v4560 = vtanh.pop %v4550
    %v4561 = vmul.f32 %v4551, 0.5
    %v4562 = vtanh.pop %v4561
    %v4563 = vmul.f32 %v4562, 0.5
    %v4564 = vadd.f32 %v4563, 0.5
    %v4565 = vmul.f32 %v4559, %v4458
    %v4566 = vmul.f32 %v4555, %v4560
    %v4567 = vadd.f32 %v4565, %v4566
    %v4568 = vtanh.pop %v4567
    %v4569 = vmul.f32 %v4564, %v4568
    %v4570 = vld [vmem:[%s2094] sm:$0xff]
    %v4571 = vld [vmem:[%s2094 + $0x8] sm:$0xff]
    %v4572 = vld [vmem:[%s2094 + $0x10] sm:$0xff]
    %v4573 = vld [vmem:[%s2094 + $0x18] sm:$0xff]
    %v4574 = vpack.c.bf16 %v4569, %v4569
    %4575 = vmatprep.subr.bf16.mxu0 %v3095
    %4576 = vmatpush1.bf16.msra.mxu0 %v3094
    %4577 = vmatprep.subr.bf16.mxu0 %v3099
    %4578 = vmatpush1.bf16.msra.mxu0 %v3098
    %4579 = vmatprep.subr.bf16.mxu0 %v3103
    %4580 = vmatpush1.bf16.msra.mxu0 %v3102
    %4581 = vmatprep.subr.bf16.mxu0 %v3107
    %4582 = vmatpush1.bf16.msra.mxu0 %v3106
    %4583 = vmatprep.subr.bf16.mxu0 %v3111
    %4584 = vmatpush1.bf16.msra.mxu0 %v3110
    %4585 = vmatprep.subr.bf16.mxu0 %v3115
    %4586 = vmatpush1.bf16.msra.mxu0 %v3114
    %4587 = vmatprep.subr.bf16.mxu0 %v3119
    %4588 = vmatpush1.bf16.msra.mxu0 %v3118
    %4589 = vmatprep.subr.bf16.mxu0 %v3123
    %4590 = vmatpush1.bf16.msra.mxu0 %v3122
    %4591 = vmatprep.subr.bf16.mxu0 0
    %4592 = vmatpush1.bf16.msra.mxu0 0
    %4593 = vmatprep.subr.bf16.mxu0 0
    %4594 = vmatpush1.bf16.msra.mxu0 0
    %4595 = vmatprep.subr.bf16.mxu0 0
    %4596 = vmatpush1.bf16.msra.mxu0 0
    %4597 = vmatprep.subr.bf16.mxu0 0
    %4598 = vmatpush1.bf16.msra.mxu0 0
    %4599 = vmatprep.subr.bf16.mxu0 0
    %4600 = vmatpush1.bf16.msra.mxu0 0
    %4601 = vmatprep.subr.bf16.mxu0 0
    %4602 = vmatpush1.bf16.msra.mxu0 0
    %4603 = vmatprep.subr.bf16.mxu0 0
    %4604 = vmatpush1.bf16.msra.mxu0 0
    %4605 = vmatprep.subr.bf16.mxu0 0
    %4606 = vmatpush1.bf16.msra.mxu0 0
    %4607 = vmatprep.mubr.bf16.mxu0 0
    %4608 = vmatmul.mubr.bf16.gmra.mrb[0].mxu0 %v4574
    %v4609 = vpop.f32.mrb[0].mxu0
    %v4610 = vadd.f32 0.0, %v4609
    %v4611 = vpop.f32.mrb[0].mxu0
    %v4612 = vadd.f32 0.0, %v4611
    %v4613 = vpop.f32.mrb[0].mxu0
    %v4614 = vpop.f32.mrb[0].mxu0
    %4615 = vdwg.mxu0
    %4616 = vmatprep.subr.bf16.mxu0 %v3097
    %4617 = vmatpush1.bf16.msra.mxu0 %v3096
    %4618 = vmatprep.subr.bf16.mxu0 %v3101
    %4619 = vmatpush1.bf16.msra.mxu0 %v3100
    %4620 = vmatprep.subr.bf16.mxu0 %v3105
    %4621 = vmatpush1.bf16.msra.mxu0 %v3104
    %4622 = vmatprep.subr.bf16.mxu0 %v3109
    %4623 = vmatpush1.bf16.msra.mxu0 %v3108
    %4624 = vmatprep.subr.bf16.mxu0 %v3113
    %4625 = vmatpush1.bf16.msra.mxu0 %v3112
    %4626 = vmatprep.subr.bf16.mxu0 %v3117
    %4627 = vmatpush1.bf16.msra.mxu0 %v3116
    %4628 = vmatprep.subr.bf16.mxu0 %v3121
    %4629 = vmatpush1.bf16.msra.mxu0 %v3120
    %4630 = vmatprep.subr.bf16.mxu0 %v3125
    %4631 = vmatpush1.bf16.msra.mxu0 %v3124
    %4632 = vmatprep.subr.bf16.mxu0 0
    %4633 = vmatpush1.bf16.msra.mxu0 0
    %4634 = vmatprep.subr.bf16.mxu0 0
    %4635 = vmatpush1.bf16.msra.mxu0 0
    %4636 = vmatprep.subr.bf16.mxu0 0
    %4637 = vmatpush1.bf16.msra.mxu0 0
    %4638 = vmatprep.subr.bf16.mxu0 0
    %4639 = vmatpush1.bf16.msra.mxu0 0
    %4640 = vmatprep.subr.bf16.mxu0 0
    %4641 = vmatpush1.bf16.msra.mxu0 0
    %4642 = vmatprep.subr.bf16.mxu0 0
    %4643 = vmatpush1.bf16.msra.mxu0 0
    %4644 = vmatprep.subr.bf16.mxu0 0
    %4645 = vmatpush1.bf16.msra.mxu0 0
    %4646 = vmatprep.subr.bf16.mxu0 0
    %4647 = vmatpush1.bf16.msra.mxu0 0
    %4648 = vmatprep.mubr.bf16.mxu0 0
    %4649 = vmatmul.mubr.bf16.gmra.mrb[0].mxu0 %v4574
    %v4650 = vpop.f32.mrb[0].mxu0
    %v4651 = vadd.f32 0.0, %v4650
    %v4652 = vpop.f32.mrb[0].mxu0
    %v4653 = vadd.f32 0.0, %v4652
    %v4654 = vpop.f32.mrb[0].mxu0
    %v4655 = vpop.f32.mrb[0].mxu0
    %4656 = vdwg.mxu0
    %v4657 = vadd.f32 %v4570, %v4610
    %v4658 = vadd.f32 %v4571, %v4612
    %v4659 = vadd.f32 %v4572, %v4651
    %v4660 = vadd.f32 %v4573, %v4653
    %v4661 = vmul.f32 %v4657, 0.5
    %v4662 = vtanh.pop %v4661
    %v4663 = vmul.f32 %v4662, 0.5
    %v4664 = vadd.f32 %v4663, 0.5
    %v4665 = vmul.f32 %v4658, 0.5
    %v4666 = vtanh.pop %v4665
    %v4667 = vmul.f32 %v4666, 0.5
    %v4668 = vadd.f32 %v4667, 0.5
    %v4669 = vtanh.pop %v4659
    %v4670 = vmul.f32 %v4660, 0.5
    %v4671 = vtanh.pop %v4670
    %v4672 = vmul.f32 %v4671, 0.5
    %v4673 = vadd.f32 %v4672, 0.5
    %v4674 = vmul.f32 %v4668, %v4567
    %v4675 = vmul.f32 %v4664, %v4669
    %v4676 = vadd.f32 %v4674, %v4675
    %v4677 = vtanh.pop %v4676
    %v4678 = vmul.f32 %v4673, %v4677
    %v4679 = vld [vmem:[%s2208] sm:$0xff]
    %v4680 = vld [vmem:[%s2208 + $0x8] sm:$0xff]
    %v4681 = vld [vmem:[%s2208 + $0x10] sm:$0xff]
    %v4682 = vld [vmem:[%s2208 + $0x18] sm:$0xff]
    %v4683 = vpack.c.bf16 %v4678, %v4678
    %4684 = vmatprep.subr.bf16.mxu0 %v3095
    %4685 = vmatpush1.bf16.msra.mxu0 %v3094
    %4686 = vmatprep.subr.bf16.mxu0 %v3099
    %4687 = vmatpush1.bf16.msra.mxu0 %v3098
    %4688 = vmatprep.subr.bf16.mxu0 %v3103
    %4689 = vmatpush1.bf16.msra.mxu0 %v3102
    %4690 = vmatprep.subr.bf16.mxu0 %v3107
    %4691 = vmatpush1.bf16.msra.mxu0 %v3106
    %4692 = vmatprep.subr.bf16.mxu0 %v3111
    %4693 = vmatpush1.bf16.msra.mxu0 %v3110
    %4694 = vmatprep.subr.bf16.mxu0 %v3115
    %4695 = vmatpush1.bf16.msra.mxu0 %v3114
    %4696 = vmatprep.subr.bf16.mxu0 %v3119
    %4697 = vmatpush1.bf16.msra.mxu0 %v3118
    %4698 = vmatprep.subr.bf16.mxu0 %v3123
    %4699 = vmatpush1.bf16.msra.mxu0 %v3122
    %4700 = vmatprep.subr.bf16.mxu0 0
    %4701 = vmatpush1.bf16.msra.mxu0 0
    %4702 = vmatprep.subr.bf16.mxu0 0
    %4703 = vmatpush1.bf16.msra.mxu0 0
    %4704 = vmatprep.subr.bf16.mxu0 0
    %4705 = vmatpush1.bf16.msra.mxu0 0
    %4706 = vmatprep.subr.bf16.mxu0 0
    %4707 = vmatpush1.bf16.msra.mxu0 0
    %4708 = vmatprep.subr.bf16.mxu0 0
    %4709 = vmatpush1.bf16.msra.mxu0 0
    %4710 = vmatprep.subr.bf16.mxu0 0
    %4711 = vmatpush1.bf16.msra.mxu0 0
    %4712 = vmatprep.subr.bf16.mxu0 0
    %4713 = vmatpush1.bf16.msra.mxu0 0
    %4714 = vmatprep.subr.bf16.mxu0 0
    %4715 = vmatpush1.bf16.msra.mxu0 0
    %4716 = vmatprep.mubr.bf16.mxu0 0
    %4717 = vmatmul.mubr.bf16.gmra.mrb[0].mxu0 %v4683
    %v4718 = vpop.f32.mrb[0].mxu0
    %v4719 = vadd.f32 0.0, %v4718
    %v4720 = vpop.f32.mrb[0].mxu0
    %v4721 = vadd.f32 0.0, %v4720
    %v4722 = vpop.f32.mrb[0].mxu0
    %v4723 = vpop.f32.mrb[0].mxu0
    %4724 = vdwg.mxu0
    %4725 = vmatprep.subr.bf16.mxu0 %v3097
    %4726 = vmatpush1.bf16.msra.mxu0 %v3096
    %4727 = vmatprep.subr.bf16.mxu0 %v3101
    %4728 = vmatpush1.bf16.msra.mxu0 %v3100
    %4729 = vmatprep.subr.bf16.mxu0 %v3105
    %4730 = vmatpush1.bf16.msra.mxu0 %v3104
    %4731 = vmatprep.subr.bf16.mxu0 %v3109
    %4732 = vmatpush1.bf16.msra.mxu0 %v3108
    %4733 = vmatprep.subr.bf16.mxu0 %v3113
    %4734 = vmatpush1.bf16.msra.mxu0 %v3112
    %4735 = vmatprep.subr.bf16.mxu0 %v3117
    %4736 = vmatpush1.bf16.msra.mxu0 %v3116
    %4737 = vmatprep.subr.bf16.mxu0 %v3121
    %4738 = vmatpush1.bf16.msra.mxu0 %v3120
    %4739 = vmatprep.subr.bf16.mxu0 %v3125
    %4740 = vmatpush1.bf16.msra.mxu0 %v3124
    %4741 = vmatprep.subr.bf16.mxu0 0
    %4742 = vmatpush1.bf16.msra.mxu0 0
    %4743 = vmatprep.subr.bf16.mxu0 0
    %4744 = vmatpush1.bf16.msra.mxu0 0
    %4745 = vmatprep.subr.bf16.mxu0 0
    %4746 = vmatpush1.bf16.msra.mxu0 0
    %4747 = vmatprep.subr.bf16.mxu0 0
    %4748 = vmatpush1.bf16.msra.mxu0 0
    %4749 = vmatprep.subr.bf16.mxu0 0
    %4750 = vmatpush1.bf16.msra.mxu0 0
    %4751 = vmatprep.subr.bf16.mxu0 0
    %4752 = vmatpush1.bf16.msra.mxu0 0
    %4753 = vmatprep.subr.bf16.mxu0 0
    %4754 = vmatpush1.bf16.msra.mxu0 0
    %4755 = vmatprep.subr.bf16.mxu0 0
    %4756 = vmatpush1.bf16.msra.mxu0 0
    %4757 = vmatprep.mubr.bf16.mxu0 0
    %4758 = vmatmul.mubr.bf16.gmra.mrb[0].mxu0 %v4683
    %v4759 = vpop.f32.mrb[0].mxu0
    %v4760 = vadd.f32 0.0, %v4759
    %v4761 = vpop.f32.mrb[0].mxu0
    %v4762 = vadd.f32 0.0, %v4761
    %v4763 = vpop.f32.mrb[0].mxu0
    %v4764 = vpop.f32.mrb[0].mxu0
    %4765 = vdwg.mxu0
    %v4766 = vadd.f32 %v4679, %v4719
    %v4767 = vadd.f32 %v4680, %v4721
    %v4768 = vadd.f32 %v4681, %v4760
    %v4769 = vadd.f32 %v4682, %v4762
    %v4770 = vmul.f32 %v4766, 0.5
    %v4771 = vtanh.pop %v4770
    %v4772 = vmul.f32 %v4771, 0.5
    %v4773 = vadd.f32 %v4772, 0.5
    %v4774 = vmul.f32 %v4767, 0.5
    %v4775 = vtanh.pop %v4774
    %v4776 = vmul.f32 %v4775, 0.5
    %v4777 = vadd.f32 %v4776, 0.5
    %v4778 = vtanh.pop %v4768
    %v4779 = vmul.f32 %v4769, 0.5
    %v4780 = vtanh.pop %v4779
    %v4781 = vmul.f32 %v4780, 0.5
    %v4782 = vadd.f32 %v4781, 0.5
    %v4783 = vmul.f32 %v4777, %v4676
    %v4784 = vmul.f32 %v4773, %v4778
    %v4785 = vadd.f32 %v4783, %v4784
    %v4786 = vtanh.pop %v4785
    %v4787 = vmul.f32 %v4782, %v4786
    %v4788 = vld [vmem:[%s2322] sm:$0xff]
    %v4789 = vld [vmem:[%s2322 + $0x8] sm:$0xff]
    %v4790 = vld [vmem:[%s2322 + $0x10] sm:$0xff]
    %v4791 = vld [vmem:[%s2322 + $0x18] sm:$0xff]
    %v4792 = vpack.c.bf16 %v4787, %v4787
    %4793 = vmatprep.subr.bf16.mxu0 %v3095
    %4794 = vmatpush1.bf16.msra.mxu0 %v3094
    %4795 = vmatprep.subr.bf16.mxu0 %v3099
    %4796 = vmatpush1.bf16.msra.mxu0 %v3098
    %4797 = vmatprep.subr.bf16.mxu0 %v3103
    %4798 = vmatpush1.bf16.msra.mxu0 %v3102
    %4799 = vmatprep.subr.bf16.mxu0 %v3107
    %4800 = vmatpush1.bf16.msra.mxu0 %v3106
    %4801 = vmatprep.subr.bf16.mxu0 %v3111
    %4802 = vmatpush1.bf16.msra.mxu0 %v3110
    %4803 = vmatprep.subr.bf16.mxu0 %v3115
    %4804 = vmatpush1.bf16.msra.mxu0 %v3114
    %4805 = vmatprep.subr.bf16.mxu0 %v3119
    %4806 = vmatpush1.bf16.msra.mxu0 %v3118
    %4807 = vmatprep.subr.bf16.mxu0 %v3123
    %4808 = vmatpush1.bf16.msra.mxu0 %v3122
    %4809 = vmatprep.subr.bf16.mxu0 0
    %4810 = vmatpush1.bf16.msra.mxu0 0
    %4811 = vmatprep.subr.bf16.mxu0 0
    %4812 = vmatpush1.bf16.msra.mxu0 0
    %4813 = vmatprep.subr.bf16.mxu0 0
    %4814 = vmatpush1.bf16.msra.mxu0 0
    %4815 = vmatprep.subr.bf16.mxu0 0
    %4816 = vmatpush1.bf16.msra.mxu0 0
    %4817 = vmatprep.subr.bf16.mxu0 0
    %4818 = vmatpush1.bf16.msra.mxu0 0
    %4819 = vmatprep.subr.bf16.mxu0 0
    %4820 = vmatpush1.bf16.msra.mxu0 0
    %4821 = vmatprep.subr.bf16.mxu0 0
    %4822 = vmatpush1.bf16.msra.mxu0 0
    %4823 = vmatprep.subr.bf16.mxu0 0
    %4824 = vmatpush1.bf16.msra.mxu0 0
    %4825 = vmatprep.mubr.bf16.mxu0 0
    %4826 = vmatmul.mubr.bf16.gmra.mrb[0].mxu0 %v4792
    %v4827 = vpop.f32.mrb[0].mxu0
    %v4828 = vadd.f32 0.0, %v4827
    %v4829 = vpop.f32.mrb[0].mxu0
    %v4830 = vadd.f32 0.0, %v4829
    %v4831 = vpop.f32.mrb[0].mxu0
    %v4832 = vpop.f32.mrb[0].mxu0
    %4833 = vdwg.mxu0
    %4834 = vmatprep.subr.bf16.mxu0 %v3097
    %4835 = vmatpush1.bf16.msra.mxu0 %v3096
    %4836 = vmatprep.subr.bf16.mxu0 %v3101
    %4837 = vmatpush1.bf16.msra.mxu0 %v3100
    %4838 = vmatprep.subr.bf16.mxu0 %v3105
    %4839 = vmatpush1.bf16.msra.mxu0 %v3104
    %4840 = vmatprep.subr.bf16.mxu0 %v3109
    %4841 = vmatpush1.bf16.msra.mxu0 %v3108
    %4842 = vmatprep.subr.bf16.mxu0 %v3113
    %4843 = vmatpush1.bf16.msra.mxu0 %v3112
    %4844 = vmatprep.subr.bf16.mxu0 %v3117
    %4845 = vmatpush1.bf16.msra.mxu0 %v3116
    %4846 = vmatprep.subr.bf16.mxu0 %v3121
    %4847 = vmatpush1.bf16.msra.mxu0 %v3120
    %4848 = vmatprep.subr.bf16.mxu0 %v3125
    %4849 = vmatpush1.bf16.msra.mxu0 %v3124
    %4850 = vmatprep.subr.bf16.mxu0 0
    %4851 = vmatpush1.bf16.msra.mxu0 0
    %4852 = vmatprep.subr.bf16.mxu0 0
    %4853 = vmatpush1.bf16.msra.mxu0 0
    %4854 = vmatprep.subr.bf16.mxu0 0
    %4855 = vmatpush1.bf16.msra.mxu0 0
    %4856 = vmatprep.subr.bf16.mxu0 0
    %4857 = vmatpush1.bf16.msra.mxu0 0
    %4858 = vmatprep.subr.bf16.mxu0 0
    %4859 = vmatpush1.bf16.msra.mxu0 0
    %4860 = vmatprep.subr.bf16.mxu0 0
    %4861 = vmatpush1.bf16.msra.mxu0 0
    %4862 = vmatprep.subr.bf16.mxu0 0
    %4863 = vmatpush1.bf16.msra.mxu0 0
    %4864 = vmatprep.subr.bf16.mxu0 0
    %4865 = vmatpush1.bf16.msra.mxu0 0
    %4866 = vmatprep.mubr.bf16.mxu0 0
    %4867 = vmatmul.mubr.bf16.gmra.mrb[0].mxu0 %v4792
    %v4868 = vpop.f32.mrb[0].mxu0
    %v4869 = vadd.f32 0.0, %v4868
    %v4870 = vpop.f32.mrb[0].mxu0
    %v4871 = vadd.f32 0.0, %v4870
    %v4872 = vpop.f32.mrb[0].mxu0
    %v4873 = vpop.f32.mrb[0].mxu0
    %4874 = vdwg.mxu0
    %v4875 = vadd.f32 %v4788, %v4828
    %v4876 = vadd.f32 %v4789, %v4830
    %v4877 = vadd.f32 %v4790, %v4869
    %v4878 = vadd.f32 %v4791, %v4871
    %v4879 = vmul.f32 %v4875, 0.5
    %v4880 = vtanh.pop %v4879
    %v4881 = vmul.f32 %v4880, 0.5
    %v4882 = vadd.f32 %v4881, 0.5
    %v4883 = vmul.f32 %v4876, 0.5
    %v4884 = vtanh.pop %v4883
    %v4885 = vmul.f32 %v4884, 0.5
    %v4886 = vadd.f32 %v4885, 0.5
    %v4887 = vtanh.pop %v4877
    %v4888 = vmul.f32 %v4878, 0.5
    %v4889 = vtanh.pop %v4888
    %v4890 = vmul.f32 %v4889, 0.5
    %v4891 = vadd.f32 %v4890, 0.5
    %v4892 = vmul.f32 %v4886, %v4785
    %v4893 = vmul.f32 %v4882, %v4887
    %v4894 = vadd.f32 %v4892, %v4893
    %v4895 = vtanh.pop %v4894
    %v4896 = vmul.f32 %v4891, %v4895
    %v4897 = vpack.c.bf16 %v4896, %v4896
    %v4898 = vld [vmem:[%s7] sm:$0xf]
    %v4899 = vld [vmem:[%s7 + $0x4] sm:$0xf]
    %v4900 = vld [vmem:[%s7 + $0x8] sm:$0xf]
    %v4901 = vld [vmem:[%s7 + $0xc] sm:$0xf]
    %v4902 = vld [vmem:[%s7 + $0x10] sm:$0xf]
    %v4903 = vld [vmem:[%s7 + $0x14] sm:$0xf]
    %v4904 = vld [vmem:[%s7 + $0x18] sm:$0xf]
    %v4905 = vld [vmem:[%s7 + $0x1c] sm:$0xf]
    %v4906 = vld [vmem:[%s7 + $0x20] sm:$0xf]
    %v4907 = vld [vmem:[%s7 + $0x24] sm:$0xf]
    %v4908 = vld [vmem:[%s7 + $0x28] sm:$0xf]
    %v4909 = vld [vmem:[%s7 + $0x2c] sm:$0xf]
    %v4910 = vld [vmem:[%s7 + $0x30] sm:$0xf]
    %v4911 = vld [vmem:[%s7 + $0x34] sm:$0xf]
    %v4912 = vld [vmem:[%s7 + $0x38] sm:$0xf]
    %v4913 = vld [vmem:[%s7 + $0x3c] sm:$0xf]
    %v4914 = vld [vmem:[%s8] sm:$0x1]
    %v4916 = vlaneseq
    %v4917 = vshrl.u32 %v4916, 7
    %v4918 = vsub.s32 0, %v4917
    %v4919 = vrot.slane %v4914, %v4918
    %v4937 = vunpack.c.l.b16 %v4898
    %v4938 = vunpack.c.l.b16 %v4899
    %v4939 = vunpack.c.l.b16 %v4900
    %v4940 = vunpack.c.l.b16 %v4901
    %v4941 = vunpack.c.l.b16 %v4902
    %v4942 = vunpack.c.l.b16 %v4903
    %v4943 = vunpack.c.l.b16 %v4904
    %v4944 = vunpack.c.l.b16 %v4905
    %v4945 = vunpack.c.l.b16 %v4906
    %v4946 = vunpack.c.l.b16 %v4907
    %v4947 = vunpack.c.l.b16 %v4908
    %v4948 = vunpack.c.l.b16 %v4909
    %v4949 = vunpack.c.l.b16 %v4910
    %v4950 = vunpack.c.l.b16 %v4911
    %v4951 = vunpack.c.l.b16 %v4912
    %v4952 = vunpack.c.l.b16 %v4913
    %v4953 = vpack.c.b16 %v4938, %v4937
    %v4954 = vpack.c.b16 %v4940, %v4939
    %v4955 = vpack.c.b16 %v4942, %v4941
    %v4956 = vpack.c.b16 %v4944, %v4943
    %v4957 = vpack.c.b16 %v4946, %v4945
    %v4958 = vpack.c.b16 %v4948, %v4947
    %v4959 = vpack.c.b16 %v4950, %v4949
    %v4960 = vpack.c.b16 %v4952, %v4951
    %4969 = vmatprep.subr.bf16.mxu0 0
    %4970 = vmatpush1.bf16.msra.mxu0 %v4953
    %4971 = vmatprep.subr.bf16.mxu0 0
    %4972 = vmatpush1.bf16.msra.mxu0 %v4954
    %4973 = vmatprep.subr.bf16.mxu0 0
    %4974 = vmatpush1.bf16.msra.mxu0 %v4955
    %4975 = vmatprep.subr.bf16.mxu0 0
    %4976 = vmatpush1.bf16.msra.mxu0 %v4956
    %4977 = vmatprep.subr.bf16.mxu0 0
    %4978 = vmatpush1.bf16.msra.mxu0 %v4957
    %4979 = vmatprep.subr.bf16.mxu0 0
    %4980 = vmatpush1.bf16.msra.mxu0 %v4958
    %4981 = vmatprep.subr.bf16.mxu0 0
    %4982 = vmatpush1.bf16.msra.mxu0 %v4959
    %4983 = vmatprep.subr.bf16.mxu0 0
    %4984 = vmatpush1.bf16.msra.mxu0 %v4960
    %4985 = vmatprep.subr.bf16.mxu0 0
    %4986 = vmatpush1.bf16.msra.mxu0 0
    %4987 = vmatprep.subr.bf16.mxu0 0
    %4988 = vmatpush1.bf16.msra.mxu0 0
    %4989 = vmatprep.subr.bf16.mxu0 0
    %4990 = vmatpush1.bf16.msra.mxu0 0
    %4991 = vmatprep.subr.bf16.mxu0 0
    %4992 = vmatpush1.bf16.msra.mxu0 0
    %4993 = vmatprep.subr.bf16.mxu0 0
    %4994 = vmatpush1.bf16.msra.mxu0 0
    %4995 = vmatprep.subr.bf16.mxu0 0
    %4996 = vmatpush1.bf16.msra.mxu0 0
    %4997 = vmatprep.subr.bf16.mxu0 0
    %4998 = vmatpush1.bf16.msra.mxu0 0
    %4999 = vmatprep.subr.bf16.mxu0 0
    %5000 = vmatpush1.bf16.msra.mxu0 0
    %5001 = vmatprep.mubr.bf16.mxu0 0
    %5002 = vmatmul.mubr.bf16.gmra.mrb[0].mxu0 %v4897
    %v5003 = vpop.f32.mrb[0].mxu0
    %v5004 = vadd.f32 %v4919, %v5003
    %v5005 = vpop.f32.mrb[0].mxu0
    %v5006 = vpop.f32.mrb[0].mxu0
    %v5007 = vpop.f32.mrb[0].mxu0
    %5008 = vdwg.mxu0
    %5009 = vst.msk [vmem:[#allocation4] sm:$0xff] %vm92, %v5004
    // Predicated region
    $region38: #{lstm_model_forward.1} parent=1 // pred_check
      _
    $region39: #{lstm_model_forward.1} parent=1 // pred_check_branch
      %5011 = sbr.rel (0) target = $region41
    $region40: #{lstm_model_forward.1} parent=1 // pred_region
      %s5013 = ssub.s32 128, 128
      %5014 = vsyncadd [#allocation5], %s5013
      %s5016 = sshll.u32 [#allocation4], 4
      %s5017 = int_to_ptr.vmem [resolvable:$true] %s5016
      %5019 = dma.vmem_to_hbm [thread:$0]  %s5017, 128, %s9, [#allocation5]
    $region41: #{lstm_model_forward.1} parent=1 // pred_fallthru
      _
    // Predicated region
    $region42: #{lstm_model_forward.1} parent=1 // pred_check
      _
    $region43: #{lstm_model_forward.1} parent=1 // pred_check_branch
      %5021 = sbr.rel (0) target = $region45
    $region44: #{lstm_model_forward.1} parent=1 // pred_region
      %5022 = dma.done [#allocation5], 128
    $region45: #{lstm_model_forward.1} parent=1 // pred_fallthru
      _
    %5023 = vsyncpa [#allocation5], 1

</llo_original>
